<compile_context>
chip_gen: v7x
topology: tpu7x:2x2x1
jax: 0.10.0
libtpu: 0.0.40
codegen_flags: <defaults>
</compile_context>

<pallas_src>
import functools

import jax
import jax.numpy as jnp
from jax import lax
from jax.experimental import pallas as pl
from jax.experimental.pallas import tpu as pltpu


# ----------------------------- fused kernel -----------------------------

def _fused_forward_kernel(*refs, layout, nhead, d_model, seq_t, bb, n_layers,
                          eps=1e-5):
    """One batch-block (bb samples) per grid step; entire forward fused.

    refs = (x_ref, slab_ref_0, ..., slab_ref_{S-1}, out_ref).
    `layout[name] = (slab_id, row_offset, n_rows)` with static Python ints.
    """
    x_ref, out_ref = refs[0], refs[-1]
    slab_refs = refs[1:-1]

    D, T = d_model, seq_t
    dk = D // nhead
    scale = 1.0 / (dk ** 0.5)

    def g(name):
        sid, off, r = layout[name]
        return slab_refs[sid][pl.ds(off, r), :]        # static slice -> load

    def layer_norm(v, gname, bname):
        gm, bt = g(gname), g(bname)                    # (1, D) rows
        mu = jnp.mean(v, axis=-1, keepdims=True)
        var = jnp.mean((v - mu) ** 2, axis=-1, keepdims=True)
        return (v - mu) * lax.rsqrt(var + eps) * gm + bt

    x = x_ref[...].astype(jnp.float32)                 # (bb*T, F)

    # ---- fc_f ----
    h = jnp.dot(x, g("fc_f_w"), preferred_element_type=jnp.float32) + g("fc_f_b")

    # ---- msa + mm_transformer layers (statically unrolled) ----
    for li in range(n_layers):
        def P(s, _li=li):
            return "L{}_{}".format(_li, s)

        hn = layer_norm(h, P("ln1_g"), P("ln1_b"))
        # fused QKV: one matmul produces q|k|v along the lane axis
        qkv = jnp.dot(hn, g(P("wqkv")),
                      preferred_element_type=jnp.float32) + g(P("bqkv"))
        q3 = qkv[:, 0 * D:1 * D].reshape(bb, T, D)
        k3 = qkv[:, 1 * D:2 * D].reshape(bb, T, D)
        v3 = qkv[:, 2 * D:3 * D].reshape(bb, T, D)

        # per-head attention, batched over the bb sample axis
        ctx_heads = []
        for hh in range(nhead):
            sl = slice(hh * dk, (hh + 1) * dk)
            qh, kh, vh = q3[..., sl], k3[..., sl], v3[..., sl]   # (bb, T, dk)
            s = lax.dot_general(qh, kh, (((2,), (2,)), ((0,), (0,))),
                                preferred_element_type=jnp.float32) * scale
            s = s - jnp.max(s, axis=-1, keepdims=True)
            e = jnp.exp(s)
            p = e / jnp.sum(e, axis=-1, keepdims=True)           # exact softmax
            ctx_heads.append(
                lax.dot_general(p, vh, (((2,), (1,)), ((0,), (0,))),
                                preferred_element_type=jnp.float32))  # (bb,T,dk)
        ctx = jnp.concatenate(ctx_heads, axis=-1).reshape(bb * T, D)
        # single W_o projection + residual (dropout = identity)
        h = h + jnp.dot(ctx, g(P("wo")),
                        preferred_element_type=jnp.float32) + g(P("bo"))

        hn2 = layer_norm(h, P("ln2_g"), P("ln2_b"))
        f1 = jnp.maximum(
            jnp.dot(hn2, g(P("ffn_w1")),
                    preferred_element_type=jnp.float32) + g(P("ffn_b1")), 0.0)
        h = h + jnp.dot(f1, g(P("ffn_w2")),
                        preferred_element_type=jnp.float32) + g(P("ffn_b2"))

    # ---- final LayerNorm of MultilayerTransformer ----
    h = layer_norm(h, "mm_norm_g", "mm_norm_b")

    # ---- MIL regressor: Linear(512)+ReLU -> Linear(32) -> Linear(1)+Sigmoid ----
    z = jnp.maximum(
        jnp.dot(h, g("mil_w1"), preferred_element_type=jnp.float32) + g("mil_b1"),
        0.0)                                                    # (bb*T, 512)
    z = jnp.dot(z, g("mil_w2"),
                preferred_element_type=jnp.float32) + g("mil_b2")   # (bb*T, 32)

    # 32 -> 1 projection producing a lane-dense (bb, T) output row per sample:
    # (1,32) x (T,32)^T matmul puts the T logits along the lane axis directly.
    z3 = z.reshape(bb, T, z.shape[-1])
    w3_row = g("mil_w3")                                        # (1, 32)
    b3 = g("mil_b3")[:, 0:1]                                    # (1, 1)
    rows = []
    for bidx in range(bb):
        rows.append(lax.dot_general(w3_row, z3[bidx],
                                    (((1,), (1,)), ((), ())),
                                    preferred_element_type=jnp.float32))  # (1,T)
    logits = jnp.concatenate(rows, axis=0) + b3                 # (bb, T)
    out_ref[...] = jax.nn.sigmoid(logits).astype(out_ref.dtype)


# ----------------------------- param packing -----------------------------

def _make_entries(params):
    """Canonical ordered (name, 2D array) list; QKV fused per layer."""
    D = params["fc_f_w"].shape[1]
    entries = [("fc_f_w", params["fc_f_w"]),
               ("fc_f_b", params["fc_f_b"].reshape(1, -1))]
    layers = [params["msa"]] + list(params["mm_layers"])
    for li, lp in enumerate(layers):
        wqkv = jnp.concatenate([lp["wq"], lp["wk"], lp["wv"]], axis=1)   # (D,3D)
        bqkv = jnp.concatenate([lp["bq"], lp["bk"], lp["bv"]]).reshape(1, -1)
        entries += [
            ("L{}_ln1_g".format(li), lp["ln1_g"].reshape(1, -1)),
            ("L{}_ln1_b".format(li), lp["ln1_b"].reshape(1, -1)),
            ("L{}_wqkv".format(li), wqkv),
            ("L{}_bqkv".format(li), bqkv),
            ("L{}_wo".format(li), lp["wo"]),
            ("L{}_bo".format(li), lp["bo"].reshape(1, -1)),
            ("L{}_ln2_g".format(li), lp["ln2_g"].reshape(1, -1)),
            ("L{}_ln2_b".format(li), lp["ln2_b"].reshape(1, -1)),
            ("L{}_ffn_w1".format(li), lp["ffn_w1"]),
            ("L{}_ffn_b1".format(li), lp["ffn_b1"].reshape(1, -1)),
            ("L{}_ffn_w2".format(li), lp["ffn_w2"]),
            ("L{}_ffn_b2".format(li), lp["ffn_b2"].reshape(1, -1)),
        ]
    b3_row = jnp.pad(params["mil_b3"].reshape(1, 1), ((0, 0), (0, D - 1)))
    entries += [
        ("mm_norm_g", params["mm_norm_g"].reshape(1, -1)),
        ("mm_norm_b", params["mm_norm_b"].reshape(1, -1)),
        ("mil_w1", params["mil_w1"]),                    # (D, 512)
        ("mil_b1", params["mil_b1"].reshape(1, -1)),     # (1, 512)
        ("mil_w2", params["mil_w2"]),                    # (512, 32)
        ("mil_b2", params["mil_b2"].reshape(1, -1)),
        ("mil_w3", params["mil_w3"].reshape(1, -1)),     # (32,1) -> (1,32) row
        ("mil_b3", b3_row),                              # scalar in col 0
    ]
    return entries, len(layers)


def _pack_slabs(entries):
    """Pack entries into one f32 slab per distinct column width.

    Each entry's rows are padded to a multiple of 8 so every static row offset
    is sublane-aligned.  Returns (slabs_in_width_order, layout) where
    layout[name] = (slab_id, row_offset, n_rows) with Python ints.
    """
    by_width = {}
    for name, arr in entries:
        arr = jnp.asarray(arr, jnp.float32)
        by_width.setdefault(int(arr.shape[1]), []).append((name, arr))
    slabs, layout = [], {}
    for sid, w in enumerate(sorted(by_width)):
        parts, off = [], 0
        for name, arr in by_width[w]:
            r = int(arr.shape[0])
            layout[name] = (sid, off, r)
            parts.append(arr)
            pad = (-r) % 8
            if pad:
                parts.append(jnp.zeros((pad, w), jnp.float32))
            off += r + pad
        slabs.append(jnp.concatenate(parts, axis=0))
    return slabs, layout


# ----------------------------- MIL filter -----------------------------

def mil_filter(logits, seq_len):
    """MIL.filter: mean of top-(seq_len//16 + 1) logits per sample."""
    if seq_len is None:
        return logits
    # TODO(synk): per-sample dynamic-k top-k has no clean static Pallas
    # formulation; done as vectorized masked top_k in plain JAX glue (stays on
    # device, jit-traceable).
    B, T = logits.shape
    sl = jnp.clip(seq_len.astype(jnp.int32), 1, T)        # guard 0 / >T
    max_k = T // 16 + 1
    pos = jnp.arange(T)[None, :]
    masked = jnp.where(pos < sl[:, None], logits, -jnp.inf)
    vals, _ = lax.top_k(masked, max_k)                     # (B, max_k), descending
    k = (sl // 16 + 1).astype(jnp.int32)
    keep = jnp.arange(max_k)[None, :] < k[:, None]
    return jnp.sum(jnp.where(keep, vals, 0.0), axis=-1) / k.astype(logits.dtype)


# ----------------------------- forward -----------------------------

def ann_vad_forward(params, f_f, nhead, seq_len=None, batch_block=None):
    B, T, F_in = f_f.shape
    D = int(params["fc_f_w"].shape[1])
    entries, n_layers = _make_entries(params)
    slabs, layout = _pack_slabs(entries)

    # Default: whole batch in ONE grid step (best on single-TC v5e/v6e).
    # For v7x 2-TC splitting, pass batch_block=B//2 (keeps >=2 parallel steps).
    bb = B if batch_block is None else batch_block
    assert B % bb == 0, "batch_block must divide B"

    x2 = f_f.reshape(B * T, F_in).astype(jnp.float32)      # rows stacked on sublanes

    kernel = functools.partial(
        _fused_forward_kernel, layout=layout, nhead=nhead, d_model=D,
        seq_t=T, bb=bb, n_layers=n_layers)

    in_specs = [pl.BlockSpec((bb * T, F_in), lambda i: (i, 0))]
    for s in slabs:
        in_specs.append(pl.BlockSpec(s.shape, lambda i: (0, 0)))

    out = pl.pallas_call(
        kernel,
        out_shape=jax.ShapeDtypeStruct((B, T), jnp.float32),
        grid=(B // bb,),
        in_specs=in_specs,
        out_specs=pl.BlockSpec((bb, T), lambda i: (i, 0)),
        compiler_params=pltpu.CompilerParams(
            dimension_semantics=("parallel",)),
    )(x2, *slabs)

    logits = out.astype(f_f.dtype)                          # (B, T), torch .squeeze()
    return mil_filter(logits, seq_len)


# ----------------------------- pure-JAX reference -----------------------------

def ann_vad_reference(params, f_f, nhead, eps=1e-5):
    def ln(v, g, b):
        mu = v.mean(-1, keepdims=True)
        var = ((v - mu) ** 2).mean(-1, keepdims=True)
        return (v - mu) / jnp.sqrt(var + eps) * g + b

    B, T, _ = f_f.shape
    h = f_f @ params["fc_f_w"] + params["fc_f_b"]
    D = h.shape[-1]
    dk = D // nhead
    for lp in [params["msa"]] + list(params["mm_layers"]):
        hn = ln(h, lp["ln1_g"], lp["ln1_b"])
        q = hn @ lp["wq"] + lp["bq"]
        k = hn @ lp["wk"] + lp["bk"]
        v = hn @ lp["wv"] + lp["bv"]
        qh = q.reshape(B, T, nhead, dk).transpose(0, 2, 1, 3)
        kh = k.reshape(B, T, nhead, dk).transpose(0, 2, 1, 3)
        vh = v.reshape(B, T, nhead, dk).transpose(0, 2, 1, 3)
        s = jnp.einsum('bhqd,bhkd->bhqk', qh, kh) / jnp.sqrt(jnp.float32(dk))
        p = jax.nn.softmax(s, axis=-1)
        ctx = jnp.einsum('bhqk,bhkd->bhqd', p, vh).transpose(0, 2, 1, 3)
        h = h + ctx.reshape(B, T, D) @ lp["wo"] + lp["bo"]
        hn2 = ln(h, lp["ln2_g"], lp["ln2_b"])
        h = h + jax.nn.relu(hn2 @ lp["ffn_w1"] + lp["ffn_b1"]) @ lp["ffn_w2"] + lp["ffn_b2"]
    h = ln(h, params["mm_norm_g"], params["mm_norm_b"])
    z = jax.nn.relu(h @ params["mil_w1"] + params["mil_b1"])
    z = z @ params["mil_w2"] + params["mil_b2"]
    logit = z @ params["mil_w3"] + params["mil_b3"]
    return jax.nn.sigmoid(logit)[..., 0]


# ----------------------------- parameter init -----------------------------

def init_linear(key, in_dim, out_dim):
    kw, kb = jax.random.split(key)
    lim = 1.0 / jnp.sqrt(jnp.float32(in_dim))
    w = jax.random.uniform(kw, (in_dim, out_dim), jnp.float32, -lim, lim)
    b = jax.random.uniform(kb, (out_dim,), jnp.float32, -lim, lim)
    return w, b


def init_transformer_layer(key, d_model, d_ff):
    ks = jax.random.split(key, 6)
    p = {
        "ln1_g": jnp.ones((d_model,), jnp.float32),
        "ln1_b": jnp.zeros((d_model,), jnp.float32),
        "ln2_g": jnp.ones((d_model,), jnp.float32),
        "ln2_b": jnp.zeros((d_model,), jnp.float32),
    }
    p["wq"], p["bq"] = init_linear(ks[0], d_model, d_model)
    p["wk"], p["bk"] = init_linear(ks[1], d_model, d_model)
    p["wv"], p["bv"] = init_linear(ks[2], d_model, d_model)
    p["wo"], p["bo"] = init_linear(ks[3], d_model, d_model)
    p["ffn_w1"], p["ffn_b1"] = init_linear(ks[4], d_model, d_ff)
    p["ffn_w2"], p["ffn_b2"] = init_linear(ks[5], d_ff, d_model)
    return p


def init_params(key, f_feature_size, hid_dim, ffn_dim, n_transformer_layer):
    keys = jax.random.split(key, 6 + n_transformer_layer)
    params = {}
    params["fc_f_w"], params["fc_f_b"] = init_linear(keys[0], f_feature_size, hid_dim)
    params["msa"] = init_transformer_layer(keys[1], hid_dim, ffn_dim)
    params["mm_layers"] = [
        init_transformer_layer(keys[2 + i], hid_dim, hid_dim)   # PFF(hid, hid)
        for i in range(n_transformer_layer)
    ]
    params["mm_norm_g"] = jnp.ones((hid_dim,), jnp.float32)
    params["mm_norm_b"] = jnp.zeros((hid_dim,), jnp.float32)
    k_mil = jax.random.split(keys[-1], 3)
    params["mil_w1"], params["mil_b1"] = init_linear(k_mil[0], hid_dim, 512)
    params["mil_w2"], params["mil_b2"] = init_linear(k_mil[1], 512, 32)
    params["mil_w3"], params["mil_b3"] = init_linear(k_mil[2], 32, 1)
    return params


# ----------------------------- main -----------------------------

if __name__ == "__main__":
    # args: f_feature_size=64, hid_dim=32, nhead=4, ffn_dim=64, n_transformer_layer=2
    B, T = 2, 8
    F_FEAT, HID, NHEAD, FFN, NLAYER = 64, 32, 4, 64, 2

    key = jax.random.PRNGKey(0)
    k_param, k_x = jax.random.split(key)
    params = init_params(k_param, F_FEAT, HID, FFN, NLAYER)
    f_f = jax.random.normal(k_x, (B, T, F_FEAT), jnp.float32)

    # Default path (seq_len=None): per-frame sigmoid scores, shape (B, T).
    out = jax.block_until_ready(ann_vad_forward(params, f_f, NHEAD, seq_len=None))
    assert out.shape == (B, T)
    assert bool(jnp.all(jnp.isfinite(out)))
    assert bool(jnp.all((out >= 0.0) & (out <= 1.0)))        # sigmoid outputs

    # Numerics check vs plain-JAX reference of the same module structure.
    ref = jax.block_until_ready(ann_vad_reference(params, f_f, NHEAD))
    assert bool(jnp.allclose(out, ref, atol=2e-3, rtol=2e-3))

    # MIL path with per-sample sequence lengths (vectorized masked top-k).
    seq_len = jnp.array([T, T - 3], jnp.int32)
    mil_out = jax.block_until_ready(
        ann_vad_forward(params, f_f, NHEAD, seq_len=seq_len))
    assert mil_out.shape == (B,)
    assert bool(jnp.all(jnp.isfinite(mil_out)))

    print("KERNEL_OK")
</pallas_src>

<mosaic_0001>
module attributes {stable_mosaic.version = 11 : i64} {
  func.func @_fused_forward_kernel(%arg0: i32, %arg1: memref<16x64xf32, #tpu.memory_space<vmem>>, %arg2: memref<1072x32xf32, #tpu.memory_space<vmem>>, %arg3: memref<40x64xf32, #tpu.memory_space<vmem>>, %arg4: memref<120x96xf32, #tpu.memory_space<vmem>>, %arg5: memref<40x512xf32, #tpu.memory_space<vmem>>, %arg6: memref<2x8xf32, #tpu.memory_space<vmem>>) attributes {dimension_semantics = [#tpu.dimension_semantics<parallel>], iteration_bounds = array<i64: 1>, scalar_prefetch = 0 : i64, scratch_operands = 0 : i64, tpu.core_type = #tpu.core_type<tc>, window_params = [{transform_indices = @transform_0, window_bounds = array<i64: 16, 64>}, {pipeline_mode = #tpu.pipeline_mode<synchronous>, transform_indices = @transform_1, window_bounds = array<i64: 1072, 32>}, {pipeline_mode = #tpu.pipeline_mode<synchronous>, transform_indices = @transform_2, window_bounds = array<i64: 40, 64>}, {pipeline_mode = #tpu.pipeline_mode<synchronous>, transform_indices = @transform_3, window_bounds = array<i64: 120, 96>}, {pipeline_mode = #tpu.pipeline_mode<synchronous>, transform_indices = @transform_4, window_bounds = array<i64: 40, 512>}, {transform_indices = @transform_5, window_bounds = array<i64: 2, 8>}]} {
    %c0 = arith.constant 0 : index
    %c0_0 = arith.constant 0 : index
    %0 = vector.load %arg1[%c0, %c0_0] : memref<16x64xf32, #tpu.memory_space<vmem>>, vector<16x64xf32>
    %c0_1 = arith.constant 0 : index
    %c0_2 = arith.constant 0 : index
    %1 = vector.load %arg2[%c0_1, %c0_2] : memref<1072x32xf32, #tpu.memory_space<vmem>>, vector<64x32xf32>
    %cst = arith.constant dense<0.000000e+00> : vector<16x32xf32>
    %2 = tpu.matmul %0, %1, %cst {dimension_numbers = #tpu.dot_dimension_numbers<[1], [0], [0], [1], [0, 0, 1, 1], [], []>} : vector<16x64xf32>, vector<64x32xf32>, vector<16x32xf32> -> vector<16x32xf32>
    %c64 = arith.constant 64 : index
    %c0_3 = arith.constant 0 : index
    %3 = vector.load %arg2[%c64, %c0_3] : memref<1072x32xf32, #tpu.memory_space<vmem>>, vector<1x32xf32>
    %4 = vector.broadcast %3 : vector<1x32xf32> to vector<16x32xf32>
    %5 = arith.addf %2, %4 : vector<16x32xf32>
    %c72 = arith.constant 72 : index
    %c0_4 = arith.constant 0 : index
    %6 = vector.load %arg2[%c72, %c0_4] : memref<1072x32xf32, #tpu.memory_space<vmem>>, vector<1x32xf32>
    %c80 = arith.constant 80 : index
    %c0_5 = arith.constant 0 : index
    %7 = vector.load %arg2[%c80, %c0_5] : memref<1072x32xf32, #tpu.memory_space<vmem>>, vector<1x32xf32>
    %cst_6 = arith.constant dense<0.000000e+00> : vector<16xf32>
    %8 = vector.multi_reduction <add>, %5, %cst_6 [1] : vector<16x32xf32> to vector<16xf32>
    %9 = vector.shape_cast %8 : vector<16xf32> to vector<16x1xf32>
    %cst_7 = arith.constant 3.200000e+01 : f32
    %10 = vector.broadcast %cst_7 : f32 to vector<16x1xf32>
    %11 = arith.divf %9, %10 : vector<16x1xf32>
    %12 = vector.broadcast %11 : vector<16x1xf32> to vector<16x32xf32>
    %13 = arith.subf %5, %12 : vector<16x32xf32>
    %14 = arith.mulf %13, %13 : vector<16x32xf32>
    %cst_8 = arith.constant dense<0.000000e+00> : vector<16xf32>
    %15 = vector.multi_reduction <add>, %14, %cst_8 [1] : vector<16x32xf32> to vector<16xf32>
    %16 = vector.shape_cast %15 : vector<16xf32> to vector<16x1xf32>
    %cst_9 = arith.constant 3.200000e+01 : f32
    %17 = vector.broadcast %cst_9 : f32 to vector<16x1xf32>
    %18 = arith.divf %16, %17 : vector<16x1xf32>
    %19 = vector.broadcast %11 : vector<16x1xf32> to vector<16x32xf32>
    %20 = arith.subf %5, %19 : vector<16x32xf32>
    %cst_10 = arith.constant 9.99999974E-6 : f32
    %21 = vector.broadcast %cst_10 : f32 to vector<16x1xf32>
    %22 = arith.addf %18, %21 : vector<16x1xf32>
    %23 = math.rsqrt %22 : vector<16x1xf32>
    %24 = vector.broadcast %23 : vector<16x1xf32> to vector<16x32xf32>
    %25 = arith.mulf %20, %24 : vector<16x32xf32>
    %26 = vector.broadcast %6 : vector<1x32xf32> to vector<16x32xf32>
    %27 = arith.mulf %25, %26 : vector<16x32xf32>
    %28 = vector.broadcast %7 : vector<1x32xf32> to vector<16x32xf32>
    %29 = arith.addf %27, %28 : vector<16x32xf32>
    %c0_11 = arith.constant 0 : index
    %c0_12 = arith.constant 0 : index
    %30 = vector.load %arg4[%c0_11, %c0_12] : memref<120x96xf32, #tpu.memory_space<vmem>>, vector<32x96xf32>
    %cst_13 = arith.constant dense<0.000000e+00> : vector<16x96xf32>
    %31 = tpu.matmul %29, %30, %cst_13 {dimension_numbers = #tpu.dot_dimension_numbers<[1], [0], [0], [1], [0, 0, 1, 1], [], []>} : vector<16x32xf32>, vector<32x96xf32>, vector<16x96xf32> -> vector<16x96xf32>
    %c32 = arith.constant 32 : index
    %c0_14 = arith.constant 0 : index
    %32 = vector.load %arg4[%c32, %c0_14] : memref<120x96xf32, #tpu.memory_space<vmem>>, vector<1x96xf32>
    %33 = vector.broadcast %32 : vector<1x96xf32> to vector<16x96xf32>
    %34 = arith.addf %31, %33 : vector<16x96xf32>
    %35 = vector.extract_strided_slice %34 {offsets = [0, 0], sizes = [16, 32], strides = [1, 1]} : vector<16x96xf32> to vector<16x32xf32>
    %36 = vector.shape_cast %35 : vector<16x32xf32> to vector<2x8x32xf32>
    %37 = vector.extract_strided_slice %34 {offsets = [0, 32], sizes = [16, 32], strides = [1, 1]} : vector<16x96xf32> to vector<16x32xf32>
    %38 = vector.shape_cast %37 : vector<16x32xf32> to vector<2x8x32xf32>
    %39 = vector.extract_strided_slice %34 {offsets = [0, 64], sizes = [16, 32], strides = [1, 1]} : vector<16x96xf32> to vector<16x32xf32>
    %40 = vector.shape_cast %39 : vector<16x32xf32> to vector<2x8x32xf32>
    %41 = vector.extract_strided_slice %36 {offsets = [0, 0, 0], sizes = [2, 8, 8], strides = [1, 1, 1]} : vector<2x8x32xf32> to vector<2x8x8xf32>
    %42 = vector.extract_strided_slice %38 {offsets = [0, 0, 0], sizes = [2, 8, 8], strides = [1, 1, 1]} : vector<2x8x32xf32> to vector<2x8x8xf32>
    %43 = vector.extract_strided_slice %40 {offsets = [0, 0, 0], sizes = [2, 8, 8], strides = [1, 1, 1]} : vector<2x8x32xf32> to vector<2x8x8xf32>
    %cst_15 = arith.constant dense<0.000000e+00> : vector<2x8x8xf32>
    %44 = tpu.matmul %41, %42, %cst_15 {dimension_numbers = #tpu.dot_dimension_numbers<[2], [2], [1], [1], [0, 0, 0, 1, 1, 1], [0], [0]>} : vector<2x8x8xf32>, vector<2x8x8xf32>, vector<2x8x8xf32> -> vector<2x8x8xf32>
    %cst_16 = arith.constant 0.353553385 : f32
    %45 = vector.broadcast %cst_16 : f32 to vector<2x8x8xf32>
    %46 = arith.mulf %44, %45 : vector<2x8x8xf32>
    %cst_17 = arith.constant dense<0xFF800000> : vector<2x8xf32>
    %47 = vector.multi_reduction <maximumf>, %46, %cst_17 [2] : vector<2x8x8xf32> to vector<2x8xf32>
    %48 = vector.shape_cast %47 : vector<2x8xf32> to vector<2x8x1xf32>
    %49 = vector.broadcast %48 : vector<2x8x1xf32> to vector<2x8x8xf32>
    %50 = arith.subf %46, %49 : vector<2x8x8xf32>
    %51 = math.exp %50 : vector<2x8x8xf32>
    %cst_18 = arith.constant dense<0.000000e+00> : vector<2x8xf32>
    %52 = vector.multi_reduction <add>, %51, %cst_18 [2] : vector<2x8x8xf32> to vector<2x8xf32>
    %53 = vector.shape_cast %52 : vector<2x8xf32> to vector<2x8x1xf32>
    %54 = vector.broadcast %53 : vector<2x8x1xf32> to vector<2x8x8xf32>
    %55 = arith.divf %51, %54 : vector<2x8x8xf32>
    %cst_19 = arith.constant dense<0.000000e+00> : vector<2x8x8xf32>
    %56 = tpu.matmul %55, %43, %cst_19 {dimension_numbers = #tpu.dot_dimension_numbers<[2], [1], [1], [2], [0, 0, 0, 1, 1, 2], [0], [0]>} : vector<2x8x8xf32>, vector<2x8x8xf32>, vector<2x8x8xf32> -> vector<2x8x8xf32>
    %57 = vector.extract_strided_slice %36 {offsets = [0, 0, 8], sizes = [2, 8, 8], strides = [1, 1, 1]} : vector<2x8x32xf32> to vector<2x8x8xf32>
    %58 = vector.extract_strided_slice %38 {offsets = [0, 0, 8], sizes = [2, 8, 8], strides = [1, 1, 1]} : vector<2x8x32xf32> to vector<2x8x8xf32>
    %59 = vector.extract_strided_slice %40 {offsets = [0, 0, 8], sizes = [2, 8, 8], strides = [1, 1, 1]} : vector<2x8x32xf32> to vector<2x8x8xf32>
    %cst_20 = arith.constant dense<0.000000e+00> : vector<2x8x8xf32>
    %60 = tpu.matmul %57, %58, %cst_20 {dimension_numbers = #tpu.dot_dimension_numbers<[2], [2], [1], [1], [0, 0, 0, 1, 1, 1], [0], [0]>} : vector<2x8x8xf32>, vector<2x8x8xf32>, vector<2x8x8xf32> -> vector<2x8x8xf32>
    %cst_21 = arith.constant 0.353553385 : f32
    %61 = vector.broadcast %cst_21 : f32 to vector<2x8x8xf32>
    %62 = arith.mulf %60, %61 : vector<2x8x8xf32>
    %cst_22 = arith.constant dense<0xFF800000> : vector<2x8xf32>
    %63 = vector.multi_reduction <maximumf>, %62, %cst_22 [2] : vector<2x8x8xf32> to vector<2x8xf32>
    %64 = vector.shape_cast %63 : vector<2x8xf32> to vector<2x8x1xf32>
    %65 = vector.broadcast %64 : vector<2x8x1xf32> to vector<2x8x8xf32>
    %66 = arith.subf %62, %65 : vector<2x8x8xf32>
    %67 = math.exp %66 : vector<2x8x8xf32>
    %cst_23 = arith.constant dense<0.000000e+00> : vector<2x8xf32>
    %68 = vector.multi_reduction <add>, %67, %cst_23 [2] : vector<2x8x8xf32> to vector<2x8xf32>
    %69 = vector.shape_cast %68 : vector<2x8xf32> to vector<2x8x1xf32>
    %70 = vector.broadcast %69 : vector<2x8x1xf32> to vector<2x8x8xf32>
    %71 = arith.divf %67, %70 : vector<2x8x8xf32>
    %cst_24 = arith.constant dense<0.000000e+00> : vector<2x8x8xf32>
    %72 = tpu.matmul %71, %59, %cst_24 {dimension_numbers = #tpu.dot_dimension_numbers<[2], [1], [1], [2], [0, 0, 0, 1, 1, 2], [0], [0]>} : vector<2x8x8xf32>, vector<2x8x8xf32>, vector<2x8x8xf32> -> vector<2x8x8xf32>
    %73 = vector.extract_strided_slice %36 {offsets = [0, 0, 16], sizes = [2, 8, 8], strides = [1, 1, 1]} : vector<2x8x32xf32> to vector<2x8x8xf32>
    %74 = vector.extract_strided_slice %38 {offsets = [0, 0, 16], sizes = [2, 8, 8], strides = [1, 1, 1]} : vector<2x8x32xf32> to vector<2x8x8xf32>
    %75 = vector.extract_strided_slice %40 {offsets = [0, 0, 16], sizes = [2, 8, 8], strides = [1, 1, 1]} : vector<2x8x32xf32> to vector<2x8x8xf32>
    %cst_25 = arith.constant dense<0.000000e+00> : vector<2x8x8xf32>
    %76 = tpu.matmul %73, %74, %cst_25 {dimension_numbers = #tpu.dot_dimension_numbers<[2], [2], [1], [1], [0, 0, 0, 1, 1, 1], [0], [0]>} : vector<2x8x8xf32>, vector<2x8x8xf32>, vector<2x8x8xf32> -> vector<2x8x8xf32>
    %cst_26 = arith.constant 0.353553385 : f32
    %77 = vector.broadcast %cst_26 : f32 to vector<2x8x8xf32>
    %78 = arith.mulf %76, %77 : vector<2x8x8xf32>
    %cst_27 = arith.constant dense<0xFF800000> : vector<2x8xf32>
    %79 = vector.multi_reduction <maximumf>, %78, %cst_27 [2] : vector<2x8x8xf32> to vector<2x8xf32>
    %80 = vector.shape_cast %79 : vector<2x8xf32> to vector<2x8x1xf32>
    %81 = vector.broadcast %80 : vector<2x8x1xf32> to vector<2x8x8xf32>
    %82 = arith.subf %78, %81 : vector<2x8x8xf32>
    %83 = math.exp %82 : vector<2x8x8xf32>
    %cst_28 = arith.constant dense<0.000000e+00> : vector<2x8xf32>
    %84 = vector.multi_reduction <add>, %83, %cst_28 [2] : vector<2x8x8xf32> to vector<2x8xf32>
    %85 = vector.shape_cast %84 : vector<2x8xf32> to vector<2x8x1xf32>
    %86 = vector.broadcast %85 : vector<2x8x1xf32> to vector<2x8x8xf32>
    %87 = arith.divf %83, %86 : vector<2x8x8xf32>
    %cst_29 = arith.constant dense<0.000000e+00> : vector<2x8x8xf32>
    %88 = tpu.matmul %87, %75, %cst_29 {dimension_numbers = #tpu.dot_dimension_numbers<[2], [1], [1], [2], [0, 0, 0, 1, 1, 2], [0], [0]>} : vector<2x8x8xf32>, vector<2x8x8xf32>, vector<2x8x8xf32> -> vector<2x8x8xf32>
    %89 = vector.extract_strided_slice %36 {offsets = [0, 0, 24], sizes = [2, 8, 8], strides = [1, 1, 1]} : vector<2x8x32xf32> to vector<2x8x8xf32>
    %90 = vector.extract_strided_slice %38 {offsets = [0, 0, 24], sizes = [2, 8, 8], strides = [1, 1, 1]} : vector<2x8x32xf32> to vector<2x8x8xf32>
    %91 = vector.extract_strided_slice %40 {offsets = [0, 0, 24], sizes = [2, 8, 8], strides = [1, 1, 1]} : vector<2x8x32xf32> to vector<2x8x8xf32>
    %cst_30 = arith.constant dense<0.000000e+00> : vector<2x8x8xf32>
    %92 = tpu.matmul %89, %90, %cst_30 {dimension_numbers = #tpu.dot_dimension_numbers<[2], [2], [1], [1], [0, 0, 0, 1, 1, 1], [0], [0]>} : vector<2x8x8xf32>, vector<2x8x8xf32>, vector<2x8x8xf32> -> vector<2x8x8xf32>
    %cst_31 = arith.constant 0.353553385 : f32
    %93 = vector.broadcast %cst_31 : f32 to vector<2x8x8xf32>
    %94 = arith.mulf %92, %93 : vector<2x8x8xf32>
    %cst_32 = arith.constant dense<0xFF800000> : vector<2x8xf32>
    %95 = vector.multi_reduction <maximumf>, %94, %cst_32 [2] : vector<2x8x8xf32> to vector<2x8xf32>
    %96 = vector.shape_cast %95 : vector<2x8xf32> to vector<2x8x1xf32>
    %97 = vector.broadcast %96 : vector<2x8x1xf32> to vector<2x8x8xf32>
    %98 = arith.subf %94, %97 : vector<2x8x8xf32>
    %99 = math.exp %98 : vector<2x8x8xf32>
    %cst_33 = arith.constant dense<0.000000e+00> : vector<2x8xf32>
    %100 = vector.multi_reduction <add>, %99, %cst_33 [2] : vector<2x8x8xf32> to vector<2x8xf32>
    %101 = vector.shape_cast %100 : vector<2x8xf32> to vector<2x8x1xf32>
    %102 = vector.broadcast %101 : vector<2x8x1xf32> to vector<2x8x8xf32>
    %103 = arith.divf %99, %102 : vector<2x8x8xf32>
    %cst_34 = arith.constant dense<0.000000e+00> : vector<2x8x8xf32>
    %104 = tpu.matmul %103, %91, %cst_34 {dimension_numbers = #tpu.dot_dimension_numbers<[2], [1], [1], [2], [0, 0, 0, 1, 1, 2], [0], [0]>} : vector<2x8x8xf32>, vector<2x8x8xf32>, vector<2x8x8xf32> -> vector<2x8x8xf32>
    %105 = tpu.concatenate %56, %72, %88, %104 in 2 : vector<2x8x8xf32>, vector<2x8x8xf32>, vector<2x8x8xf32>, vector<2x8x8xf32> -> vector<2x8x32xf32>
    %106 = vector.shape_cast %105 : vector<2x8x32xf32> to vector<16x32xf32>
    %c88 = arith.constant 88 : index
    %c0_35 = arith.constant 0 : index
    %107 = vector.load %arg2[%c88, %c0_35] : memref<1072x32xf32, #tpu.memory_space<vmem>>, vector<32x32xf32>
    %cst_36 = arith.constant dense<0.000000e+00> : vector<16x32xf32>
    %108 = tpu.matmul %106, %107, %cst_36 {dimension_numbers = #tpu.dot_dimension_numbers<[1], [0], [0], [1], [0, 0, 1, 1], [], []>} : vector<16x32xf32>, vector<32x32xf32>, vector<16x32xf32> -> vector<16x32xf32>
    %109 = arith.addf %5, %108 : vector<16x32xf32>
    %c120 = arith.constant 120 : index
    %c0_37 = arith.constant 0 : index
    %110 = vector.load %arg2[%c120, %c0_37] : memref<1072x32xf32, #tpu.memory_space<vmem>>, vector<1x32xf32>
    %111 = vector.broadcast %110 : vector<1x32xf32> to vector<16x32xf32>
    %112 = arith.addf %109, %111 : vector<16x32xf32>
    %c128 = arith.constant 128 : index
    %c0_38 = arith.constant 0 : index
    %113 = vector.load %arg2[%c128, %c0_38] : memref<1072x32xf32, #tpu.memory_space<vmem>>, vector<1x32xf32>
    %c136 = arith.constant 136 : index
    %c0_39 = arith.constant 0 : index
    %114 = vector.load %arg2[%c136, %c0_39] : memref<1072x32xf32, #tpu.memory_space<vmem>>, vector<1x32xf32>
    %cst_40 = arith.constant dense<0.000000e+00> : vector<16xf32>
    %115 = vector.multi_reduction <add>, %112, %cst_40 [1] : vector<16x32xf32> to vector<16xf32>
    %116 = vector.shape_cast %115 : vector<16xf32> to vector<16x1xf32>
    %cst_41 = arith.constant 3.200000e+01 : f32
    %117 = vector.broadcast %cst_41 : f32 to vector<16x1xf32>
    %118 = arith.divf %116, %117 : vector<16x1xf32>
    %119 = vector.broadcast %118 : vector<16x1xf32> to vector<16x32xf32>
    %120 = arith.subf %112, %119 : vector<16x32xf32>
    %121 = arith.mulf %120, %120 : vector<16x32xf32>
    %cst_42 = arith.constant dense<0.000000e+00> : vector<16xf32>
    %122 = vector.multi_reduction <add>, %121, %cst_42 [1] : vector<16x32xf32> to vector<16xf32>
    %123 = vector.shape_cast %122 : vector<16xf32> to vector<16x1xf32>
    %cst_43 = arith.constant 3.200000e+01 : f32
    %124 = vector.broadcast %cst_43 : f32 to vector<16x1xf32>
    %125 = arith.divf %123, %124 : vector<16x1xf32>
    %126 = vector.broadcast %118 : vector<16x1xf32> to vector<16x32xf32>
    %127 = arith.subf %112, %126 : vector<16x32xf32>
    %cst_44 = arith.constant 9.99999974E-6 : f32
    %128 = vector.broadcast %cst_44 : f32 to vector<16x1xf32>
    %129 = arith.addf %125, %128 : vector<16x1xf32>
    %130 = math.rsqrt %129 : vector<16x1xf32>
    %131 = vector.broadcast %130 : vector<16x1xf32> to vector<16x32xf32>
    %132 = arith.mulf %127, %131 : vector<16x32xf32>
    %133 = vector.broadcast %113 : vector<1x32xf32> to vector<16x32xf32>
    %134 = arith.mulf %132, %133 : vector<16x32xf32>
    %135 = vector.broadcast %114 : vector<1x32xf32> to vector<16x32xf32>
    %136 = arith.addf %134, %135 : vector<16x32xf32>
    %c0_45 = arith.constant 0 : index
    %c0_46 = arith.constant 0 : index
    %137 = vector.load %arg3[%c0_45, %c0_46] : memref<40x64xf32, #tpu.memory_space<vmem>>, vector<32x64xf32>
    %cst_47 = arith.constant dense<0.000000e+00> : vector<16x64xf32>
    %138 = tpu.matmul %136, %137, %cst_47 {dimension_numbers = #tpu.dot_dimension_numbers<[1], [0], [0], [1], [0, 0, 1, 1], [], []>} : vector<16x32xf32>, vector<32x64xf32>, vector<16x64xf32> -> vector<16x64xf32>
    %c32_48 = arith.constant 32 : index
    %c0_49 = arith.constant 0 : index
    %139 = vector.load %arg3[%c32_48, %c0_49] : memref<40x64xf32, #tpu.memory_space<vmem>>, vector<1x64xf32>
    %140 = vector.broadcast %139 : vector<1x64xf32> to vector<16x64xf32>
    %141 = arith.addf %138, %140 : vector<16x64xf32>
    %cst_50 = arith.constant 0.000000e+00 : f32
    %142 = vector.broadcast %cst_50 : f32 to vector<16x64xf32>
    %143 = arith.maximumf %141, %142 : vector<16x64xf32>
    %c144 = arith.constant 144 : index
    %c0_51 = arith.constant 0 : index
    %144 = vector.load %arg2[%c144, %c0_51] : memref<1072x32xf32, #tpu.memory_space<vmem>>, vector<64x32xf32>
    %cst_52 = arith.constant dense<0.000000e+00> : vector<16x32xf32>
    %145 = tpu.matmul %143, %144, %cst_52 {dimension_numbers = #tpu.dot_dimension_numbers<[1], [0], [0], [1], [0, 0, 1, 1], [], []>} : vector<16x64xf32>, vector<64x32xf32>, vector<16x32xf32> -> vector<16x32xf32>
    %146 = arith.addf %112, %145 : vector<16x32xf32>
    %c208 = arith.constant 208 : index
    %c0_53 = arith.constant 0 : index
    %147 = vector.load %arg2[%c208, %c0_53] : memref<1072x32xf32, #tpu.memory_space<vmem>>, vector<1x32xf32>
    %148 = vector.broadcast %147 : vector<1x32xf32> to vector<16x32xf32>
    %149 = arith.addf %146, %148 : vector<16x32xf32>
    %c216 = arith.constant 216 : index
    %c0_54 = arith.constant 0 : index
    %150 = vector.load %arg2[%c216, %c0_54] : memref<1072x32xf32, #tpu.memory_space<vmem>>, vector<1x32xf32>
    %c224 = arith.constant 224 : index
    %c0_55 = arith.constant 0 : index
    %151 = vector.load %arg2[%c224, %c0_55] : memref<1072x32xf32, #tpu.memory_space<vmem>>, vector<1x32xf32>
    %cst_56 = arith.constant dense<0.000000e+00> : vector<16xf32>
    %152 = vector.multi_reduction <add>, %149, %cst_56 [1] : vector<16x32xf32> to vector<16xf32>
    %153 = vector.shape_cast %152 : vector<16xf32> to vector<16x1xf32>
    %cst_57 = arith.constant 3.200000e+01 : f32
    %154 = vector.broadcast %cst_57 : f32 to vector<16x1xf32>
    %155 = arith.divf %153, %154 : vector<16x1xf32>
    %156 = vector.broadcast %155 : vector<16x1xf32> to vector<16x32xf32>
    %157 = arith.subf %149, %156 : vector<16x32xf32>
    %158 = arith.mulf %157, %157 : vector<16x32xf32>
    %cst_58 = arith.constant dense<0.000000e+00> : vector<16xf32>
    %159 = vector.multi_reduction <add>, %158, %cst_58 [1] : vector<16x32xf32> to vector<16xf32>
    %160 = vector.shape_cast %159 : vector<16xf32> to vector<16x1xf32>
    %cst_59 = arith.constant 3.200000e+01 : f32
    %161 = vector.broadcast %cst_59 : f32 to vector<16x1xf32>
    %162 = arith.divf %160, %161 : vector<16x1xf32>
    %163 = vector.broadcast %155 : vector<16x1xf32> to vector<16x32xf32>
    %164 = arith.subf %149, %163 : vector<16x32xf32>
    %cst_60 = arith.constant 9.99999974E-6 : f32
    %165 = vector.broadcast %cst_60 : f32 to vector<16x1xf32>
    %166 = arith.addf %162, %165 : vector<16x1xf32>
    %167 = math.rsqrt %166 : vector<16x1xf32>
    %168 = vector.broadcast %167 : vector<16x1xf32> to vector<16x32xf32>
    %169 = arith.mulf %164, %168 : vector<16x32xf32>
    %170 = vector.broadcast %150 : vector<1x32xf32> to vector<16x32xf32>
    %171 = arith.mulf %169, %170 : vector<16x32xf32>
    %172 = vector.broadcast %151 : vector<1x32xf32> to vector<16x32xf32>
    %173 = arith.addf %171, %172 : vector<16x32xf32>
    %c40 = arith.constant 40 : index
    %c0_61 = arith.constant 0 : index
    %174 = vector.load %arg4[%c40, %c0_61] : memref<120x96xf32, #tpu.memory_space<vmem>>, vector<32x96xf32>
    %cst_62 = arith.constant dense<0.000000e+00> : vector<16x96xf32>
    %175 = tpu.matmul %173, %174, %cst_62 {dimension_numbers = #tpu.dot_dimension_numbers<[1], [0], [0], [1], [0, 0, 1, 1], [], []>} : vector<16x32xf32>, vector<32x96xf32>, vector<16x96xf32> -> vector<16x96xf32>
    %c72_63 = arith.constant 72 : index
    %c0_64 = arith.constant 0 : index
    %176 = vector.load %arg4[%c72_63, %c0_64] : memref<120x96xf32, #tpu.memory_space<vmem>>, vector<1x96xf32>
    %177 = vector.broadcast %176 : vector<1x96xf32> to vector<16x96xf32>
    %178 = arith.addf %175, %177 : vector<16x96xf32>
    %179 = vector.extract_strided_slice %178 {offsets = [0, 0], sizes = [16, 32], strides = [1, 1]} : vector<16x96xf32> to vector<16x32xf32>
    %180 = vector.shape_cast %179 : vector<16x32xf32> to vector<2x8x32xf32>
    %181 = vector.extract_strided_slice %178 {offsets = [0, 32], sizes = [16, 32], strides = [1, 1]} : vector<16x96xf32> to vector<16x32xf32>
    %182 = vector.shape_cast %181 : vector<16x32xf32> to vector<2x8x32xf32>
    %183 = vector.extract_strided_slice %178 {offsets = [0, 64], sizes = [16, 32], strides = [1, 1]} : vector<16x96xf32> to vector<16x32xf32>
    %184 = vector.shape_cast %183 : vector<16x32xf32> to vector<2x8x32xf32>
    %185 = vector.extract_strided_slice %180 {offsets = [0, 0, 0], sizes = [2, 8, 8], strides = [1, 1, 1]} : vector<2x8x32xf32> to vector<2x8x8xf32>
    %186 = vector.extract_strided_slice %182 {offsets = [0, 0, 0], sizes = [2, 8, 8], strides = [1, 1, 1]} : vector<2x8x32xf32> to vector<2x8x8xf32>
    %187 = vector.extract_strided_slice %184 {offsets = [0, 0, 0], sizes = [2, 8, 8], strides = [1, 1, 1]} : vector<2x8x32xf32> to vector<2x8x8xf32>
    %cst_65 = arith.constant dense<0.000000e+00> : vector<2x8x8xf32>
    %188 = tpu.matmul %185, %186, %cst_65 {dimension_numbers = #tpu.dot_dimension_numbers<[2], [2], [1], [1], [0, 0, 0, 1, 1, 1], [0], [0]>} : vector<2x8x8xf32>, vector<2x8x8xf32>, vector<2x8x8xf32> -> vector<2x8x8xf32>
    %cst_66 = arith.constant 0.353553385 : f32
    %189 = vector.broadcast %cst_66 : f32 to vector<2x8x8xf32>
    %190 = arith.mulf %188, %189 : vector<2x8x8xf32>
    %cst_67 = arith.constant dense<0xFF800000> : vector<2x8xf32>
    %191 = vector.multi_reduction <maximumf>, %190, %cst_67 [2] : vector<2x8x8xf32> to vector<2x8xf32>
    %192 = vector.shape_cast %191 : vector<2x8xf32> to vector<2x8x1xf32>
    %193 = vector.broadcast %192 : vector<2x8x1xf32> to vector<2x8x8xf32>
    %194 = arith.subf %190, %193 : vector<2x8x8xf32>
    %195 = math.exp %194 : vector<2x8x8xf32>
    %cst_68 = arith.constant dense<0.000000e+00> : vector<2x8xf32>
    %196 = vector.multi_reduction <add>, %195, %cst_68 [2] : vector<2x8x8xf32> to vector<2x8xf32>
    %197 = vector.shape_cast %196 : vector<2x8xf32> to vector<2x8x1xf32>
    %198 = vector.broadcast %197 : vector<2x8x1xf32> to vector<2x8x8xf32>
    %199 = arith.divf %195, %198 : vector<2x8x8xf32>
    %cst_69 = arith.constant dense<0.000000e+00> : vector<2x8x8xf32>
    %200 = tpu.matmul %199, %187, %cst_69 {dimension_numbers = #tpu.dot_dimension_numbers<[2], [1], [1], [2], [0, 0, 0, 1, 1, 2], [0], [0]>} : vector<2x8x8xf32>, vector<2x8x8xf32>, vector<2x8x8xf32> -> vector<2x8x8xf32>
    %201 = vector.extract_strided_slice %180 {offsets = [0, 0, 8], sizes = [2, 8, 8], strides = [1, 1, 1]} : vector<2x8x32xf32> to vector<2x8x8xf32>
    %202 = vector.extract_strided_slice %182 {offsets = [0, 0, 8], sizes = [2, 8, 8], strides = [1, 1, 1]} : vector<2x8x32xf32> to vector<2x8x8xf32>
    %203 = vector.extract_strided_slice %184 {offsets = [0, 0, 8], sizes = [2, 8, 8], strides = [1, 1, 1]} : vector<2x8x32xf32> to vector<2x8x8xf32>
    %cst_70 = arith.constant dense<0.000000e+00> : vector<2x8x8xf32>
    %204 = tpu.matmul %201, %202, %cst_70 {dimension_numbers = #tpu.dot_dimension_numbers<[2], [2], [1], [1], [0, 0, 0, 1, 1, 1], [0], [0]>} : vector<2x8x8xf32>, vector<2x8x8xf32>, vector<2x8x8xf32> -> vector<2x8x8xf32>
    %cst_71 = arith.constant 0.353553385 : f32
    %205 = vector.broadcast %cst_71 : f32 to vector<2x8x8xf32>
    %206 = arith.mulf %204, %205 : vector<2x8x8xf32>
    %cst_72 = arith.constant dense<0xFF800000> : vector<2x8xf32>
    %207 = vector.multi_reduction <maximumf>, %206, %cst_72 [2] : vector<2x8x8xf32> to vector<2x8xf32>
    %208 = vector.shape_cast %207 : vector<2x8xf32> to vector<2x8x1xf32>
    %209 = vector.broadcast %208 : vector<2x8x1xf32> to vector<2x8x8xf32>
    %210 = arith.subf %206, %209 : vector<2x8x8xf32>
    %211 = math.exp %210 : vector<2x8x8xf32>
    %cst_73 = arith.constant dense<0.000000e+00> : vector<2x8xf32>
    %212 = vector.multi_reduction <add>, %211, %cst_73 [2] : vector<2x8x8xf32> to vector<2x8xf32>
    %213 = vector.shape_cast %212 : vector<2x8xf32> to vector<2x8x1xf32>
    %214 = vector.broadcast %213 : vector<2x8x1xf32> to vector<2x8x8xf32>
    %215 = arith.divf %211, %214 : vector<2x8x8xf32>
    %cst_74 = arith.constant dense<0.000000e+00> : vector<2x8x8xf32>
    %216 = tpu.matmul %215, %203, %cst_74 {dimension_numbers = #tpu.dot_dimension_numbers<[2], [1], [1], [2], [0, 0, 0, 1, 1, 2], [0], [0]>} : vector<2x8x8xf32>, vector<2x8x8xf32>, vector<2x8x8xf32> -> vector<2x8x8xf32>
    %217 = vector.extract_strided_slice %180 {offsets = [0, 0, 16], sizes = [2, 8, 8], strides = [1, 1, 1]} : vector<2x8x32xf32> to vector<2x8x8xf32>
    %218 = vector.extract_strided_slice %182 {offsets = [0, 0, 16], sizes = [2, 8, 8], strides = [1, 1, 1]} : vector<2x8x32xf32> to vector<2x8x8xf32>
    %219 = vector.extract_strided_slice %184 {offsets = [0, 0, 16], sizes = [2, 8, 8], strides = [1, 1, 1]} : vector<2x8x32xf32> to vector<2x8x8xf32>
    %cst_75 = arith.constant dense<0.000000e+00> : vector<2x8x8xf32>
    %220 = tpu.matmul %217, %218, %cst_75 {dimension_numbers = #tpu.dot_dimension_numbers<[2], [2], [1], [1], [0, 0, 0, 1, 1, 1], [0], [0]>} : vector<2x8x8xf32>, vector<2x8x8xf32>, vector<2x8x8xf32> -> vector<2x8x8xf32>
    %cst_76 = arith.constant 0.353553385 : f32
    %221 = vector.broadcast %cst_76 : f32 to vector<2x8x8xf32>
    %222 = arith.mulf %220, %221 : vector<2x8x8xf32>
    %cst_77 = arith.constant dense<0xFF800000> : vector<2x8xf32>
    %223 = vector.multi_reduction <maximumf>, %222, %cst_77 [2] : vector<2x8x8xf32> to vector<2x8xf32>
    %224 = vector.shape_cast %223 : vector<2x8xf32> to vector<2x8x1xf32>
    %225 = vector.broadcast %224 : vector<2x8x1xf32> to vector<2x8x8xf32>
    %226 = arith.subf %222, %225 : vector<2x8x8xf32>
    %227 = math.exp %226 : vector<2x8x8xf32>
    %cst_78 = arith.constant dense<0.000000e+00> : vector<2x8xf32>
    %228 = vector.multi_reduction <add>, %227, %cst_78 [2] : vector<2x8x8xf32> to vector<2x8xf32>
    %229 = vector.shape_cast %228 : vector<2x8xf32> to vector<2x8x1xf32>
    %230 = vector.broadcast %229 : vector<2x8x1xf32> to vector<2x8x8xf32>
    %231 = arith.divf %227, %230 : vector<2x8x8xf32>
    %cst_79 = arith.constant dense<0.000000e+00> : vector<2x8x8xf32>
    %232 = tpu.matmul %231, %219, %cst_79 {dimension_numbers = #tpu.dot_dimension_numbers<[2], [1], [1], [2], [0, 0, 0, 1, 1, 2], [0], [0]>} : vector<2x8x8xf32>, vector<2x8x8xf32>, vector<2x8x8xf32> -> vector<2x8x8xf32>
    %233 = vector.extract_strided_slice %180 {offsets = [0, 0, 24], sizes = [2, 8, 8], strides = [1, 1, 1]} : vector<2x8x32xf32> to vector<2x8x8xf32>
    %234 = vector.extract_strided_slice %182 {offsets = [0, 0, 24], sizes = [2, 8, 8], strides = [1, 1, 1]} : vector<2x8x32xf32> to vector<2x8x8xf32>
    %235 = vector.extract_strided_slice %184 {offsets = [0, 0, 24], sizes = [2, 8, 8], strides = [1, 1, 1]} : vector<2x8x32xf32> to vector<2x8x8xf32>
    %cst_80 = arith.constant dense<0.000000e+00> : vector<2x8x8xf32>
    %236 = tpu.matmul %233, %234, %cst_80 {dimension_numbers = #tpu.dot_dimension_numbers<[2], [2], [1], [1], [0, 0, 0, 1, 1, 1], [0], [0]>} : vector<2x8x8xf32>, vector<2x8x8xf32>, vector<2x8x8xf32> -> vector<2x8x8xf32>
    %cst_81 = arith.constant 0.353553385 : f32
    %237 = vector.broadcast %cst_81 : f32 to vector<2x8x8xf32>
    %238 = arith.mulf %236, %237 : vector<2x8x8xf32>
    %cst_82 = arith.constant dense<0xFF800000> : vector<2x8xf32>
    %239 = vector.multi_reduction <maximumf>, %238, %cst_82 [2] : vector<2x8x8xf32> to vector<2x8xf32>
    %240 = vector.shape_cast %239 : vector<2x8xf32> to vector<2x8x1xf32>
    %241 = vector.broadcast %240 : vector<2x8x1xf32> to vector<2x8x8xf32>
    %242 = arith.subf %238, %241 : vector<2x8x8xf32>
    %243 = math.exp %242 : vector<2x8x8xf32>
    %cst_83 = arith.constant dense<0.000000e+00> : vector<2x8xf32>
    %244 = vector.multi_reduction <add>, %243, %cst_83 [2] : vector<2x8x8xf32> to vector<2x8xf32>
    %245 = vector.shape_cast %244 : vector<2x8xf32> to vector<2x8x1xf32>
    %246 = vector.broadcast %245 : vector<2x8x1xf32> to vector<2x8x8xf32>
    %247 = arith.divf %243, %246 : vector<2x8x8xf32>
    %cst_84 = arith.constant dense<0.000000e+00> : vector<2x8x8xf32>
    %248 = tpu.matmul %247, %235, %cst_84 {dimension_numbers = #tpu.dot_dimension_numbers<[2], [1], [1], [2], [0, 0, 0, 1, 1, 2], [0], [0]>} : vector<2x8x8xf32>, vector<2x8x8xf32>, vector<2x8x8xf32> -> vector<2x8x8xf32>
    %249 = tpu.concatenate %200, %216, %232, %248 in 2 : vector<2x8x8xf32>, vector<2x8x8xf32>, vector<2x8x8xf32>, vector<2x8x8xf32> -> vector<2x8x32xf32>
    %250 = vector.shape_cast %249 : vector<2x8x32xf32> to vector<16x32xf32>
    %c232 = arith.constant 232 : index
    %c0_85 = arith.constant 0 : index
    %251 = vector.load %arg2[%c232, %c0_85] : memref<1072x32xf32, #tpu.memory_space<vmem>>, vector<32x32xf32>
    %cst_86 = arith.constant dense<0.000000e+00> : vector<16x32xf32>
    %252 = tpu.matmul %250, %251, %cst_86 {dimension_numbers = #tpu.dot_dimension_numbers<[1], [0], [0], [1], [0, 0, 1, 1], [], []>} : vector<16x32xf32>, vector<32x32xf32>, vector<16x32xf32> -> vector<16x32xf32>
    %253 = arith.addf %149, %252 : vector<16x32xf32>
    %c264 = arith.constant 264 : index
    %c0_87 = arith.constant 0 : index
    %254 = vector.load %arg2[%c264, %c0_87] : memref<1072x32xf32, #tpu.memory_space<vmem>>, vector<1x32xf32>
    %255 = vector.broadcast %254 : vector<1x32xf32> to vector<16x32xf32>
    %256 = arith.addf %253, %255 : vector<16x32xf32>
    %c272 = arith.constant 272 : index
    %c0_88 = arith.constant 0 : index
    %257 = vector.load %arg2[%c272, %c0_88] : memref<1072x32xf32, #tpu.memory_space<vmem>>, vector<1x32xf32>
    %c280 = arith.constant 280 : index
    %c0_89 = arith.constant 0 : index
    %258 = vector.load %arg2[%c280, %c0_89] : memref<1072x32xf32, #tpu.memory_space<vmem>>, vector<1x32xf32>
    %cst_90 = arith.constant dense<0.000000e+00> : vector<16xf32>
    %259 = vector.multi_reduction <add>, %256, %cst_90 [1] : vector<16x32xf32> to vector<16xf32>
    %260 = vector.shape_cast %259 : vector<16xf32> to vector<16x1xf32>
    %cst_91 = arith.constant 3.200000e+01 : f32
    %261 = vector.broadcast %cst_91 : f32 to vector<16x1xf32>
    %262 = arith.divf %260, %261 : vector<16x1xf32>
    %263 = vector.broadcast %262 : vector<16x1xf32> to vector<16x32xf32>
    %264 = arith.subf %256, %263 : vector<16x32xf32>
    %265 = arith.mulf %264, %264 : vector<16x32xf32>
    %cst_92 = arith.constant dense<0.000000e+00> : vector<16xf32>
    %266 = vector.multi_reduction <add>, %265, %cst_92 [1] : vector<16x32xf32> to vector<16xf32>
    %267 = vector.shape_cast %266 : vector<16xf32> to vector<16x1xf32>
    %cst_93 = arith.constant 3.200000e+01 : f32
    %268 = vector.broadcast %cst_93 : f32 to vector<16x1xf32>
    %269 = arith.divf %267, %268 : vector<16x1xf32>
    %270 = vector.broadcast %262 : vector<16x1xf32> to vector<16x32xf32>
    %271 = arith.subf %256, %270 : vector<16x32xf32>
    %cst_94 = arith.constant 9.99999974E-6 : f32
    %272 = vector.broadcast %cst_94 : f32 to vector<16x1xf32>
    %273 = arith.addf %269, %272 : vector<16x1xf32>
    %274 = math.rsqrt %273 : vector<16x1xf32>
    %275 = vector.broadcast %274 : vector<16x1xf32> to vector<16x32xf32>
    %276 = arith.mulf %271, %275 : vector<16x32xf32>
    %277 = vector.broadcast %257 : vector<1x32xf32> to vector<16x32xf32>
    %278 = arith.mulf %276, %277 : vector<16x32xf32>
    %279 = vector.broadcast %258 : vector<1x32xf32> to vector<16x32xf32>
    %280 = arith.addf %278, %279 : vector<16x32xf32>
    %c288 = arith.constant 288 : index
    %c0_95 = arith.constant 0 : index
    %281 = vector.load %arg2[%c288, %c0_95] : memref<1072x32xf32, #tpu.memory_space<vmem>>, vector<32x32xf32>
    %cst_96 = arith.constant dense<0.000000e+00> : vector<16x32xf32>
    %282 = tpu.matmul %280, %281, %cst_96 {dimension_numbers = #tpu.dot_dimension_numbers<[1], [0], [0], [1], [0, 0, 1, 1], [], []>} : vector<16x32xf32>, vector<32x32xf32>, vector<16x32xf32> -> vector<16x32xf32>
    %c320 = arith.constant 320 : index
    %c0_97 = arith.constant 0 : index
    %283 = vector.load %arg2[%c320, %c0_97] : memref<1072x32xf32, #tpu.memory_space<vmem>>, vector<1x32xf32>
    %284 = vector.broadcast %283 : vector<1x32xf32> to vector<16x32xf32>
    %285 = arith.addf %282, %284 : vector<16x32xf32>
    %cst_98 = arith.constant 0.000000e+00 : f32
    %286 = vector.broadcast %cst_98 : f32 to vector<16x32xf32>
    %287 = arith.maximumf %285, %286 : vector<16x32xf32>
    %c328 = arith.constant 328 : index
    %c0_99 = arith.constant 0 : index
    %288 = vector.load %arg2[%c328, %c0_99] : memref<1072x32xf32, #tpu.memory_space<vmem>>, vector<32x32xf32>
    %cst_100 = arith.constant dense<0.000000e+00> : vector<16x32xf32>
    %289 = tpu.matmul %287, %288, %cst_100 {dimension_numbers = #tpu.dot_dimension_numbers<[1], [0], [0], [1], [0, 0, 1, 1], [], []>} : vector<16x32xf32>, vector<32x32xf32>, vector<16x32xf32> -> vector<16x32xf32>
    %290 = arith.addf %256, %289 : vector<16x32xf32>
    %c360 = arith.constant 360 : index
    %c0_101 = arith.constant 0 : index
    %291 = vector.load %arg2[%c360, %c0_101] : memref<1072x32xf32, #tpu.memory_space<vmem>>, vector<1x32xf32>
    %292 = vector.broadcast %291 : vector<1x32xf32> to vector<16x32xf32>
    %293 = arith.addf %290, %292 : vector<16x32xf32>
    %c368 = arith.constant 368 : index
    %c0_102 = arith.constant 0 : index
    %294 = vector.load %arg2[%c368, %c0_102] : memref<1072x32xf32, #tpu.memory_space<vmem>>, vector<1x32xf32>
    %c376 = arith.constant 376 : index
    %c0_103 = arith.constant 0 : index
    %295 = vector.load %arg2[%c376, %c0_103] : memref<1072x32xf32, #tpu.memory_space<vmem>>, vector<1x32xf32>
    %cst_104 = arith.constant dense<0.000000e+00> : vector<16xf32>
    %296 = vector.multi_reduction <add>, %293, %cst_104 [1] : vector<16x32xf32> to vector<16xf32>
    %297 = vector.shape_cast %296 : vector<16xf32> to vector<16x1xf32>
    %cst_105 = arith.constant 3.200000e+01 : f32
    %298 = vector.broadcast %cst_105 : f32 to vector<16x1xf32>
    %299 = arith.divf %297, %298 : vector<16x1xf32>
    %300 = vector.broadcast %299 : vector<16x1xf32> to vector<16x32xf32>
    %301 = arith.subf %293, %300 : vector<16x32xf32>
    %302 = arith.mulf %301, %301 : vector<16x32xf32>
    %cst_106 = arith.constant dense<0.000000e+00> : vector<16xf32>
    %303 = vector.multi_reduction <add>, %302, %cst_106 [1] : vector<16x32xf32> to vector<16xf32>
    %304 = vector.shape_cast %303 : vector<16xf32> to vector<16x1xf32>
    %cst_107 = arith.constant 3.200000e+01 : f32
    %305 = vector.broadcast %cst_107 : f32 to vector<16x1xf32>
    %306 = arith.divf %304, %305 : vector<16x1xf32>
    %307 = vector.broadcast %299 : vector<16x1xf32> to vector<16x32xf32>
    %308 = arith.subf %293, %307 : vector<16x32xf32>
    %cst_108 = arith.constant 9.99999974E-6 : f32
    %309 = vector.broadcast %cst_108 : f32 to vector<16x1xf32>
    %310 = arith.addf %306, %309 : vector<16x1xf32>
    %311 = math.rsqrt %310 : vector<16x1xf32>
    %312 = vector.broadcast %311 : vector<16x1xf32> to vector<16x32xf32>
    %313 = arith.mulf %308, %312 : vector<16x32xf32>
    %314 = vector.broadcast %294 : vector<1x32xf32> to vector<16x32xf32>
    %315 = arith.mulf %313, %314 : vector<16x32xf32>
    %316 = vector.broadcast %295 : vector<1x32xf32> to vector<16x32xf32>
    %317 = arith.addf %315, %316 : vector<16x32xf32>
    %c80_109 = arith.constant 80 : index
    %c0_110 = arith.constant 0 : index
    %318 = vector.load %arg4[%c80_109, %c0_110] : memref<120x96xf32, #tpu.memory_space<vmem>>, vector<32x96xf32>
    %cst_111 = arith.constant dense<0.000000e+00> : vector<16x96xf32>
    %319 = tpu.matmul %317, %318, %cst_111 {dimension_numbers = #tpu.dot_dimension_numbers<[1], [0], [0], [1], [0, 0, 1, 1], [], []>} : vector<16x32xf32>, vector<32x96xf32>, vector<16x96xf32> -> vector<16x96xf32>
    %c112 = arith.constant 112 : index
    %c0_112 = arith.constant 0 : index
    %320 = vector.load %arg4[%c112, %c0_112] : memref<120x96xf32, #tpu.memory_space<vmem>>, vector<1x96xf32>
    %321 = vector.broadcast %320 : vector<1x96xf32> to vector<16x96xf32>
    %322 = arith.addf %319, %321 : vector<16x96xf32>
    %323 = vector.extract_strided_slice %322 {offsets = [0, 0], sizes = [16, 32], strides = [1, 1]} : vector<16x96xf32> to vector<16x32xf32>
    %324 = vector.shape_cast %323 : vector<16x32xf32> to vector<2x8x32xf32>
    %325 = vector.extract_strided_slice %322 {offsets = [0, 32], sizes = [16, 32], strides = [1, 1]} : vector<16x96xf32> to vector<16x32xf32>
    %326 = vector.shape_cast %325 : vector<16x32xf32> to vector<2x8x32xf32>
    %327 = vector.extract_strided_slice %322 {offsets = [0, 64], sizes = [16, 32], strides = [1, 1]} : vector<16x96xf32> to vector<16x32xf32>
    %328 = vector.shape_cast %327 : vector<16x32xf32> to vector<2x8x32xf32>
    %329 = vector.extract_strided_slice %324 {offsets = [0, 0, 0], sizes = [2, 8, 8], strides = [1, 1, 1]} : vector<2x8x32xf32> to vector<2x8x8xf32>
    %330 = vector.extract_strided_slice %326 {offsets = [0, 0, 0], sizes = [2, 8, 8], strides = [1, 1, 1]} : vector<2x8x32xf32> to vector<2x8x8xf32>
    %331 = vector.extract_strided_slice %328 {offsets = [0, 0, 0], sizes = [2, 8, 8], strides = [1, 1, 1]} : vector<2x8x32xf32> to vector<2x8x8xf32>
    %cst_113 = arith.constant dense<0.000000e+00> : vector<2x8x8xf32>
    %332 = tpu.matmul %329, %330, %cst_113 {dimension_numbers = #tpu.dot_dimension_numbers<[2], [2], [1], [1], [0, 0, 0, 1, 1, 1], [0], [0]>} : vector<2x8x8xf32>, vector<2x8x8xf32>, vector<2x8x8xf32> -> vector<2x8x8xf32>
    %cst_114 = arith.constant 0.353553385 : f32
    %333 = vector.broadcast %cst_114 : f32 to vector<2x8x8xf32>
    %334 = arith.mulf %332, %333 : vector<2x8x8xf32>
    %cst_115 = arith.constant dense<0xFF800000> : vector<2x8xf32>
    %335 = vector.multi_reduction <maximumf>, %334, %cst_115 [2] : vector<2x8x8xf32> to vector<2x8xf32>
    %336 = vector.shape_cast %335 : vector<2x8xf32> to vector<2x8x1xf32>
    %337 = vector.broadcast %336 : vector<2x8x1xf32> to vector<2x8x8xf32>
    %338 = arith.subf %334, %337 : vector<2x8x8xf32>
    %339 = math.exp %338 : vector<2x8x8xf32>
    %cst_116 = arith.constant dense<0.000000e+00> : vector<2x8xf32>
    %340 = vector.multi_reduction <add>, %339, %cst_116 [2] : vector<2x8x8xf32> to vector<2x8xf32>
    %341 = vector.shape_cast %340 : vector<2x8xf32> to vector<2x8x1xf32>
    %342 = vector.broadcast %341 : vector<2x8x1xf32> to vector<2x8x8xf32>
    %343 = arith.divf %339, %342 : vector<2x8x8xf32>
    %cst_117 = arith.constant dense<0.000000e+00> : vector<2x8x8xf32>
    %344 = tpu.matmul %343, %331, %cst_117 {dimension_numbers = #tpu.dot_dimension_numbers<[2], [1], [1], [2], [0, 0, 0, 1, 1, 2], [0], [0]>} : vector<2x8x8xf32>, vector<2x8x8xf32>, vector<2x8x8xf32> -> vector<2x8x8xf32>
    %345 = vector.extract_strided_slice %324 {offsets = [0, 0, 8], sizes = [2, 8, 8], strides = [1, 1, 1]} : vector<2x8x32xf32> to vector<2x8x8xf32>
    %346 = vector.extract_strided_slice %326 {offsets = [0, 0, 8], sizes = [2, 8, 8], strides = [1, 1, 1]} : vector<2x8x32xf32> to vector<2x8x8xf32>
    %347 = vector.extract_strided_slice %328 {offsets = [0, 0, 8], sizes = [2, 8, 8], strides = [1, 1, 1]} : vector<2x8x32xf32> to vector<2x8x8xf32>
    %cst_118 = arith.constant dense<0.000000e+00> : vector<2x8x8xf32>
    %348 = tpu.matmul %345, %346, %cst_118 {dimension_numbers = #tpu.dot_dimension_numbers<[2], [2], [1], [1], [0, 0, 0, 1, 1, 1], [0], [0]>} : vector<2x8x8xf32>, vector<2x8x8xf32>, vector<2x8x8xf32> -> vector<2x8x8xf32>
    %cst_119 = arith.constant 0.353553385 : f32
    %349 = vector.broadcast %cst_119 : f32 to vector<2x8x8xf32>
    %350 = arith.mulf %348, %349 : vector<2x8x8xf32>
    %cst_120 = arith.constant dense<0xFF800000> : vector<2x8xf32>
    %351 = vector.multi_reduction <maximumf>, %350, %cst_120 [2] : vector<2x8x8xf32> to vector<2x8xf32>
    %352 = vector.shape_cast %351 : vector<2x8xf32> to vector<2x8x1xf32>
    %353 = vector.broadcast %352 : vector<2x8x1xf32> to vector<2x8x8xf32>
    %354 = arith.subf %350, %353 : vector<2x8x8xf32>
    %355 = math.exp %354 : vector<2x8x8xf32>
    %cst_121 = arith.constant dense<0.000000e+00> : vector<2x8xf32>
    %356 = vector.multi_reduction <add>, %355, %cst_121 [2] : vector<2x8x8xf32> to vector<2x8xf32>
    %357 = vector.shape_cast %356 : vector<2x8xf32> to vector<2x8x1xf32>
    %358 = vector.broadcast %357 : vector<2x8x1xf32> to vector<2x8x8xf32>
    %359 = arith.divf %355, %358 : vector<2x8x8xf32>
    %cst_122 = arith.constant dense<0.000000e+00> : vector<2x8x8xf32>
    %360 = tpu.matmul %359, %347, %cst_122 {dimension_numbers = #tpu.dot_dimension_numbers<[2], [1], [1], [2], [0, 0, 0, 1, 1, 2], [0], [0]>} : vector<2x8x8xf32>, vector<2x8x8xf32>, vector<2x8x8xf32> -> vector<2x8x8xf32>
    %361 = vector.extract_strided_slice %324 {offsets = [0, 0, 16], sizes = [2, 8, 8], strides = [1, 1, 1]} : vector<2x8x32xf32> to vector<2x8x8xf32>
    %362 = vector.extract_strided_slice %326 {offsets = [0, 0, 16], sizes = [2, 8, 8], strides = [1, 1, 1]} : vector<2x8x32xf32> to vector<2x8x8xf32>
    %363 = vector.extract_strided_slice %328 {offsets = [0, 0, 16], sizes = [2, 8, 8], strides = [1, 1, 1]} : vector<2x8x32xf32> to vector<2x8x8xf32>
    %cst_123 = arith.constant dense<0.000000e+00> : vector<2x8x8xf32>
    %364 = tpu.matmul %361, %362, %cst_123 {dimension_numbers = #tpu.dot_dimension_numbers<[2], [2], [1], [1], [0, 0, 0, 1, 1, 1], [0], [0]>} : vector<2x8x8xf32>, vector<2x8x8xf32>, vector<2x8x8xf32> -> vector<2x8x8xf32>
    %cst_124 = arith.constant 0.353553385 : f32
    %365 = vector.broadcast %cst_124 : f32 to vector<2x8x8xf32>
    %366 = arith.mulf %364, %365 : vector<2x8x8xf32>
    %cst_125 = arith.constant dense<0xFF800000> : vector<2x8xf32>
    %367 = vector.multi_reduction <maximumf>, %366, %cst_125 [2] : vector<2x8x8xf32> to vector<2x8xf32>
    %368 = vector.shape_cast %367 : vector<2x8xf32> to vector<2x8x1xf32>
    %369 = vector.broadcast %368 : vector<2x8x1xf32> to vector<2x8x8xf32>
    %370 = arith.subf %366, %369 : vector<2x8x8xf32>
    %371 = math.exp %370 : vector<2x8x8xf32>
    %cst_126 = arith.constant dense<0.000000e+00> : vector<2x8xf32>
    %372 = vector.multi_reduction <add>, %371, %cst_126 [2] : vector<2x8x8xf32> to vector<2x8xf32>
    %373 = vector.shape_cast %372 : vector<2x8xf32> to vector<2x8x1xf32>
    %374 = vector.broadcast %373 : vector<2x8x1xf32> to vector<2x8x8xf32>
    %375 = arith.divf %371, %374 : vector<2x8x8xf32>
    %cst_127 = arith.constant dense<0.000000e+00> : vector<2x8x8xf32>
    %376 = tpu.matmul %375, %363, %cst_127 {dimension_numbers = #tpu.dot_dimension_numbers<[2], [1], [1], [2], [0, 0, 0, 1, 1, 2], [0], [0]>} : vector<2x8x8xf32>, vector<2x8x8xf32>, vector<2x8x8xf32> -> vector<2x8x8xf32>
    %377 = vector.extract_strided_slice %324 {offsets = [0, 0, 24], sizes = [2, 8, 8], strides = [1, 1, 1]} : vector<2x8x32xf32> to vector<2x8x8xf32>
    %378 = vector.extract_strided_slice %326 {offsets = [0, 0, 24], sizes = [2, 8, 8], strides = [1, 1, 1]} : vector<2x8x32xf32> to vector<2x8x8xf32>
    %379 = vector.extract_strided_slice %328 {offsets = [0, 0, 24], sizes = [2, 8, 8], strides = [1, 1, 1]} : vector<2x8x32xf32> to vector<2x8x8xf32>
    %cst_128 = arith.constant dense<0.000000e+00> : vector<2x8x8xf32>
    %380 = tpu.matmul %377, %378, %cst_128 {dimension_numbers = #tpu.dot_dimension_numbers<[2], [2], [1], [1], [0, 0, 0, 1, 1, 1], [0], [0]>} : vector<2x8x8xf32>, vector<2x8x8xf32>, vector<2x8x8xf32> -> vector<2x8x8xf32>
    %cst_129 = arith.constant 0.353553385 : f32
    %381 = vector.broadcast %cst_129 : f32 to vector<2x8x8xf32>
    %382 = arith.mulf %380, %381 : vector<2x8x8xf32>
    %cst_130 = arith.constant dense<0xFF800000> : vector<2x8xf32>
    %383 = vector.multi_reduction <maximumf>, %382, %cst_130 [2] : vector<2x8x8xf32> to vector<2x8xf32>
    %384 = vector.shape_cast %383 : vector<2x8xf32> to vector<2x8x1xf32>
    %385 = vector.broadcast %384 : vector<2x8x1xf32> to vector<2x8x8xf32>
    %386 = arith.subf %382, %385 : vector<2x8x8xf32>
    %387 = math.exp %386 : vector<2x8x8xf32>
    %cst_131 = arith.constant dense<0.000000e+00> : vector<2x8xf32>
    %388 = vector.multi_reduction <add>, %387, %cst_131 [2] : vector<2x8x8xf32> to vector<2x8xf32>
    %389 = vector.shape_cast %388 : vector<2x8xf32> to vector<2x8x1xf32>
    %390 = vector.broadcast %389 : vector<2x8x1xf32> to vector<2x8x8xf32>
    %391 = arith.divf %387, %390 : vector<2x8x8xf32>
    %cst_132 = arith.constant dense<0.000000e+00> : vector<2x8x8xf32>
    %392 = tpu.matmul %391, %379, %cst_132 {dimension_numbers = #tpu.dot_dimension_numbers<[2], [1], [1], [2], [0, 0, 0, 1, 1, 2], [0], [0]>} : vector<2x8x8xf32>, vector<2x8x8xf32>, vector<2x8x8xf32> -> vector<2x8x8xf32>
    %393 = tpu.concatenate %344, %360, %376, %392 in 2 : vector<2x8x8xf32>, vector<2x8x8xf32>, vector<2x8x8xf32>, vector<2x8x8xf32> -> vector<2x8x32xf32>
    %394 = vector.shape_cast %393 : vector<2x8x32xf32> to vector<16x32xf32>
    %c384 = arith.constant 384 : index
    %c0_133 = arith.constant 0 : index
    %395 = vector.load %arg2[%c384, %c0_133] : memref<1072x32xf32, #tpu.memory_space<vmem>>, vector<32x32xf32>
    %cst_134 = arith.constant dense<0.000000e+00> : vector<16x32xf32>
    %396 = tpu.matmul %394, %395, %cst_134 {dimension_numbers = #tpu.dot_dimension_numbers<[1], [0], [0], [1], [0, 0, 1, 1], [], []>} : vector<16x32xf32>, vector<32x32xf32>, vector<16x32xf32> -> vector<16x32xf32>
    %397 = arith.addf %293, %396 : vector<16x32xf32>
    %c416 = arith.constant 416 : index
    %c0_135 = arith.constant 0 : index
    %398 = vector.load %arg2[%c416, %c0_135] : memref<1072x32xf32, #tpu.memory_space<vmem>>, vector<1x32xf32>
    %399 = vector.broadcast %398 : vector<1x32xf32> to vector<16x32xf32>
    %400 = arith.addf %397, %399 : vector<16x32xf32>
    %c424 = arith.constant 424 : index
    %c0_136 = arith.constant 0 : index
    %401 = vector.load %arg2[%c424, %c0_136] : memref<1072x32xf32, #tpu.memory_space<vmem>>, vector<1x32xf32>
    %c432 = arith.constant 432 : index
    %c0_137 = arith.constant 0 : index
    %402 = vector.load %arg2[%c432, %c0_137] : memref<1072x32xf32, #tpu.memory_space<vmem>>, vector<1x32xf32>
    %cst_138 = arith.constant dense<0.000000e+00> : vector<16xf32>
    %403 = vector.multi_reduction <add>, %400, %cst_138 [1] : vector<16x32xf32> to vector<16xf32>
    %404 = vector.shape_cast %403 : vector<16xf32> to vector<16x1xf32>
    %cst_139 = arith.constant 3.200000e+01 : f32
    %405 = vector.broadcast %cst_139 : f32 to vector<16x1xf32>
    %406 = arith.divf %404, %405 : vector<16x1xf32>
    %407 = vector.broadcast %406 : vector<16x1xf32> to vector<16x32xf32>
    %408 = arith.subf %400, %407 : vector<16x32xf32>
    %409 = arith.mulf %408, %408 : vector<16x32xf32>
    %cst_140 = arith.constant dense<0.000000e+00> : vector<16xf32>
    %410 = vector.multi_reduction <add>, %409, %cst_140 [1] : vector<16x32xf32> to vector<16xf32>
    %411 = vector.shape_cast %410 : vector<16xf32> to vector<16x1xf32>
    %cst_141 = arith.constant 3.200000e+01 : f32
    %412 = vector.broadcast %cst_141 : f32 to vector<16x1xf32>
    %413 = arith.divf %411, %412 : vector<16x1xf32>
    %414 = vector.broadcast %406 : vector<16x1xf32> to vector<16x32xf32>
    %415 = arith.subf %400, %414 : vector<16x32xf32>
    %cst_142 = arith.constant 9.99999974E-6 : f32
    %416 = vector.broadcast %cst_142 : f32 to vector<16x1xf32>
    %417 = arith.addf %413, %416 : vector<16x1xf32>
    %418 = math.rsqrt %417 : vector<16x1xf32>
    %419 = vector.broadcast %418 : vector<16x1xf32> to vector<16x32xf32>
    %420 = arith.mulf %415, %419 : vector<16x32xf32>
    %421 = vector.broadcast %401 : vector<1x32xf32> to vector<16x32xf32>
    %422 = arith.mulf %420, %421 : vector<16x32xf32>
    %423 = vector.broadcast %402 : vector<1x32xf32> to vector<16x32xf32>
    %424 = arith.addf %422, %423 : vector<16x32xf32>
    %c440 = arith.constant 440 : index
    %c0_143 = arith.constant 0 : index
    %425 = vector.load %arg2[%c440, %c0_143] : memref<1072x32xf32, #tpu.memory_space<vmem>>, vector<32x32xf32>
    %cst_144 = arith.constant dense<0.000000e+00> : vector<16x32xf32>
    %426 = tpu.matmul %424, %425, %cst_144 {dimension_numbers = #tpu.dot_dimension_numbers<[1], [0], [0], [1], [0, 0, 1, 1], [], []>} : vector<16x32xf32>, vector<32x32xf32>, vector<16x32xf32> -> vector<16x32xf32>
    %c472 = arith.constant 472 : index
    %c0_145 = arith.constant 0 : index
    %427 = vector.load %arg2[%c472, %c0_145] : memref<1072x32xf32, #tpu.memory_space<vmem>>, vector<1x32xf32>
    %428 = vector.broadcast %427 : vector<1x32xf32> to vector<16x32xf32>
    %429 = arith.addf %426, %428 : vector<16x32xf32>
    %cst_146 = arith.constant 0.000000e+00 : f32
    %430 = vector.broadcast %cst_146 : f32 to vector<16x32xf32>
    %431 = arith.maximumf %429, %430 : vector<16x32xf32>
    %c480 = arith.constant 480 : index
    %c0_147 = arith.constant 0 : index
    %432 = vector.load %arg2[%c480, %c0_147] : memref<1072x32xf32, #tpu.memory_space<vmem>>, vector<32x32xf32>
    %cst_148 = arith.constant dense<0.000000e+00> : vector<16x32xf32>
    %433 = tpu.matmul %431, %432, %cst_148 {dimension_numbers = #tpu.dot_dimension_numbers<[1], [0], [0], [1], [0, 0, 1, 1], [], []>} : vector<16x32xf32>, vector<32x32xf32>, vector<16x32xf32> -> vector<16x32xf32>
    %434 = arith.addf %400, %433 : vector<16x32xf32>
    %c512 = arith.constant 512 : index
    %c0_149 = arith.constant 0 : index
    %435 = vector.load %arg2[%c512, %c0_149] : memref<1072x32xf32, #tpu.memory_space<vmem>>, vector<1x32xf32>
    %436 = vector.broadcast %435 : vector<1x32xf32> to vector<16x32xf32>
    %437 = arith.addf %434, %436 : vector<16x32xf32>
    %c520 = arith.constant 520 : index
    %c0_150 = arith.constant 0 : index
    %438 = vector.load %arg2[%c520, %c0_150] : memref<1072x32xf32, #tpu.memory_space<vmem>>, vector<1x32xf32>
    %c528 = arith.constant 528 : index
    %c0_151 = arith.constant 0 : index
    %439 = vector.load %arg2[%c528, %c0_151] : memref<1072x32xf32, #tpu.memory_space<vmem>>, vector<1x32xf32>
    %cst_152 = arith.constant dense<0.000000e+00> : vector<16xf32>
    %440 = vector.multi_reduction <add>, %437, %cst_152 [1] : vector<16x32xf32> to vector<16xf32>
    %441 = vector.shape_cast %440 : vector<16xf32> to vector<16x1xf32>
    %cst_153 = arith.constant 3.200000e+01 : f32
    %442 = vector.broadcast %cst_153 : f32 to vector<16x1xf32>
    %443 = arith.divf %441, %442 : vector<16x1xf32>
    %444 = vector.broadcast %443 : vector<16x1xf32> to vector<16x32xf32>
    %445 = arith.subf %437, %444 : vector<16x32xf32>
    %446 = arith.mulf %445, %445 : vector<16x32xf32>
    %cst_154 = arith.constant dense<0.000000e+00> : vector<16xf32>
    %447 = vector.multi_reduction <add>, %446, %cst_154 [1] : vector<16x32xf32> to vector<16xf32>
    %448 = vector.shape_cast %447 : vector<16xf32> to vector<16x1xf32>
    %cst_155 = arith.constant 3.200000e+01 : f32
    %449 = vector.broadcast %cst_155 : f32 to vector<16x1xf32>
    %450 = arith.divf %448, %449 : vector<16x1xf32>
    %451 = vector.broadcast %443 : vector<16x1xf32> to vector<16x32xf32>
    %452 = arith.subf %437, %451 : vector<16x32xf32>
    %cst_156 = arith.constant 9.99999974E-6 : f32
    %453 = vector.broadcast %cst_156 : f32 to vector<16x1xf32>
    %454 = arith.addf %450, %453 : vector<16x1xf32>
    %455 = math.rsqrt %454 : vector<16x1xf32>
    %456 = vector.broadcast %455 : vector<16x1xf32> to vector<16x32xf32>
    %457 = arith.mulf %452, %456 : vector<16x32xf32>
    %458 = vector.broadcast %438 : vector<1x32xf32> to vector<16x32xf32>
    %459 = arith.mulf %457, %458 : vector<16x32xf32>
    %460 = vector.broadcast %439 : vector<1x32xf32> to vector<16x32xf32>
    %461 = arith.addf %459, %460 : vector<16x32xf32>
    %c0_157 = arith.constant 0 : index
    %c0_158 = arith.constant 0 : index
    %462 = vector.load %arg5[%c0_157, %c0_158] : memref<40x512xf32, #tpu.memory_space<vmem>>, vector<32x512xf32>
    %cst_159 = arith.constant dense<0.000000e+00> : vector<16x512xf32>
    %463 = tpu.matmul %461, %462, %cst_159 {dimension_numbers = #tpu.dot_dimension_numbers<[1], [0], [0], [1], [0, 0, 1, 1], [], []>} : vector<16x32xf32>, vector<32x512xf32>, vector<16x512xf32> -> vector<16x512xf32>
    %c32_160 = arith.constant 32 : index
    %c0_161 = arith.constant 0 : index
    %464 = vector.load %arg5[%c32_160, %c0_161] : memref<40x512xf32, #tpu.memory_space<vmem>>, vector<1x512xf32>
    %465 = vector.broadcast %464 : vector<1x512xf32> to vector<16x512xf32>
    %466 = arith.addf %463, %465 : vector<16x512xf32>
    %cst_162 = arith.constant 0.000000e+00 : f32
    %467 = vector.broadcast %cst_162 : f32 to vector<16x512xf32>
    %468 = arith.maximumf %466, %467 : vector<16x512xf32>
    %c536 = arith.constant 536 : index
    %c0_163 = arith.constant 0 : index
    %469 = vector.load %arg2[%c536, %c0_163] : memref<1072x32xf32, #tpu.memory_space<vmem>>, vector<512x32xf32>
    %cst_164 = arith.constant dense<0.000000e+00> : vector<16x32xf32>
    %470 = tpu.matmul %468, %469, %cst_164 {dimension_numbers = #tpu.dot_dimension_numbers<[1], [0], [0], [1], [0, 0, 1, 1], [], []>} : vector<16x512xf32>, vector<512x32xf32>, vector<16x32xf32> -> vector<16x32xf32>
    %c1048 = arith.constant 1048 : index
    %c0_165 = arith.constant 0 : index
    %471 = vector.load %arg2[%c1048, %c0_165] : memref<1072x32xf32, #tpu.memory_space<vmem>>, vector<1x32xf32>
    %472 = vector.broadcast %471 : vector<1x32xf32> to vector<16x32xf32>
    %473 = arith.addf %470, %472 : vector<16x32xf32>
    %474 = vector.shape_cast %473 : vector<16x32xf32> to vector<2x8x32xf32>
    %c1056 = arith.constant 1056 : index
    %c0_166 = arith.constant 0 : index
    %475 = vector.load %arg2[%c1056, %c0_166] : memref<1072x32xf32, #tpu.memory_space<vmem>>, vector<1x32xf32>
    %c1064 = arith.constant 1064 : index
    %c0_167 = arith.constant 0 : index
    %476 = vector.load %arg2[%c1064, %c0_167] : memref<1072x32xf32, #tpu.memory_space<vmem>>, vector<1x32xf32>
    %477 = vector.extract_strided_slice %476 {offsets = [0, 0], sizes = [1, 1], strides = [1, 1]} : vector<1x32xf32> to vector<1x1xf32>
    %478 = vector.extract_strided_slice %474 {offsets = [0, 0, 0], sizes = [1, 8, 32], strides = [1, 1, 1]} : vector<2x8x32xf32> to vector<1x8x32xf32>
    %479 = vector.shape_cast %478 : vector<1x8x32xf32> to vector<8x32xf32>
    %cst_168 = arith.constant dense<0.000000e+00> : vector<1x8xf32>
    %480 = tpu.matmul %475, %479, %cst_168 {dimension_numbers = #tpu.dot_dimension_numbers<[1], [1], [0], [0], [0, 0, 1, 0], [], []>} : vector<1x32xf32>, vector<8x32xf32>, vector<1x8xf32> -> vector<1x8xf32>
    %481 = vector.extract_strided_slice %474 {offsets = [1, 0, 0], sizes = [1, 8, 32], strides = [1, 1, 1]} : vector<2x8x32xf32> to vector<1x8x32xf32>
    %482 = vector.shape_cast %481 : vector<1x8x32xf32> to vector<8x32xf32>
    %cst_169 = arith.constant dense<0.000000e+00> : vector<1x8xf32>
    %483 = tpu.matmul %475, %482, %cst_169 {dimension_numbers = #tpu.dot_dimension_numbers<[1], [1], [0], [0], [0, 0, 1, 0], [], []>} : vector<1x32xf32>, vector<8x32xf32>, vector<1x8xf32> -> vector<1x8xf32>
    %484 = tpu.concatenate %480, %483 in 0 : vector<1x8xf32>, vector<1x8xf32> -> vector<2x8xf32>
    %485 = vector.broadcast %477 : vector<1x1xf32> to vector<2x8xf32>
    %486 = arith.addf %484, %485 : vector<2x8xf32>
    %487 = arith.negf %486 : vector<2x8xf32>
    %488 = math.exp %487 : vector<2x8xf32>
    %cst_170 = arith.constant 1.000000e+00 : f32
    %489 = vector.broadcast %cst_170 : f32 to vector<2x8xf32>
    %490 = arith.addf %489, %488 : vector<2x8xf32>
    %491 = arith.divf %489, %490 : vector<2x8xf32>
    %c0_171 = arith.constant 0 : index
    %c0_172 = arith.constant 0 : index
    %492 = vector.load %arg6[%c0_171, %c0_172] : memref<2x8xf32, #tpu.memory_space<vmem>>, vector<2x8xf32>
    tpu.vector_store %arg6[%c0_171, %c0_172], %491 {strides = array<i32>} : memref<2x8xf32, #tpu.memory_space<vmem>>, vector<2x8xf32>,
    return
  }
  func.func @transform_0(%arg0: i32) -> (i32, i32) {
    %c0_i32 = arith.constant 0 : i32
    %c0_i32_0 = arith.constant 0 : i32
    return %arg0, %c0_i32 : i32, i32
  }
  func.func @transform_1(%arg0: i32) -> (i32, i32) {
    %c0_i32 = arith.constant 0 : i32
    %c0_i32_0 = arith.constant 0 : i32
    %c0_i32_1 = arith.constant 0 : i32
    return %c0_i32, %c0_i32_0 : i32, i32
  }
  func.func @transform_2(%arg0: i32) -> (i32, i32) {
    %c0_i32 = arith.constant 0 : i32
    %c0_i32_0 = arith.constant 0 : i32
    %c0_i32_1 = arith.constant 0 : i32
    return %c0_i32, %c0_i32_0 : i32, i32
  }
  func.func @transform_3(%arg0: i32) -> (i32, i32) {
    %c0_i32 = arith.constant 0 : i32
    %c0_i32_0 = arith.constant 0 : i32
    %c0_i32_1 = arith.constant 0 : i32
    return %c0_i32, %c0_i32_0 : i32, i32
  }
  func.func @transform_4(%arg0: i32) -> (i32, i32) {
    %c0_i32 = arith.constant 0 : i32
    %c0_i32_0 = arith.constant 0 : i32
    %c0_i32_1 = arith.constant 0 : i32
    return %c0_i32, %c0_i32_0 : i32, i32
  }
  func.func @transform_5(%arg0: i32) -> (i32, i32) {
    %c0_i32 = arith.constant 0 : i32
    %c0_i32_0 = arith.constant 0 : i32
    return %arg0, %c0_i32 : i32, i32
  }
}

</mosaic_0001>

<llo_original>
// kernel: tpu_custom_call.1
$region0: #{tpu_custom_call.1}
  #allocation0 [shape = 'u32[]', space=smem, size = 0x4, offset = 0x4, fixed_abs, tag = 'smem constant byte address 0x4 - core index']
  #allocation1 [shape = 'u32[144,128]{1,0:T(1,128)}', space=vmem, size = 0x12000, scoped, tag = 'internal scratch']
  %s0 = inlined_call_operand.vmem [shape: f32[16,64], index: 0, kind: input, shape index: {}]
  %s1 = inlined_call_operand.vmem [shape: f32[1072,32], index: 1, kind: input, shape index: {}]
  %s2 = inlined_call_operand.vmem [shape: f32[40,64], index: 2, kind: input, shape index: {}]
  %s3 = inlined_call_operand.vmem [shape: f32[120,96], index: 3, kind: input, shape index: {}]
  %s4 = inlined_call_operand.vmem [shape: f32[40,512], index: 4, kind: input, shape index: {}]
  %s5 = inlined_call_operand.hbm [shape: f32[2,8], index: 5, kind: output, shape index: {}]
  %s6 = sld [smem:[#allocation0]]
  $region30: #{tpu_custom_call.1} parent=0
    _
  %s8 = ssub.s32 1, %s6
  %s9 = scalar_select 0, %s8, %s6
  $region1: #{tpu_custom_call.1} parent=0
    #allocation2 [shape = 'u8[1024]{0}', space=vmem, size = 0x400, scoped, tag = 'output window, operand 0, single buffered']
    #allocation3 [shape = 's32[1]{0}', space=sflag, size = 0x4, scoped, tag = 'scoped memory for tpu_custom_call.1']
    %10 = vsyncpa [#allocation3], 0
    // Predicated region
    $region2: #{tpu_custom_call.1} parent=1 // pred_check
      _
    $region3: #{tpu_custom_call.1} parent=1 // pred_check_branch
      %12 = sbr.rel (0) target = $region5
    $region4: #{tpu_custom_call.1} parent=1 // pred_region
      _
    $region5: #{tpu_custom_call.1} parent=1 // pred_fallthru
      _
    // Predicated region
    $region6: #{tpu_custom_call.1} parent=1 // pred_check
      _
    $region7: #{tpu_custom_call.1} parent=1 // pred_check_branch
      %14 = sbr.rel (0) target = $region9
    $region8: #{tpu_custom_call.1} parent=1 // pred_region
      _
    $region9: #{tpu_custom_call.1} parent=1 // pred_fallthru
      _
    // Predicated region
    $region10: #{tpu_custom_call.1} parent=1 // pred_check
      _
    $region11: #{tpu_custom_call.1} parent=1 // pred_check_branch
      %16 = sbr.rel (0) target = $region13
    $region12: #{tpu_custom_call.1} parent=1 // pred_region
      _
    $region13: #{tpu_custom_call.1} parent=1 // pred_fallthru
      _
    // Predicated region
    $region14: #{tpu_custom_call.1} parent=1 // pred_check
      _
    $region15: #{tpu_custom_call.1} parent=1 // pred_check_branch
      %18 = sbr.rel (0) target = $region17
    $region16: #{tpu_custom_call.1} parent=1 // pred_region
      _
    $region17: #{tpu_custom_call.1} parent=1 // pred_fallthru
      _
    // Predicated region
    $region18: #{tpu_custom_call.1} parent=1 // pred_check
      _
    $region19: #{tpu_custom_call.1} parent=1 // pred_check_branch
      %20 = sbr.rel (0) target = $region21
    $region20: #{tpu_custom_call.1} parent=1 // pred_region
      _
    $region21: #{tpu_custom_call.1} parent=1 // pred_fallthru
      _
    %v21 = vld [vmem:[%s0] sm:$0xff]
    %v22 = vld [vmem:[%s0 + $0x8] sm:$0xff]
    %v23 = vld [vmem:[%s1] sm:$0xff]
    %v24 = vld [vmem:[%s1 + $0x8] sm:$0xff]
    %v25 = vld [vmem:[%s1 + $0x10] sm:$0xff]
    %v26 = vld [vmem:[%s1 + $0x18] sm:$0xff]
    %v27 = vld [vmem:[%s1 + $0x20] sm:$0xff]
    %v28 = vld [vmem:[%s1 + $0x28] sm:$0xff]
    %v29 = vld [vmem:[%s1 + $0x30] sm:$0xff]
    %v30 = vld [vmem:[%s1 + $0x38] sm:$0xff]
    %v31 = vld [vmem:[%s1 + $0x40] sm:$0x1]
    %v32 = vlaneseq
    %v33 = vshrl.u32 %v32, 7
    %v34 = vsub.s32 0, %v33
    %v35 = vrot.slane %v31, %v34
    %vm36 = vcmask 523264
    %v38 = vsel %vm36, %v21, 0
    %v41 = vsel %vm36, %v22, 0
    %43 = vmatprep.subr.mxu0 0.0
    %44 = vmatpush1.msra.mxu0 %v23
    %45 = vmatprep.subr.mxu0 0.0
    %46 = vmatpush1.msra.mxu0 %v24
    %47 = vmatprep.subr.mxu0 0.0
    %48 = vmatpush1.msra.mxu0 %v25
    %49 = vmatprep.subr.mxu0 0.0
    %50 = vmatpush1.msra.mxu0 %v26
    %51 = vmatprep.subr.mxu0 0.0
    %52 = vmatpush1.msra.mxu0 %v27
    %53 = vmatprep.subr.mxu0 0.0
    %54 = vmatpush1.msra.mxu0 %v28
    %55 = vmatprep.subr.mxu0 0.0
    %56 = vmatpush1.msra.mxu0 %v29
    %57 = vmatprep.subr.mxu0 0.0
    %58 = vmatpush1.msra.mxu0 %v30
    %59 = vmatprep.subr.mxu0 0.0
    %60 = vmatpush1.msra.mxu0 0.0
    %61 = vmatprep.subr.mxu0 0.0
    %62 = vmatpush1.msra.mxu0 0.0
    %63 = vmatprep.subr.mxu0 0.0
    %64 = vmatpush1.msra.mxu0 0.0
    %65 = vmatprep.subr.mxu0 0.0
    %66 = vmatpush1.msra.mxu0 0.0
    %67 = vmatprep.subr.mxu0 0.0
    %68 = vmatpush1.msra.mxu0 0.0
    %69 = vmatprep.subr.mxu0 0.0
    %70 = vmatpush1.msra.mxu0 0.0
    %71 = vmatprep.subr.mxu0 0.0
    %72 = vmatpush1.msra.mxu0 0.0
    %73 = vmatprep.subr.mxu0 0.0
    %74 = vmatpush1.msra.mxu0 0.0
    %75 = vmatprep.subr.mxu0 0.0
    %76 = vmatpush1.msra.mxu0 0.0
    %77 = vmatprep.subr.mxu0 0.0
    %78 = vmatpush1.msra.mxu0 0.0
    %79 = vmatprep.subr.mxu0 0.0
    %80 = vmatpush1.msra.mxu0 0.0
    %81 = vmatprep.subr.mxu0 0.0
    %82 = vmatpush1.msra.mxu0 0.0
    %83 = vmatprep.subr.mxu0 0.0
    %84 = vmatpush1.msra.mxu0 0.0
    %85 = vmatprep.subr.mxu0 0.0
    %86 = vmatpush1.msra.mxu0 0.0
    %87 = vmatprep.subr.mxu0 0.0
    %88 = vmatpush1.msra.mxu0 0.0
    %89 = vmatprep.subr.mxu0 0.0
    %90 = vmatpush1.msra.mxu0 0.0
    %91 = vmatprep.subr.mxu0 0.0
    %92 = vmatpush1.msra.mxu0 0.0
    %93 = vmatprep.subr.mxu0 0.0
    %94 = vmatpush1.msra.mxu0 0.0
    %95 = vmatprep.subr.mxu0 0.0
    %96 = vmatpush1.msra.mxu0 0.0
    %97 = vmatprep.subr.mxu0 0.0
    %98 = vmatpush1.msra.mxu0 0.0
    %99 = vmatprep.subr.mxu0 0.0
    %100 = vmatpush1.msra.mxu0 0.0
    %101 = vmatprep.subr.mxu0 0.0
    %102 = vmatpush1.msra.mxu0 0.0
    %103 = vmatprep.subr.mxu0 0.0
    %104 = vmatpush1.msra.mxu0 0.0
    %105 = vmatprep.subr.mxu0 0.0
    %106 = vmatpush1.msra.mxu0 0.0
    %107 = vmatprep.mubr.f32.mxu0 0.0
    %108 = vmatmul.mubr.f32.gmra.mrb[0].mxu0 %v38
    %v109 = vpop.f32.mrb[0].mxu0
    %v110 = vadd.f32 %v35, %v109
    %v111 = vpop.f32.mrb[0].mxu0
    %112 = vmatprep.mubr.f32.mxu0 0.0
    %113 = vmatmul.mubr.f32.gmra.mrb[0].mxu0 %v41
    %v114 = vpop.f32.mrb[0].mxu0
    %v115 = vadd.f32 %v35, %v114
    %v116 = vpop.f32.mrb[0].mxu0
    %117 = vdwg.mxu0
    %v118 = vld [vmem:[%s1 + $0x48] sm:$0x1]
    %v119 = vld [vmem:[%s1 + $0x50] sm:$0x1]
    %vm120 = vcmask 261120
    %v121 = vsel %vm120, %v110, 0.0
    %122 = vadd.xlane.f32.xlu0 %v121
    %v123 = vpop.xlane.xlu0 %122
    %v124 = vsel %vm120, %v115, 0.0
    %125 = vadd.xlane.f32.xlu0 %v124
    %v126 = vpop.xlane.xlu0 %125
    %v127 = vrcp.pop 32.0
    %v128 = vmul.f32 %v123, %v127
    %v129 = vmul.f32 %v126, %v127
    %v130 = vsub.f32 %v110, %v128
    %v131 = vsub.f32 %v115, %v129
    %v132 = vmul.f32 %v130, %v130
    %v133 = vmul.f32 %v131, %v131
    %v134 = vsel %vm120, %v132, 0.0
    %135 = vadd.xlane.f32.xlu0 %v134
    %v136 = vpop.xlane.xlu0 %135
    %v137 = vsel %vm120, %v133, 0.0
    %138 = vadd.xlane.f32.xlu0 %v137
    %v139 = vpop.xlane.xlu0 %138
    %v140 = vmul.f32 %v136, %v127
    %v141 = vmul.f32 %v139, %v127
    %v142 = vadd.f32 %v140, 1e-05
    %v143 = vadd.f32 %v141, 1e-05
    %v144 = vrsqrt.pop %v142
    %v145 = vrsqrt.pop %v143
    %v146 = vmul.f32 %v130, %v144
    %v147 = vmul.f32 %v131, %v145
    %v148 = vlaneseq
    %v149 = vshrl.u32 %v148, 7
    %v150 = vsub.s32 0, %v149
    %v151 = vrot.slane %v118, %v150
    %v152 = vmul.f32 %v146, %v151
    %v153 = vmul.f32 %v147, %v151
    %v154 = vlaneseq
    %v155 = vshrl.u32 %v154, 7
    %v156 = vsub.s32 0, %v155
    %v157 = vrot.slane %v119, %v156
    %v158 = vadd.f32 %v152, %v157
    %v159 = vadd.f32 %v153, %v157
    %v160 = vld [vmem:[%s3] sm:$0xff]
    %v161 = vld [vmem:[%s3 + $0x8] sm:$0xff]
    %v162 = vld [vmem:[%s3 + $0x10] sm:$0xff]
    %v163 = vld [vmem:[%s3 + $0x18] sm:$0xff]
    %v164 = vld [vmem:[%s3 + $0x20] sm:$0x1]
    %v165 = vlaneseq
    %v166 = vshrl.u32 %v165, 7
    %v167 = vsub.s32 0, %v166
    %v168 = vrot.slane %v164, %v167
    %v170 = vsel %vm120, %v158, 0
    %v173 = vsel %vm120, %v159, 0
    %175 = vmatprep.subr.mxu0 0.0
    %176 = vmatpush1.msra.mxu0 %v160
    %177 = vmatprep.subr.mxu0 0.0
    %178 = vmatpush1.msra.mxu0 %v161
    %179 = vmatprep.subr.mxu0 0.0
    %180 = vmatpush1.msra.mxu0 %v162
    %181 = vmatprep.subr.mxu0 0.0
    %182 = vmatpush1.msra.mxu0 %v163
    %183 = vmatprep.subr.mxu0 0.0
    %184 = vmatpush1.msra.mxu0 0.0
    %185 = vmatprep.subr.mxu0 0.0
    %186 = vmatpush1.msra.mxu0 0.0
    %187 = vmatprep.subr.mxu0 0.0
    %188 = vmatpush1.msra.mxu0 0.0
    %189 = vmatprep.subr.mxu0 0.0
    %190 = vmatpush1.msra.mxu0 0.0
    %191 = vmatprep.subr.mxu0 0.0
    %192 = vmatpush1.msra.mxu0 0.0
    %193 = vmatprep.subr.mxu0 0.0
    %194 = vmatpush1.msra.mxu0 0.0
    %195 = vmatprep.subr.mxu0 0.0
    %196 = vmatpush1.msra.mxu0 0.0
    %197 = vmatprep.subr.mxu0 0.0
    %198 = vmatpush1.msra.mxu0 0.0
    %199 = vmatprep.subr.mxu0 0.0
    %200 = vmatpush1.msra.mxu0 0.0
    %201 = vmatprep.subr.mxu0 0.0
    %202 = vmatpush1.msra.mxu0 0.0
    %203 = vmatprep.subr.mxu0 0.0
    %204 = vmatpush1.msra.mxu0 0.0
    %205 = vmatprep.subr.mxu0 0.0
    %206 = vmatpush1.msra.mxu0 0.0
    %207 = vmatprep.subr.mxu0 0.0
    %208 = vmatpush1.msra.mxu0 0.0
    %209 = vmatprep.subr.mxu0 0.0
    %210 = vmatpush1.msra.mxu0 0.0
    %211 = vmatprep.subr.mxu0 0.0
    %212 = vmatpush1.msra.mxu0 0.0
    %213 = vmatprep.subr.mxu0 0.0
    %214 = vmatpush1.msra.mxu0 0.0
    %215 = vmatprep.subr.mxu0 0.0
    %216 = vmatpush1.msra.mxu0 0.0
    %217 = vmatprep.subr.mxu0 0.0
    %218 = vmatpush1.msra.mxu0 0.0
    %219 = vmatprep.subr.mxu0 0.0
    %220 = vmatpush1.msra.mxu0 0.0
    %221 = vmatprep.subr.mxu0 0.0
    %222 = vmatpush1.msra.mxu0 0.0
    %223 = vmatprep.subr.mxu0 0.0
    %224 = vmatpush1.msra.mxu0 0.0
    %225 = vmatprep.subr.mxu0 0.0
    %226 = vmatpush1.msra.mxu0 0.0
    %227 = vmatprep.subr.mxu0 0.0
    %228 = vmatpush1.msra.mxu0 0.0
    %229 = vmatprep.subr.mxu0 0.0
    %230 = vmatpush1.msra.mxu0 0.0
    %231 = vmatprep.subr.mxu0 0.0
    %232 = vmatpush1.msra.mxu0 0.0
    %233 = vmatprep.subr.mxu0 0.0
    %234 = vmatpush1.msra.mxu0 0.0
    %235 = vmatprep.subr.mxu0 0.0
    %236 = vmatpush1.msra.mxu0 0.0
    %237 = vmatprep.subr.mxu0 0.0
    %238 = vmatpush1.msra.mxu0 0.0
    %239 = vmatprep.mubr.f32.mxu0 0.0
    %240 = vmatmul.mubr.f32.gmra.mrb[0].mxu0 %v170
    %v241 = vpop.f32.mrb[0].mxu0
    %v242 = vadd.f32 %v168, %v241
    %v243 = vpop.f32.mrb[0].mxu0
    %244 = vmatprep.mubr.f32.mxu0 0.0
    %245 = vmatmul.mubr.f32.gmra.mrb[0].mxu0 %v173
    %v246 = vpop.f32.mrb[0].mxu0
    %v247 = vadd.f32 %v168, %v246
    %v248 = vpop.f32.mrb[0].mxu0
    %249 = vdwg.mxu0
    %251 = vrot.lane.b32.xlu0 %v242, 96
    %v252 = vpop.permute.xlu0 %251
    %vm253 = vcmask 64512
    %v254 = vsel %vm253, %v242, 0
    %v256 = vsel %vm253, %v252, 0
    %258 = vmatprep.subr.mxu0 0.0
    %259 = vmatpush1.xpose.msra.mxu0 %v256
    %260 = vmatprep.subr.mxu0 0.0
    %261 = vmatpush1.xpose.msra.mxu0 0.0
    %262 = vmatprep.subr.mxu0 0.0
    %263 = vmatpush1.xpose.msra.mxu0 0.0
    %264 = vmatprep.subr.mxu0 0.0
    %265 = vmatpush1.xpose.msra.mxu0 0.0
    %266 = vmatprep.subr.mxu0 0.0
    %267 = vmatpush1.xpose.msra.mxu0 0.0
    %268 = vmatprep.subr.mxu0 0.0
    %269 = vmatpush1.xpose.msra.mxu0 0.0
    %270 = vmatprep.subr.mxu0 0.0
    %271 = vmatpush1.xpose.msra.mxu0 0.0
    %272 = vmatprep.subr.mxu0 0.0
    %273 = vmatpush1.xpose.msra.mxu0 0.0
    %274 = vmatprep.subr.mxu0 0.0
    %275 = vmatpush1.xpose.msra.mxu0 0.0
    %276 = vmatprep.subr.mxu0 0.0
    %277 = vmatpush1.xpose.msra.mxu0 0.0
    %278 = vmatprep.subr.mxu0 0.0
    %279 = vmatpush1.xpose.msra.mxu0 0.0
    %280 = vmatprep.subr.mxu0 0.0
    %281 = vmatpush1.xpose.msra.mxu0 0.0
    %282 = vmatprep.subr.mxu0 0.0
    %283 = vmatpush1.xpose.msra.mxu0 0.0
    %284 = vmatprep.subr.mxu0 0.0
    %285 = vmatpush1.xpose.msra.mxu0 0.0
    %286 = vmatprep.subr.mxu0 0.0
    %287 = vmatpush1.xpose.msra.mxu0 0.0
    %288 = vmatprep.subr.mxu0 0.0
    %289 = vmatpush1.xpose.msra.mxu0 0.0
    %290 = vmatprep.subr.mxu0 0.0
    %291 = vmatpush1.xpose.msra.mxu0 0.0
    %292 = vmatprep.subr.mxu0 0.0
    %293 = vmatpush1.xpose.msra.mxu0 0.0
    %294 = vmatprep.subr.mxu0 0.0
    %295 = vmatpush1.xpose.msra.mxu0 0.0
    %296 = vmatprep.subr.mxu0 0.0
    %297 = vmatpush1.xpose.msra.mxu0 0.0
    %298 = vmatprep.subr.mxu0 0.0
    %299 = vmatpush1.xpose.msra.mxu0 0.0
    %300 = vmatprep.subr.mxu0 0.0
    %301 = vmatpush1.xpose.msra.mxu0 0.0
    %302 = vmatprep.subr.mxu0 0.0
    %303 = vmatpush1.xpose.msra.mxu0 0.0
    %304 = vmatprep.subr.mxu0 0.0
    %305 = vmatpush1.xpose.msra.mxu0 0.0
    %306 = vmatprep.subr.mxu0 0.0
    %307 = vmatpush1.xpose.msra.mxu0 0.0
    %308 = vmatprep.subr.mxu0 0.0
    %309 = vmatpush1.xpose.msra.mxu0 0.0
    %310 = vmatprep.subr.mxu0 0.0
    %311 = vmatpush1.xpose.msra.mxu0 0.0
    %312 = vmatprep.subr.mxu0 0.0
    %313 = vmatpush1.xpose.msra.mxu0 0.0
    %314 = vmatprep.subr.mxu0 0.0
    %315 = vmatpush1.xpose.msra.mxu0 0.0
    %316 = vmatprep.subr.mxu0 0.0
    %317 = vmatpush1.xpose.msra.mxu0 0.0
    %318 = vmatprep.subr.mxu0 0.0
    %319 = vmatpush1.xpose.msra.mxu0 0.0
    %320 = vmatprep.subr.mxu0 0.0
    %321 = vmatpush1.xpose.msra.mxu0 0.0
    %322 = vmatprep.mubr.f32.mxu0 0.0
    %323 = vmatmul.mubr.f32.gmra.mrb[0].mxu0 %v254
    %v324 = vpop.f32.mrb[0].mxu0
    %v325 = vadd.f32 0.0, %v324
    %v326 = vpop.f32.mrb[0].mxu0
    %327 = vdwg.mxu0
    %329 = vrot.lane.b32.xlu0 %v247, 96
    %v330 = vpop.permute.xlu0 %329
    %v331 = vsel %vm253, %v247, 0
    %v333 = vsel %vm253, %v330, 0
    %335 = vmatprep.subr.mxu0 0.0
    %336 = vmatpush1.xpose.msra.mxu0 %v333
    %337 = vmatprep.subr.mxu0 0.0
    %338 = vmatpush1.xpose.msra.mxu0 0.0
    %339 = vmatprep.subr.mxu0 0.0
    %340 = vmatpush1.xpose.msra.mxu0 0.0
    %341 = vmatprep.subr.mxu0 0.0
    %342 = vmatpush1.xpose.msra.mxu0 0.0
    %343 = vmatprep.subr.mxu0 0.0
    %344 = vmatpush1.xpose.msra.mxu0 0.0
    %345 = vmatprep.subr.mxu0 0.0
    %346 = vmatpush1.xpose.msra.mxu0 0.0
    %347 = vmatprep.subr.mxu0 0.0
    %348 = vmatpush1.xpose.msra.mxu0 0.0
    %349 = vmatprep.subr.mxu0 0.0
    %350 = vmatpush1.xpose.msra.mxu0 0.0
    %351 = vmatprep.subr.mxu0 0.0
    %352 = vmatpush1.xpose.msra.mxu0 0.0
    %353 = vmatprep.subr.mxu0 0.0
    %354 = vmatpush1.xpose.msra.mxu0 0.0
    %355 = vmatprep.subr.mxu0 0.0
    %356 = vmatpush1.xpose.msra.mxu0 0.0
    %357 = vmatprep.subr.mxu0 0.0
    %358 = vmatpush1.xpose.msra.mxu0 0.0
    %359 = vmatprep.subr.mxu0 0.0
    %360 = vmatpush1.xpose.msra.mxu0 0.0
    %361 = vmatprep.subr.mxu0 0.0
    %362 = vmatpush1.xpose.msra.mxu0 0.0
    %363 = vmatprep.subr.mxu0 0.0
    %364 = vmatpush1.xpose.msra.mxu0 0.0
    %365 = vmatprep.subr.mxu0 0.0
    %366 = vmatpush1.xpose.msra.mxu0 0.0
    %367 = vmatprep.subr.mxu0 0.0
    %368 = vmatpush1.xpose.msra.mxu0 0.0
    %369 = vmatprep.subr.mxu0 0.0
    %370 = vmatpush1.xpose.msra.mxu0 0.0
    %371 = vmatprep.subr.mxu0 0.0
    %372 = vmatpush1.xpose.msra.mxu0 0.0
    %373 = vmatprep.subr.mxu0 0.0
    %374 = vmatpush1.xpose.msra.mxu0 0.0
    %375 = vmatprep.subr.mxu0 0.0
    %376 = vmatpush1.xpose.msra.mxu0 0.0
    %377 = vmatprep.subr.mxu0 0.0
    %378 = vmatpush1.xpose.msra.mxu0 0.0
    %379 = vmatprep.subr.mxu0 0.0
    %380 = vmatpush1.xpose.msra.mxu0 0.0
    %381 = vmatprep.subr.mxu0 0.0
    %382 = vmatpush1.xpose.msra.mxu0 0.0
    %383 = vmatprep.subr.mxu0 0.0
    %384 = vmatpush1.xpose.msra.mxu0 0.0
    %385 = vmatprep.subr.mxu0 0.0
    %386 = vmatpush1.xpose.msra.mxu0 0.0
    %387 = vmatprep.subr.mxu0 0.0
    %388 = vmatpush1.xpose.msra.mxu0 0.0
    %389 = vmatprep.subr.mxu0 0.0
    %390 = vmatpush1.xpose.msra.mxu0 0.0
    %391 = vmatprep.subr.mxu0 0.0
    %392 = vmatpush1.xpose.msra.mxu0 0.0
    %393 = vmatprep.subr.mxu0 0.0
    %394 = vmatpush1.xpose.msra.mxu0 0.0
    %395 = vmatprep.subr.mxu0 0.0
    %396 = vmatpush1.xpose.msra.mxu0 0.0
    %397 = vmatprep.subr.mxu0 0.0
    %398 = vmatpush1.xpose.msra.mxu0 0.0
    %399 = vmatprep.mubr.f32.mxu0 0.0
    %400 = vmatmul.mubr.f32.gmra.mrb[0].mxu0 %v331
    %v401 = vpop.f32.mrb[0].mxu0
    %v402 = vadd.f32 0.0, %v401
    %v403 = vpop.f32.mrb[0].mxu0
    %404 = vdwg.mxu0
    %v405 = vmul.f32 %v325, 0.35355338
    %v406 = vmul.f32 %v402, 0.35355338
    %v407 = vsel %vm253, %v405, -inf
    %408 = vmax.xlane.f32.xlu0 %v407
    %v409 = vpop.xlane.xlu0 %408
    %v410 = vsel %vm253, %v406, -inf
    %411 = vmax.xlane.f32.xlu0 %v410
    %v412 = vpop.xlane.xlu0 %411
    %v413 = vsub.f32 %v405, %v409
    %v414 = vsub.f32 %v406, %v412
    %v415 = vmul.f32 %v413, 1.442695
    %v416 = vpow.pop %v415
    %v417 = vmul.f32 %v414, 1.442695
    %v418 = vpow.pop %v417
    %v419 = vsel %vm253, %v416, 0.0
    %420 = vadd.xlane.f32.xlu0 %v419
    %v421 = vpop.xlane.xlu0 %420
    %v422 = vsel %vm253, %v418, 0.0
    %423 = vadd.xlane.f32.xlu0 %v422
    %v424 = vpop.xlane.xlu0 %423
    %v425 = vrcp.pop %v421
    %v426 = vmul.f32 %v416, %v425
    %v427 = vrcp.pop %v424
    %v428 = vmul.f32 %v418, %v427
    %429 = vrot.lane.b32.xlu0 %v242, 64
    %v430 = vpop.permute.xlu0 %429
    %v433 = vsel %vm253, %v426, 0
    %435 = vmatprep.subr.mxu0 0.0
    %436 = vmatpush1.msra.mxu0 %v430
    %437 = vmatprep.subr.mxu0 0.0
    %438 = vmatpush1.msra.mxu0 0.0
    %439 = vmatprep.subr.mxu0 0.0
    %440 = vmatpush1.msra.mxu0 0.0
    %441 = vmatprep.subr.mxu0 0.0
    %442 = vmatpush1.msra.mxu0 0.0
    %443 = vmatprep.subr.mxu0 0.0
    %444 = vmatpush1.msra.mxu0 0.0
    %445 = vmatprep.subr.mxu0 0.0
    %446 = vmatpush1.msra.mxu0 0.0
    %447 = vmatprep.subr.mxu0 0.0
    %448 = vmatpush1.msra.mxu0 0.0
    %449 = vmatprep.subr.mxu0 0.0
    %450 = vmatpush1.msra.mxu0 0.0
    %451 = vmatprep.subr.mxu0 0.0
    %452 = vmatpush1.msra.mxu0 0.0
    %453 = vmatprep.subr.mxu0 0.0
    %454 = vmatpush1.msra.mxu0 0.0
    %455 = vmatprep.subr.mxu0 0.0
    %456 = vmatpush1.msra.mxu0 0.0
    %457 = vmatprep.subr.mxu0 0.0
    %458 = vmatpush1.msra.mxu0 0.0
    %459 = vmatprep.subr.mxu0 0.0
    %460 = vmatpush1.msra.mxu0 0.0
    %461 = vmatprep.subr.mxu0 0.0
    %462 = vmatpush1.msra.mxu0 0.0
    %463 = vmatprep.subr.mxu0 0.0
    %464 = vmatpush1.msra.mxu0 0.0
    %465 = vmatprep.subr.mxu0 0.0
    %466 = vmatpush1.msra.mxu0 0.0
    %467 = vmatprep.subr.mxu0 0.0
    %468 = vmatpush1.msra.mxu0 0.0
    %469 = vmatprep.subr.mxu0 0.0
    %470 = vmatpush1.msra.mxu0 0.0
    %471 = vmatprep.subr.mxu0 0.0
    %472 = vmatpush1.msra.mxu0 0.0
    %473 = vmatprep.subr.mxu0 0.0
    %474 = vmatpush1.msra.mxu0 0.0
    %475 = vmatprep.subr.mxu0 0.0
    %476 = vmatpush1.msra.mxu0 0.0
    %477 = vmatprep.subr.mxu0 0.0
    %478 = vmatpush1.msra.mxu0 0.0
    %479 = vmatprep.subr.mxu0 0.0
    %480 = vmatpush1.msra.mxu0 0.0
    %481 = vmatprep.subr.mxu0 0.0
    %482 = vmatpush1.msra.mxu0 0.0
    %483 = vmatprep.subr.mxu0 0.0
    %484 = vmatpush1.msra.mxu0 0.0
    %485 = vmatprep.subr.mxu0 0.0
    %486 = vmatpush1.msra.mxu0 0.0
    %487 = vmatprep.subr.mxu0 0.0
    %488 = vmatpush1.msra.mxu0 0.0
    %489 = vmatprep.subr.mxu0 0.0
    %490 = vmatpush1.msra.mxu0 0.0
    %491 = vmatprep.subr.mxu0 0.0
    %492 = vmatpush1.msra.mxu0 0.0
    %493 = vmatprep.subr.mxu0 0.0
    %494 = vmatpush1.msra.mxu0 0.0
    %495 = vmatprep.subr.mxu0 0.0
    %496 = vmatpush1.msra.mxu0 0.0
    %497 = vmatprep.subr.mxu0 0.0
    %498 = vmatpush1.msra.mxu0 0.0
    %499 = vmatprep.mubr.f32.mxu0 0.0
    %500 = vmatmul.mubr.f32.gmra.mrb[0].mxu0 %v433
    %v501 = vpop.f32.mrb[0].mxu0
    %v502 = vadd.f32 0.0, %v501
    %v503 = vpop.f32.mrb[0].mxu0
    %504 = vdwg.mxu0
    %505 = vrot.lane.b32.xlu0 %v247, 64
    %v506 = vpop.permute.xlu0 %505
    %v509 = vsel %vm253, %v428, 0
    %511 = vmatprep.subr.mxu0 0.0
    %512 = vmatpush1.msra.mxu0 %v506
    %513 = vmatprep.subr.mxu0 0.0
    %514 = vmatpush1.msra.mxu0 0.0
    %515 = vmatprep.subr.mxu0 0.0
    %516 = vmatpush1.msra.mxu0 0.0
    %517 = vmatprep.subr.mxu0 0.0
    %518 = vmatpush1.msra.mxu0 0.0
    %519 = vmatprep.subr.mxu0 0.0
    %520 = vmatpush1.msra.mxu0 0.0
    %521 = vmatprep.subr.mxu0 0.0
    %522 = vmatpush1.msra.mxu0 0.0
    %523 = vmatprep.subr.mxu0 0.0
    %524 = vmatpush1.msra.mxu0 0.0
    %525 = vmatprep.subr.mxu0 0.0
    %526 = vmatpush1.msra.mxu0 0.0
    %527 = vmatprep.subr.mxu0 0.0
    %528 = vmatpush1.msra.mxu0 0.0
    %529 = vmatprep.subr.mxu0 0.0
    %530 = vmatpush1.msra.mxu0 0.0
    %531 = vmatprep.subr.mxu0 0.0
    %532 = vmatpush1.msra.mxu0 0.0
    %533 = vmatprep.subr.mxu0 0.0
    %534 = vmatpush1.msra.mxu0 0.0
    %535 = vmatprep.subr.mxu0 0.0
    %536 = vmatpush1.msra.mxu0 0.0
    %537 = vmatprep.subr.mxu0 0.0
    %538 = vmatpush1.msra.mxu0 0.0
    %539 = vmatprep.subr.mxu0 0.0
    %540 = vmatpush1.msra.mxu0 0.0
    %541 = vmatprep.subr.mxu0 0.0
    %542 = vmatpush1.msra.mxu0 0.0
    %543 = vmatprep.subr.mxu0 0.0
    %544 = vmatpush1.msra.mxu0 0.0
    %545 = vmatprep.subr.mxu0 0.0
    %546 = vmatpush1.msra.mxu0 0.0
    %547 = vmatprep.subr.mxu0 0.0
    %548 = vmatpush1.msra.mxu0 0.0
    %549 = vmatprep.subr.mxu0 0.0
    %550 = vmatpush1.msra.mxu0 0.0
    %551 = vmatprep.subr.mxu0 0.0
    %552 = vmatpush1.msra.mxu0 0.0
    %553 = vmatprep.subr.mxu0 0.0
    %554 = vmatpush1.msra.mxu0 0.0
    %555 = vmatprep.subr.mxu0 0.0
    %556 = vmatpush1.msra.mxu0 0.0
    %557 = vmatprep.subr.mxu0 0.0
    %558 = vmatpush1.msra.mxu0 0.0
    %559 = vmatprep.subr.mxu0 0.0
    %560 = vmatpush1.msra.mxu0 0.0
    %561 = vmatprep.subr.mxu0 0.0
    %562 = vmatpush1.msra.mxu0 0.0
    %563 = vmatprep.subr.mxu0 0.0
    %564 = vmatpush1.msra.mxu0 0.0
    %565 = vmatprep.subr.mxu0 0.0
    %566 = vmatpush1.msra.mxu0 0.0
    %567 = vmatprep.subr.mxu0 0.0
    %568 = vmatpush1.msra.mxu0 0.0
    %569 = vmatprep.subr.mxu0 0.0
    %570 = vmatpush1.msra.mxu0 0.0
    %571 = vmatprep.subr.mxu0 0.0
    %572 = vmatpush1.msra.mxu0 0.0
    %573 = vmatprep.subr.mxu0 0.0
    %574 = vmatpush1.msra.mxu0 0.0
    %575 = vmatprep.mubr.f32.mxu0 0.0
    %576 = vmatmul.mubr.f32.gmra.mrb[0].mxu0 %v509
    %v577 = vpop.f32.mrb[0].mxu0
    %v578 = vadd.f32 0.0, %v577
    %v579 = vpop.f32.mrb[0].mxu0
    %580 = vdwg.mxu0
    %581 = vrot.lane.b32.xlu0 %v242, 120
    %v582 = vpop.permute.xlu0 %581
    %583 = vrot.lane.b32.xlu0 %v242, 88
    %v584 = vpop.permute.xlu0 %583
    %v585 = vsel %vm253, %v582, 0
    %v587 = vsel %vm253, %v584, 0
    %589 = vmatprep.subr.mxu0 0.0
    %590 = vmatpush1.xpose.msra.mxu0 %v587
    %591 = vmatprep.subr.mxu0 0.0
    %592 = vmatpush1.xpose.msra.mxu0 0.0
    %593 = vmatprep.subr.mxu0 0.0
    %594 = vmatpush1.xpose.msra.mxu0 0.0
    %595 = vmatprep.subr.mxu0 0.0
    %596 = vmatpush1.xpose.msra.mxu0 0.0
    %597 = vmatprep.subr.mxu0 0.0
    %598 = vmatpush1.xpose.msra.mxu0 0.0
    %599 = vmatprep.subr.mxu0 0.0
    %600 = vmatpush1.xpose.msra.mxu0 0.0
    %601 = vmatprep.subr.mxu0 0.0
    %602 = vmatpush1.xpose.msra.mxu0 0.0
    %603 = vmatprep.subr.mxu0 0.0
    %604 = vmatpush1.xpose.msra.mxu0 0.0
    %605 = vmatprep.subr.mxu0 0.0
    %606 = vmatpush1.xpose.msra.mxu0 0.0
    %607 = vmatprep.subr.mxu0 0.0
    %608 = vmatpush1.xpose.msra.mxu0 0.0
    %609 = vmatprep.subr.mxu0 0.0
    %610 = vmatpush1.xpose.msra.mxu0 0.0
    %611 = vmatprep.subr.mxu0 0.0
    %612 = vmatpush1.xpose.msra.mxu0 0.0
    %613 = vmatprep.subr.mxu0 0.0
    %614 = vmatpush1.xpose.msra.mxu0 0.0
    %615 = vmatprep.subr.mxu0 0.0
    %616 = vmatpush1.xpose.msra.mxu0 0.0
    %617 = vmatprep.subr.mxu0 0.0
    %618 = vmatpush1.xpose.msra.mxu0 0.0
    %619 = vmatprep.subr.mxu0 0.0
    %620 = vmatpush1.xpose.msra.mxu0 0.0
    %621 = vmatprep.subr.mxu0 0.0
    %622 = vmatpush1.xpose.msra.mxu0 0.0
    %623 = vmatprep.subr.mxu0 0.0
    %624 = vmatpush1.xpose.msra.mxu0 0.0
    %625 = vmatprep.subr.mxu0 0.0
    %626 = vmatpush1.xpose.msra.mxu0 0.0
    %627 = vmatprep.subr.mxu0 0.0
    %628 = vmatpush1.xpose.msra.mxu0 0.0
    %629 = vmatprep.subr.mxu0 0.0
    %630 = vmatpush1.xpose.msra.mxu0 0.0
    %631 = vmatprep.subr.mxu0 0.0
    %632 = vmatpush1.xpose.msra.mxu0 0.0
    %633 = vmatprep.subr.mxu0 0.0
    %634 = vmatpush1.xpose.msra.mxu0 0.0
    %635 = vmatprep.subr.mxu0 0.0
    %636 = vmatpush1.xpose.msra.mxu0 0.0
    %637 = vmatprep.subr.mxu0 0.0
    %638 = vmatpush1.xpose.msra.mxu0 0.0
    %639 = vmatprep.subr.mxu0 0.0
    %640 = vmatpush1.xpose.msra.mxu0 0.0
    %641 = vmatprep.subr.mxu0 0.0
    %642 = vmatpush1.xpose.msra.mxu0 0.0
    %643 = vmatprep.subr.mxu0 0.0
    %644 = vmatpush1.xpose.msra.mxu0 0.0
    %645 = vmatprep.subr.mxu0 0.0
    %646 = vmatpush1.xpose.msra.mxu0 0.0
    %647 = vmatprep.subr.mxu0 0.0
    %648 = vmatpush1.xpose.msra.mxu0 0.0
    %649 = vmatprep.subr.mxu0 0.0
    %650 = vmatpush1.xpose.msra.mxu0 0.0
    %651 = vmatprep.subr.mxu0 0.0
    %652 = vmatpush1.xpose.msra.mxu0 0.0
    %653 = vmatprep.mubr.f32.mxu0 0.0
    %654 = vmatmul.mubr.f32.gmra.mrb[0].mxu0 %v585
    %v655 = vpop.f32.mrb[0].mxu0
    %v656 = vadd.f32 0.0, %v655
    %v657 = vpop.f32.mrb[0].mxu0
    %658 = vdwg.mxu0
    %659 = vrot.lane.b32.xlu0 %v247, 120
    %v660 = vpop.permute.xlu0 %659
    %661 = vrot.lane.b32.xlu0 %v247, 88
    %v662 = vpop.permute.xlu0 %661
    %v663 = vsel %vm253, %v660, 0
    %v665 = vsel %vm253, %v662, 0
    %667 = vmatprep.subr.mxu0 0.0
    %668 = vmatpush1.xpose.msra.mxu0 %v665
    %669 = vmatprep.subr.mxu0 0.0
    %670 = vmatpush1.xpose.msra.mxu0 0.0
    %671 = vmatprep.subr.mxu0 0.0
    %672 = vmatpush1.xpose.msra.mxu0 0.0
    %673 = vmatprep.subr.mxu0 0.0
    %674 = vmatpush1.xpose.msra.mxu0 0.0
    %675 = vmatprep.subr.mxu0 0.0
    %676 = vmatpush1.xpose.msra.mxu0 0.0
    %677 = vmatprep.subr.mxu0 0.0
    %678 = vmatpush1.xpose.msra.mxu0 0.0
    %679 = vmatprep.subr.mxu0 0.0
    %680 = vmatpush1.xpose.msra.mxu0 0.0
    %681 = vmatprep.subr.mxu0 0.0
    %682 = vmatpush1.xpose.msra.mxu0 0.0
    %683 = vmatprep.subr.mxu0 0.0
    %684 = vmatpush1.xpose.msra.mxu0 0.0
    %685 = vmatprep.subr.mxu0 0.0
    %686 = vmatpush1.xpose.msra.mxu0 0.0
    %687 = vmatprep.subr.mxu0 0.0
    %688 = vmatpush1.xpose.msra.mxu0 0.0
    %689 = vmatprep.subr.mxu0 0.0
    %690 = vmatpush1.xpose.msra.mxu0 0.0
    %691 = vmatprep.subr.mxu0 0.0
    %692 = vmatpush1.xpose.msra.mxu0 0.0
    %693 = vmatprep.subr.mxu0 0.0
    %694 = vmatpush1.xpose.msra.mxu0 0.0
    %695 = vmatprep.subr.mxu0 0.0
    %696 = vmatpush1.xpose.msra.mxu0 0.0
    %697 = vmatprep.subr.mxu0 0.0
    %698 = vmatpush1.xpose.msra.mxu0 0.0
    %699 = vmatprep.subr.mxu0 0.0
    %700 = vmatpush1.xpose.msra.mxu0 0.0
    %701 = vmatprep.subr.mxu0 0.0
    %702 = vmatpush1.xpose.msra.mxu0 0.0
    %703 = vmatprep.subr.mxu0 0.0
    %704 = vmatpush1.xpose.msra.mxu0 0.0
    %705 = vmatprep.subr.mxu0 0.0
    %706 = vmatpush1.xpose.msra.mxu0 0.0
    %707 = vmatprep.subr.mxu0 0.0
    %708 = vmatpush1.xpose.msra.mxu0 0.0
    %709 = vmatprep.subr.mxu0 0.0
    %710 = vmatpush1.xpose.msra.mxu0 0.0
    %711 = vmatprep.subr.mxu0 0.0
    %712 = vmatpush1.xpose.msra.mxu0 0.0
    %713 = vmatprep.subr.mxu0 0.0
    %714 = vmatpush1.xpose.msra.mxu0 0.0
    %715 = vmatprep.subr.mxu0 0.0
    %716 = vmatpush1.xpose.msra.mxu0 0.0
    %717 = vmatprep.subr.mxu0 0.0
    %718 = vmatpush1.xpose.msra.mxu0 0.0
    %719 = vmatprep.subr.mxu0 0.0
    %720 = vmatpush1.xpose.msra.mxu0 0.0
    %721 = vmatprep.subr.mxu0 0.0
    %722 = vmatpush1.xpose.msra.mxu0 0.0
    %723 = vmatprep.subr.mxu0 0.0
    %724 = vmatpush1.xpose.msra.mxu0 0.0
    %725 = vmatprep.subr.mxu0 0.0
    %726 = vmatpush1.xpose.msra.mxu0 0.0
    %727 = vmatprep.subr.mxu0 0.0
    %728 = vmatpush1.xpose.msra.mxu0 0.0
    %729 = vmatprep.subr.mxu0 0.0
    %730 = vmatpush1.xpose.msra.mxu0 0.0
    %731 = vmatprep.mubr.f32.mxu0 0.0
    %732 = vmatmul.mubr.f32.gmra.mrb[0].mxu0 %v663
    %v733 = vpop.f32.mrb[0].mxu0
    %v734 = vadd.f32 0.0, %v733
    %v735 = vpop.f32.mrb[0].mxu0
    %736 = vdwg.mxu0
    %v737 = vmul.f32 %v656, 0.35355338
    %v738 = vmul.f32 %v734, 0.35355338
    %v739 = vsel %vm253, %v737, -inf
    %740 = vmax.xlane.f32.xlu0 %v739
    %v741 = vpop.xlane.xlu0 %740
    %v742 = vsel %vm253, %v738, -inf
    %743 = vmax.xlane.f32.xlu0 %v742
    %v744 = vpop.xlane.xlu0 %743
    %v745 = vsub.f32 %v737, %v741
    %v746 = vsub.f32 %v738, %v744
    %v747 = vmul.f32 %v745, 1.442695
    %v748 = vpow.pop %v747
    %v749 = vmul.f32 %v746, 1.442695
    %v750 = vpow.pop %v749
    %v751 = vsel %vm253, %v748, 0.0
    %752 = vadd.xlane.f32.xlu0 %v751
    %v753 = vpop.xlane.xlu0 %752
    %v754 = vsel %vm253, %v750, 0.0
    %755 = vadd.xlane.f32.xlu0 %v754
    %v756 = vpop.xlane.xlu0 %755
    %v757 = vrcp.pop %v753
    %v758 = vmul.f32 %v748, %v757
    %v759 = vrcp.pop %v756
    %v760 = vmul.f32 %v750, %v759
    %761 = vrot.lane.b32.xlu0 %v242, 56
    %v762 = vpop.permute.xlu0 %761
    %v765 = vsel %vm253, %v758, 0
    %767 = vmatprep.subr.mxu0 0.0
    %768 = vmatpush1.msra.mxu0 %v762
    %769 = vmatprep.subr.mxu0 0.0
    %770 = vmatpush1.msra.mxu0 0.0
    %771 = vmatprep.subr.mxu0 0.0
    %772 = vmatpush1.msra.mxu0 0.0
    %773 = vmatprep.subr.mxu0 0.0
    %774 = vmatpush1.msra.mxu0 0.0
    %775 = vmatprep.subr.mxu0 0.0
    %776 = vmatpush1.msra.mxu0 0.0
    %777 = vmatprep.subr.mxu0 0.0
    %778 = vmatpush1.msra.mxu0 0.0
    %779 = vmatprep.subr.mxu0 0.0
    %780 = vmatpush1.msra.mxu0 0.0
    %781 = vmatprep.subr.mxu0 0.0
    %782 = vmatpush1.msra.mxu0 0.0
    %783 = vmatprep.subr.mxu0 0.0
    %784 = vmatpush1.msra.mxu0 0.0
    %785 = vmatprep.subr.mxu0 0.0
    %786 = vmatpush1.msra.mxu0 0.0
    %787 = vmatprep.subr.mxu0 0.0
    %788 = vmatpush1.msra.mxu0 0.0
    %789 = vmatprep.subr.mxu0 0.0
    %790 = vmatpush1.msra.mxu0 0.0
    %791 = vmatprep.subr.mxu0 0.0
    %792 = vmatpush1.msra.mxu0 0.0
    %793 = vmatprep.subr.mxu0 0.0
    %794 = vmatpush1.msra.mxu0 0.0
    %795 = vmatprep.subr.mxu0 0.0
    %796 = vmatpush1.msra.mxu0 0.0
    %797 = vmatprep.subr.mxu0 0.0
    %798 = vmatpush1.msra.mxu0 0.0
    %799 = vmatprep.subr.mxu0 0.0
    %800 = vmatpush1.msra.mxu0 0.0
    %801 = vmatprep.subr.mxu0 0.0
    %802 = vmatpush1.msra.mxu0 0.0
    %803 = vmatprep.subr.mxu0 0.0
    %804 = vmatpush1.msra.mxu0 0.0
    %805 = vmatprep.subr.mxu0 0.0
    %806 = vmatpush1.msra.mxu0 0.0
    %807 = vmatprep.subr.mxu0 0.0
    %808 = vmatpush1.msra.mxu0 0.0
    %809 = vmatprep.subr.mxu0 0.0
    %810 = vmatpush1.msra.mxu0 0.0
    %811 = vmatprep.subr.mxu0 0.0
    %812 = vmatpush1.msra.mxu0 0.0
    %813 = vmatprep.subr.mxu0 0.0
    %814 = vmatpush1.msra.mxu0 0.0
    %815 = vmatprep.subr.mxu0 0.0
    %816 = vmatpush1.msra.mxu0 0.0
    %817 = vmatprep.subr.mxu0 0.0
    %818 = vmatpush1.msra.mxu0 0.0
    %819 = vmatprep.subr.mxu0 0.0
    %820 = vmatpush1.msra.mxu0 0.0
    %821 = vmatprep.subr.mxu0 0.0
    %822 = vmatpush1.msra.mxu0 0.0
    %823 = vmatprep.subr.mxu0 0.0
    %824 = vmatpush1.msra.mxu0 0.0
    %825 = vmatprep.subr.mxu0 0.0
    %826 = vmatpush1.msra.mxu0 0.0
    %827 = vmatprep.subr.mxu0 0.0
    %828 = vmatpush1.msra.mxu0 0.0
    %829 = vmatprep.subr.mxu0 0.0
    %830 = vmatpush1.msra.mxu0 0.0
    %831 = vmatprep.mubr.f32.mxu0 0.0
    %832 = vmatmul.mubr.f32.gmra.mrb[0].mxu0 %v765
    %v833 = vpop.f32.mrb[0].mxu0
    %v834 = vadd.f32 0.0, %v833
    %v835 = vpop.f32.mrb[0].mxu0
    %836 = vdwg.mxu0
    %837 = vrot.lane.b32.xlu0 %v247, 56
    %v838 = vpop.permute.xlu0 %837
    %v841 = vsel %vm253, %v760, 0
    %843 = vmatprep.subr.mxu0 0.0
    %844 = vmatpush1.msra.mxu0 %v838
    %845 = vmatprep.subr.mxu0 0.0
    %846 = vmatpush1.msra.mxu0 0.0
    %847 = vmatprep.subr.mxu0 0.0
    %848 = vmatpush1.msra.mxu0 0.0
    %849 = vmatprep.subr.mxu0 0.0
    %850 = vmatpush1.msra.mxu0 0.0
    %851 = vmatprep.subr.mxu0 0.0
    %852 = vmatpush1.msra.mxu0 0.0
    %853 = vmatprep.subr.mxu0 0.0
    %854 = vmatpush1.msra.mxu0 0.0
    %855 = vmatprep.subr.mxu0 0.0
    %856 = vmatpush1.msra.mxu0 0.0
    %857 = vmatprep.subr.mxu0 0.0
    %858 = vmatpush1.msra.mxu0 0.0
    %859 = vmatprep.subr.mxu0 0.0
    %860 = vmatpush1.msra.mxu0 0.0
    %861 = vmatprep.subr.mxu0 0.0
    %862 = vmatpush1.msra.mxu0 0.0
    %863 = vmatprep.subr.mxu0 0.0
    %864 = vmatpush1.msra.mxu0 0.0
    %865 = vmatprep.subr.mxu0 0.0
    %866 = vmatpush1.msra.mxu0 0.0
    %867 = vmatprep.subr.mxu0 0.0
    %868 = vmatpush1.msra.mxu0 0.0
    %869 = vmatprep.subr.mxu0 0.0
    %870 = vmatpush1.msra.mxu0 0.0
    %871 = vmatprep.subr.mxu0 0.0
    %872 = vmatpush1.msra.mxu0 0.0
    %873 = vmatprep.subr.mxu0 0.0
    %874 = vmatpush1.msra.mxu0 0.0
    %875 = vmatprep.subr.mxu0 0.0
    %876 = vmatpush1.msra.mxu0 0.0
    %877 = vmatprep.subr.mxu0 0.0
    %878 = vmatpush1.msra.mxu0 0.0
    %879 = vmatprep.subr.mxu0 0.0
    %880 = vmatpush1.msra.mxu0 0.0
    %881 = vmatprep.subr.mxu0 0.0
    %882 = vmatpush1.msra.mxu0 0.0
    %883 = vmatprep.subr.mxu0 0.0
    %884 = vmatpush1.msra.mxu0 0.0
    %885 = vmatprep.subr.mxu0 0.0
    %886 = vmatpush1.msra.mxu0 0.0
    %887 = vmatprep.subr.mxu0 0.0
    %888 = vmatpush1.msra.mxu0 0.0
    %889 = vmatprep.subr.mxu0 0.0
    %890 = vmatpush1.msra.mxu0 0.0
    %891 = vmatprep.subr.mxu0 0.0
    %892 = vmatpush1.msra.mxu0 0.0
    %893 = vmatprep.subr.mxu0 0.0
    %894 = vmatpush1.msra.mxu0 0.0
    %895 = vmatprep.subr.mxu0 0.0
    %896 = vmatpush1.msra.mxu0 0.0
    %897 = vmatprep.subr.mxu0 0.0
    %898 = vmatpush1.msra.mxu0 0.0
    %899 = vmatprep.subr.mxu0 0.0
    %900 = vmatpush1.msra.mxu0 0.0
    %901 = vmatprep.subr.mxu0 0.0
    %902 = vmatpush1.msra.mxu0 0.0
    %903 = vmatprep.subr.mxu0 0.0
    %904 = vmatpush1.msra.mxu0 0.0
    %905 = vmatprep.subr.mxu0 0.0
    %906 = vmatpush1.msra.mxu0 0.0
    %907 = vmatprep.mubr.f32.mxu0 0.0
    %908 = vmatmul.mubr.f32.gmra.mrb[0].mxu0 %v841
    %v909 = vpop.f32.mrb[0].mxu0
    %v910 = vadd.f32 0.0, %v909
    %v911 = vpop.f32.mrb[0].mxu0
    %912 = vdwg.mxu0
    %913 = vrot.lane.b32.xlu0 %v242, 112
    %v914 = vpop.permute.xlu0 %913
    %915 = vrot.lane.b32.xlu0 %v242, 80
    %v916 = vpop.permute.xlu0 %915
    %v917 = vsel %vm253, %v914, 0
    %v919 = vsel %vm253, %v916, 0
    %921 = vmatprep.subr.mxu0 0.0
    %922 = vmatpush1.xpose.msra.mxu0 %v919
    %923 = vmatprep.subr.mxu0 0.0
    %924 = vmatpush1.xpose.msra.mxu0 0.0
    %925 = vmatprep.subr.mxu0 0.0
    %926 = vmatpush1.xpose.msra.mxu0 0.0
    %927 = vmatprep.subr.mxu0 0.0
    %928 = vmatpush1.xpose.msra.mxu0 0.0
    %929 = vmatprep.subr.mxu0 0.0
    %930 = vmatpush1.xpose.msra.mxu0 0.0
    %931 = vmatprep.subr.mxu0 0.0
    %932 = vmatpush1.xpose.msra.mxu0 0.0
    %933 = vmatprep.subr.mxu0 0.0
    %934 = vmatpush1.xpose.msra.mxu0 0.0
    %935 = vmatprep.subr.mxu0 0.0
    %936 = vmatpush1.xpose.msra.mxu0 0.0
    %937 = vmatprep.subr.mxu0 0.0
    %938 = vmatpush1.xpose.msra.mxu0 0.0
    %939 = vmatprep.subr.mxu0 0.0
    %940 = vmatpush1.xpose.msra.mxu0 0.0
    %941 = vmatprep.subr.mxu0 0.0
    %942 = vmatpush1.xpose.msra.mxu0 0.0
    %943 = vmatprep.subr.mxu0 0.0
    %944 = vmatpush1.xpose.msra.mxu0 0.0
    %945 = vmatprep.subr.mxu0 0.0
    %946 = vmatpush1.xpose.msra.mxu0 0.0
    %947 = vmatprep.subr.mxu0 0.0
    %948 = vmatpush1.xpose.msra.mxu0 0.0
    %949 = vmatprep.subr.mxu0 0.0
    %950 = vmatpush1.xpose.msra.mxu0 0.0
    %951 = vmatprep.subr.mxu0 0.0
    %952 = vmatpush1.xpose.msra.mxu0 0.0
    %953 = vmatprep.subr.mxu0 0.0
    %954 = vmatpush1.xpose.msra.mxu0 0.0
    %955 = vmatprep.subr.mxu0 0.0
    %956 = vmatpush1.xpose.msra.mxu0 0.0
    %957 = vmatprep.subr.mxu0 0.0
    %958 = vmatpush1.xpose.msra.mxu0 0.0
    %959 = vmatprep.subr.mxu0 0.0
    %960 = vmatpush1.xpose.msra.mxu0 0.0
    %961 = vmatprep.subr.mxu0 0.0
    %962 = vmatpush1.xpose.msra.mxu0 0.0
    %963 = vmatprep.subr.mxu0 0.0
    %964 = vmatpush1.xpose.msra.mxu0 0.0
    %965 = vmatprep.subr.mxu0 0.0
    %966 = vmatpush1.xpose.msra.mxu0 0.0
    %967 = vmatprep.subr.mxu0 0.0
    %968 = vmatpush1.xpose.msra.mxu0 0.0
    %969 = vmatprep.subr.mxu0 0.0
    %970 = vmatpush1.xpose.msra.mxu0 0.0
    %971 = vmatprep.subr.mxu0 0.0
    %972 = vmatpush1.xpose.msra.mxu0 0.0
    %973 = vmatprep.subr.mxu0 0.0
    %974 = vmatpush1.xpose.msra.mxu0 0.0
    %975 = vmatprep.subr.mxu0 0.0
    %976 = vmatpush1.xpose.msra.mxu0 0.0
    %977 = vmatprep.subr.mxu0 0.0
    %978 = vmatpush1.xpose.msra.mxu0 0.0
    %979 = vmatprep.subr.mxu0 0.0
    %980 = vmatpush1.xpose.msra.mxu0 0.0
    %981 = vmatprep.subr.mxu0 0.0
    %982 = vmatpush1.xpose.msra.mxu0 0.0
    %983 = vmatprep.subr.mxu0 0.0
    %984 = vmatpush1.xpose.msra.mxu0 0.0
    %985 = vmatprep.mubr.f32.mxu0 0.0
    %986 = vmatmul.mubr.f32.gmra.mrb[0].mxu0 %v917
    %v987 = vpop.f32.mrb[0].mxu0
    %v988 = vadd.f32 0.0, %v987
    %v989 = vpop.f32.mrb[0].mxu0
    %990 = vdwg.mxu0
    %991 = vrot.lane.b32.xlu0 %v247, 112
    %v992 = vpop.permute.xlu0 %991
    %993 = vrot.lane.b32.xlu0 %v247, 80
    %v994 = vpop.permute.xlu0 %993
    %v995 = vsel %vm253, %v992, 0
    %v997 = vsel %vm253, %v994, 0
    %999 = vmatprep.subr.mxu0 0.0
    %1000 = vmatpush1.xpose.msra.mxu0 %v997
    %1001 = vmatprep.subr.mxu0 0.0
    %1002 = vmatpush1.xpose.msra.mxu0 0.0
    %1003 = vmatprep.subr.mxu0 0.0
    %1004 = vmatpush1.xpose.msra.mxu0 0.0
    %1005 = vmatprep.subr.mxu0 0.0
    %1006 = vmatpush1.xpose.msra.mxu0 0.0
    %1007 = vmatprep.subr.mxu0 0.0
    %1008 = vmatpush1.xpose.msra.mxu0 0.0
    %1009 = vmatprep.subr.mxu0 0.0
    %1010 = vmatpush1.xpose.msra.mxu0 0.0
    %1011 = vmatprep.subr.mxu0 0.0
    %1012 = vmatpush1.xpose.msra.mxu0 0.0
    %1013 = vmatprep.subr.mxu0 0.0
    %1014 = vmatpush1.xpose.msra.mxu0 0.0
    %1015 = vmatprep.subr.mxu0 0.0
    %1016 = vmatpush1.xpose.msra.mxu0 0.0
    %1017 = vmatprep.subr.mxu0 0.0
    %1018 = vmatpush1.xpose.msra.mxu0 0.0
    %1019 = vmatprep.subr.mxu0 0.0
    %1020 = vmatpush1.xpose.msra.mxu0 0.0
    %1021 = vmatprep.subr.mxu0 0.0
    %1022 = vmatpush1.xpose.msra.mxu0 0.0
    %1023 = vmatprep.subr.mxu0 0.0
    %1024 = vmatpush1.xpose.msra.mxu0 0.0
    %1025 = vmatprep.subr.mxu0 0.0
    %1026 = vmatpush1.xpose.msra.mxu0 0.0
    %1027 = vmatprep.subr.mxu0 0.0
    %1028 = vmatpush1.xpose.msra.mxu0 0.0
    %1029 = vmatprep.subr.mxu0 0.0
    %1030 = vmatpush1.xpose.msra.mxu0 0.0
    %1031 = vmatprep.subr.mxu0 0.0
    %1032 = vmatpush1.xpose.msra.mxu0 0.0
    %1033 = vmatprep.subr.mxu0 0.0
    %1034 = vmatpush1.xpose.msra.mxu0 0.0
    %1035 = vmatprep.subr.mxu0 0.0
    %1036 = vmatpush1.xpose.msra.mxu0 0.0
    %1037 = vmatprep.subr.mxu0 0.0
    %1038 = vmatpush1.xpose.msra.mxu0 0.0
    %1039 = vmatprep.subr.mxu0 0.0
    %1040 = vmatpush1.xpose.msra.mxu0 0.0
    %1041 = vmatprep.subr.mxu0 0.0
    %1042 = vmatpush1.xpose.msra.mxu0 0.0
    %1043 = vmatprep.subr.mxu0 0.0
    %1044 = vmatpush1.xpose.msra.mxu0 0.0
    %1045 = vmatprep.subr.mxu0 0.0
    %1046 = vmatpush1.xpose.msra.mxu0 0.0
    %1047 = vmatprep.subr.mxu0 0.0
    %1048 = vmatpush1.xpose.msra.mxu0 0.0
    %1049 = vmatprep.subr.mxu0 0.0
    %1050 = vmatpush1.xpose.msra.mxu0 0.0
    %1051 = vmatprep.subr.mxu0 0.0
    %1052 = vmatpush1.xpose.msra.mxu0 0.0
    %1053 = vmatprep.subr.mxu0 0.0
    %1054 = vmatpush1.xpose.msra.mxu0 0.0
    %1055 = vmatprep.subr.mxu0 0.0
    %1056 = vmatpush1.xpose.msra.mxu0 0.0
    %1057 = vmatprep.subr.mxu0 0.0
    %1058 = vmatpush1.xpose.msra.mxu0 0.0
    %1059 = vmatprep.subr.mxu0 0.0
    %1060 = vmatpush1.xpose.msra.mxu0 0.0
    %1061 = vmatprep.subr.mxu0 0.0
    %1062 = vmatpush1.xpose.msra.mxu0 0.0
    %1063 = vmatprep.mubr.f32.mxu0 0.0
    %1064 = vmatmul.mubr.f32.gmra.mrb[0].mxu0 %v995
    %v1065 = vpop.f32.mrb[0].mxu0
    %v1066 = vadd.f32 0.0, %v1065
    %v1067 = vpop.f32.mrb[0].mxu0
    %1068 = vdwg.mxu0
    %v1069 = vmul.f32 %v988, 0.35355338
    %v1070 = vmul.f32 %v1066, 0.35355338
    %v1071 = vsel %vm253, %v1069, -inf
    %1072 = vmax.xlane.f32.xlu0 %v1071
    %v1073 = vpop.xlane.xlu0 %1072
    %v1074 = vsel %vm253, %v1070, -inf
    %1075 = vmax.xlane.f32.xlu0 %v1074
    %v1076 = vpop.xlane.xlu0 %1075
    %v1077 = vsub.f32 %v1069, %v1073
    %v1078 = vsub.f32 %v1070, %v1076
    %v1079 = vmul.f32 %v1077, 1.442695
    %v1080 = vpow.pop %v1079
    %v1081 = vmul.f32 %v1078, 1.442695
    %v1082 = vpow.pop %v1081
    %v1083 = vsel %vm253, %v1080, 0.0
    %1084 = vadd.xlane.f32.xlu0 %v1083
    %v1085 = vpop.xlane.xlu0 %1084
    %v1086 = vsel %vm253, %v1082, 0.0
    %1087 = vadd.xlane.f32.xlu0 %v1086
    %v1088 = vpop.xlane.xlu0 %1087
    %v1089 = vrcp.pop %v1085
    %v1090 = vmul.f32 %v1080, %v1089
    %v1091 = vrcp.pop %v1088
    %v1092 = vmul.f32 %v1082, %v1091
    %1093 = vrot.lane.b32.xlu0 %v242, 48
    %v1094 = vpop.permute.xlu0 %1093
    %v1097 = vsel %vm253, %v1090, 0
    %1099 = vmatprep.subr.mxu0 0.0
    %1100 = vmatpush1.msra.mxu0 %v1094
    %1101 = vmatprep.subr.mxu0 0.0
    %1102 = vmatpush1.msra.mxu0 0.0
    %1103 = vmatprep.subr.mxu0 0.0
    %1104 = vmatpush1.msra.mxu0 0.0
    %1105 = vmatprep.subr.mxu0 0.0
    %1106 = vmatpush1.msra.mxu0 0.0
    %1107 = vmatprep.subr.mxu0 0.0
    %1108 = vmatpush1.msra.mxu0 0.0
    %1109 = vmatprep.subr.mxu0 0.0
    %1110 = vmatpush1.msra.mxu0 0.0
    %1111 = vmatprep.subr.mxu0 0.0
    %1112 = vmatpush1.msra.mxu0 0.0
    %1113 = vmatprep.subr.mxu0 0.0
    %1114 = vmatpush1.msra.mxu0 0.0
    %1115 = vmatprep.subr.mxu0 0.0
    %1116 = vmatpush1.msra.mxu0 0.0
    %1117 = vmatprep.subr.mxu0 0.0
    %1118 = vmatpush1.msra.mxu0 0.0
    %1119 = vmatprep.subr.mxu0 0.0
    %1120 = vmatpush1.msra.mxu0 0.0
    %1121 = vmatprep.subr.mxu0 0.0
    %1122 = vmatpush1.msra.mxu0 0.0
    %1123 = vmatprep.subr.mxu0 0.0
    %1124 = vmatpush1.msra.mxu0 0.0
    %1125 = vmatprep.subr.mxu0 0.0
    %1126 = vmatpush1.msra.mxu0 0.0
    %1127 = vmatprep.subr.mxu0 0.0
    %1128 = vmatpush1.msra.mxu0 0.0
    %1129 = vmatprep.subr.mxu0 0.0
    %1130 = vmatpush1.msra.mxu0 0.0
    %1131 = vmatprep.subr.mxu0 0.0
    %1132 = vmatpush1.msra.mxu0 0.0
    %1133 = vmatprep.subr.mxu0 0.0
    %1134 = vmatpush1.msra.mxu0 0.0
    %1135 = vmatprep.subr.mxu0 0.0
    %1136 = vmatpush1.msra.mxu0 0.0
    %1137 = vmatprep.subr.mxu0 0.0
    %1138 = vmatpush1.msra.mxu0 0.0
    %1139 = vmatprep.subr.mxu0 0.0
    %1140 = vmatpush1.msra.mxu0 0.0
    %1141 = vmatprep.subr.mxu0 0.0
    %1142 = vmatpush1.msra.mxu0 0.0
    %1143 = vmatprep.subr.mxu0 0.0
    %1144 = vmatpush1.msra.mxu0 0.0
    %1145 = vmatprep.subr.mxu0 0.0
    %1146 = vmatpush1.msra.mxu0 0.0
    %1147 = vmatprep.subr.mxu0 0.0
    %1148 = vmatpush1.msra.mxu0 0.0
    %1149 = vmatprep.subr.mxu0 0.0
    %1150 = vmatpush1.msra.mxu0 0.0
    %1151 = vmatprep.subr.mxu0 0.0
    %1152 = vmatpush1.msra.mxu0 0.0
    %1153 = vmatprep.subr.mxu0 0.0
    %1154 = vmatpush1.msra.mxu0 0.0
    %1155 = vmatprep.subr.mxu0 0.0
    %1156 = vmatpush1.msra.mxu0 0.0
    %1157 = vmatprep.subr.mxu0 0.0
    %1158 = vmatpush1.msra.mxu0 0.0
    %1159 = vmatprep.subr.mxu0 0.0
    %1160 = vmatpush1.msra.mxu0 0.0
    %1161 = vmatprep.subr.mxu0 0.0
    %1162 = vmatpush1.msra.mxu0 0.0
    %1163 = vmatprep.mubr.f32.mxu0 0.0
    %1164 = vmatmul.mubr.f32.gmra.mrb[0].mxu0 %v1097
    %v1165 = vpop.f32.mrb[0].mxu0
    %v1166 = vadd.f32 0.0, %v1165
    %v1167 = vpop.f32.mrb[0].mxu0
    %1168 = vdwg.mxu0
    %1169 = vrot.lane.b32.xlu0 %v247, 48
    %v1170 = vpop.permute.xlu0 %1169
    %v1173 = vsel %vm253, %v1092, 0
    %1175 = vmatprep.subr.mxu0 0.0
    %1176 = vmatpush1.msra.mxu0 %v1170
    %1177 = vmatprep.subr.mxu0 0.0
    %1178 = vmatpush1.msra.mxu0 0.0
    %1179 = vmatprep.subr.mxu0 0.0
    %1180 = vmatpush1.msra.mxu0 0.0
    %1181 = vmatprep.subr.mxu0 0.0
    %1182 = vmatpush1.msra.mxu0 0.0
    %1183 = vmatprep.subr.mxu0 0.0
    %1184 = vmatpush1.msra.mxu0 0.0
    %1185 = vmatprep.subr.mxu0 0.0
    %1186 = vmatpush1.msra.mxu0 0.0
    %1187 = vmatprep.subr.mxu0 0.0
    %1188 = vmatpush1.msra.mxu0 0.0
    %1189 = vmatprep.subr.mxu0 0.0
    %1190 = vmatpush1.msra.mxu0 0.0
    %1191 = vmatprep.subr.mxu0 0.0
    %1192 = vmatpush1.msra.mxu0 0.0
    %1193 = vmatprep.subr.mxu0 0.0
    %1194 = vmatpush1.msra.mxu0 0.0
    %1195 = vmatprep.subr.mxu0 0.0
    %1196 = vmatpush1.msra.mxu0 0.0
    %1197 = vmatprep.subr.mxu0 0.0
    %1198 = vmatpush1.msra.mxu0 0.0
    %1199 = vmatprep.subr.mxu0 0.0
    %1200 = vmatpush1.msra.mxu0 0.0
    %1201 = vmatprep.subr.mxu0 0.0
    %1202 = vmatpush1.msra.mxu0 0.0
    %1203 = vmatprep.subr.mxu0 0.0
    %1204 = vmatpush1.msra.mxu0 0.0
    %1205 = vmatprep.subr.mxu0 0.0
    %1206 = vmatpush1.msra.mxu0 0.0
    %1207 = vmatprep.subr.mxu0 0.0
    %1208 = vmatpush1.msra.mxu0 0.0
    %1209 = vmatprep.subr.mxu0 0.0
    %1210 = vmatpush1.msra.mxu0 0.0
    %1211 = vmatprep.subr.mxu0 0.0
    %1212 = vmatpush1.msra.mxu0 0.0
    %1213 = vmatprep.subr.mxu0 0.0
    %1214 = vmatpush1.msra.mxu0 0.0
    %1215 = vmatprep.subr.mxu0 0.0
    %1216 = vmatpush1.msra.mxu0 0.0
    %1217 = vmatprep.subr.mxu0 0.0
    %1218 = vmatpush1.msra.mxu0 0.0
    %1219 = vmatprep.subr.mxu0 0.0
    %1220 = vmatpush1.msra.mxu0 0.0
    %1221 = vmatprep.subr.mxu0 0.0
    %1222 = vmatpush1.msra.mxu0 0.0
    %1223 = vmatprep.subr.mxu0 0.0
    %1224 = vmatpush1.msra.mxu0 0.0
    %1225 = vmatprep.subr.mxu0 0.0
    %1226 = vmatpush1.msra.mxu0 0.0
    %1227 = vmatprep.subr.mxu0 0.0
    %1228 = vmatpush1.msra.mxu0 0.0
    %1229 = vmatprep.subr.mxu0 0.0
    %1230 = vmatpush1.msra.mxu0 0.0
    %1231 = vmatprep.subr.mxu0 0.0
    %1232 = vmatpush1.msra.mxu0 0.0
    %1233 = vmatprep.subr.mxu0 0.0
    %1234 = vmatpush1.msra.mxu0 0.0
    %1235 = vmatprep.subr.mxu0 0.0
    %1236 = vmatpush1.msra.mxu0 0.0
    %1237 = vmatprep.subr.mxu0 0.0
    %1238 = vmatpush1.msra.mxu0 0.0
    %1239 = vmatprep.mubr.f32.mxu0 0.0
    %1240 = vmatmul.mubr.f32.gmra.mrb[0].mxu0 %v1173
    %v1241 = vpop.f32.mrb[0].mxu0
    %v1242 = vadd.f32 0.0, %v1241
    %v1243 = vpop.f32.mrb[0].mxu0
    %1244 = vdwg.mxu0
    %1245 = vrot.lane.b32.xlu0 %v242, 104
    %v1246 = vpop.permute.xlu0 %1245
    %1247 = vrot.lane.b32.xlu0 %v242, 72
    %v1248 = vpop.permute.xlu0 %1247
    %v1249 = vsel %vm253, %v1246, 0
    %v1251 = vsel %vm253, %v1248, 0
    %1253 = vmatprep.subr.mxu0 0.0
    %1254 = vmatpush1.xpose.msra.mxu0 %v1251
    %1255 = vmatprep.subr.mxu0 0.0
    %1256 = vmatpush1.xpose.msra.mxu0 0.0
    %1257 = vmatprep.subr.mxu0 0.0
    %1258 = vmatpush1.xpose.msra.mxu0 0.0
    %1259 = vmatprep.subr.mxu0 0.0
    %1260 = vmatpush1.xpose.msra.mxu0 0.0
    %1261 = vmatprep.subr.mxu0 0.0
    %1262 = vmatpush1.xpose.msra.mxu0 0.0
    %1263 = vmatprep.subr.mxu0 0.0
    %1264 = vmatpush1.xpose.msra.mxu0 0.0
    %1265 = vmatprep.subr.mxu0 0.0
    %1266 = vmatpush1.xpose.msra.mxu0 0.0
    %1267 = vmatprep.subr.mxu0 0.0
    %1268 = vmatpush1.xpose.msra.mxu0 0.0
    %1269 = vmatprep.subr.mxu0 0.0
    %1270 = vmatpush1.xpose.msra.mxu0 0.0
    %1271 = vmatprep.subr.mxu0 0.0
    %1272 = vmatpush1.xpose.msra.mxu0 0.0
    %1273 = vmatprep.subr.mxu0 0.0
    %1274 = vmatpush1.xpose.msra.mxu0 0.0
    %1275 = vmatprep.subr.mxu0 0.0
    %1276 = vmatpush1.xpose.msra.mxu0 0.0
    %1277 = vmatprep.subr.mxu0 0.0
    %1278 = vmatpush1.xpose.msra.mxu0 0.0
    %1279 = vmatprep.subr.mxu0 0.0
    %1280 = vmatpush1.xpose.msra.mxu0 0.0
    %1281 = vmatprep.subr.mxu0 0.0
    %1282 = vmatpush1.xpose.msra.mxu0 0.0
    %1283 = vmatprep.subr.mxu0 0.0
    %1284 = vmatpush1.xpose.msra.mxu0 0.0
    %1285 = vmatprep.subr.mxu0 0.0
    %1286 = vmatpush1.xpose.msra.mxu0 0.0
    %1287 = vmatprep.subr.mxu0 0.0
    %1288 = vmatpush1.xpose.msra.mxu0 0.0
    %1289 = vmatprep.subr.mxu0 0.0
    %1290 = vmatpush1.xpose.msra.mxu0 0.0
    %1291 = vmatprep.subr.mxu0 0.0
    %1292 = vmatpush1.xpose.msra.mxu0 0.0
    %1293 = vmatprep.subr.mxu0 0.0
    %1294 = vmatpush1.xpose.msra.mxu0 0.0
    %1295 = vmatprep.subr.mxu0 0.0
    %1296 = vmatpush1.xpose.msra.mxu0 0.0
    %1297 = vmatprep.subr.mxu0 0.0
    %1298 = vmatpush1.xpose.msra.mxu0 0.0
    %1299 = vmatprep.subr.mxu0 0.0
    %1300 = vmatpush1.xpose.msra.mxu0 0.0
    %1301 = vmatprep.subr.mxu0 0.0
    %1302 = vmatpush1.xpose.msra.mxu0 0.0
    %1303 = vmatprep.subr.mxu0 0.0
    %1304 = vmatpush1.xpose.msra.mxu0 0.0
    %1305 = vmatprep.subr.mxu0 0.0
    %1306 = vmatpush1.xpose.msra.mxu0 0.0
    %1307 = vmatprep.subr.mxu0 0.0
    %1308 = vmatpush1.xpose.msra.mxu0 0.0
    %1309 = vmatprep.subr.mxu0 0.0
    %1310 = vmatpush1.xpose.msra.mxu0 0.0
    %1311 = vmatprep.subr.mxu0 0.0
    %1312 = vmatpush1.xpose.msra.mxu0 0.0
    %1313 = vmatprep.subr.mxu0 0.0
    %1314 = vmatpush1.xpose.msra.mxu0 0.0
    %1315 = vmatprep.subr.mxu0 0.0
    %1316 = vmatpush1.xpose.msra.mxu0 0.0
    %1317 = vmatprep.mubr.f32.mxu0 0.0
    %1318 = vmatmul.mubr.f32.gmra.mrb[0].mxu0 %v1249
    %v1319 = vpop.f32.mrb[0].mxu0
    %v1320 = vadd.f32 0.0, %v1319
    %v1321 = vpop.f32.mrb[0].mxu0
    %1322 = vdwg.mxu0
    %1323 = vrot.lane.b32.xlu0 %v247, 104
    %v1324 = vpop.permute.xlu0 %1323
    %1325 = vrot.lane.b32.xlu0 %v247, 72
    %v1326 = vpop.permute.xlu0 %1325
    %v1327 = vsel %vm253, %v1324, 0
    %v1329 = vsel %vm253, %v1326, 0
    %1331 = vmatprep.subr.mxu0 0.0
    %1332 = vmatpush1.xpose.msra.mxu0 %v1329
    %1333 = vmatprep.subr.mxu0 0.0
    %1334 = vmatpush1.xpose.msra.mxu0 0.0
    %1335 = vmatprep.subr.mxu0 0.0
    %1336 = vmatpush1.xpose.msra.mxu0 0.0
    %1337 = vmatprep.subr.mxu0 0.0
    %1338 = vmatpush1.xpose.msra.mxu0 0.0
    %1339 = vmatprep.subr.mxu0 0.0
    %1340 = vmatpush1.xpose.msra.mxu0 0.0
    %1341 = vmatprep.subr.mxu0 0.0
    %1342 = vmatpush1.xpose.msra.mxu0 0.0
    %1343 = vmatprep.subr.mxu0 0.0
    %1344 = vmatpush1.xpose.msra.mxu0 0.0
    %1345 = vmatprep.subr.mxu0 0.0
    %1346 = vmatpush1.xpose.msra.mxu0 0.0
    %1347 = vmatprep.subr.mxu0 0.0
    %1348 = vmatpush1.xpose.msra.mxu0 0.0
    %1349 = vmatprep.subr.mxu0 0.0
    %1350 = vmatpush1.xpose.msra.mxu0 0.0
    %1351 = vmatprep.subr.mxu0 0.0
    %1352 = vmatpush1.xpose.msra.mxu0 0.0
    %1353 = vmatprep.subr.mxu0 0.0
    %1354 = vmatpush1.xpose.msra.mxu0 0.0
    %1355 = vmatprep.subr.mxu0 0.0
    %1356 = vmatpush1.xpose.msra.mxu0 0.0
    %1357 = vmatprep.subr.mxu0 0.0
    %1358 = vmatpush1.xpose.msra.mxu0 0.0
    %1359 = vmatprep.subr.mxu0 0.0
    %1360 = vmatpush1.xpose.msra.mxu0 0.0
    %1361 = vmatprep.subr.mxu0 0.0
    %1362 = vmatpush1.xpose.msra.mxu0 0.0
    %1363 = vmatprep.subr.mxu0 0.0
    %1364 = vmatpush1.xpose.msra.mxu0 0.0
    %1365 = vmatprep.subr.mxu0 0.0
    %1366 = vmatpush1.xpose.msra.mxu0 0.0
    %1367 = vmatprep.subr.mxu0 0.0
    %1368 = vmatpush1.xpose.msra.mxu0 0.0
    %1369 = vmatprep.subr.mxu0 0.0
    %1370 = vmatpush1.xpose.msra.mxu0 0.0
    %1371 = vmatprep.subr.mxu0 0.0
    %1372 = vmatpush1.xpose.msra.mxu0 0.0
    %1373 = vmatprep.subr.mxu0 0.0
    %1374 = vmatpush1.xpose.msra.mxu0 0.0
    %1375 = vmatprep.subr.mxu0 0.0
    %1376 = vmatpush1.xpose.msra.mxu0 0.0
    %1377 = vmatprep.subr.mxu0 0.0
    %1378 = vmatpush1.xpose.msra.mxu0 0.0
    %1379 = vmatprep.subr.mxu0 0.0
    %1380 = vmatpush1.xpose.msra.mxu0 0.0
    %1381 = vmatprep.subr.mxu0 0.0
    %1382 = vmatpush1.xpose.msra.mxu0 0.0
    %1383 = vmatprep.subr.mxu0 0.0
    %1384 = vmatpush1.xpose.msra.mxu0 0.0
    %1385 = vmatprep.subr.mxu0 0.0
    %1386 = vmatpush1.xpose.msra.mxu0 0.0
    %1387 = vmatprep.subr.mxu0 0.0
    %1388 = vmatpush1.xpose.msra.mxu0 0.0
    %1389 = vmatprep.subr.mxu0 0.0
    %1390 = vmatpush1.xpose.msra.mxu0 0.0
    %1391 = vmatprep.subr.mxu0 0.0
    %1392 = vmatpush1.xpose.msra.mxu0 0.0
    %1393 = vmatprep.subr.mxu0 0.0
    %1394 = vmatpush1.xpose.msra.mxu0 0.0
    %1395 = vmatprep.mubr.f32.mxu0 0.0
    %1396 = vmatmul.mubr.f32.gmra.mrb[0].mxu0 %v1327
    %v1397 = vpop.f32.mrb[0].mxu0
    %v1398 = vadd.f32 0.0, %v1397
    %v1399 = vpop.f32.mrb[0].mxu0
    %1400 = vdwg.mxu0
    %v1401 = vmul.f32 %v1320, 0.35355338
    %v1402 = vmul.f32 %v1398, 0.35355338
    %v1403 = vsel %vm253, %v1401, -inf
    %1404 = vmax.xlane.f32.xlu0 %v1403
    %v1405 = vpop.xlane.xlu0 %1404
    %v1406 = vsel %vm253, %v1402, -inf
    %1407 = vmax.xlane.f32.xlu0 %v1406
    %v1408 = vpop.xlane.xlu0 %1407
    %v1409 = vsub.f32 %v1401, %v1405
    %v1410 = vsub.f32 %v1402, %v1408
    %v1411 = vmul.f32 %v1409, 1.442695
    %v1412 = vpow.pop %v1411
    %v1413 = vmul.f32 %v1410, 1.442695
    %v1414 = vpow.pop %v1413
    %v1415 = vsel %vm253, %v1412, 0.0
    %1416 = vadd.xlane.f32.xlu0 %v1415
    %v1417 = vpop.xlane.xlu0 %1416
    %v1418 = vsel %vm253, %v1414, 0.0
    %1419 = vadd.xlane.f32.xlu0 %v1418
    %v1420 = vpop.xlane.xlu0 %1419
    %v1421 = vrcp.pop %v1417
    %v1422 = vmul.f32 %v1412, %v1421
    %v1423 = vrcp.pop %v1420
    %v1424 = vmul.f32 %v1414, %v1423
    %1425 = vrot.lane.b32.xlu0 %v242, 40
    %v1426 = vpop.permute.xlu0 %1425
    %v1429 = vsel %vm253, %v1422, 0
    %1431 = vmatprep.subr.mxu0 0.0
    %1432 = vmatpush1.msra.mxu0 %v1426
    %1433 = vmatprep.subr.mxu0 0.0
    %1434 = vmatpush1.msra.mxu0 0.0
    %1435 = vmatprep.subr.mxu0 0.0
    %1436 = vmatpush1.msra.mxu0 0.0
    %1437 = vmatprep.subr.mxu0 0.0
    %1438 = vmatpush1.msra.mxu0 0.0
    %1439 = vmatprep.subr.mxu0 0.0
    %1440 = vmatpush1.msra.mxu0 0.0
    %1441 = vmatprep.subr.mxu0 0.0
    %1442 = vmatpush1.msra.mxu0 0.0
    %1443 = vmatprep.subr.mxu0 0.0
    %1444 = vmatpush1.msra.mxu0 0.0
    %1445 = vmatprep.subr.mxu0 0.0
    %1446 = vmatpush1.msra.mxu0 0.0
    %1447 = vmatprep.subr.mxu0 0.0
    %1448 = vmatpush1.msra.mxu0 0.0
    %1449 = vmatprep.subr.mxu0 0.0
    %1450 = vmatpush1.msra.mxu0 0.0
    %1451 = vmatprep.subr.mxu0 0.0
    %1452 = vmatpush1.msra.mxu0 0.0
    %1453 = vmatprep.subr.mxu0 0.0
    %1454 = vmatpush1.msra.mxu0 0.0
    %1455 = vmatprep.subr.mxu0 0.0
    %1456 = vmatpush1.msra.mxu0 0.0
    %1457 = vmatprep.subr.mxu0 0.0
    %1458 = vmatpush1.msra.mxu0 0.0
    %1459 = vmatprep.subr.mxu0 0.0
    %1460 = vmatpush1.msra.mxu0 0.0
    %1461 = vmatprep.subr.mxu0 0.0
    %1462 = vmatpush1.msra.mxu0 0.0
    %1463 = vmatprep.subr.mxu0 0.0
    %1464 = vmatpush1.msra.mxu0 0.0
    %1465 = vmatprep.subr.mxu0 0.0
    %1466 = vmatpush1.msra.mxu0 0.0
    %1467 = vmatprep.subr.mxu0 0.0
    %1468 = vmatpush1.msra.mxu0 0.0
    %1469 = vmatprep.subr.mxu0 0.0
    %1470 = vmatpush1.msra.mxu0 0.0
    %1471 = vmatprep.subr.mxu0 0.0
    %1472 = vmatpush1.msra.mxu0 0.0
    %1473 = vmatprep.subr.mxu0 0.0
    %1474 = vmatpush1.msra.mxu0 0.0
    %1475 = vmatprep.subr.mxu0 0.0
    %1476 = vmatpush1.msra.mxu0 0.0
    %1477 = vmatprep.subr.mxu0 0.0
    %1478 = vmatpush1.msra.mxu0 0.0
    %1479 = vmatprep.subr.mxu0 0.0
    %1480 = vmatpush1.msra.mxu0 0.0
    %1481 = vmatprep.subr.mxu0 0.0
    %1482 = vmatpush1.msra.mxu0 0.0
    %1483 = vmatprep.subr.mxu0 0.0
    %1484 = vmatpush1.msra.mxu0 0.0
    %1485 = vmatprep.subr.mxu0 0.0
    %1486 = vmatpush1.msra.mxu0 0.0
    %1487 = vmatprep.subr.mxu0 0.0
    %1488 = vmatpush1.msra.mxu0 0.0
    %1489 = vmatprep.subr.mxu0 0.0
    %1490 = vmatpush1.msra.mxu0 0.0
    %1491 = vmatprep.subr.mxu0 0.0
    %1492 = vmatpush1.msra.mxu0 0.0
    %1493 = vmatprep.subr.mxu0 0.0
    %1494 = vmatpush1.msra.mxu0 0.0
    %1495 = vmatprep.mubr.f32.mxu0 0.0
    %1496 = vmatmul.mubr.f32.gmra.mrb[0].mxu0 %v1429
    %v1497 = vpop.f32.mrb[0].mxu0
    %v1498 = vadd.f32 0.0, %v1497
    %v1499 = vpop.f32.mrb[0].mxu0
    %1500 = vdwg.mxu0
    %1501 = vrot.lane.b32.xlu0 %v247, 40
    %v1502 = vpop.permute.xlu0 %1501
    %v1505 = vsel %vm253, %v1424, 0
    %1507 = vmatprep.subr.mxu0 0.0
    %1508 = vmatpush1.msra.mxu0 %v1502
    %1509 = vmatprep.subr.mxu0 0.0
    %1510 = vmatpush1.msra.mxu0 0.0
    %1511 = vmatprep.subr.mxu0 0.0
    %1512 = vmatpush1.msra.mxu0 0.0
    %1513 = vmatprep.subr.mxu0 0.0
    %1514 = vmatpush1.msra.mxu0 0.0
    %1515 = vmatprep.subr.mxu0 0.0
    %1516 = vmatpush1.msra.mxu0 0.0
    %1517 = vmatprep.subr.mxu0 0.0
    %1518 = vmatpush1.msra.mxu0 0.0
    %1519 = vmatprep.subr.mxu0 0.0
    %1520 = vmatpush1.msra.mxu0 0.0
    %1521 = vmatprep.subr.mxu0 0.0
    %1522 = vmatpush1.msra.mxu0 0.0
    %1523 = vmatprep.subr.mxu0 0.0
    %1524 = vmatpush1.msra.mxu0 0.0
    %1525 = vmatprep.subr.mxu0 0.0
    %1526 = vmatpush1.msra.mxu0 0.0
    %1527 = vmatprep.subr.mxu0 0.0
    %1528 = vmatpush1.msra.mxu0 0.0
    %1529 = vmatprep.subr.mxu0 0.0
    %1530 = vmatpush1.msra.mxu0 0.0
    %1531 = vmatprep.subr.mxu0 0.0
    %1532 = vmatpush1.msra.mxu0 0.0
    %1533 = vmatprep.subr.mxu0 0.0
    %1534 = vmatpush1.msra.mxu0 0.0
    %1535 = vmatprep.subr.mxu0 0.0
    %1536 = vmatpush1.msra.mxu0 0.0
    %1537 = vmatprep.subr.mxu0 0.0
    %1538 = vmatpush1.msra.mxu0 0.0
    %1539 = vmatprep.subr.mxu0 0.0
    %1540 = vmatpush1.msra.mxu0 0.0
    %1541 = vmatprep.subr.mxu0 0.0
    %1542 = vmatpush1.msra.mxu0 0.0
    %1543 = vmatprep.subr.mxu0 0.0
    %1544 = vmatpush1.msra.mxu0 0.0
    %1545 = vmatprep.subr.mxu0 0.0
    %1546 = vmatpush1.msra.mxu0 0.0
    %1547 = vmatprep.subr.mxu0 0.0
    %1548 = vmatpush1.msra.mxu0 0.0
    %1549 = vmatprep.subr.mxu0 0.0
    %1550 = vmatpush1.msra.mxu0 0.0
    %1551 = vmatprep.subr.mxu0 0.0
    %1552 = vmatpush1.msra.mxu0 0.0
    %1553 = vmatprep.subr.mxu0 0.0
    %1554 = vmatpush1.msra.mxu0 0.0
    %1555 = vmatprep.subr.mxu0 0.0
    %1556 = vmatpush1.msra.mxu0 0.0
    %1557 = vmatprep.subr.mxu0 0.0
    %1558 = vmatpush1.msra.mxu0 0.0
    %1559 = vmatprep.subr.mxu0 0.0
    %1560 = vmatpush1.msra.mxu0 0.0
    %1561 = vmatprep.subr.mxu0 0.0
    %1562 = vmatpush1.msra.mxu0 0.0
    %1563 = vmatprep.subr.mxu0 0.0
    %1564 = vmatpush1.msra.mxu0 0.0
    %1565 = vmatprep.subr.mxu0 0.0
    %1566 = vmatpush1.msra.mxu0 0.0
    %1567 = vmatprep.subr.mxu0 0.0
    %1568 = vmatpush1.msra.mxu0 0.0
    %1569 = vmatprep.subr.mxu0 0.0
    %1570 = vmatpush1.msra.mxu0 0.0
    %1571 = vmatprep.mubr.f32.mxu0 0.0
    %1572 = vmatmul.mubr.f32.gmra.mrb[0].mxu0 %v1505
    %v1573 = vpop.f32.mrb[0].mxu0
    %v1574 = vadd.f32 0.0, %v1573
    %v1575 = vpop.f32.mrb[0].mxu0
    %1576 = vdwg.mxu0
    %1579 = vrot.lane.b32.xlu0 %v834, 8
    %v1580 = vpop.permute.xlu0 %1579
    %1581 = vrot.lane.b32.xlu0 %v910, 8
    %v1582 = vpop.permute.xlu0 %1581
    %1587 = vrot.lane.b32.xlu0 %v1166, 16
    %v1588 = vpop.permute.xlu0 %1587
    %1589 = vrot.lane.b32.xlu0 %v1242, 16
    %v1590 = vpop.permute.xlu0 %1589
    %1595 = vrot.lane.b32.xlu0 %v1498, 24
    %v1596 = vpop.permute.xlu0 %1595
    %1597 = vrot.lane.b32.xlu0 %v1574, 24
    %v1598 = vpop.permute.xlu0 %1597
    %v1601 = vsel %vm253, %v502, %v1580
    %v1602 = vsel %vm253, %v578, %v1582
    %vm1603 = vcmask 130048
    %v1604 = vsel %vm1603, %v1601, %v1588
    %v1605 = vsel %vm1603, %v1602, %v1590
    %vm1606 = vcmask 195584
    %v1607 = vsel %vm1606, %v1604, %v1596
    %v1608 = vsel %vm1606, %v1605, %v1598
    %v1609 = vld [vmem:[%s1 + $0x58] sm:$0xff]
    %v1610 = vld [vmem:[%s1 + $0x60] sm:$0xff]
    %v1611 = vld [vmem:[%s1 + $0x68] sm:$0xff]
    %v1612 = vld [vmem:[%s1 + $0x70] sm:$0xff]
    %v1614 = vsel %vm120, %v1607, 0
    %v1617 = vsel %vm120, %v1608, 0
    %1619 = vmatprep.subr.mxu0 0.0
    %1620 = vmatpush1.msra.mxu0 %v1609
    %1621 = vmatprep.subr.mxu0 0.0
    %1622 = vmatpush1.msra.mxu0 %v1610
    %1623 = vmatprep.subr.mxu0 0.0
    %1624 = vmatpush1.msra.mxu0 %v1611
    %1625 = vmatprep.subr.mxu0 0.0
    %1626 = vmatpush1.msra.mxu0 %v1612
    %1627 = vmatprep.subr.mxu0 0.0
    %1628 = vmatpush1.msra.mxu0 0.0
    %1629 = vmatprep.subr.mxu0 0.0
    %1630 = vmatpush1.msra.mxu0 0.0
    %1631 = vmatprep.subr.mxu0 0.0
    %1632 = vmatpush1.msra.mxu0 0.0
    %1633 = vmatprep.subr.mxu0 0.0
    %1634 = vmatpush1.msra.mxu0 0.0
    %1635 = vmatprep.subr.mxu0 0.0
    %1636 = vmatpush1.msra.mxu0 0.0
    %1637 = vmatprep.subr.mxu0 0.0
    %1638 = vmatpush1.msra.mxu0 0.0
    %1639 = vmatprep.subr.mxu0 0.0
    %1640 = vmatpush1.msra.mxu0 0.0
    %1641 = vmatprep.subr.mxu0 0.0
    %1642 = vmatpush1.msra.mxu0 0.0
    %1643 = vmatprep.subr.mxu0 0.0
    %1644 = vmatpush1.msra.mxu0 0.0
    %1645 = vmatprep.subr.mxu0 0.0
    %1646 = vmatpush1.msra.mxu0 0.0
    %1647 = vmatprep.subr.mxu0 0.0
    %1648 = vmatpush1.msra.mxu0 0.0
    %1649 = vmatprep.subr.mxu0 0.0
    %1650 = vmatpush1.msra.mxu0 0.0
    %1651 = vmatprep.subr.mxu0 0.0
    %1652 = vmatpush1.msra.mxu0 0.0
    %1653 = vmatprep.subr.mxu0 0.0
    %1654 = vmatpush1.msra.mxu0 0.0
    %1655 = vmatprep.subr.mxu0 0.0
    %1656 = vmatpush1.msra.mxu0 0.0
    %1657 = vmatprep.subr.mxu0 0.0
    %1658 = vmatpush1.msra.mxu0 0.0
    %1659 = vmatprep.subr.mxu0 0.0
    %1660 = vmatpush1.msra.mxu0 0.0
    %1661 = vmatprep.subr.mxu0 0.0
    %1662 = vmatpush1.msra.mxu0 0.0
    %1663 = vmatprep.subr.mxu0 0.0
    %1664 = vmatpush1.msra.mxu0 0.0
    %1665 = vmatprep.subr.mxu0 0.0
    %1666 = vmatpush1.msra.mxu0 0.0
    %1667 = vmatprep.subr.mxu0 0.0
    %1668 = vmatpush1.msra.mxu0 0.0
    %1669 = vmatprep.subr.mxu0 0.0
    %1670 = vmatpush1.msra.mxu0 0.0
    %1671 = vmatprep.subr.mxu0 0.0
    %1672 = vmatpush1.msra.mxu0 0.0
    %1673 = vmatprep.subr.mxu0 0.0
    %1674 = vmatpush1.msra.mxu0 0.0
    %1675 = vmatprep.subr.mxu0 0.0
    %1676 = vmatpush1.msra.mxu0 0.0
    %1677 = vmatprep.subr.mxu0 0.0
    %1678 = vmatpush1.msra.mxu0 0.0
    %1679 = vmatprep.subr.mxu0 0.0
    %1680 = vmatpush1.msra.mxu0 0.0
    %1681 = vmatprep.subr.mxu0 0.0
    %1682 = vmatpush1.msra.mxu0 0.0
    %1683 = vmatprep.mubr.f32.mxu0 0.0
    %1684 = vmatmul.mubr.f32.gmra.mrb[0].mxu0 %v1614
    %v1685 = vpop.f32.mrb[0].mxu0
    %v1686 = vadd.f32 0.0, %v1685
    %v1687 = vpop.f32.mrb[0].mxu0
    %1688 = vmatprep.mubr.f32.mxu0 0.0
    %1689 = vmatmul.mubr.f32.gmra.mrb[0].mxu0 %v1617
    %v1690 = vpop.f32.mrb[0].mxu0
    %v1691 = vadd.f32 0.0, %v1690
    %v1692 = vpop.f32.mrb[0].mxu0
    %1693 = vdwg.mxu0
    %v1694 = vadd.f32 %v110, %v1686
    %v1695 = vadd.f32 %v115, %v1691
    %v1696 = vld [vmem:[%s1 + $0x78] sm:$0x1]
    %v1697 = vlaneseq
    %v1698 = vshrl.u32 %v1697, 7
    %v1699 = vsub.s32 0, %v1698
    %v1700 = vrot.slane %v1696, %v1699
    %v1701 = vadd.f32 %v1694, %v1700
    %v1702 = vadd.f32 %v1695, %v1700
    %v1703 = vld [vmem:[%s1 + $0x80] sm:$0x1]
    %v1704 = vld [vmem:[%s1 + $0x88] sm:$0x1]
    %v1705 = vsel %vm120, %v1701, 0.0
    %1706 = vadd.xlane.f32.xlu0 %v1705
    %v1707 = vpop.xlane.xlu0 %1706
    %v1708 = vsel %vm120, %v1702, 0.0
    %1709 = vadd.xlane.f32.xlu0 %v1708
    %v1710 = vpop.xlane.xlu0 %1709
    %v1711 = vmul.f32 %v1707, %v127
    %v1712 = vmul.f32 %v1710, %v127
    %v1713 = vsub.f32 %v1701, %v1711
    %v1714 = vsub.f32 %v1702, %v1712
    %v1715 = vmul.f32 %v1713, %v1713
    %v1716 = vmul.f32 %v1714, %v1714
    %v1717 = vsel %vm120, %v1715, 0.0
    %1718 = vadd.xlane.f32.xlu0 %v1717
    %v1719 = vpop.xlane.xlu0 %1718
    %v1720 = vsel %vm120, %v1716, 0.0
    %1721 = vadd.xlane.f32.xlu0 %v1720
    %v1722 = vpop.xlane.xlu0 %1721
    %v1723 = vmul.f32 %v1719, %v127
    %v1724 = vmul.f32 %v1722, %v127
    %v1725 = vadd.f32 %v1723, 1e-05
    %v1726 = vadd.f32 %v1724, 1e-05
    %v1727 = vrsqrt.pop %v1725
    %v1728 = vrsqrt.pop %v1726
    %v1729 = vmul.f32 %v1713, %v1727
    %v1730 = vmul.f32 %v1714, %v1728
    %v1731 = vlaneseq
    %v1732 = vshrl.u32 %v1731, 7
    %v1733 = vsub.s32 0, %v1732
    %v1734 = vrot.slane %v1703, %v1733
    %v1735 = vmul.f32 %v1729, %v1734
    %v1736 = vmul.f32 %v1730, %v1734
    %v1737 = vlaneseq
    %v1738 = vshrl.u32 %v1737, 7
    %v1739 = vsub.s32 0, %v1738
    %v1740 = vrot.slane %v1704, %v1739
    %v1741 = vadd.f32 %v1735, %v1740
    %v1742 = vadd.f32 %v1736, %v1740
    %v1743 = vld [vmem:[%s2] sm:$0xff]
    %v1744 = vld [vmem:[%s2 + $0x8] sm:$0xff]
    %v1745 = vld [vmem:[%s2 + $0x10] sm:$0xff]
    %v1746 = vld [vmem:[%s2 + $0x18] sm:$0xff]
    %v1747 = vld [vmem:[%s2 + $0x20] sm:$0x1]
    %v1748 = vlaneseq
    %v1749 = vshrl.u32 %v1748, 7
    %v1750 = vsub.s32 0, %v1749
    %v1751 = vrot.slane %v1747, %v1750
    %v1753 = vsel %vm120, %v1741, 0
    %v1756 = vsel %vm120, %v1742, 0
    %1758 = vmatprep.subr.mxu0 0.0
    %1759 = vmatpush1.msra.mxu0 %v1743
    %1760 = vmatprep.subr.mxu0 0.0
    %1761 = vmatpush1.msra.mxu0 %v1744
    %1762 = vmatprep.subr.mxu0 0.0
    %1763 = vmatpush1.msra.mxu0 %v1745
    %1764 = vmatprep.subr.mxu0 0.0
    %1765 = vmatpush1.msra.mxu0 %v1746
    %1766 = vmatprep.subr.mxu0 0.0
    %1767 = vmatpush1.msra.mxu0 0.0
    %1768 = vmatprep.subr.mxu0 0.0
    %1769 = vmatpush1.msra.mxu0 0.0
    %1770 = vmatprep.subr.mxu0 0.0
    %1771 = vmatpush1.msra.mxu0 0.0
    %1772 = vmatprep.subr.mxu0 0.0
    %1773 = vmatpush1.msra.mxu0 0.0
    %1774 = vmatprep.subr.mxu0 0.0
    %1775 = vmatpush1.msra.mxu0 0.0
    %1776 = vmatprep.subr.mxu0 0.0
    %1777 = vmatpush1.msra.mxu0 0.0
    %1778 = vmatprep.subr.mxu0 0.0
    %1779 = vmatpush1.msra.mxu0 0.0
    %1780 = vmatprep.subr.mxu0 0.0
    %1781 = vmatpush1.msra.mxu0 0.0
    %1782 = vmatprep.subr.mxu0 0.0
    %1783 = vmatpush1.msra.mxu0 0.0
    %1784 = vmatprep.subr.mxu0 0.0
    %1785 = vmatpush1.msra.mxu0 0.0
    %1786 = vmatprep.subr.mxu0 0.0
    %1787 = vmatpush1.msra.mxu0 0.0
    %1788 = vmatprep.subr.mxu0 0.0
    %1789 = vmatpush1.msra.mxu0 0.0
    %1790 = vmatprep.subr.mxu0 0.0
    %1791 = vmatpush1.msra.mxu0 0.0
    %1792 = vmatprep.subr.mxu0 0.0
    %1793 = vmatpush1.msra.mxu0 0.0
    %1794 = vmatprep.subr.mxu0 0.0
    %1795 = vmatpush1.msra.mxu0 0.0
    %1796 = vmatprep.subr.mxu0 0.0
    %1797 = vmatpush1.msra.mxu0 0.0
    %1798 = vmatprep.subr.mxu0 0.0
    %1799 = vmatpush1.msra.mxu0 0.0
    %1800 = vmatprep.subr.mxu0 0.0
    %1801 = vmatpush1.msra.mxu0 0.0
    %1802 = vmatprep.subr.mxu0 0.0
    %1803 = vmatpush1.msra.mxu0 0.0
    %1804 = vmatprep.subr.mxu0 0.0
    %1805 = vmatpush1.msra.mxu0 0.0
    %1806 = vmatprep.subr.mxu0 0.0
    %1807 = vmatpush1.msra.mxu0 0.0
    %1808 = vmatprep.subr.mxu0 0.0
    %1809 = vmatpush1.msra.mxu0 0.0
    %1810 = vmatprep.subr.mxu0 0.0
    %1811 = vmatpush1.msra.mxu0 0.0
    %1812 = vmatprep.subr.mxu0 0.0
    %1813 = vmatpush1.msra.mxu0 0.0
    %1814 = vmatprep.subr.mxu0 0.0
    %1815 = vmatpush1.msra.mxu0 0.0
    %1816 = vmatprep.subr.mxu0 0.0
    %1817 = vmatpush1.msra.mxu0 0.0
    %1818 = vmatprep.subr.mxu0 0.0
    %1819 = vmatpush1.msra.mxu0 0.0
    %1820 = vmatprep.subr.mxu0 0.0
    %1821 = vmatpush1.msra.mxu0 0.0
    %1822 = vmatprep.mubr.f32.mxu0 0.0
    %1823 = vmatmul.mubr.f32.gmra.mrb[0].mxu0 %v1753
    %v1824 = vpop.f32.mrb[0].mxu0
    %v1825 = vadd.f32 %v1751, %v1824
    %v1826 = vpop.f32.mrb[0].mxu0
    %1827 = vmatprep.mubr.f32.mxu0 0.0
    %1828 = vmatmul.mubr.f32.gmra.mrb[0].mxu0 %v1756
    %v1829 = vpop.f32.mrb[0].mxu0
    %v1830 = vadd.f32 %v1751, %v1829
    %v1831 = vpop.f32.mrb[0].mxu0
    %1832 = vdwg.mxu0
    %v1833 = vmax.f32 %v1825, 0.0
    %v1834 = vmax.f32 %v1830, 0.0
    %v1835 = vld [vmem:[%s1 + $0x90] sm:$0xff]
    %v1836 = vld [vmem:[%s1 + $0x98] sm:$0xff]
    %v1837 = vld [vmem:[%s1 + $0xa0] sm:$0xff]
    %v1838 = vld [vmem:[%s1 + $0xa8] sm:$0xff]
    %v1839 = vld [vmem:[%s1 + $0xb0] sm:$0xff]
    %v1840 = vld [vmem:[%s1 + $0xb8] sm:$0xff]
    %v1841 = vld [vmem:[%s1 + $0xc0] sm:$0xff]
    %v1842 = vld [vmem:[%s1 + $0xc8] sm:$0xff]
    %v1844 = vsel %vm36, %v1833, 0
    %v1847 = vsel %vm36, %v1834, 0
    %1849 = vmatprep.subr.mxu0 0.0
    %1850 = vmatpush1.msra.mxu0 %v1835
    %1851 = vmatprep.subr.mxu0 0.0
    %1852 = vmatpush1.msra.mxu0 %v1836
    %1853 = vmatprep.subr.mxu0 0.0
    %1854 = vmatpush1.msra.mxu0 %v1837
    %1855 = vmatprep.subr.mxu0 0.0
    %1856 = vmatpush1.msra.mxu0 %v1838
    %1857 = vmatprep.subr.mxu0 0.0
    %1858 = vmatpush1.msra.mxu0 %v1839
    %1859 = vmatprep.subr.mxu0 0.0
    %1860 = vmatpush1.msra.mxu0 %v1840
    %1861 = vmatprep.subr.mxu0 0.0
    %1862 = vmatpush1.msra.mxu0 %v1841
    %1863 = vmatprep.subr.mxu0 0.0
    %1864 = vmatpush1.msra.mxu0 %v1842
    %1865 = vmatprep.subr.mxu0 0.0
    %1866 = vmatpush1.msra.mxu0 0.0
    %1867 = vmatprep.subr.mxu0 0.0
    %1868 = vmatpush1.msra.mxu0 0.0
    %1869 = vmatprep.subr.mxu0 0.0
    %1870 = vmatpush1.msra.mxu0 0.0
    %1871 = vmatprep.subr.mxu0 0.0
    %1872 = vmatpush1.msra.mxu0 0.0
    %1873 = vmatprep.subr.mxu0 0.0
    %1874 = vmatpush1.msra.mxu0 0.0
    %1875 = vmatprep.subr.mxu0 0.0
    %1876 = vmatpush1.msra.mxu0 0.0
    %1877 = vmatprep.subr.mxu0 0.0
    %1878 = vmatpush1.msra.mxu0 0.0
    %1879 = vmatprep.subr.mxu0 0.0
    %1880 = vmatpush1.msra.mxu0 0.0
    %1881 = vmatprep.subr.mxu0 0.0
    %1882 = vmatpush1.msra.mxu0 0.0
    %1883 = vmatprep.subr.mxu0 0.0
    %1884 = vmatpush1.msra.mxu0 0.0
    %1885 = vmatprep.subr.mxu0 0.0
    %1886 = vmatpush1.msra.mxu0 0.0
    %1887 = vmatprep.subr.mxu0 0.0
    %1888 = vmatpush1.msra.mxu0 0.0
    %1889 = vmatprep.subr.mxu0 0.0
    %1890 = vmatpush1.msra.mxu0 0.0
    %1891 = vmatprep.subr.mxu0 0.0
    %1892 = vmatpush1.msra.mxu0 0.0
    %1893 = vmatprep.subr.mxu0 0.0
    %1894 = vmatpush1.msra.mxu0 0.0
    %1895 = vmatprep.subr.mxu0 0.0
    %1896 = vmatpush1.msra.mxu0 0.0
    %1897 = vmatprep.subr.mxu0 0.0
    %1898 = vmatpush1.msra.mxu0 0.0
    %1899 = vmatprep.subr.mxu0 0.0
    %1900 = vmatpush1.msra.mxu0 0.0
    %1901 = vmatprep.subr.mxu0 0.0
    %1902 = vmatpush1.msra.mxu0 0.0
    %1903 = vmatprep.subr.mxu0 0.0
    %1904 = vmatpush1.msra.mxu0 0.0
    %1905 = vmatprep.subr.mxu0 0.0
    %1906 = vmatpush1.msra.mxu0 0.0
    %1907 = vmatprep.subr.mxu0 0.0
    %1908 = vmatpush1.msra.mxu0 0.0
    %1909 = vmatprep.subr.mxu0 0.0
    %1910 = vmatpush1.msra.mxu0 0.0
    %1911 = vmatprep.subr.mxu0 0.0
    %1912 = vmatpush1.msra.mxu0 0.0
    %1913 = vmatprep.mubr.f32.mxu0 0.0
    %1914 = vmatmul.mubr.f32.gmra.mrb[0].mxu0 %v1844
    %v1915 = vpop.f32.mrb[0].mxu0
    %v1916 = vadd.f32 0.0, %v1915
    %v1917 = vpop.f32.mrb[0].mxu0
    %1918 = vmatprep.mubr.f32.mxu0 0.0
    %1919 = vmatmul.mubr.f32.gmra.mrb[0].mxu0 %v1847
    %v1920 = vpop.f32.mrb[0].mxu0
    %v1921 = vadd.f32 0.0, %v1920
    %v1922 = vpop.f32.mrb[0].mxu0
    %1923 = vdwg.mxu0
    %v1924 = vadd.f32 %v1701, %v1916
    %v1925 = vadd.f32 %v1702, %v1921
    %v1926 = vld [vmem:[%s1 + $0xd0] sm:$0x1]
    %v1927 = vlaneseq
    %v1928 = vshrl.u32 %v1927, 7
    %v1929 = vsub.s32 0, %v1928
    %v1930 = vrot.slane %v1926, %v1929
    %v1931 = vadd.f32 %v1924, %v1930
    %v1932 = vadd.f32 %v1925, %v1930
    %v1933 = vld [vmem:[%s1 + $0xd8] sm:$0x1]
    %v1934 = vld [vmem:[%s1 + $0xe0] sm:$0x1]
    %v1935 = vsel %vm120, %v1931, 0.0
    %1936 = vadd.xlane.f32.xlu0 %v1935
    %v1937 = vpop.xlane.xlu0 %1936
    %v1938 = vsel %vm120, %v1932, 0.0
    %1939 = vadd.xlane.f32.xlu0 %v1938
    %v1940 = vpop.xlane.xlu0 %1939
    %v1941 = vmul.f32 %v1937, %v127
    %v1942 = vmul.f32 %v1940, %v127
    %v1943 = vsub.f32 %v1931, %v1941
    %v1944 = vsub.f32 %v1932, %v1942
    %v1945 = vmul.f32 %v1943, %v1943
    %v1946 = vmul.f32 %v1944, %v1944
    %v1947 = vsel %vm120, %v1945, 0.0
    %1948 = vadd.xlane.f32.xlu0 %v1947
    %v1949 = vpop.xlane.xlu0 %1948
    %v1950 = vsel %vm120, %v1946, 0.0
    %1951 = vadd.xlane.f32.xlu0 %v1950
    %v1952 = vpop.xlane.xlu0 %1951
    %v1953 = vmul.f32 %v1949, %v127
    %v1954 = vmul.f32 %v1952, %v127
    %v1955 = vadd.f32 %v1953, 1e-05
    %v1956 = vadd.f32 %v1954, 1e-05
    %v1957 = vrsqrt.pop %v1955
    %v1958 = vrsqrt.pop %v1956
    %v1959 = vmul.f32 %v1943, %v1957
    %v1960 = vmul.f32 %v1944, %v1958
    %v1961 = vlaneseq
    %v1962 = vshrl.u32 %v1961, 7
    %v1963 = vsub.s32 0, %v1962
    %v1964 = vrot.slane %v1933, %v1963
    %v1965 = vmul.f32 %v1959, %v1964
    %v1966 = vmul.f32 %v1960, %v1964
    %v1967 = vlaneseq
    %v1968 = vshrl.u32 %v1967, 7
    %v1969 = vsub.s32 0, %v1968
    %v1970 = vrot.slane %v1934, %v1969
    %v1971 = vadd.f32 %v1965, %v1970
    %v1972 = vadd.f32 %v1966, %v1970
    %v1973 = vld [vmem:[%s3 + $0x28] sm:$0xff]
    %v1974 = vld [vmem:[%s3 + $0x30] sm:$0xff]
    %v1975 = vld [vmem:[%s3 + $0x38] sm:$0xff]
    %v1976 = vld [vmem:[%s3 + $0x40] sm:$0xff]
    %v1977 = vld [vmem:[%s3 + $0x48] sm:$0x1]
    %v1978 = vlaneseq
    %v1979 = vshrl.u32 %v1978, 7
    %v1980 = vsub.s32 0, %v1979
    %v1981 = vrot.slane %v1977, %v1980
    %v1983 = vsel %vm120, %v1971, 0
    %v1986 = vsel %vm120, %v1972, 0
    %1988 = vmatprep.subr.mxu0 0.0
    %1989 = vmatpush1.msra.mxu0 %v1973
    %1990 = vmatprep.subr.mxu0 0.0
    %1991 = vmatpush1.msra.mxu0 %v1974
    %1992 = vmatprep.subr.mxu0 0.0
    %1993 = vmatpush1.msra.mxu0 %v1975
    %1994 = vmatprep.subr.mxu0 0.0
    %1995 = vmatpush1.msra.mxu0 %v1976
    %1996 = vmatprep.subr.mxu0 0.0
    %1997 = vmatpush1.msra.mxu0 0.0
    %1998 = vmatprep.subr.mxu0 0.0
    %1999 = vmatpush1.msra.mxu0 0.0
    %2000 = vmatprep.subr.mxu0 0.0
    %2001 = vmatpush1.msra.mxu0 0.0
    %2002 = vmatprep.subr.mxu0 0.0
    %2003 = vmatpush1.msra.mxu0 0.0
    %2004 = vmatprep.subr.mxu0 0.0
    %2005 = vmatpush1.msra.mxu0 0.0
    %2006 = vmatprep.subr.mxu0 0.0
    %2007 = vmatpush1.msra.mxu0 0.0
    %2008 = vmatprep.subr.mxu0 0.0
    %2009 = vmatpush1.msra.mxu0 0.0
    %2010 = vmatprep.subr.mxu0 0.0
    %2011 = vmatpush1.msra.mxu0 0.0
    %2012 = vmatprep.subr.mxu0 0.0
    %2013 = vmatpush1.msra.mxu0 0.0
    %2014 = vmatprep.subr.mxu0 0.0
    %2015 = vmatpush1.msra.mxu0 0.0
    %2016 = vmatprep.subr.mxu0 0.0
    %2017 = vmatpush1.msra.mxu0 0.0
    %2018 = vmatprep.subr.mxu0 0.0
    %2019 = vmatpush1.msra.mxu0 0.0
    %2020 = vmatprep.subr.mxu0 0.0
    %2021 = vmatpush1.msra.mxu0 0.0
    %2022 = vmatprep.subr.mxu0 0.0
    %2023 = vmatpush1.msra.mxu0 0.0
    %2024 = vmatprep.subr.mxu0 0.0
    %2025 = vmatpush1.msra.mxu0 0.0
    %2026 = vmatprep.subr.mxu0 0.0
    %2027 = vmatpush1.msra.mxu0 0.0
    %2028 = vmatprep.subr.mxu0 0.0
    %2029 = vmatpush1.msra.mxu0 0.0
    %2030 = vmatprep.subr.mxu0 0.0
    %2031 = vmatpush1.msra.mxu0 0.0
    %2032 = vmatprep.subr.mxu0 0.0
    %2033 = vmatpush1.msra.mxu0 0.0
    %2034 = vmatprep.subr.mxu0 0.0
    %2035 = vmatpush1.msra.mxu0 0.0
    %2036 = vmatprep.subr.mxu0 0.0
    %2037 = vmatpush1.msra.mxu0 0.0
    %2038 = vmatprep.subr.mxu0 0.0
    %2039 = vmatpush1.msra.mxu0 0.0
    %2040 = vmatprep.subr.mxu0 0.0
    %2041 = vmatpush1.msra.mxu0 0.0
    %2042 = vmatprep.subr.mxu0 0.0
    %2043 = vmatpush1.msra.mxu0 0.0
    %2044 = vmatprep.subr.mxu0 0.0
    %2045 = vmatpush1.msra.mxu0 0.0
    %2046 = vmatprep.subr.mxu0 0.0
    %2047 = vmatpush1.msra.mxu0 0.0
    %2048 = vmatprep.subr.mxu0 0.0
    %2049 = vmatpush1.msra.mxu0 0.0
    %2050 = vmatprep.subr.mxu0 0.0
    %2051 = vmatpush1.msra.mxu0 0.0
    %2052 = vmatprep.mubr.f32.mxu0 0.0
    %2053 = vmatmul.mubr.f32.gmra.mrb[0].mxu0 %v1983
    %v2054 = vpop.f32.mrb[0].mxu0
    %v2055 = vadd.f32 %v1981, %v2054
    %v2056 = vpop.f32.mrb[0].mxu0
    %2057 = vmatprep.mubr.f32.mxu0 0.0
    %2058 = vmatmul.mubr.f32.gmra.mrb[0].mxu0 %v1986
    %v2059 = vpop.f32.mrb[0].mxu0
    %v2060 = vadd.f32 %v1981, %v2059
    %v2061 = vpop.f32.mrb[0].mxu0
    %2062 = vdwg.mxu0
    %2064 = vrot.lane.b32.xlu0 %v2055, 96
    %v2065 = vpop.permute.xlu0 %2064
    %v2066 = vsel %vm253, %v2055, 0
    %v2068 = vsel %vm253, %v2065, 0
    %2070 = vmatprep.subr.mxu0 0.0
    %2071 = vmatpush1.xpose.msra.mxu0 %v2068
    %2072 = vmatprep.subr.mxu0 0.0
    %2073 = vmatpush1.xpose.msra.mxu0 0.0
    %2074 = vmatprep.subr.mxu0 0.0
    %2075 = vmatpush1.xpose.msra.mxu0 0.0
    %2076 = vmatprep.subr.mxu0 0.0
    %2077 = vmatpush1.xpose.msra.mxu0 0.0
    %2078 = vmatprep.subr.mxu0 0.0
    %2079 = vmatpush1.xpose.msra.mxu0 0.0
    %2080 = vmatprep.subr.mxu0 0.0
    %2081 = vmatpush1.xpose.msra.mxu0 0.0
    %2082 = vmatprep.subr.mxu0 0.0
    %2083 = vmatpush1.xpose.msra.mxu0 0.0
    %2084 = vmatprep.subr.mxu0 0.0
    %2085 = vmatpush1.xpose.msra.mxu0 0.0
    %2086 = vmatprep.subr.mxu0 0.0
    %2087 = vmatpush1.xpose.msra.mxu0 0.0
    %2088 = vmatprep.subr.mxu0 0.0
    %2089 = vmatpush1.xpose.msra.mxu0 0.0
    %2090 = vmatprep.subr.mxu0 0.0
    %2091 = vmatpush1.xpose.msra.mxu0 0.0
    %2092 = vmatprep.subr.mxu0 0.0
    %2093 = vmatpush1.xpose.msra.mxu0 0.0
    %2094 = vmatprep.subr.mxu0 0.0
    %2095 = vmatpush1.xpose.msra.mxu0 0.0
    %2096 = vmatprep.subr.mxu0 0.0
    %2097 = vmatpush1.xpose.msra.mxu0 0.0
    %2098 = vmatprep.subr.mxu0 0.0
    %2099 = vmatpush1.xpose.msra.mxu0 0.0
    %2100 = vmatprep.subr.mxu0 0.0
    %2101 = vmatpush1.xpose.msra.mxu0 0.0
    %2102 = vmatprep.subr.mxu0 0.0
    %2103 = vmatpush1.xpose.msra.mxu0 0.0
    %2104 = vmatprep.subr.mxu0 0.0
    %2105 = vmatpush1.xpose.msra.mxu0 0.0
    %2106 = vmatprep.subr.mxu0 0.0
    %2107 = vmatpush1.xpose.msra.mxu0 0.0
    %2108 = vmatprep.subr.mxu0 0.0
    %2109 = vmatpush1.xpose.msra.mxu0 0.0
    %2110 = vmatprep.subr.mxu0 0.0
    %2111 = vmatpush1.xpose.msra.mxu0 0.0
    %2112 = vmatprep.subr.mxu0 0.0
    %2113 = vmatpush1.xpose.msra.mxu0 0.0
    %2114 = vmatprep.subr.mxu0 0.0
    %2115 = vmatpush1.xpose.msra.mxu0 0.0
    %2116 = vmatprep.subr.mxu0 0.0
    %2117 = vmatpush1.xpose.msra.mxu0 0.0
    %2118 = vmatprep.subr.mxu0 0.0
    %2119 = vmatpush1.xpose.msra.mxu0 0.0
    %2120 = vmatprep.subr.mxu0 0.0
    %2121 = vmatpush1.xpose.msra.mxu0 0.0
    %2122 = vmatprep.subr.mxu0 0.0
    %2123 = vmatpush1.xpose.msra.mxu0 0.0
    %2124 = vmatprep.subr.mxu0 0.0
    %2125 = vmatpush1.xpose.msra.mxu0 0.0
    %2126 = vmatprep.subr.mxu0 0.0
    %2127 = vmatpush1.xpose.msra.mxu0 0.0
    %2128 = vmatprep.subr.mxu0 0.0
    %2129 = vmatpush1.xpose.msra.mxu0 0.0
    %2130 = vmatprep.subr.mxu0 0.0
    %2131 = vmatpush1.xpose.msra.mxu0 0.0
    %2132 = vmatprep.subr.mxu0 0.0
    %2133 = vmatpush1.xpose.msra.mxu0 0.0
    %2134 = vmatprep.mubr.f32.mxu0 0.0
    %2135 = vmatmul.mubr.f32.gmra.mrb[0].mxu0 %v2066
    %v2136 = vpop.f32.mrb[0].mxu0
    %v2137 = vadd.f32 0.0, %v2136
    %v2138 = vpop.f32.mrb[0].mxu0
    %2139 = vdwg.mxu0
    %2141 = vrot.lane.b32.xlu0 %v2060, 96
    %v2142 = vpop.permute.xlu0 %2141
    %v2143 = vsel %vm253, %v2060, 0
    %v2145 = vsel %vm253, %v2142, 0
    %2147 = vmatprep.subr.mxu0 0.0
    %2148 = vmatpush1.xpose.msra.mxu0 %v2145
    %2149 = vmatprep.subr.mxu0 0.0
    %2150 = vmatpush1.xpose.msra.mxu0 0.0
    %2151 = vmatprep.subr.mxu0 0.0
    %2152 = vmatpush1.xpose.msra.mxu0 0.0
    %2153 = vmatprep.subr.mxu0 0.0
    %2154 = vmatpush1.xpose.msra.mxu0 0.0
    %2155 = vmatprep.subr.mxu0 0.0
    %2156 = vmatpush1.xpose.msra.mxu0 0.0
    %2157 = vmatprep.subr.mxu0 0.0
    %2158 = vmatpush1.xpose.msra.mxu0 0.0
    %2159 = vmatprep.subr.mxu0 0.0
    %2160 = vmatpush1.xpose.msra.mxu0 0.0
    %2161 = vmatprep.subr.mxu0 0.0
    %2162 = vmatpush1.xpose.msra.mxu0 0.0
    %2163 = vmatprep.subr.mxu0 0.0
    %2164 = vmatpush1.xpose.msra.mxu0 0.0
    %2165 = vmatprep.subr.mxu0 0.0
    %2166 = vmatpush1.xpose.msra.mxu0 0.0
    %2167 = vmatprep.subr.mxu0 0.0
    %2168 = vmatpush1.xpose.msra.mxu0 0.0
    %2169 = vmatprep.subr.mxu0 0.0
    %2170 = vmatpush1.xpose.msra.mxu0 0.0
    %2171 = vmatprep.subr.mxu0 0.0
    %2172 = vmatpush1.xpose.msra.mxu0 0.0
    %2173 = vmatprep.subr.mxu0 0.0
    %2174 = vmatpush1.xpose.msra.mxu0 0.0
    %2175 = vmatprep.subr.mxu0 0.0
    %2176 = vmatpush1.xpose.msra.mxu0 0.0
    %2177 = vmatprep.subr.mxu0 0.0
    %2178 = vmatpush1.xpose.msra.mxu0 0.0
    %2179 = vmatprep.subr.mxu0 0.0
    %2180 = vmatpush1.xpose.msra.mxu0 0.0
    %2181 = vmatprep.subr.mxu0 0.0
    %2182 = vmatpush1.xpose.msra.mxu0 0.0
    %2183 = vmatprep.subr.mxu0 0.0
    %2184 = vmatpush1.xpose.msra.mxu0 0.0
    %2185 = vmatprep.subr.mxu0 0.0
    %2186 = vmatpush1.xpose.msra.mxu0 0.0
    %2187 = vmatprep.subr.mxu0 0.0
    %2188 = vmatpush1.xpose.msra.mxu0 0.0
    %2189 = vmatprep.subr.mxu0 0.0
    %2190 = vmatpush1.xpose.msra.mxu0 0.0
    %2191 = vmatprep.subr.mxu0 0.0
    %2192 = vmatpush1.xpose.msra.mxu0 0.0
    %2193 = vmatprep.subr.mxu0 0.0
    %2194 = vmatpush1.xpose.msra.mxu0 0.0
    %2195 = vmatprep.subr.mxu0 0.0
    %2196 = vmatpush1.xpose.msra.mxu0 0.0
    %2197 = vmatprep.subr.mxu0 0.0
    %2198 = vmatpush1.xpose.msra.mxu0 0.0
    %2199 = vmatprep.subr.mxu0 0.0
    %2200 = vmatpush1.xpose.msra.mxu0 0.0
    %2201 = vmatprep.subr.mxu0 0.0
    %2202 = vmatpush1.xpose.msra.mxu0 0.0
    %2203 = vmatprep.subr.mxu0 0.0
    %2204 = vmatpush1.xpose.msra.mxu0 0.0
    %2205 = vmatprep.subr.mxu0 0.0
    %2206 = vmatpush1.xpose.msra.mxu0 0.0
    %2207 = vmatprep.subr.mxu0 0.0
    %2208 = vmatpush1.xpose.msra.mxu0 0.0
    %2209 = vmatprep.subr.mxu0 0.0
    %2210 = vmatpush1.xpose.msra.mxu0 0.0
    %2211 = vmatprep.mubr.f32.mxu0 0.0
    %2212 = vmatmul.mubr.f32.gmra.mrb[0].mxu0 %v2143
    %v2213 = vpop.f32.mrb[0].mxu0
    %v2214 = vadd.f32 0.0, %v2213
    %v2215 = vpop.f32.mrb[0].mxu0
    %2216 = vdwg.mxu0
    %v2217 = vmul.f32 %v2137, 0.35355338
    %v2218 = vmul.f32 %v2214, 0.35355338
    %v2219 = vsel %vm253, %v2217, -inf
    %2220 = vmax.xlane.f32.xlu0 %v2219
    %v2221 = vpop.xlane.xlu0 %2220
    %v2222 = vsel %vm253, %v2218, -inf
    %2223 = vmax.xlane.f32.xlu0 %v2222
    %v2224 = vpop.xlane.xlu0 %2223
    %v2225 = vsub.f32 %v2217, %v2221
    %v2226 = vsub.f32 %v2218, %v2224
    %v2227 = vmul.f32 %v2225, 1.442695
    %v2228 = vpow.pop %v2227
    %v2229 = vmul.f32 %v2226, 1.442695
    %v2230 = vpow.pop %v2229
    %v2231 = vsel %vm253, %v2228, 0.0
    %2232 = vadd.xlane.f32.xlu0 %v2231
    %v2233 = vpop.xlane.xlu0 %2232
    %v2234 = vsel %vm253, %v2230, 0.0
    %2235 = vadd.xlane.f32.xlu0 %v2234
    %v2236 = vpop.xlane.xlu0 %2235
    %v2237 = vrcp.pop %v2233
    %v2238 = vmul.f32 %v2228, %v2237
    %v2239 = vrcp.pop %v2236
    %v2240 = vmul.f32 %v2230, %v2239
    %2241 = vrot.lane.b32.xlu0 %v2055, 64
    %v2242 = vpop.permute.xlu0 %2241
    %v2245 = vsel %vm253, %v2238, 0
    %2247 = vmatprep.subr.mxu0 0.0
    %2248 = vmatpush1.msra.mxu0 %v2242
    %2249 = vmatprep.subr.mxu0 0.0
    %2250 = vmatpush1.msra.mxu0 0.0
    %2251 = vmatprep.subr.mxu0 0.0
    %2252 = vmatpush1.msra.mxu0 0.0
    %2253 = vmatprep.subr.mxu0 0.0
    %2254 = vmatpush1.msra.mxu0 0.0
    %2255 = vmatprep.subr.mxu0 0.0
    %2256 = vmatpush1.msra.mxu0 0.0
    %2257 = vmatprep.subr.mxu0 0.0
    %2258 = vmatpush1.msra.mxu0 0.0
    %2259 = vmatprep.subr.mxu0 0.0
    %2260 = vmatpush1.msra.mxu0 0.0
    %2261 = vmatprep.subr.mxu0 0.0
    %2262 = vmatpush1.msra.mxu0 0.0
    %2263 = vmatprep.subr.mxu0 0.0
    %2264 = vmatpush1.msra.mxu0 0.0
    %2265 = vmatprep.subr.mxu0 0.0
    %2266 = vmatpush1.msra.mxu0 0.0
    %2267 = vmatprep.subr.mxu0 0.0
    %2268 = vmatpush1.msra.mxu0 0.0
    %2269 = vmatprep.subr.mxu0 0.0
    %2270 = vmatpush1.msra.mxu0 0.0
    %2271 = vmatprep.subr.mxu0 0.0
    %2272 = vmatpush1.msra.mxu0 0.0
    %2273 = vmatprep.subr.mxu0 0.0
    %2274 = vmatpush1.msra.mxu0 0.0
    %2275 = vmatprep.subr.mxu0 0.0
    %2276 = vmatpush1.msra.mxu0 0.0
    %2277 = vmatprep.subr.mxu0 0.0
    %2278 = vmatpush1.msra.mxu0 0.0
    %2279 = vmatprep.subr.mxu0 0.0
    %2280 = vmatpush1.msra.mxu0 0.0
    %2281 = vmatprep.subr.mxu0 0.0
    %2282 = vmatpush1.msra.mxu0 0.0
    %2283 = vmatprep.subr.mxu0 0.0
    %2284 = vmatpush1.msra.mxu0 0.0
    %2285 = vmatprep.subr.mxu0 0.0
    %2286 = vmatpush1.msra.mxu0 0.0
    %2287 = vmatprep.subr.mxu0 0.0
    %2288 = vmatpush1.msra.mxu0 0.0
    %2289 = vmatprep.subr.mxu0 0.0
    %2290 = vmatpush1.msra.mxu0 0.0
    %2291 = vmatprep.subr.mxu0 0.0
    %2292 = vmatpush1.msra.mxu0 0.0
    %2293 = vmatprep.subr.mxu0 0.0
    %2294 = vmatpush1.msra.mxu0 0.0
    %2295 = vmatprep.subr.mxu0 0.0
    %2296 = vmatpush1.msra.mxu0 0.0
    %2297 = vmatprep.subr.mxu0 0.0
    %2298 = vmatpush1.msra.mxu0 0.0
    %2299 = vmatprep.subr.mxu0 0.0
    %2300 = vmatpush1.msra.mxu0 0.0
    %2301 = vmatprep.subr.mxu0 0.0
    %2302 = vmatpush1.msra.mxu0 0.0
    %2303 = vmatprep.subr.mxu0 0.0
    %2304 = vmatpush1.msra.mxu0 0.0
    %2305 = vmatprep.subr.mxu0 0.0
    %2306 = vmatpush1.msra.mxu0 0.0
    %2307 = vmatprep.subr.mxu0 0.0
    %2308 = vmatpush1.msra.mxu0 0.0
    %2309 = vmatprep.subr.mxu0 0.0
    %2310 = vmatpush1.msra.mxu0 0.0
    %2311 = vmatprep.mubr.f32.mxu0 0.0
    %2312 = vmatmul.mubr.f32.gmra.mrb[0].mxu0 %v2245
    %v2313 = vpop.f32.mrb[0].mxu0
    %v2314 = vadd.f32 0.0, %v2313
    %v2315 = vpop.f32.mrb[0].mxu0
    %2316 = vdwg.mxu0
    %2317 = vrot.lane.b32.xlu0 %v2060, 64
    %v2318 = vpop.permute.xlu0 %2317
    %v2321 = vsel %vm253, %v2240, 0
    %2323 = vmatprep.subr.mxu0 0.0
    %2324 = vmatpush1.msra.mxu0 %v2318
    %2325 = vmatprep.subr.mxu0 0.0
    %2326 = vmatpush1.msra.mxu0 0.0
    %2327 = vmatprep.subr.mxu0 0.0
    %2328 = vmatpush1.msra.mxu0 0.0
    %2329 = vmatprep.subr.mxu0 0.0
    %2330 = vmatpush1.msra.mxu0 0.0
    %2331 = vmatprep.subr.mxu0 0.0
    %2332 = vmatpush1.msra.mxu0 0.0
    %2333 = vmatprep.subr.mxu0 0.0
    %2334 = vmatpush1.msra.mxu0 0.0
    %2335 = vmatprep.subr.mxu0 0.0
    %2336 = vmatpush1.msra.mxu0 0.0
    %2337 = vmatprep.subr.mxu0 0.0
    %2338 = vmatpush1.msra.mxu0 0.0
    %2339 = vmatprep.subr.mxu0 0.0
    %2340 = vmatpush1.msra.mxu0 0.0
    %2341 = vmatprep.subr.mxu0 0.0
    %2342 = vmatpush1.msra.mxu0 0.0
    %2343 = vmatprep.subr.mxu0 0.0
    %2344 = vmatpush1.msra.mxu0 0.0
    %2345 = vmatprep.subr.mxu0 0.0
    %2346 = vmatpush1.msra.mxu0 0.0
    %2347 = vmatprep.subr.mxu0 0.0
    %2348 = vmatpush1.msra.mxu0 0.0
    %2349 = vmatprep.subr.mxu0 0.0
    %2350 = vmatpush1.msra.mxu0 0.0
    %2351 = vmatprep.subr.mxu0 0.0
    %2352 = vmatpush1.msra.mxu0 0.0
    %2353 = vmatprep.subr.mxu0 0.0
    %2354 = vmatpush1.msra.mxu0 0.0
    %2355 = vmatprep.subr.mxu0 0.0
    %2356 = vmatpush1.msra.mxu0 0.0
    %2357 = vmatprep.subr.mxu0 0.0
    %2358 = vmatpush1.msra.mxu0 0.0
    %2359 = vmatprep.subr.mxu0 0.0
    %2360 = vmatpush1.msra.mxu0 0.0
    %2361 = vmatprep.subr.mxu0 0.0
    %2362 = vmatpush1.msra.mxu0 0.0
    %2363 = vmatprep.subr.mxu0 0.0
    %2364 = vmatpush1.msra.mxu0 0.0
    %2365 = vmatprep.subr.mxu0 0.0
    %2366 = vmatpush1.msra.mxu0 0.0
    %2367 = vmatprep.subr.mxu0 0.0
    %2368 = vmatpush1.msra.mxu0 0.0
    %2369 = vmatprep.subr.mxu0 0.0
    %2370 = vmatpush1.msra.mxu0 0.0
    %2371 = vmatprep.subr.mxu0 0.0
    %2372 = vmatpush1.msra.mxu0 0.0
    %2373 = vmatprep.subr.mxu0 0.0
    %2374 = vmatpush1.msra.mxu0 0.0
    %2375 = vmatprep.subr.mxu0 0.0
    %2376 = vmatpush1.msra.mxu0 0.0
    %2377 = vmatprep.subr.mxu0 0.0
    %2378 = vmatpush1.msra.mxu0 0.0
    %2379 = vmatprep.subr.mxu0 0.0
    %2380 = vmatpush1.msra.mxu0 0.0
    %2381 = vmatprep.subr.mxu0 0.0
    %2382 = vmatpush1.msra.mxu0 0.0
    %2383 = vmatprep.subr.mxu0 0.0
    %2384 = vmatpush1.msra.mxu0 0.0
    %2385 = vmatprep.subr.mxu0 0.0
    %2386 = vmatpush1.msra.mxu0 0.0
    %2387 = vmatprep.mubr.f32.mxu0 0.0
    %2388 = vmatmul.mubr.f32.gmra.mrb[0].mxu0 %v2321
    %v2389 = vpop.f32.mrb[0].mxu0
    %v2390 = vadd.f32 0.0, %v2389
    %v2391 = vpop.f32.mrb[0].mxu0
    %2392 = vdwg.mxu0
    %2393 = vrot.lane.b32.xlu0 %v2055, 120
    %v2394 = vpop.permute.xlu0 %2393
    %2395 = vrot.lane.b32.xlu0 %v2055, 88
    %v2396 = vpop.permute.xlu0 %2395
    %v2397 = vsel %vm253, %v2394, 0
    %v2399 = vsel %vm253, %v2396, 0
    %2401 = vmatprep.subr.mxu0 0.0
    %2402 = vmatpush1.xpose.msra.mxu0 %v2399
    %2403 = vmatprep.subr.mxu0 0.0
    %2404 = vmatpush1.xpose.msra.mxu0 0.0
    %2405 = vmatprep.subr.mxu0 0.0
    %2406 = vmatpush1.xpose.msra.mxu0 0.0
    %2407 = vmatprep.subr.mxu0 0.0
    %2408 = vmatpush1.xpose.msra.mxu0 0.0
    %2409 = vmatprep.subr.mxu0 0.0
    %2410 = vmatpush1.xpose.msra.mxu0 0.0
    %2411 = vmatprep.subr.mxu0 0.0
    %2412 = vmatpush1.xpose.msra.mxu0 0.0
    %2413 = vmatprep.subr.mxu0 0.0
    %2414 = vmatpush1.xpose.msra.mxu0 0.0
    %2415 = vmatprep.subr.mxu0 0.0
    %2416 = vmatpush1.xpose.msra.mxu0 0.0
    %2417 = vmatprep.subr.mxu0 0.0
    %2418 = vmatpush1.xpose.msra.mxu0 0.0
    %2419 = vmatprep.subr.mxu0 0.0
    %2420 = vmatpush1.xpose.msra.mxu0 0.0
    %2421 = vmatprep.subr.mxu0 0.0
    %2422 = vmatpush1.xpose.msra.mxu0 0.0
    %2423 = vmatprep.subr.mxu0 0.0
    %2424 = vmatpush1.xpose.msra.mxu0 0.0
    %2425 = vmatprep.subr.mxu0 0.0
    %2426 = vmatpush1.xpose.msra.mxu0 0.0
    %2427 = vmatprep.subr.mxu0 0.0
    %2428 = vmatpush1.xpose.msra.mxu0 0.0
    %2429 = vmatprep.subr.mxu0 0.0
    %2430 = vmatpush1.xpose.msra.mxu0 0.0
    %2431 = vmatprep.subr.mxu0 0.0
    %2432 = vmatpush1.xpose.msra.mxu0 0.0
    %2433 = vmatprep.subr.mxu0 0.0
    %2434 = vmatpush1.xpose.msra.mxu0 0.0
    %2435 = vmatprep.subr.mxu0 0.0
    %2436 = vmatpush1.xpose.msra.mxu0 0.0
    %2437 = vmatprep.subr.mxu0 0.0
    %2438 = vmatpush1.xpose.msra.mxu0 0.0
    %2439 = vmatprep.subr.mxu0 0.0
    %2440 = vmatpush1.xpose.msra.mxu0 0.0
    %2441 = vmatprep.subr.mxu0 0.0
    %2442 = vmatpush1.xpose.msra.mxu0 0.0
    %2443 = vmatprep.subr.mxu0 0.0
    %2444 = vmatpush1.xpose.msra.mxu0 0.0
    %2445 = vmatprep.subr.mxu0 0.0
    %2446 = vmatpush1.xpose.msra.mxu0 0.0
    %2447 = vmatprep.subr.mxu0 0.0
    %2448 = vmatpush1.xpose.msra.mxu0 0.0
    %2449 = vmatprep.subr.mxu0 0.0
    %2450 = vmatpush1.xpose.msra.mxu0 0.0
    %2451 = vmatprep.subr.mxu0 0.0
    %2452 = vmatpush1.xpose.msra.mxu0 0.0
    %2453 = vmatprep.subr.mxu0 0.0
    %2454 = vmatpush1.xpose.msra.mxu0 0.0
    %2455 = vmatprep.subr.mxu0 0.0
    %2456 = vmatpush1.xpose.msra.mxu0 0.0
    %2457 = vmatprep.subr.mxu0 0.0
    %2458 = vmatpush1.xpose.msra.mxu0 0.0
    %2459 = vmatprep.subr.mxu0 0.0
    %2460 = vmatpush1.xpose.msra.mxu0 0.0
    %2461 = vmatprep.subr.mxu0 0.0
    %2462 = vmatpush1.xpose.msra.mxu0 0.0
    %2463 = vmatprep.subr.mxu0 0.0
    %2464 = vmatpush1.xpose.msra.mxu0 0.0
    %2465 = vmatprep.mubr.f32.mxu0 0.0
    %2466 = vmatmul.mubr.f32.gmra.mrb[0].mxu0 %v2397
    %v2467 = vpop.f32.mrb[0].mxu0
    %v2468 = vadd.f32 0.0, %v2467
    %v2469 = vpop.f32.mrb[0].mxu0
    %2470 = vdwg.mxu0
    %2471 = vrot.lane.b32.xlu0 %v2060, 120
    %v2472 = vpop.permute.xlu0 %2471
    %2473 = vrot.lane.b32.xlu0 %v2060, 88
    %v2474 = vpop.permute.xlu0 %2473
    %v2475 = vsel %vm253, %v2472, 0
    %v2477 = vsel %vm253, %v2474, 0
    %2479 = vmatprep.subr.mxu0 0.0
    %2480 = vmatpush1.xpose.msra.mxu0 %v2477
    %2481 = vmatprep.subr.mxu0 0.0
    %2482 = vmatpush1.xpose.msra.mxu0 0.0
    %2483 = vmatprep.subr.mxu0 0.0
    %2484 = vmatpush1.xpose.msra.mxu0 0.0
    %2485 = vmatprep.subr.mxu0 0.0
    %2486 = vmatpush1.xpose.msra.mxu0 0.0
    %2487 = vmatprep.subr.mxu0 0.0
    %2488 = vmatpush1.xpose.msra.mxu0 0.0
    %2489 = vmatprep.subr.mxu0 0.0
    %2490 = vmatpush1.xpose.msra.mxu0 0.0
    %2491 = vmatprep.subr.mxu0 0.0
    %2492 = vmatpush1.xpose.msra.mxu0 0.0
    %2493 = vmatprep.subr.mxu0 0.0
    %2494 = vmatpush1.xpose.msra.mxu0 0.0
    %2495 = vmatprep.subr.mxu0 0.0
    %2496 = vmatpush1.xpose.msra.mxu0 0.0
    %2497 = vmatprep.subr.mxu0 0.0
    %2498 = vmatpush1.xpose.msra.mxu0 0.0
    %2499 = vmatprep.subr.mxu0 0.0
    %2500 = vmatpush1.xpose.msra.mxu0 0.0
    %2501 = vmatprep.subr.mxu0 0.0
    %2502 = vmatpush1.xpose.msra.mxu0 0.0
    %2503 = vmatprep.subr.mxu0 0.0
    %2504 = vmatpush1.xpose.msra.mxu0 0.0
    %2505 = vmatprep.subr.mxu0 0.0
    %2506 = vmatpush1.xpose.msra.mxu0 0.0
    %2507 = vmatprep.subr.mxu0 0.0
    %2508 = vmatpush1.xpose.msra.mxu0 0.0
    %2509 = vmatprep.subr.mxu0 0.0
    %2510 = vmatpush1.xpose.msra.mxu0 0.0
    %2511 = vmatprep.subr.mxu0 0.0
    %2512 = vmatpush1.xpose.msra.mxu0 0.0
    %2513 = vmatprep.subr.mxu0 0.0
    %2514 = vmatpush1.xpose.msra.mxu0 0.0
    %2515 = vmatprep.subr.mxu0 0.0
    %2516 = vmatpush1.xpose.msra.mxu0 0.0
    %2517 = vmatprep.subr.mxu0 0.0
    %2518 = vmatpush1.xpose.msra.mxu0 0.0
    %2519 = vmatprep.subr.mxu0 0.0
    %2520 = vmatpush1.xpose.msra.mxu0 0.0
    %2521 = vmatprep.subr.mxu0 0.0
    %2522 = vmatpush1.xpose.msra.mxu0 0.0
    %2523 = vmatprep.subr.mxu0 0.0
    %2524 = vmatpush1.xpose.msra.mxu0 0.0
    %2525 = vmatprep.subr.mxu0 0.0
    %2526 = vmatpush1.xpose.msra.mxu0 0.0
    %2527 = vmatprep.subr.mxu0 0.0
    %2528 = vmatpush1.xpose.msra.mxu0 0.0
    %2529 = vmatprep.subr.mxu0 0.0
    %2530 = vmatpush1.xpose.msra.mxu0 0.0
    %2531 = vmatprep.subr.mxu0 0.0
    %2532 = vmatpush1.xpose.msra.mxu0 0.0
    %2533 = vmatprep.subr.mxu0 0.0
    %2534 = vmatpush1.xpose.msra.mxu0 0.0
    %2535 = vmatprep.subr.mxu0 0.0
    %2536 = vmatpush1.xpose.msra.mxu0 0.0
    %2537 = vmatprep.subr.mxu0 0.0
    %2538 = vmatpush1.xpose.msra.mxu0 0.0
    %2539 = vmatprep.subr.mxu0 0.0
    %2540 = vmatpush1.xpose.msra.mxu0 0.0
    %2541 = vmatprep.subr.mxu0 0.0
    %2542 = vmatpush1.xpose.msra.mxu0 0.0
    %2543 = vmatprep.mubr.f32.mxu0 0.0
    %2544 = vmatmul.mubr.f32.gmra.mrb[0].mxu0 %v2475
    %v2545 = vpop.f32.mrb[0].mxu0
    %v2546 = vadd.f32 0.0, %v2545
    %v2547 = vpop.f32.mrb[0].mxu0
    %2548 = vdwg.mxu0
    %v2549 = vmul.f32 %v2468, 0.35355338
    %v2550 = vmul.f32 %v2546, 0.35355338
    %v2551 = vsel %vm253, %v2549, -inf
    %2552 = vmax.xlane.f32.xlu0 %v2551
    %v2553 = vpop.xlane.xlu0 %2552
    %v2554 = vsel %vm253, %v2550, -inf
    %2555 = vmax.xlane.f32.xlu0 %v2554
    %v2556 = vpop.xlane.xlu0 %2555
    %v2557 = vsub.f32 %v2549, %v2553
    %v2558 = vsub.f32 %v2550, %v2556
    %v2559 = vmul.f32 %v2557, 1.442695
    %v2560 = vpow.pop %v2559
    %v2561 = vmul.f32 %v2558, 1.442695
    %v2562 = vpow.pop %v2561
    %v2563 = vsel %vm253, %v2560, 0.0
    %2564 = vadd.xlane.f32.xlu0 %v2563
    %v2565 = vpop.xlane.xlu0 %2564
    %v2566 = vsel %vm253, %v2562, 0.0
    %2567 = vadd.xlane.f32.xlu0 %v2566
    %v2568 = vpop.xlane.xlu0 %2567
    %v2569 = vrcp.pop %v2565
    %v2570 = vmul.f32 %v2560, %v2569
    %v2571 = vrcp.pop %v2568
    %v2572 = vmul.f32 %v2562, %v2571
    %2573 = vrot.lane.b32.xlu0 %v2055, 56
    %v2574 = vpop.permute.xlu0 %2573
    %v2577 = vsel %vm253, %v2570, 0
    %2579 = vmatprep.subr.mxu0 0.0
    %2580 = vmatpush1.msra.mxu0 %v2574
    %2581 = vmatprep.subr.mxu0 0.0
    %2582 = vmatpush1.msra.mxu0 0.0
    %2583 = vmatprep.subr.mxu0 0.0
    %2584 = vmatpush1.msra.mxu0 0.0
    %2585 = vmatprep.subr.mxu0 0.0
    %2586 = vmatpush1.msra.mxu0 0.0
    %2587 = vmatprep.subr.mxu0 0.0
    %2588 = vmatpush1.msra.mxu0 0.0
    %2589 = vmatprep.subr.mxu0 0.0
    %2590 = vmatpush1.msra.mxu0 0.0
    %2591 = vmatprep.subr.mxu0 0.0
    %2592 = vmatpush1.msra.mxu0 0.0
    %2593 = vmatprep.subr.mxu0 0.0
    %2594 = vmatpush1.msra.mxu0 0.0
    %2595 = vmatprep.subr.mxu0 0.0
    %2596 = vmatpush1.msra.mxu0 0.0
    %2597 = vmatprep.subr.mxu0 0.0
    %2598 = vmatpush1.msra.mxu0 0.0
    %2599 = vmatprep.subr.mxu0 0.0
    %2600 = vmatpush1.msra.mxu0 0.0
    %2601 = vmatprep.subr.mxu0 0.0
    %2602 = vmatpush1.msra.mxu0 0.0
    %2603 = vmatprep.subr.mxu0 0.0
    %2604 = vmatpush1.msra.mxu0 0.0
    %2605 = vmatprep.subr.mxu0 0.0
    %2606 = vmatpush1.msra.mxu0 0.0
    %2607 = vmatprep.subr.mxu0 0.0
    %2608 = vmatpush1.msra.mxu0 0.0
    %2609 = vmatprep.subr.mxu0 0.0
    %2610 = vmatpush1.msra.mxu0 0.0
    %2611 = vmatprep.subr.mxu0 0.0
    %2612 = vmatpush1.msra.mxu0 0.0
    %2613 = vmatprep.subr.mxu0 0.0
    %2614 = vmatpush1.msra.mxu0 0.0
    %2615 = vmatprep.subr.mxu0 0.0
    %2616 = vmatpush1.msra.mxu0 0.0
    %2617 = vmatprep.subr.mxu0 0.0
    %2618 = vmatpush1.msra.mxu0 0.0
    %2619 = vmatprep.subr.mxu0 0.0
    %2620 = vmatpush1.msra.mxu0 0.0
    %2621 = vmatprep.subr.mxu0 0.0
    %2622 = vmatpush1.msra.mxu0 0.0
    %2623 = vmatprep.subr.mxu0 0.0
    %2624 = vmatpush1.msra.mxu0 0.0
    %2625 = vmatprep.subr.mxu0 0.0
    %2626 = vmatpush1.msra.mxu0 0.0
    %2627 = vmatprep.subr.mxu0 0.0
    %2628 = vmatpush1.msra.mxu0 0.0
    %2629 = vmatprep.subr.mxu0 0.0
    %2630 = vmatpush1.msra.mxu0 0.0
    %2631 = vmatprep.subr.mxu0 0.0
    %2632 = vmatpush1.msra.mxu0 0.0
    %2633 = vmatprep.subr.mxu0 0.0
    %2634 = vmatpush1.msra.mxu0 0.0
    %2635 = vmatprep.subr.mxu0 0.0
    %2636 = vmatpush1.msra.mxu0 0.0
    %2637 = vmatprep.subr.mxu0 0.0
    %2638 = vmatpush1.msra.mxu0 0.0
    %2639 = vmatprep.subr.mxu0 0.0
    %2640 = vmatpush1.msra.mxu0 0.0
    %2641 = vmatprep.subr.mxu0 0.0
    %2642 = vmatpush1.msra.mxu0 0.0
    %2643 = vmatprep.mubr.f32.mxu0 0.0
    %2644 = vmatmul.mubr.f32.gmra.mrb[0].mxu0 %v2577
    %v2645 = vpop.f32.mrb[0].mxu0
    %v2646 = vadd.f32 0.0, %v2645
    %v2647 = vpop.f32.mrb[0].mxu0
    %2648 = vdwg.mxu0
    %2649 = vrot.lane.b32.xlu0 %v2060, 56
    %v2650 = vpop.permute.xlu0 %2649
    %v2653 = vsel %vm253, %v2572, 0
    %2655 = vmatprep.subr.mxu0 0.0
    %2656 = vmatpush1.msra.mxu0 %v2650
    %2657 = vmatprep.subr.mxu0 0.0
    %2658 = vmatpush1.msra.mxu0 0.0
    %2659 = vmatprep.subr.mxu0 0.0
    %2660 = vmatpush1.msra.mxu0 0.0
    %2661 = vmatprep.subr.mxu0 0.0
    %2662 = vmatpush1.msra.mxu0 0.0
    %2663 = vmatprep.subr.mxu0 0.0
    %2664 = vmatpush1.msra.mxu0 0.0
    %2665 = vmatprep.subr.mxu0 0.0
    %2666 = vmatpush1.msra.mxu0 0.0
    %2667 = vmatprep.subr.mxu0 0.0
    %2668 = vmatpush1.msra.mxu0 0.0
    %2669 = vmatprep.subr.mxu0 0.0
    %2670 = vmatpush1.msra.mxu0 0.0
    %2671 = vmatprep.subr.mxu0 0.0
    %2672 = vmatpush1.msra.mxu0 0.0
    %2673 = vmatprep.subr.mxu0 0.0
    %2674 = vmatpush1.msra.mxu0 0.0
    %2675 = vmatprep.subr.mxu0 0.0
    %2676 = vmatpush1.msra.mxu0 0.0
    %2677 = vmatprep.subr.mxu0 0.0
    %2678 = vmatpush1.msra.mxu0 0.0
    %2679 = vmatprep.subr.mxu0 0.0
    %2680 = vmatpush1.msra.mxu0 0.0
    %2681 = vmatprep.subr.mxu0 0.0
    %2682 = vmatpush1.msra.mxu0 0.0
    %2683 = vmatprep.subr.mxu0 0.0
    %2684 = vmatpush1.msra.mxu0 0.0
    %2685 = vmatprep.subr.mxu0 0.0
    %2686 = vmatpush1.msra.mxu0 0.0
    %2687 = vmatprep.subr.mxu0 0.0
    %2688 = vmatpush1.msra.mxu0 0.0
    %2689 = vmatprep.subr.mxu0 0.0
    %2690 = vmatpush1.msra.mxu0 0.0
    %2691 = vmatprep.subr.mxu0 0.0
    %2692 = vmatpush1.msra.mxu0 0.0
    %2693 = vmatprep.subr.mxu0 0.0
    %2694 = vmatpush1.msra.mxu0 0.0
    %2695 = vmatprep.subr.mxu0 0.0
    %2696 = vmatpush1.msra.mxu0 0.0
    %2697 = vmatprep.subr.mxu0 0.0
    %2698 = vmatpush1.msra.mxu0 0.0
    %2699 = vmatprep.subr.mxu0 0.0
    %2700 = vmatpush1.msra.mxu0 0.0
    %2701 = vmatprep.subr.mxu0 0.0
    %2702 = vmatpush1.msra.mxu0 0.0
    %2703 = vmatprep.subr.mxu0 0.0
    %2704 = vmatpush1.msra.mxu0 0.0
    %2705 = vmatprep.subr.mxu0 0.0
    %2706 = vmatpush1.msra.mxu0 0.0
    %2707 = vmatprep.subr.mxu0 0.0
    %2708 = vmatpush1.msra.mxu0 0.0
    %2709 = vmatprep.subr.mxu0 0.0
    %2710 = vmatpush1.msra.mxu0 0.0
    %2711 = vmatprep.subr.mxu0 0.0
    %2712 = vmatpush1.msra.mxu0 0.0
    %2713 = vmatprep.subr.mxu0 0.0
    %2714 = vmatpush1.msra.mxu0 0.0
    %2715 = vmatprep.subr.mxu0 0.0
    %2716 = vmatpush1.msra.mxu0 0.0
    %2717 = vmatprep.subr.mxu0 0.0
    %2718 = vmatpush1.msra.mxu0 0.0
    %2719 = vmatprep.mubr.f32.mxu0 0.0
    %2720 = vmatmul.mubr.f32.gmra.mrb[0].mxu0 %v2653
    %v2721 = vpop.f32.mrb[0].mxu0
    %v2722 = vadd.f32 0.0, %v2721
    %v2723 = vpop.f32.mrb[0].mxu0
    %2724 = vdwg.mxu0
    %2725 = vrot.lane.b32.xlu0 %v2055, 112
    %v2726 = vpop.permute.xlu0 %2725
    %2727 = vrot.lane.b32.xlu0 %v2055, 80
    %v2728 = vpop.permute.xlu0 %2727
    %v2729 = vsel %vm253, %v2726, 0
    %v2731 = vsel %vm253, %v2728, 0
    %2733 = vmatprep.subr.mxu0 0.0
    %2734 = vmatpush1.xpose.msra.mxu0 %v2731
    %2735 = vmatprep.subr.mxu0 0.0
    %2736 = vmatpush1.xpose.msra.mxu0 0.0
    %2737 = vmatprep.subr.mxu0 0.0
    %2738 = vmatpush1.xpose.msra.mxu0 0.0
    %2739 = vmatprep.subr.mxu0 0.0
    %2740 = vmatpush1.xpose.msra.mxu0 0.0
    %2741 = vmatprep.subr.mxu0 0.0
    %2742 = vmatpush1.xpose.msra.mxu0 0.0
    %2743 = vmatprep.subr.mxu0 0.0
    %2744 = vmatpush1.xpose.msra.mxu0 0.0
    %2745 = vmatprep.subr.mxu0 0.0
    %2746 = vmatpush1.xpose.msra.mxu0 0.0
    %2747 = vmatprep.subr.mxu0 0.0
    %2748 = vmatpush1.xpose.msra.mxu0 0.0
    %2749 = vmatprep.subr.mxu0 0.0
    %2750 = vmatpush1.xpose.msra.mxu0 0.0
    %2751 = vmatprep.subr.mxu0 0.0
    %2752 = vmatpush1.xpose.msra.mxu0 0.0
    %2753 = vmatprep.subr.mxu0 0.0
    %2754 = vmatpush1.xpose.msra.mxu0 0.0
    %2755 = vmatprep.subr.mxu0 0.0
    %2756 = vmatpush1.xpose.msra.mxu0 0.0
    %2757 = vmatprep.subr.mxu0 0.0
    %2758 = vmatpush1.xpose.msra.mxu0 0.0
    %2759 = vmatprep.subr.mxu0 0.0
    %2760 = vmatpush1.xpose.msra.mxu0 0.0
    %2761 = vmatprep.subr.mxu0 0.0
    %2762 = vmatpush1.xpose.msra.mxu0 0.0
    %2763 = vmatprep.subr.mxu0 0.0
    %2764 = vmatpush1.xpose.msra.mxu0 0.0
    %2765 = vmatprep.subr.mxu0 0.0
    %2766 = vmatpush1.xpose.msra.mxu0 0.0
    %2767 = vmatprep.subr.mxu0 0.0
    %2768 = vmatpush1.xpose.msra.mxu0 0.0
    %2769 = vmatprep.subr.mxu0 0.0
    %2770 = vmatpush1.xpose.msra.mxu0 0.0
    %2771 = vmatprep.subr.mxu0 0.0
    %2772 = vmatpush1.xpose.msra.mxu0 0.0
    %2773 = vmatprep.subr.mxu0 0.0
    %2774 = vmatpush1.xpose.msra.mxu0 0.0
    %2775 = vmatprep.subr.mxu0 0.0
    %2776 = vmatpush1.xpose.msra.mxu0 0.0
    %2777 = vmatprep.subr.mxu0 0.0
    %2778 = vmatpush1.xpose.msra.mxu0 0.0
    %2779 = vmatprep.subr.mxu0 0.0
    %2780 = vmatpush1.xpose.msra.mxu0 0.0
    %2781 = vmatprep.subr.mxu0 0.0
    %2782 = vmatpush1.xpose.msra.mxu0 0.0
    %2783 = vmatprep.subr.mxu0 0.0
    %2784 = vmatpush1.xpose.msra.mxu0 0.0
    %2785 = vmatprep.subr.mxu0 0.0
    %2786 = vmatpush1.xpose.msra.mxu0 0.0
    %2787 = vmatprep.subr.mxu0 0.0
    %2788 = vmatpush1.xpose.msra.mxu0 0.0
    %2789 = vmatprep.subr.mxu0 0.0
    %2790 = vmatpush1.xpose.msra.mxu0 0.0
    %2791 = vmatprep.subr.mxu0 0.0
    %2792 = vmatpush1.xpose.msra.mxu0 0.0
    %2793 = vmatprep.subr.mxu0 0.0
    %2794 = vmatpush1.xpose.msra.mxu0 0.0
    %2795 = vmatprep.subr.mxu0 0.0
    %2796 = vmatpush1.xpose.msra.mxu0 0.0
    %2797 = vmatprep.mubr.f32.mxu0 0.0
    %2798 = vmatmul.mubr.f32.gmra.mrb[0].mxu0 %v2729
    %v2799 = vpop.f32.mrb[0].mxu0
    %v2800 = vadd.f32 0.0, %v2799
    %v2801 = vpop.f32.mrb[0].mxu0
    %2802 = vdwg.mxu0
    %2803 = vrot.lane.b32.xlu0 %v2060, 112
    %v2804 = vpop.permute.xlu0 %2803
    %2805 = vrot.lane.b32.xlu0 %v2060, 80
    %v2806 = vpop.permute.xlu0 %2805
    %v2807 = vsel %vm253, %v2804, 0
    %v2809 = vsel %vm253, %v2806, 0
    %2811 = vmatprep.subr.mxu0 0.0
    %2812 = vmatpush1.xpose.msra.mxu0 %v2809
    %2813 = vmatprep.subr.mxu0 0.0
    %2814 = vmatpush1.xpose.msra.mxu0 0.0
    %2815 = vmatprep.subr.mxu0 0.0
    %2816 = vmatpush1.xpose.msra.mxu0 0.0
    %2817 = vmatprep.subr.mxu0 0.0
    %2818 = vmatpush1.xpose.msra.mxu0 0.0
    %2819 = vmatprep.subr.mxu0 0.0
    %2820 = vmatpush1.xpose.msra.mxu0 0.0
    %2821 = vmatprep.subr.mxu0 0.0
    %2822 = vmatpush1.xpose.msra.mxu0 0.0
    %2823 = vmatprep.subr.mxu0 0.0
    %2824 = vmatpush1.xpose.msra.mxu0 0.0
    %2825 = vmatprep.subr.mxu0 0.0
    %2826 = vmatpush1.xpose.msra.mxu0 0.0
    %2827 = vmatprep.subr.mxu0 0.0
    %2828 = vmatpush1.xpose.msra.mxu0 0.0
    %2829 = vmatprep.subr.mxu0 0.0
    %2830 = vmatpush1.xpose.msra.mxu0 0.0
    %2831 = vmatprep.subr.mxu0 0.0
    %2832 = vmatpush1.xpose.msra.mxu0 0.0
    %2833 = vmatprep.subr.mxu0 0.0
    %2834 = vmatpush1.xpose.msra.mxu0 0.0
    %2835 = vmatprep.subr.mxu0 0.0
    %2836 = vmatpush1.xpose.msra.mxu0 0.0
    %2837 = vmatprep.subr.mxu0 0.0
    %2838 = vmatpush1.xpose.msra.mxu0 0.0
    %2839 = vmatprep.subr.mxu0 0.0
    %2840 = vmatpush1.xpose.msra.mxu0 0.0
    %2841 = vmatprep.subr.mxu0 0.0
    %2842 = vmatpush1.xpose.msra.mxu0 0.0
    %2843 = vmatprep.subr.mxu0 0.0
    %2844 = vmatpush1.xpose.msra.mxu0 0.0
    %2845 = vmatprep.subr.mxu0 0.0
    %2846 = vmatpush1.xpose.msra.mxu0 0.0
    %2847 = vmatprep.subr.mxu0 0.0
    %2848 = vmatpush1.xpose.msra.mxu0 0.0
    %2849 = vmatprep.subr.mxu0 0.0
    %2850 = vmatpush1.xpose.msra.mxu0 0.0
    %2851 = vmatprep.subr.mxu0 0.0
    %2852 = vmatpush1.xpose.msra.mxu0 0.0
    %2853 = vmatprep.subr.mxu0 0.0
    %2854 = vmatpush1.xpose.msra.mxu0 0.0
    %2855 = vmatprep.subr.mxu0 0.0
    %2856 = vmatpush1.xpose.msra.mxu0 0.0
    %2857 = vmatprep.subr.mxu0 0.0
    %2858 = vmatpush1.xpose.msra.mxu0 0.0
    %2859 = vmatprep.subr.mxu0 0.0
    %2860 = vmatpush1.xpose.msra.mxu0 0.0
    %2861 = vmatprep.subr.mxu0 0.0
    %2862 = vmatpush1.xpose.msra.mxu0 0.0
    %2863 = vmatprep.subr.mxu0 0.0
    %2864 = vmatpush1.xpose.msra.mxu0 0.0
    %2865 = vmatprep.subr.mxu0 0.0
    %2866 = vmatpush1.xpose.msra.mxu0 0.0
    %2867 = vmatprep.subr.mxu0 0.0
    %2868 = vmatpush1.xpose.msra.mxu0 0.0
    %2869 = vmatprep.subr.mxu0 0.0
    %2870 = vmatpush1.xpose.msra.mxu0 0.0
    %2871 = vmatprep.subr.mxu0 0.0
    %2872 = vmatpush1.xpose.msra.mxu0 0.0
    %2873 = vmatprep.subr.mxu0 0.0
    %2874 = vmatpush1.xpose.msra.mxu0 0.0
    %2875 = vmatprep.mubr.f32.mxu0 0.0
    %2876 = vmatmul.mubr.f32.gmra.mrb[0].mxu0 %v2807
    %v2877 = vpop.f32.mrb[0].mxu0
    %v2878 = vadd.f32 0.0, %v2877
    %v2879 = vpop.f32.mrb[0].mxu0
    %2880 = vdwg.mxu0
    %v2881 = vmul.f32 %v2800, 0.35355338
    %v2882 = vmul.f32 %v2878, 0.35355338
    %v2883 = vsel %vm253, %v2881, -inf
    %2884 = vmax.xlane.f32.xlu0 %v2883
    %v2885 = vpop.xlane.xlu0 %2884
    %v2886 = vsel %vm253, %v2882, -inf
    %2887 = vmax.xlane.f32.xlu0 %v2886
    %v2888 = vpop.xlane.xlu0 %2887
    %v2889 = vsub.f32 %v2881, %v2885
    %v2890 = vsub.f32 %v2882, %v2888
    %v2891 = vmul.f32 %v2889, 1.442695
    %v2892 = vpow.pop %v2891
    %v2893 = vmul.f32 %v2890, 1.442695
    %v2894 = vpow.pop %v2893
    %v2895 = vsel %vm253, %v2892, 0.0
    %2896 = vadd.xlane.f32.xlu0 %v2895
    %v2897 = vpop.xlane.xlu0 %2896
    %v2898 = vsel %vm253, %v2894, 0.0
    %2899 = vadd.xlane.f32.xlu0 %v2898
    %v2900 = vpop.xlane.xlu0 %2899
    %v2901 = vrcp.pop %v2897
    %v2902 = vmul.f32 %v2892, %v2901
    %v2903 = vrcp.pop %v2900
    %v2904 = vmul.f32 %v2894, %v2903
    %2905 = vrot.lane.b32.xlu0 %v2055, 48
    %v2906 = vpop.permute.xlu0 %2905
    %v2909 = vsel %vm253, %v2902, 0
    %2911 = vmatprep.subr.mxu0 0.0
    %2912 = vmatpush1.msra.mxu0 %v2906
    %2913 = vmatprep.subr.mxu0 0.0
    %2914 = vmatpush1.msra.mxu0 0.0
    %2915 = vmatprep.subr.mxu0 0.0
    %2916 = vmatpush1.msra.mxu0 0.0
    %2917 = vmatprep.subr.mxu0 0.0
    %2918 = vmatpush1.msra.mxu0 0.0
    %2919 = vmatprep.subr.mxu0 0.0
    %2920 = vmatpush1.msra.mxu0 0.0
    %2921 = vmatprep.subr.mxu0 0.0
    %2922 = vmatpush1.msra.mxu0 0.0
    %2923 = vmatprep.subr.mxu0 0.0
    %2924 = vmatpush1.msra.mxu0 0.0
    %2925 = vmatprep.subr.mxu0 0.0
    %2926 = vmatpush1.msra.mxu0 0.0
    %2927 = vmatprep.subr.mxu0 0.0
    %2928 = vmatpush1.msra.mxu0 0.0
    %2929 = vmatprep.subr.mxu0 0.0
    %2930 = vmatpush1.msra.mxu0 0.0
    %2931 = vmatprep.subr.mxu0 0.0
    %2932 = vmatpush1.msra.mxu0 0.0
    %2933 = vmatprep.subr.mxu0 0.0
    %2934 = vmatpush1.msra.mxu0 0.0
    %2935 = vmatprep.subr.mxu0 0.0
    %2936 = vmatpush1.msra.mxu0 0.0
    %2937 = vmatprep.subr.mxu0 0.0
    %2938 = vmatpush1.msra.mxu0 0.0
    %2939 = vmatprep.subr.mxu0 0.0
    %2940 = vmatpush1.msra.mxu0 0.0
    %2941 = vmatprep.subr.mxu0 0.0
    %2942 = vmatpush1.msra.mxu0 0.0
    %2943 = vmatprep.subr.mxu0 0.0
    %2944 = vmatpush1.msra.mxu0 0.0
    %2945 = vmatprep.subr.mxu0 0.0
    %2946 = vmatpush1.msra.mxu0 0.0
    %2947 = vmatprep.subr.mxu0 0.0
    %2948 = vmatpush1.msra.mxu0 0.0
    %2949 = vmatprep.subr.mxu0 0.0
    %2950 = vmatpush1.msra.mxu0 0.0
    %2951 = vmatprep.subr.mxu0 0.0
    %2952 = vmatpush1.msra.mxu0 0.0
    %2953 = vmatprep.subr.mxu0 0.0
    %2954 = vmatpush1.msra.mxu0 0.0
    %2955 = vmatprep.subr.mxu0 0.0
    %2956 = vmatpush1.msra.mxu0 0.0
    %2957 = vmatprep.subr.mxu0 0.0
    %2958 = vmatpush1.msra.mxu0 0.0
    %2959 = vmatprep.subr.mxu0 0.0
    %2960 = vmatpush1.msra.mxu0 0.0
    %2961 = vmatprep.subr.mxu0 0.0
    %2962 = vmatpush1.msra.mxu0 0.0
    %2963 = vmatprep.subr.mxu0 0.0
    %2964 = vmatpush1.msra.mxu0 0.0
    %2965 = vmatprep.subr.mxu0 0.0
    %2966 = vmatpush1.msra.mxu0 0.0
    %2967 = vmatprep.subr.mxu0 0.0
    %2968 = vmatpush1.msra.mxu0 0.0
    %2969 = vmatprep.subr.mxu0 0.0
    %2970 = vmatpush1.msra.mxu0 0.0
    %2971 = vmatprep.subr.mxu0 0.0
    %2972 = vmatpush1.msra.mxu0 0.0
    %2973 = vmatprep.subr.mxu0 0.0
    %2974 = vmatpush1.msra.mxu0 0.0
    %2975 = vmatprep.mubr.f32.mxu0 0.0
    %2976 = vmatmul.mubr.f32.gmra.mrb[0].mxu0 %v2909
    %v2977 = vpop.f32.mrb[0].mxu0
    %v2978 = vadd.f32 0.0, %v2977
    %v2979 = vpop.f32.mrb[0].mxu0
    %2980 = vdwg.mxu0
    %2981 = vrot.lane.b32.xlu0 %v2060, 48
    %v2982 = vpop.permute.xlu0 %2981
    %v2985 = vsel %vm253, %v2904, 0
    %2987 = vmatprep.subr.mxu0 0.0
    %2988 = vmatpush1.msra.mxu0 %v2982
    %2989 = vmatprep.subr.mxu0 0.0
    %2990 = vmatpush1.msra.mxu0 0.0
    %2991 = vmatprep.subr.mxu0 0.0
    %2992 = vmatpush1.msra.mxu0 0.0
    %2993 = vmatprep.subr.mxu0 0.0
    %2994 = vmatpush1.msra.mxu0 0.0
    %2995 = vmatprep.subr.mxu0 0.0
    %2996 = vmatpush1.msra.mxu0 0.0
    %2997 = vmatprep.subr.mxu0 0.0
    %2998 = vmatpush1.msra.mxu0 0.0
    %2999 = vmatprep.subr.mxu0 0.0
    %3000 = vmatpush1.msra.mxu0 0.0
    %3001 = vmatprep.subr.mxu0 0.0
    %3002 = vmatpush1.msra.mxu0 0.0
    %3003 = vmatprep.subr.mxu0 0.0
    %3004 = vmatpush1.msra.mxu0 0.0
    %3005 = vmatprep.subr.mxu0 0.0
    %3006 = vmatpush1.msra.mxu0 0.0
    %3007 = vmatprep.subr.mxu0 0.0
    %3008 = vmatpush1.msra.mxu0 0.0
    %3009 = vmatprep.subr.mxu0 0.0
    %3010 = vmatpush1.msra.mxu0 0.0
    %3011 = vmatprep.subr.mxu0 0.0
    %3012 = vmatpush1.msra.mxu0 0.0
    %3013 = vmatprep.subr.mxu0 0.0
    %3014 = vmatpush1.msra.mxu0 0.0
    %3015 = vmatprep.subr.mxu0 0.0
    %3016 = vmatpush1.msra.mxu0 0.0
    %3017 = vmatprep.subr.mxu0 0.0
    %3018 = vmatpush1.msra.mxu0 0.0
    %3019 = vmatprep.subr.mxu0 0.0
    %3020 = vmatpush1.msra.mxu0 0.0
    %3021 = vmatprep.subr.mxu0 0.0
    %3022 = vmatpush1.msra.mxu0 0.0
    %3023 = vmatprep.subr.mxu0 0.0
    %3024 = vmatpush1.msra.mxu0 0.0
    %3025 = vmatprep.subr.mxu0 0.0
    %3026 = vmatpush1.msra.mxu0 0.0
    %3027 = vmatprep.subr.mxu0 0.0
    %3028 = vmatpush1.msra.mxu0 0.0
    %3029 = vmatprep.subr.mxu0 0.0
    %3030 = vmatpush1.msra.mxu0 0.0
    %3031 = vmatprep.subr.mxu0 0.0
    %3032 = vmatpush1.msra.mxu0 0.0
    %3033 = vmatprep.subr.mxu0 0.0
    %3034 = vmatpush1.msra.mxu0 0.0
    %3035 = vmatprep.subr.mxu0 0.0
    %3036 = vmatpush1.msra.mxu0 0.0
    %3037 = vmatprep.subr.mxu0 0.0
    %3038 = vmatpush1.msra.mxu0 0.0
    %3039 = vmatprep.subr.mxu0 0.0
    %3040 = vmatpush1.msra.mxu0 0.0
    %3041 = vmatprep.subr.mxu0 0.0
    %3042 = vmatpush1.msra.mxu0 0.0
    %3043 = vmatprep.subr.mxu0 0.0
    %3044 = vmatpush1.msra.mxu0 0.0
    %3045 = vmatprep.subr.mxu0 0.0
    %3046 = vmatpush1.msra.mxu0 0.0
    %3047 = vmatprep.subr.mxu0 0.0
    %3048 = vmatpush1.msra.mxu0 0.0
    %3049 = vmatprep.subr.mxu0 0.0
    %3050 = vmatpush1.msra.mxu0 0.0
    %3051 = vmatprep.mubr.f32.mxu0 0.0
    %3052 = vmatmul.mubr.f32.gmra.mrb[0].mxu0 %v2985
    %v3053 = vpop.f32.mrb[0].mxu0
    %v3054 = vadd.f32 0.0, %v3053
    %v3055 = vpop.f32.mrb[0].mxu0
    %3056 = vdwg.mxu0
    %3057 = vrot.lane.b32.xlu0 %v2055, 104
    %v3058 = vpop.permute.xlu0 %3057
    %3059 = vrot.lane.b32.xlu0 %v2055, 72
    %v3060 = vpop.permute.xlu0 %3059
    %v3061 = vsel %vm253, %v3058, 0
    %v3063 = vsel %vm253, %v3060, 0
    %3065 = vmatprep.subr.mxu0 0.0
    %3066 = vmatpush1.xpose.msra.mxu0 %v3063
    %3067 = vmatprep.subr.mxu0 0.0
    %3068 = vmatpush1.xpose.msra.mxu0 0.0
    %3069 = vmatprep.subr.mxu0 0.0
    %3070 = vmatpush1.xpose.msra.mxu0 0.0
    %3071 = vmatprep.subr.mxu0 0.0
    %3072 = vmatpush1.xpose.msra.mxu0 0.0
    %3073 = vmatprep.subr.mxu0 0.0
    %3074 = vmatpush1.xpose.msra.mxu0 0.0
    %3075 = vmatprep.subr.mxu0 0.0
    %3076 = vmatpush1.xpose.msra.mxu0 0.0
    %3077 = vmatprep.subr.mxu0 0.0
    %3078 = vmatpush1.xpose.msra.mxu0 0.0
    %3079 = vmatprep.subr.mxu0 0.0
    %3080 = vmatpush1.xpose.msra.mxu0 0.0
    %3081 = vmatprep.subr.mxu0 0.0
    %3082 = vmatpush1.xpose.msra.mxu0 0.0
    %3083 = vmatprep.subr.mxu0 0.0
    %3084 = vmatpush1.xpose.msra.mxu0 0.0
    %3085 = vmatprep.subr.mxu0 0.0
    %3086 = vmatpush1.xpose.msra.mxu0 0.0
    %3087 = vmatprep.subr.mxu0 0.0
    %3088 = vmatpush1.xpose.msra.mxu0 0.0
    %3089 = vmatprep.subr.mxu0 0.0
    %3090 = vmatpush1.xpose.msra.mxu0 0.0
    %3091 = vmatprep.subr.mxu0 0.0
    %3092 = vmatpush1.xpose.msra.mxu0 0.0
    %3093 = vmatprep.subr.mxu0 0.0
    %3094 = vmatpush1.xpose.msra.mxu0 0.0
    %3095 = vmatprep.subr.mxu0 0.0
    %3096 = vmatpush1.xpose.msra.mxu0 0.0
    %3097 = vmatprep.subr.mxu0 0.0
    %3098 = vmatpush1.xpose.msra.mxu0 0.0
    %3099 = vmatprep.subr.mxu0 0.0
    %3100 = vmatpush1.xpose.msra.mxu0 0.0
    %3101 = vmatprep.subr.mxu0 0.0
    %3102 = vmatpush1.xpose.msra.mxu0 0.0
    %3103 = vmatprep.subr.mxu0 0.0
    %3104 = vmatpush1.xpose.msra.mxu0 0.0
    %3105 = vmatprep.subr.mxu0 0.0
    %3106 = vmatpush1.xpose.msra.mxu0 0.0
    %3107 = vmatprep.subr.mxu0 0.0
    %3108 = vmatpush1.xpose.msra.mxu0 0.0
    %3109 = vmatprep.subr.mxu0 0.0
    %3110 = vmatpush1.xpose.msra.mxu0 0.0
    %3111 = vmatprep.subr.mxu0 0.0
    %3112 = vmatpush1.xpose.msra.mxu0 0.0
    %3113 = vmatprep.subr.mxu0 0.0
    %3114 = vmatpush1.xpose.msra.mxu0 0.0
    %3115 = vmatprep.subr.mxu0 0.0
    %3116 = vmatpush1.xpose.msra.mxu0 0.0
    %3117 = vmatprep.subr.mxu0 0.0
    %3118 = vmatpush1.xpose.msra.mxu0 0.0
    %3119 = vmatprep.subr.mxu0 0.0
    %3120 = vmatpush1.xpose.msra.mxu0 0.0
    %3121 = vmatprep.subr.mxu0 0.0
    %3122 = vmatpush1.xpose.msra.mxu0 0.0
    %3123 = vmatprep.subr.mxu0 0.0
    %3124 = vmatpush1.xpose.msra.mxu0 0.0
    %3125 = vmatprep.subr.mxu0 0.0
    %3126 = vmatpush1.xpose.msra.mxu0 0.0
    %3127 = vmatprep.subr.mxu0 0.0
    %3128 = vmatpush1.xpose.msra.mxu0 0.0
    %3129 = vmatprep.mubr.f32.mxu0 0.0
    %3130 = vmatmul.mubr.f32.gmra.mrb[0].mxu0 %v3061
    %v3131 = vpop.f32.mrb[0].mxu0
    %v3132 = vadd.f32 0.0, %v3131
    %v3133 = vpop.f32.mrb[0].mxu0
    %3134 = vdwg.mxu0
    %3135 = vrot.lane.b32.xlu0 %v2060, 104
    %v3136 = vpop.permute.xlu0 %3135
    %3137 = vrot.lane.b32.xlu0 %v2060, 72
    %v3138 = vpop.permute.xlu0 %3137
    %v3139 = vsel %vm253, %v3136, 0
    %v3141 = vsel %vm253, %v3138, 0
    %3143 = vmatprep.subr.mxu0 0.0
    %3144 = vmatpush1.xpose.msra.mxu0 %v3141
    %3145 = vmatprep.subr.mxu0 0.0
    %3146 = vmatpush1.xpose.msra.mxu0 0.0
    %3147 = vmatprep.subr.mxu0 0.0
    %3148 = vmatpush1.xpose.msra.mxu0 0.0
    %3149 = vmatprep.subr.mxu0 0.0
    %3150 = vmatpush1.xpose.msra.mxu0 0.0
    %3151 = vmatprep.subr.mxu0 0.0
    %3152 = vmatpush1.xpose.msra.mxu0 0.0
    %3153 = vmatprep.subr.mxu0 0.0
    %3154 = vmatpush1.xpose.msra.mxu0 0.0
    %3155 = vmatprep.subr.mxu0 0.0
    %3156 = vmatpush1.xpose.msra.mxu0 0.0
    %3157 = vmatprep.subr.mxu0 0.0
    %3158 = vmatpush1.xpose.msra.mxu0 0.0
    %3159 = vmatprep.subr.mxu0 0.0
    %3160 = vmatpush1.xpose.msra.mxu0 0.0
    %3161 = vmatprep.subr.mxu0 0.0
    %3162 = vmatpush1.xpose.msra.mxu0 0.0
    %3163 = vmatprep.subr.mxu0 0.0
    %3164 = vmatpush1.xpose.msra.mxu0 0.0
    %3165 = vmatprep.subr.mxu0 0.0
    %3166 = vmatpush1.xpose.msra.mxu0 0.0
    %3167 = vmatprep.subr.mxu0 0.0
    %3168 = vmatpush1.xpose.msra.mxu0 0.0
    %3169 = vmatprep.subr.mxu0 0.0
    %3170 = vmatpush1.xpose.msra.mxu0 0.0
    %3171 = vmatprep.subr.mxu0 0.0
    %3172 = vmatpush1.xpose.msra.mxu0 0.0
    %3173 = vmatprep.subr.mxu0 0.0
    %3174 = vmatpush1.xpose.msra.mxu0 0.0
    %3175 = vmatprep.subr.mxu0 0.0
    %3176 = vmatpush1.xpose.msra.mxu0 0.0
    %3177 = vmatprep.subr.mxu0 0.0
    %3178 = vmatpush1.xpose.msra.mxu0 0.0
    %3179 = vmatprep.subr.mxu0 0.0
    %3180 = vmatpush1.xpose.msra.mxu0 0.0
    %3181 = vmatprep.subr.mxu0 0.0
    %3182 = vmatpush1.xpose.msra.mxu0 0.0
    %3183 = vmatprep.subr.mxu0 0.0
    %3184 = vmatpush1.xpose.msra.mxu0 0.0
    %3185 = vmatprep.subr.mxu0 0.0
    %3186 = vmatpush1.xpose.msra.mxu0 0.0
    %3187 = vmatprep.subr.mxu0 0.0
    %3188 = vmatpush1.xpose.msra.mxu0 0.0
    %3189 = vmatprep.subr.mxu0 0.0
    %3190 = vmatpush1.xpose.msra.mxu0 0.0
    %3191 = vmatprep.subr.mxu0 0.0
    %3192 = vmatpush1.xpose.msra.mxu0 0.0
    %3193 = vmatprep.subr.mxu0 0.0
    %3194 = vmatpush1.xpose.msra.mxu0 0.0
    %3195 = vmatprep.subr.mxu0 0.0
    %3196 = vmatpush1.xpose.msra.mxu0 0.0
    %3197 = vmatprep.subr.mxu0 0.0
    %3198 = vmatpush1.xpose.msra.mxu0 0.0
    %3199 = vmatprep.subr.mxu0 0.0
    %3200 = vmatpush1.xpose.msra.mxu0 0.0
    %3201 = vmatprep.subr.mxu0 0.0
    %3202 = vmatpush1.xpose.msra.mxu0 0.0
    %3203 = vmatprep.subr.mxu0 0.0
    %3204 = vmatpush1.xpose.msra.mxu0 0.0
    %3205 = vmatprep.subr.mxu0 0.0
    %3206 = vmatpush1.xpose.msra.mxu0 0.0
    %3207 = vmatprep.mubr.f32.mxu0 0.0
    %3208 = vmatmul.mubr.f32.gmra.mrb[0].mxu0 %v3139
    %v3209 = vpop.f32.mrb[0].mxu0
    %v3210 = vadd.f32 0.0, %v3209
    %v3211 = vpop.f32.mrb[0].mxu0
    %3212 = vdwg.mxu0
    %v3213 = vmul.f32 %v3132, 0.35355338
    %v3214 = vmul.f32 %v3210, 0.35355338
    %v3215 = vsel %vm253, %v3213, -inf
    %3216 = vmax.xlane.f32.xlu0 %v3215
    %v3217 = vpop.xlane.xlu0 %3216
    %v3218 = vsel %vm253, %v3214, -inf
    %3219 = vmax.xlane.f32.xlu0 %v3218
    %v3220 = vpop.xlane.xlu0 %3219
    %v3221 = vsub.f32 %v3213, %v3217
    %v3222 = vsub.f32 %v3214, %v3220
    %v3223 = vmul.f32 %v3221, 1.442695
    %v3224 = vpow.pop %v3223
    %v3225 = vmul.f32 %v3222, 1.442695
    %v3226 = vpow.pop %v3225
    %v3227 = vsel %vm253, %v3224, 0.0
    %3228 = vadd.xlane.f32.xlu0 %v3227
    %v3229 = vpop.xlane.xlu0 %3228
    %v3230 = vsel %vm253, %v3226, 0.0
    %3231 = vadd.xlane.f32.xlu0 %v3230
    %v3232 = vpop.xlane.xlu0 %3231
    %v3233 = vrcp.pop %v3229
    %v3234 = vmul.f32 %v3224, %v3233
    %v3235 = vrcp.pop %v3232
    %v3236 = vmul.f32 %v3226, %v3235
    %3237 = vrot.lane.b32.xlu0 %v2055, 40
    %v3238 = vpop.permute.xlu0 %3237
    %v3241 = vsel %vm253, %v3234, 0
    %3243 = vmatprep.subr.mxu0 0.0
    %3244 = vmatpush1.msra.mxu0 %v3238
    %3245 = vmatprep.subr.mxu0 0.0
    %3246 = vmatpush1.msra.mxu0 0.0
    %3247 = vmatprep.subr.mxu0 0.0
    %3248 = vmatpush1.msra.mxu0 0.0
    %3249 = vmatprep.subr.mxu0 0.0
    %3250 = vmatpush1.msra.mxu0 0.0
    %3251 = vmatprep.subr.mxu0 0.0
    %3252 = vmatpush1.msra.mxu0 0.0
    %3253 = vmatprep.subr.mxu0 0.0
    %3254 = vmatpush1.msra.mxu0 0.0
    %3255 = vmatprep.subr.mxu0 0.0
    %3256 = vmatpush1.msra.mxu0 0.0
    %3257 = vmatprep.subr.mxu0 0.0
    %3258 = vmatpush1.msra.mxu0 0.0
    %3259 = vmatprep.subr.mxu0 0.0
    %3260 = vmatpush1.msra.mxu0 0.0
    %3261 = vmatprep.subr.mxu0 0.0
    %3262 = vmatpush1.msra.mxu0 0.0
    %3263 = vmatprep.subr.mxu0 0.0
    %3264 = vmatpush1.msra.mxu0 0.0
    %3265 = vmatprep.subr.mxu0 0.0
    %3266 = vmatpush1.msra.mxu0 0.0
    %3267 = vmatprep.subr.mxu0 0.0
    %3268 = vmatpush1.msra.mxu0 0.0
    %3269 = vmatprep.subr.mxu0 0.0
    %3270 = vmatpush1.msra.mxu0 0.0
    %3271 = vmatprep.subr.mxu0 0.0
    %3272 = vmatpush1.msra.mxu0 0.0
    %3273 = vmatprep.subr.mxu0 0.0
    %3274 = vmatpush1.msra.mxu0 0.0
    %3275 = vmatprep.subr.mxu0 0.0
    %3276 = vmatpush1.msra.mxu0 0.0
    %3277 = vmatprep.subr.mxu0 0.0
    %3278 = vmatpush1.msra.mxu0 0.0
    %3279 = vmatprep.subr.mxu0 0.0
    %3280 = vmatpush1.msra.mxu0 0.0
    %3281 = vmatprep.subr.mxu0 0.0
    %3282 = vmatpush1.msra.mxu0 0.0
    %3283 = vmatprep.subr.mxu0 0.0
    %3284 = vmatpush1.msra.mxu0 0.0
    %3285 = vmatprep.subr.mxu0 0.0
    %3286 = vmatpush1.msra.mxu0 0.0
    %3287 = vmatprep.subr.mxu0 0.0
    %3288 = vmatpush1.msra.mxu0 0.0
    %3289 = vmatprep.subr.mxu0 0.0
    %3290 = vmatpush1.msra.mxu0 0.0
    %3291 = vmatprep.subr.mxu0 0.0
    %3292 = vmatpush1.msra.mxu0 0.0
    %3293 = vmatprep.subr.mxu0 0.0
    %3294 = vmatpush1.msra.mxu0 0.0
    %3295 = vmatprep.subr.mxu0 0.0
    %3296 = vmatpush1.msra.mxu0 0.0
    %3297 = vmatprep.subr.mxu0 0.0
    %3298 = vmatpush1.msra.mxu0 0.0
    %3299 = vmatprep.subr.mxu0 0.0
    %3300 = vmatpush1.msra.mxu0 0.0
    %3301 = vmatprep.subr.mxu0 0.0
    %3302 = vmatpush1.msra.mxu0 0.0
    %3303 = vmatprep.subr.mxu0 0.0
    %3304 = vmatpush1.msra.mxu0 0.0
    %3305 = vmatprep.subr.mxu0 0.0
    %3306 = vmatpush1.msra.mxu0 0.0
    %3307 = vmatprep.mubr.f32.mxu0 0.0
    %3308 = vmatmul.mubr.f32.gmra.mrb[0].mxu0 %v3241
    %v3309 = vpop.f32.mrb[0].mxu0
    %v3310 = vadd.f32 0.0, %v3309
    %v3311 = vpop.f32.mrb[0].mxu0
    %3312 = vdwg.mxu0
    %3313 = vrot.lane.b32.xlu0 %v2060, 40
    %v3314 = vpop.permute.xlu0 %3313
    %v3317 = vsel %vm253, %v3236, 0
    %3319 = vmatprep.subr.mxu0 0.0
    %3320 = vmatpush1.msra.mxu0 %v3314
    %3321 = vmatprep.subr.mxu0 0.0
    %3322 = vmatpush1.msra.mxu0 0.0
    %3323 = vmatprep.subr.mxu0 0.0
    %3324 = vmatpush1.msra.mxu0 0.0
    %3325 = vmatprep.subr.mxu0 0.0
    %3326 = vmatpush1.msra.mxu0 0.0
    %3327 = vmatprep.subr.mxu0 0.0
    %3328 = vmatpush1.msra.mxu0 0.0
    %3329 = vmatprep.subr.mxu0 0.0
    %3330 = vmatpush1.msra.mxu0 0.0
    %3331 = vmatprep.subr.mxu0 0.0
    %3332 = vmatpush1.msra.mxu0 0.0
    %3333 = vmatprep.subr.mxu0 0.0
    %3334 = vmatpush1.msra.mxu0 0.0
    %3335 = vmatprep.subr.mxu0 0.0
    %3336 = vmatpush1.msra.mxu0 0.0
    %3337 = vmatprep.subr.mxu0 0.0
    %3338 = vmatpush1.msra.mxu0 0.0
    %3339 = vmatprep.subr.mxu0 0.0
    %3340 = vmatpush1.msra.mxu0 0.0
    %3341 = vmatprep.subr.mxu0 0.0
    %3342 = vmatpush1.msra.mxu0 0.0
    %3343 = vmatprep.subr.mxu0 0.0
    %3344 = vmatpush1.msra.mxu0 0.0
    %3345 = vmatprep.subr.mxu0 0.0
    %3346 = vmatpush1.msra.mxu0 0.0
    %3347 = vmatprep.subr.mxu0 0.0
    %3348 = vmatpush1.msra.mxu0 0.0
    %3349 = vmatprep.subr.mxu0 0.0
    %3350 = vmatpush1.msra.mxu0 0.0
    %3351 = vmatprep.subr.mxu0 0.0
    %3352 = vmatpush1.msra.mxu0 0.0
    %3353 = vmatprep.subr.mxu0 0.0
    %3354 = vmatpush1.msra.mxu0 0.0
    %3355 = vmatprep.subr.mxu0 0.0
    %3356 = vmatpush1.msra.mxu0 0.0
    %3357 = vmatprep.subr.mxu0 0.0
    %3358 = vmatpush1.msra.mxu0 0.0
    %3359 = vmatprep.subr.mxu0 0.0
    %3360 = vmatpush1.msra.mxu0 0.0
    %3361 = vmatprep.subr.mxu0 0.0
    %3362 = vmatpush1.msra.mxu0 0.0
    %3363 = vmatprep.subr.mxu0 0.0
    %3364 = vmatpush1.msra.mxu0 0.0
    %3365 = vmatprep.subr.mxu0 0.0
    %3366 = vmatpush1.msra.mxu0 0.0
    %3367 = vmatprep.subr.mxu0 0.0
    %3368 = vmatpush1.msra.mxu0 0.0
    %3369 = vmatprep.subr.mxu0 0.0
    %3370 = vmatpush1.msra.mxu0 0.0
    %3371 = vmatprep.subr.mxu0 0.0
    %3372 = vmatpush1.msra.mxu0 0.0
    %3373 = vmatprep.subr.mxu0 0.0
    %3374 = vmatpush1.msra.mxu0 0.0
    %3375 = vmatprep.subr.mxu0 0.0
    %3376 = vmatpush1.msra.mxu0 0.0
    %3377 = vmatprep.subr.mxu0 0.0
    %3378 = vmatpush1.msra.mxu0 0.0
    %3379 = vmatprep.subr.mxu0 0.0
    %3380 = vmatpush1.msra.mxu0 0.0
    %3381 = vmatprep.subr.mxu0 0.0
    %3382 = vmatpush1.msra.mxu0 0.0
    %3383 = vmatprep.mubr.f32.mxu0 0.0
    %3384 = vmatmul.mubr.f32.gmra.mrb[0].mxu0 %v3317
    %v3385 = vpop.f32.mrb[0].mxu0
    %v3386 = vadd.f32 0.0, %v3385
    %v3387 = vpop.f32.mrb[0].mxu0
    %3388 = vdwg.mxu0
    %3391 = vrot.lane.b32.xlu0 %v2646, 8
    %v3392 = vpop.permute.xlu0 %3391
    %3393 = vrot.lane.b32.xlu0 %v2722, 8
    %v3394 = vpop.permute.xlu0 %3393
    %3399 = vrot.lane.b32.xlu0 %v2978, 16
    %v3400 = vpop.permute.xlu0 %3399
    %3401 = vrot.lane.b32.xlu0 %v3054, 16
    %v3402 = vpop.permute.xlu0 %3401
    %3407 = vrot.lane.b32.xlu0 %v3310, 24
    %v3408 = vpop.permute.xlu0 %3407
    %3409 = vrot.lane.b32.xlu0 %v3386, 24
    %v3410 = vpop.permute.xlu0 %3409
    %v3413 = vsel %vm253, %v2314, %v3392
    %v3414 = vsel %vm253, %v2390, %v3394
    %v3415 = vsel %vm1603, %v3413, %v3400
    %v3416 = vsel %vm1603, %v3414, %v3402
    %v3417 = vsel %vm1606, %v3415, %v3408
    %v3418 = vsel %vm1606, %v3416, %v3410
    %v3419 = vld [vmem:[%s1 + $0xe8] sm:$0xff]
    %v3420 = vld [vmem:[%s1 + $0xf0] sm:$0xff]
    %v3421 = vld [vmem:[%s1 + $0xf8] sm:$0xff]
    %v3422 = vld [vmem:[%s1 + $0x100] sm:$0xff]
    %v3424 = vsel %vm120, %v3417, 0
    %v3427 = vsel %vm120, %v3418, 0
    %3429 = vmatprep.subr.mxu0 0.0
    %3430 = vmatpush1.msra.mxu0 %v3419
    %3431 = vmatprep.subr.mxu0 0.0
    %3432 = vmatpush1.msra.mxu0 %v3420
    %3433 = vmatprep.subr.mxu0 0.0
    %3434 = vmatpush1.msra.mxu0 %v3421
    %3435 = vmatprep.subr.mxu0 0.0
    %3436 = vmatpush1.msra.mxu0 %v3422
    %3437 = vmatprep.subr.mxu0 0.0
    %3438 = vmatpush1.msra.mxu0 0.0
    %3439 = vmatprep.subr.mxu0 0.0
    %3440 = vmatpush1.msra.mxu0 0.0
    %3441 = vmatprep.subr.mxu0 0.0
    %3442 = vmatpush1.msra.mxu0 0.0
    %3443 = vmatprep.subr.mxu0 0.0
    %3444 = vmatpush1.msra.mxu0 0.0
    %3445 = vmatprep.subr.mxu0 0.0
    %3446 = vmatpush1.msra.mxu0 0.0
    %3447 = vmatprep.subr.mxu0 0.0
    %3448 = vmatpush1.msra.mxu0 0.0
    %3449 = vmatprep.subr.mxu0 0.0
    %3450 = vmatpush1.msra.mxu0 0.0
    %3451 = vmatprep.subr.mxu0 0.0
    %3452 = vmatpush1.msra.mxu0 0.0
    %3453 = vmatprep.subr.mxu0 0.0
    %3454 = vmatpush1.msra.mxu0 0.0
    %3455 = vmatprep.subr.mxu0 0.0
    %3456 = vmatpush1.msra.mxu0 0.0
    %3457 = vmatprep.subr.mxu0 0.0
    %3458 = vmatpush1.msra.mxu0 0.0
    %3459 = vmatprep.subr.mxu0 0.0
    %3460 = vmatpush1.msra.mxu0 0.0
    %3461 = vmatprep.subr.mxu0 0.0
    %3462 = vmatpush1.msra.mxu0 0.0
    %3463 = vmatprep.subr.mxu0 0.0
    %3464 = vmatpush1.msra.mxu0 0.0
    %3465 = vmatprep.subr.mxu0 0.0
    %3466 = vmatpush1.msra.mxu0 0.0
    %3467 = vmatprep.subr.mxu0 0.0
    %3468 = vmatpush1.msra.mxu0 0.0
    %3469 = vmatprep.subr.mxu0 0.0
    %3470 = vmatpush1.msra.mxu0 0.0
    %3471 = vmatprep.subr.mxu0 0.0
    %3472 = vmatpush1.msra.mxu0 0.0
    %3473 = vmatprep.subr.mxu0 0.0
    %3474 = vmatpush1.msra.mxu0 0.0
    %3475 = vmatprep.subr.mxu0 0.0
    %3476 = vmatpush1.msra.mxu0 0.0
    %3477 = vmatprep.subr.mxu0 0.0
    %3478 = vmatpush1.msra.mxu0 0.0
    %3479 = vmatprep.subr.mxu0 0.0
    %3480 = vmatpush1.msra.mxu0 0.0
    %3481 = vmatprep.subr.mxu0 0.0
    %3482 = vmatpush1.msra.mxu0 0.0
    %3483 = vmatprep.subr.mxu0 0.0
    %3484 = vmatpush1.msra.mxu0 0.0
    %3485 = vmatprep.subr.mxu0 0.0
    %3486 = vmatpush1.msra.mxu0 0.0
    %3487 = vmatprep.subr.mxu0 0.0
    %3488 = vmatpush1.msra.mxu0 0.0
    %3489 = vmatprep.subr.mxu0 0.0
    %3490 = vmatpush1.msra.mxu0 0.0
    %3491 = vmatprep.subr.mxu0 0.0
    %3492 = vmatpush1.msra.mxu0 0.0
    %3493 = vmatprep.mubr.f32.mxu0 0.0
    %3494 = vmatmul.mubr.f32.gmra.mrb[0].mxu0 %v3424
    %v3495 = vpop.f32.mrb[0].mxu0
    %v3496 = vadd.f32 0.0, %v3495
    %v3497 = vpop.f32.mrb[0].mxu0
    %3498 = vmatprep.mubr.f32.mxu0 0.0
    %3499 = vmatmul.mubr.f32.gmra.mrb[0].mxu0 %v3427
    %v3500 = vpop.f32.mrb[0].mxu0
    %v3501 = vadd.f32 0.0, %v3500
    %v3502 = vpop.f32.mrb[0].mxu0
    %3503 = vdwg.mxu0
    %v3504 = vadd.f32 %v1931, %v3496
    %v3505 = vadd.f32 %v1932, %v3501
    %v3506 = vld [vmem:[%s1 + $0x108] sm:$0x1]
    %v3507 = vlaneseq
    %v3508 = vshrl.u32 %v3507, 7
    %v3509 = vsub.s32 0, %v3508
    %v3510 = vrot.slane %v3506, %v3509
    %v3511 = vadd.f32 %v3504, %v3510
    %v3512 = vadd.f32 %v3505, %v3510
    %v3513 = vld [vmem:[%s1 + $0x110] sm:$0x1]
    %v3514 = vld [vmem:[%s1 + $0x118] sm:$0x1]
    %v3515 = vsel %vm120, %v3511, 0.0
    %3516 = vadd.xlane.f32.xlu0 %v3515
    %v3517 = vpop.xlane.xlu0 %3516
    %v3518 = vsel %vm120, %v3512, 0.0
    %3519 = vadd.xlane.f32.xlu0 %v3518
    %v3520 = vpop.xlane.xlu0 %3519
    %v3521 = vmul.f32 %v3517, %v127
    %v3522 = vmul.f32 %v3520, %v127
    %v3523 = vsub.f32 %v3511, %v3521
    %v3524 = vsub.f32 %v3512, %v3522
    %v3525 = vmul.f32 %v3523, %v3523
    %v3526 = vmul.f32 %v3524, %v3524
    %v3527 = vsel %vm120, %v3525, 0.0
    %3528 = vadd.xlane.f32.xlu0 %v3527
    %v3529 = vpop.xlane.xlu0 %3528
    %v3530 = vsel %vm120, %v3526, 0.0
    %3531 = vadd.xlane.f32.xlu0 %v3530
    %v3532 = vpop.xlane.xlu0 %3531
    %v3533 = vmul.f32 %v3529, %v127
    %v3534 = vmul.f32 %v3532, %v127
    %v3535 = vadd.f32 %v3533, 1e-05
    %v3536 = vadd.f32 %v3534, 1e-05
    %v3537 = vrsqrt.pop %v3535
    %v3538 = vrsqrt.pop %v3536
    %v3539 = vmul.f32 %v3523, %v3537
    %v3540 = vmul.f32 %v3524, %v3538
    %v3541 = vlaneseq
    %v3542 = vshrl.u32 %v3541, 7
    %v3543 = vsub.s32 0, %v3542
    %v3544 = vrot.slane %v3513, %v3543
    %v3545 = vmul.f32 %v3539, %v3544
    %v3546 = vmul.f32 %v3540, %v3544
    %v3547 = vlaneseq
    %v3548 = vshrl.u32 %v3547, 7
    %v3549 = vsub.s32 0, %v3548
    %v3550 = vrot.slane %v3514, %v3549
    %v3551 = vadd.f32 %v3545, %v3550
    %v3552 = vadd.f32 %v3546, %v3550
    %v3553 = vld [vmem:[%s1 + $0x120] sm:$0xff]
    %v3554 = vld [vmem:[%s1 + $0x128] sm:$0xff]
    %v3555 = vld [vmem:[%s1 + $0x130] sm:$0xff]
    %v3556 = vld [vmem:[%s1 + $0x138] sm:$0xff]
    %v3557 = vld [vmem:[%s1 + $0x140] sm:$0x1]
    %v3558 = vlaneseq
    %v3559 = vshrl.u32 %v3558, 7
    %v3560 = vsub.s32 0, %v3559
    %v3561 = vrot.slane %v3557, %v3560
    %v3563 = vsel %vm120, %v3551, 0
    %v3566 = vsel %vm120, %v3552, 0
    %3568 = vmatprep.subr.mxu0 0.0
    %3569 = vmatpush1.msra.mxu0 %v3553
    %3570 = vmatprep.subr.mxu0 0.0
    %3571 = vmatpush1.msra.mxu0 %v3554
    %3572 = vmatprep.subr.mxu0 0.0
    %3573 = vmatpush1.msra.mxu0 %v3555
    %3574 = vmatprep.subr.mxu0 0.0
    %3575 = vmatpush1.msra.mxu0 %v3556
    %3576 = vmatprep.subr.mxu0 0.0
    %3577 = vmatpush1.msra.mxu0 0.0
    %3578 = vmatprep.subr.mxu0 0.0
    %3579 = vmatpush1.msra.mxu0 0.0
    %3580 = vmatprep.subr.mxu0 0.0
    %3581 = vmatpush1.msra.mxu0 0.0
    %3582 = vmatprep.subr.mxu0 0.0
    %3583 = vmatpush1.msra.mxu0 0.0
    %3584 = vmatprep.subr.mxu0 0.0
    %3585 = vmatpush1.msra.mxu0 0.0
    %3586 = vmatprep.subr.mxu0 0.0
    %3587 = vmatpush1.msra.mxu0 0.0
    %3588 = vmatprep.subr.mxu0 0.0
    %3589 = vmatpush1.msra.mxu0 0.0
    %3590 = vmatprep.subr.mxu0 0.0
    %3591 = vmatpush1.msra.mxu0 0.0
    %3592 = vmatprep.subr.mxu0 0.0
    %3593 = vmatpush1.msra.mxu0 0.0
    %3594 = vmatprep.subr.mxu0 0.0
    %3595 = vmatpush1.msra.mxu0 0.0
    %3596 = vmatprep.subr.mxu0 0.0
    %3597 = vmatpush1.msra.mxu0 0.0
    %3598 = vmatprep.subr.mxu0 0.0
    %3599 = vmatpush1.msra.mxu0 0.0
    %3600 = vmatprep.subr.mxu0 0.0
    %3601 = vmatpush1.msra.mxu0 0.0
    %3602 = vmatprep.subr.mxu0 0.0
    %3603 = vmatpush1.msra.mxu0 0.0
    %3604 = vmatprep.subr.mxu0 0.0
    %3605 = vmatpush1.msra.mxu0 0.0
    %3606 = vmatprep.subr.mxu0 0.0
    %3607 = vmatpush1.msra.mxu0 0.0
    %3608 = vmatprep.subr.mxu0 0.0
    %3609 = vmatpush1.msra.mxu0 0.0
    %3610 = vmatprep.subr.mxu0 0.0
    %3611 = vmatpush1.msra.mxu0 0.0
    %3612 = vmatprep.subr.mxu0 0.0
    %3613 = vmatpush1.msra.mxu0 0.0
    %3614 = vmatprep.subr.mxu0 0.0
    %3615 = vmatpush1.msra.mxu0 0.0
    %3616 = vmatprep.subr.mxu0 0.0
    %3617 = vmatpush1.msra.mxu0 0.0
    %3618 = vmatprep.subr.mxu0 0.0
    %3619 = vmatpush1.msra.mxu0 0.0
    %3620 = vmatprep.subr.mxu0 0.0
    %3621 = vmatpush1.msra.mxu0 0.0
    %3622 = vmatprep.subr.mxu0 0.0
    %3623 = vmatpush1.msra.mxu0 0.0
    %3624 = vmatprep.subr.mxu0 0.0
    %3625 = vmatpush1.msra.mxu0 0.0
    %3626 = vmatprep.subr.mxu0 0.0
    %3627 = vmatpush1.msra.mxu0 0.0
    %3628 = vmatprep.subr.mxu0 0.0
    %3629 = vmatpush1.msra.mxu0 0.0
    %3630 = vmatprep.subr.mxu0 0.0
    %3631 = vmatpush1.msra.mxu0 0.0
    %3632 = vmatprep.mubr.f32.mxu0 0.0
    %3633 = vmatmul.mubr.f32.gmra.mrb[0].mxu0 %v3563
    %v3634 = vpop.f32.mrb[0].mxu0
    %v3635 = vadd.f32 %v3561, %v3634
    %v3636 = vpop.f32.mrb[0].mxu0
    %3637 = vmatprep.mubr.f32.mxu0 0.0
    %3638 = vmatmul.mubr.f32.gmra.mrb[0].mxu0 %v3566
    %v3639 = vpop.f32.mrb[0].mxu0
    %v3640 = vadd.f32 %v3561, %v3639
    %v3641 = vpop.f32.mrb[0].mxu0
    %3642 = vdwg.mxu0
    %v3643 = vmax.f32 %v3635, 0.0
    %v3644 = vmax.f32 %v3640, 0.0
    %v3645 = vld [vmem:[%s1 + $0x148] sm:$0xff]
    %v3646 = vld [vmem:[%s1 + $0x150] sm:$0xff]
    %v3647 = vld [vmem:[%s1 + $0x158] sm:$0xff]
    %v3648 = vld [vmem:[%s1 + $0x160] sm:$0xff]
    %v3650 = vsel %vm120, %v3643, 0
    %v3653 = vsel %vm120, %v3644, 0
    %3655 = vmatprep.subr.mxu0 0.0
    %3656 = vmatpush1.msra.mxu0 %v3645
    %3657 = vmatprep.subr.mxu0 0.0
    %3658 = vmatpush1.msra.mxu0 %v3646
    %3659 = vmatprep.subr.mxu0 0.0
    %3660 = vmatpush1.msra.mxu0 %v3647
    %3661 = vmatprep.subr.mxu0 0.0
    %3662 = vmatpush1.msra.mxu0 %v3648
    %3663 = vmatprep.subr.mxu0 0.0
    %3664 = vmatpush1.msra.mxu0 0.0
    %3665 = vmatprep.subr.mxu0 0.0
    %3666 = vmatpush1.msra.mxu0 0.0
    %3667 = vmatprep.subr.mxu0 0.0
    %3668 = vmatpush1.msra.mxu0 0.0
    %3669 = vmatprep.subr.mxu0 0.0
    %3670 = vmatpush1.msra.mxu0 0.0
    %3671 = vmatprep.subr.mxu0 0.0
    %3672 = vmatpush1.msra.mxu0 0.0
    %3673 = vmatprep.subr.mxu0 0.0
    %3674 = vmatpush1.msra.mxu0 0.0
    %3675 = vmatprep.subr.mxu0 0.0
    %3676 = vmatpush1.msra.mxu0 0.0
    %3677 = vmatprep.subr.mxu0 0.0
    %3678 = vmatpush1.msra.mxu0 0.0
    %3679 = vmatprep.subr.mxu0 0.0
    %3680 = vmatpush1.msra.mxu0 0.0
    %3681 = vmatprep.subr.mxu0 0.0
    %3682 = vmatpush1.msra.mxu0 0.0
    %3683 = vmatprep.subr.mxu0 0.0
    %3684 = vmatpush1.msra.mxu0 0.0
    %3685 = vmatprep.subr.mxu0 0.0
    %3686 = vmatpush1.msra.mxu0 0.0
    %3687 = vmatprep.subr.mxu0 0.0
    %3688 = vmatpush1.msra.mxu0 0.0
    %3689 = vmatprep.subr.mxu0 0.0
    %3690 = vmatpush1.msra.mxu0 0.0
    %3691 = vmatprep.subr.mxu0 0.0
    %3692 = vmatpush1.msra.mxu0 0.0
    %3693 = vmatprep.subr.mxu0 0.0
    %3694 = vmatpush1.msra.mxu0 0.0
    %3695 = vmatprep.subr.mxu0 0.0
    %3696 = vmatpush1.msra.mxu0 0.0
    %3697 = vmatprep.subr.mxu0 0.0
    %3698 = vmatpush1.msra.mxu0 0.0
    %3699 = vmatprep.subr.mxu0 0.0
    %3700 = vmatpush1.msra.mxu0 0.0
    %3701 = vmatprep.subr.mxu0 0.0
    %3702 = vmatpush1.msra.mxu0 0.0
    %3703 = vmatprep.subr.mxu0 0.0
    %3704 = vmatpush1.msra.mxu0 0.0
    %3705 = vmatprep.subr.mxu0 0.0
    %3706 = vmatpush1.msra.mxu0 0.0
    %3707 = vmatprep.subr.mxu0 0.0
    %3708 = vmatpush1.msra.mxu0 0.0
    %3709 = vmatprep.subr.mxu0 0.0
    %3710 = vmatpush1.msra.mxu0 0.0
    %3711 = vmatprep.subr.mxu0 0.0
    %3712 = vmatpush1.msra.mxu0 0.0
    %3713 = vmatprep.subr.mxu0 0.0
    %3714 = vmatpush1.msra.mxu0 0.0
    %3715 = vmatprep.subr.mxu0 0.0
    %3716 = vmatpush1.msra.mxu0 0.0
    %3717 = vmatprep.subr.mxu0 0.0
    %3718 = vmatpush1.msra.mxu0 0.0
    %3719 = vmatprep.mubr.f32.mxu0 0.0
    %3720 = vmatmul.mubr.f32.gmra.mrb[0].mxu0 %v3650
    %v3721 = vpop.f32.mrb[0].mxu0
    %v3722 = vadd.f32 0.0, %v3721
    %v3723 = vpop.f32.mrb[0].mxu0
    %3724 = vmatprep.mubr.f32.mxu0 0.0
    %3725 = vmatmul.mubr.f32.gmra.mrb[0].mxu0 %v3653
    %v3726 = vpop.f32.mrb[0].mxu0
    %v3727 = vadd.f32 0.0, %v3726
    %v3728 = vpop.f32.mrb[0].mxu0
    %3729 = vdwg.mxu0
    %v3730 = vadd.f32 %v3511, %v3722
    %v3731 = vadd.f32 %v3512, %v3727
    %v3732 = vld [vmem:[%s1 + $0x168] sm:$0x1]
    %v3733 = vlaneseq
    %v3734 = vshrl.u32 %v3733, 7
    %v3735 = vsub.s32 0, %v3734
    %v3736 = vrot.slane %v3732, %v3735
    %v3737 = vadd.f32 %v3730, %v3736
    %v3738 = vadd.f32 %v3731, %v3736
    %v3739 = vld [vmem:[%s1 + $0x170] sm:$0x1]
    %v3740 = vld [vmem:[%s1 + $0x178] sm:$0x1]
    %v3741 = vsel %vm120, %v3737, 0.0
    %3742 = vadd.xlane.f32.xlu0 %v3741
    %v3743 = vpop.xlane.xlu0 %3742
    %v3744 = vsel %vm120, %v3738, 0.0
    %3745 = vadd.xlane.f32.xlu0 %v3744
    %v3746 = vpop.xlane.xlu0 %3745
    %v3747 = vmul.f32 %v3743, %v127
    %v3748 = vmul.f32 %v3746, %v127
    %v3749 = vsub.f32 %v3737, %v3747
    %v3750 = vsub.f32 %v3738, %v3748
    %v3751 = vmul.f32 %v3749, %v3749
    %v3752 = vmul.f32 %v3750, %v3750
    %v3753 = vsel %vm120, %v3751, 0.0
    %3754 = vadd.xlane.f32.xlu0 %v3753
    %v3755 = vpop.xlane.xlu0 %3754
    %v3756 = vsel %vm120, %v3752, 0.0
    %3757 = vadd.xlane.f32.xlu0 %v3756
    %v3758 = vpop.xlane.xlu0 %3757
    %v3759 = vmul.f32 %v3755, %v127
    %v3760 = vmul.f32 %v3758, %v127
    %v3761 = vadd.f32 %v3759, 1e-05
    %v3762 = vadd.f32 %v3760, 1e-05
    %v3763 = vrsqrt.pop %v3761
    %v3764 = vrsqrt.pop %v3762
    %v3765 = vmul.f32 %v3749, %v3763
    %v3766 = vmul.f32 %v3750, %v3764
    %v3767 = vlaneseq
    %v3768 = vshrl.u32 %v3767, 7
    %v3769 = vsub.s32 0, %v3768
    %v3770 = vrot.slane %v3739, %v3769
    %v3771 = vmul.f32 %v3765, %v3770
    %v3772 = vmul.f32 %v3766, %v3770
    %v3773 = vlaneseq
    %v3774 = vshrl.u32 %v3773, 7
    %v3775 = vsub.s32 0, %v3774
    %v3776 = vrot.slane %v3740, %v3775
    %v3777 = vadd.f32 %v3771, %v3776
    %v3778 = vadd.f32 %v3772, %v3776
    %v3779 = vld [vmem:[%s3 + $0x50] sm:$0xff]
    %v3780 = vld [vmem:[%s3 + $0x58] sm:$0xff]
    %v3781 = vld [vmem:[%s3 + $0x60] sm:$0xff]
    %v3782 = vld [vmem:[%s3 + $0x68] sm:$0xff]
    %v3783 = vld [vmem:[%s3 + $0x70] sm:$0x1]
    %v3784 = vlaneseq
    %v3785 = vshrl.u32 %v3784, 7
    %v3786 = vsub.s32 0, %v3785
    %v3787 = vrot.slane %v3783, %v3786
    %v3789 = vsel %vm120, %v3777, 0
    %v3792 = vsel %vm120, %v3778, 0
    %3794 = vmatprep.subr.mxu0 0.0
    %3795 = vmatpush1.msra.mxu0 %v3779
    %3796 = vmatprep.subr.mxu0 0.0
    %3797 = vmatpush1.msra.mxu0 %v3780
    %3798 = vmatprep.subr.mxu0 0.0
    %3799 = vmatpush1.msra.mxu0 %v3781
    %3800 = vmatprep.subr.mxu0 0.0
    %3801 = vmatpush1.msra.mxu0 %v3782
    %3802 = vmatprep.subr.mxu0 0.0
    %3803 = vmatpush1.msra.mxu0 0.0
    %3804 = vmatprep.subr.mxu0 0.0
    %3805 = vmatpush1.msra.mxu0 0.0
    %3806 = vmatprep.subr.mxu0 0.0
    %3807 = vmatpush1.msra.mxu0 0.0
    %3808 = vmatprep.subr.mxu0 0.0
    %3809 = vmatpush1.msra.mxu0 0.0
    %3810 = vmatprep.subr.mxu0 0.0
    %3811 = vmatpush1.msra.mxu0 0.0
    %3812 = vmatprep.subr.mxu0 0.0
    %3813 = vmatpush1.msra.mxu0 0.0
    %3814 = vmatprep.subr.mxu0 0.0
    %3815 = vmatpush1.msra.mxu0 0.0
    %3816 = vmatprep.subr.mxu0 0.0
    %3817 = vmatpush1.msra.mxu0 0.0
    %3818 = vmatprep.subr.mxu0 0.0
    %3819 = vmatpush1.msra.mxu0 0.0
    %3820 = vmatprep.subr.mxu0 0.0
    %3821 = vmatpush1.msra.mxu0 0.0
    %3822 = vmatprep.subr.mxu0 0.0
    %3823 = vmatpush1.msra.mxu0 0.0
    %3824 = vmatprep.subr.mxu0 0.0
    %3825 = vmatpush1.msra.mxu0 0.0
    %3826 = vmatprep.subr.mxu0 0.0
    %3827 = vmatpush1.msra.mxu0 0.0
    %3828 = vmatprep.subr.mxu0 0.0
    %3829 = vmatpush1.msra.mxu0 0.0
    %3830 = vmatprep.subr.mxu0 0.0
    %3831 = vmatpush1.msra.mxu0 0.0
    %3832 = vmatprep.subr.mxu0 0.0
    %3833 = vmatpush1.msra.mxu0 0.0
    %3834 = vmatprep.subr.mxu0 0.0
    %3835 = vmatpush1.msra.mxu0 0.0
    %3836 = vmatprep.subr.mxu0 0.0
    %3837 = vmatpush1.msra.mxu0 0.0
    %3838 = vmatprep.subr.mxu0 0.0
    %3839 = vmatpush1.msra.mxu0 0.0
    %3840 = vmatprep.subr.mxu0 0.0
    %3841 = vmatpush1.msra.mxu0 0.0
    %3842 = vmatprep.subr.mxu0 0.0
    %3843 = vmatpush1.msra.mxu0 0.0
    %3844 = vmatprep.subr.mxu0 0.0
    %3845 = vmatpush1.msra.mxu0 0.0
    %3846 = vmatprep.subr.mxu0 0.0
    %3847 = vmatpush1.msra.mxu0 0.0
    %3848 = vmatprep.subr.mxu0 0.0
    %3849 = vmatpush1.msra.mxu0 0.0
    %3850 = vmatprep.subr.mxu0 0.0
    %3851 = vmatpush1.msra.mxu0 0.0
    %3852 = vmatprep.subr.mxu0 0.0
    %3853 = vmatpush1.msra.mxu0 0.0
    %3854 = vmatprep.subr.mxu0 0.0
    %3855 = vmatpush1.msra.mxu0 0.0
    %3856 = vmatprep.subr.mxu0 0.0
    %3857 = vmatpush1.msra.mxu0 0.0
    %3858 = vmatprep.mubr.f32.mxu0 0.0
    %3859 = vmatmul.mubr.f32.gmra.mrb[0].mxu0 %v3789
    %v3860 = vpop.f32.mrb[0].mxu0
    %v3861 = vadd.f32 %v3787, %v3860
    %v3862 = vpop.f32.mrb[0].mxu0
    %3863 = vmatprep.mubr.f32.mxu0 0.0
    %3864 = vmatmul.mubr.f32.gmra.mrb[0].mxu0 %v3792
    %v3865 = vpop.f32.mrb[0].mxu0
    %v3866 = vadd.f32 %v3787, %v3865
    %v3867 = vpop.f32.mrb[0].mxu0
    %3868 = vdwg.mxu0
    %3870 = vrot.lane.b32.xlu0 %v3861, 96
    %v3871 = vpop.permute.xlu0 %3870
    %v3872 = vsel %vm253, %v3861, 0
    %v3874 = vsel %vm253, %v3871, 0
    %3876 = vmatprep.subr.mxu0 0.0
    %3877 = vmatpush1.xpose.msra.mxu0 %v3874
    %3878 = vmatprep.subr.mxu0 0.0
    %3879 = vmatpush1.xpose.msra.mxu0 0.0
    %3880 = vmatprep.subr.mxu0 0.0
    %3881 = vmatpush1.xpose.msra.mxu0 0.0
    %3882 = vmatprep.subr.mxu0 0.0
    %3883 = vmatpush1.xpose.msra.mxu0 0.0
    %3884 = vmatprep.subr.mxu0 0.0
    %3885 = vmatpush1.xpose.msra.mxu0 0.0
    %3886 = vmatprep.subr.mxu0 0.0
    %3887 = vmatpush1.xpose.msra.mxu0 0.0
    %3888 = vmatprep.subr.mxu0 0.0
    %3889 = vmatpush1.xpose.msra.mxu0 0.0
    %3890 = vmatprep.subr.mxu0 0.0
    %3891 = vmatpush1.xpose.msra.mxu0 0.0
    %3892 = vmatprep.subr.mxu0 0.0
    %3893 = vmatpush1.xpose.msra.mxu0 0.0
    %3894 = vmatprep.subr.mxu0 0.0
    %3895 = vmatpush1.xpose.msra.mxu0 0.0
    %3896 = vmatprep.subr.mxu0 0.0
    %3897 = vmatpush1.xpose.msra.mxu0 0.0
    %3898 = vmatprep.subr.mxu0 0.0
    %3899 = vmatpush1.xpose.msra.mxu0 0.0
    %3900 = vmatprep.subr.mxu0 0.0
    %3901 = vmatpush1.xpose.msra.mxu0 0.0
    %3902 = vmatprep.subr.mxu0 0.0
    %3903 = vmatpush1.xpose.msra.mxu0 0.0
    %3904 = vmatprep.subr.mxu0 0.0
    %3905 = vmatpush1.xpose.msra.mxu0 0.0
    %3906 = vmatprep.subr.mxu0 0.0
    %3907 = vmatpush1.xpose.msra.mxu0 0.0
    %3908 = vmatprep.subr.mxu0 0.0
    %3909 = vmatpush1.xpose.msra.mxu0 0.0
    %3910 = vmatprep.subr.mxu0 0.0
    %3911 = vmatpush1.xpose.msra.mxu0 0.0
    %3912 = vmatprep.subr.mxu0 0.0
    %3913 = vmatpush1.xpose.msra.mxu0 0.0
    %3914 = vmatprep.subr.mxu0 0.0
    %3915 = vmatpush1.xpose.msra.mxu0 0.0
    %3916 = vmatprep.subr.mxu0 0.0
    %3917 = vmatpush1.xpose.msra.mxu0 0.0
    %3918 = vmatprep.subr.mxu0 0.0
    %3919 = vmatpush1.xpose.msra.mxu0 0.0
    %3920 = vmatprep.subr.mxu0 0.0
    %3921 = vmatpush1.xpose.msra.mxu0 0.0
    %3922 = vmatprep.subr.mxu0 0.0
    %3923 = vmatpush1.xpose.msra.mxu0 0.0
    %3924 = vmatprep.subr.mxu0 0.0
    %3925 = vmatpush1.xpose.msra.mxu0 0.0
    %3926 = vmatprep.subr.mxu0 0.0
    %3927 = vmatpush1.xpose.msra.mxu0 0.0
    %3928 = vmatprep.subr.mxu0 0.0
    %3929 = vmatpush1.xpose.msra.mxu0 0.0
    %3930 = vmatprep.subr.mxu0 0.0
    %3931 = vmatpush1.xpose.msra.mxu0 0.0
    %3932 = vmatprep.subr.mxu0 0.0
    %3933 = vmatpush1.xpose.msra.mxu0 0.0
    %3934 = vmatprep.subr.mxu0 0.0
    %3935 = vmatpush1.xpose.msra.mxu0 0.0
    %3936 = vmatprep.subr.mxu0 0.0
    %3937 = vmatpush1.xpose.msra.mxu0 0.0
    %3938 = vmatprep.subr.mxu0 0.0
    %3939 = vmatpush1.xpose.msra.mxu0 0.0
    %3940 = vmatprep.mubr.f32.mxu0 0.0
    %3941 = vmatmul.mubr.f32.gmra.mrb[0].mxu0 %v3872
    %v3942 = vpop.f32.mrb[0].mxu0
    %v3943 = vadd.f32 0.0, %v3942
    %v3944 = vpop.f32.mrb[0].mxu0
    %3945 = vdwg.mxu0
    %3947 = vrot.lane.b32.xlu0 %v3866, 96
    %v3948 = vpop.permute.xlu0 %3947
    %v3949 = vsel %vm253, %v3866, 0
    %v3951 = vsel %vm253, %v3948, 0
    %3953 = vmatprep.subr.mxu0 0.0
    %3954 = vmatpush1.xpose.msra.mxu0 %v3951
    %3955 = vmatprep.subr.mxu0 0.0
    %3956 = vmatpush1.xpose.msra.mxu0 0.0
    %3957 = vmatprep.subr.mxu0 0.0
    %3958 = vmatpush1.xpose.msra.mxu0 0.0
    %3959 = vmatprep.subr.mxu0 0.0
    %3960 = vmatpush1.xpose.msra.mxu0 0.0
    %3961 = vmatprep.subr.mxu0 0.0
    %3962 = vmatpush1.xpose.msra.mxu0 0.0
    %3963 = vmatprep.subr.mxu0 0.0
    %3964 = vmatpush1.xpose.msra.mxu0 0.0
    %3965 = vmatprep.subr.mxu0 0.0
    %3966 = vmatpush1.xpose.msra.mxu0 0.0
    %3967 = vmatprep.subr.mxu0 0.0
    %3968 = vmatpush1.xpose.msra.mxu0 0.0
    %3969 = vmatprep.subr.mxu0 0.0
    %3970 = vmatpush1.xpose.msra.mxu0 0.0
    %3971 = vmatprep.subr.mxu0 0.0
    %3972 = vmatpush1.xpose.msra.mxu0 0.0
    %3973 = vmatprep.subr.mxu0 0.0
    %3974 = vmatpush1.xpose.msra.mxu0 0.0
    %3975 = vmatprep.subr.mxu0 0.0
    %3976 = vmatpush1.xpose.msra.mxu0 0.0
    %3977 = vmatprep.subr.mxu0 0.0
    %3978 = vmatpush1.xpose.msra.mxu0 0.0
    %3979 = vmatprep.subr.mxu0 0.0
    %3980 = vmatpush1.xpose.msra.mxu0 0.0
    %3981 = vmatprep.subr.mxu0 0.0
    %3982 = vmatpush1.xpose.msra.mxu0 0.0
    %3983 = vmatprep.subr.mxu0 0.0
    %3984 = vmatpush1.xpose.msra.mxu0 0.0
    %3985 = vmatprep.subr.mxu0 0.0
    %3986 = vmatpush1.xpose.msra.mxu0 0.0
    %3987 = vmatprep.subr.mxu0 0.0
    %3988 = vmatpush1.xpose.msra.mxu0 0.0
    %3989 = vmatprep.subr.mxu0 0.0
    %3990 = vmatpush1.xpose.msra.mxu0 0.0
    %3991 = vmatprep.subr.mxu0 0.0
    %3992 = vmatpush1.xpose.msra.mxu0 0.0
    %3993 = vmatprep.subr.mxu0 0.0
    %3994 = vmatpush1.xpose.msra.mxu0 0.0
    %3995 = vmatprep.subr.mxu0 0.0
    %3996 = vmatpush1.xpose.msra.mxu0 0.0
    %3997 = vmatprep.subr.mxu0 0.0
    %3998 = vmatpush1.xpose.msra.mxu0 0.0
    %3999 = vmatprep.subr.mxu0 0.0
    %4000 = vmatpush1.xpose.msra.mxu0 0.0
    %4001 = vmatprep.subr.mxu0 0.0
    %4002 = vmatpush1.xpose.msra.mxu0 0.0
    %4003 = vmatprep.subr.mxu0 0.0
    %4004 = vmatpush1.xpose.msra.mxu0 0.0
    %4005 = vmatprep.subr.mxu0 0.0
    %4006 = vmatpush1.xpose.msra.mxu0 0.0
    %4007 = vmatprep.subr.mxu0 0.0
    %4008 = vmatpush1.xpose.msra.mxu0 0.0
    %4009 = vmatprep.subr.mxu0 0.0
    %4010 = vmatpush1.xpose.msra.mxu0 0.0
    %4011 = vmatprep.subr.mxu0 0.0
    %4012 = vmatpush1.xpose.msra.mxu0 0.0
    %4013 = vmatprep.subr.mxu0 0.0
    %4014 = vmatpush1.xpose.msra.mxu0 0.0
    %4015 = vmatprep.subr.mxu0 0.0
    %4016 = vmatpush1.xpose.msra.mxu0 0.0
    %4017 = vmatprep.mubr.f32.mxu0 0.0
    %4018 = vmatmul.mubr.f32.gmra.mrb[0].mxu0 %v3949
    %v4019 = vpop.f32.mrb[0].mxu0
    %v4020 = vadd.f32 0.0, %v4019
    %v4021 = vpop.f32.mrb[0].mxu0
    %4022 = vdwg.mxu0
    %v4023 = vmul.f32 %v3943, 0.35355338
    %v4024 = vmul.f32 %v4020, 0.35355338
    %v4025 = vsel %vm253, %v4023, -inf
    %4026 = vmax.xlane.f32.xlu0 %v4025
    %v4027 = vpop.xlane.xlu0 %4026
    %v4028 = vsel %vm253, %v4024, -inf
    %4029 = vmax.xlane.f32.xlu0 %v4028
    %v4030 = vpop.xlane.xlu0 %4029
    %v4031 = vsub.f32 %v4023, %v4027
    %v4032 = vsub.f32 %v4024, %v4030
    %v4033 = vmul.f32 %v4031, 1.442695
    %v4034 = vpow.pop %v4033
    %v4035 = vmul.f32 %v4032, 1.442695
    %v4036 = vpow.pop %v4035
    %v4037 = vsel %vm253, %v4034, 0.0
    %4038 = vadd.xlane.f32.xlu0 %v4037
    %v4039 = vpop.xlane.xlu0 %4038
    %v4040 = vsel %vm253, %v4036, 0.0
    %4041 = vadd.xlane.f32.xlu0 %v4040
    %v4042 = vpop.xlane.xlu0 %4041
    %v4043 = vrcp.pop %v4039
    %v4044 = vmul.f32 %v4034, %v4043
    %v4045 = vrcp.pop %v4042
    %v4046 = vmul.f32 %v4036, %v4045
    %4047 = vrot.lane.b32.xlu0 %v3861, 64
    %v4048 = vpop.permute.xlu0 %4047
    %v4051 = vsel %vm253, %v4044, 0
    %4053 = vmatprep.subr.mxu0 0.0
    %4054 = vmatpush1.msra.mxu0 %v4048
    %4055 = vmatprep.subr.mxu0 0.0
    %4056 = vmatpush1.msra.mxu0 0.0
    %4057 = vmatprep.subr.mxu0 0.0
    %4058 = vmatpush1.msra.mxu0 0.0
    %4059 = vmatprep.subr.mxu0 0.0
    %4060 = vmatpush1.msra.mxu0 0.0
    %4061 = vmatprep.subr.mxu0 0.0
    %4062 = vmatpush1.msra.mxu0 0.0
    %4063 = vmatprep.subr.mxu0 0.0
    %4064 = vmatpush1.msra.mxu0 0.0
    %4065 = vmatprep.subr.mxu0 0.0
    %4066 = vmatpush1.msra.mxu0 0.0
    %4067 = vmatprep.subr.mxu0 0.0
    %4068 = vmatpush1.msra.mxu0 0.0
    %4069 = vmatprep.subr.mxu0 0.0
    %4070 = vmatpush1.msra.mxu0 0.0
    %4071 = vmatprep.subr.mxu0 0.0
    %4072 = vmatpush1.msra.mxu0 0.0
    %4073 = vmatprep.subr.mxu0 0.0
    %4074 = vmatpush1.msra.mxu0 0.0
    %4075 = vmatprep.subr.mxu0 0.0
    %4076 = vmatpush1.msra.mxu0 0.0
    %4077 = vmatprep.subr.mxu0 0.0
    %4078 = vmatpush1.msra.mxu0 0.0
    %4079 = vmatprep.subr.mxu0 0.0
    %4080 = vmatpush1.msra.mxu0 0.0
    %4081 = vmatprep.subr.mxu0 0.0
    %4082 = vmatpush1.msra.mxu0 0.0
    %4083 = vmatprep.subr.mxu0 0.0
    %4084 = vmatpush1.msra.mxu0 0.0
    %4085 = vmatprep.subr.mxu0 0.0
    %4086 = vmatpush1.msra.mxu0 0.0
    %4087 = vmatprep.subr.mxu0 0.0
    %4088 = vmatpush1.msra.mxu0 0.0
    %4089 = vmatprep.subr.mxu0 0.0
    %4090 = vmatpush1.msra.mxu0 0.0
    %4091 = vmatprep.subr.mxu0 0.0
    %4092 = vmatpush1.msra.mxu0 0.0
    %4093 = vmatprep.subr.mxu0 0.0
    %4094 = vmatpush1.msra.mxu0 0.0
    %4095 = vmatprep.subr.mxu0 0.0
    %4096 = vmatpush1.msra.mxu0 0.0
    %4097 = vmatprep.subr.mxu0 0.0
    %4098 = vmatpush1.msra.mxu0 0.0
    %4099 = vmatprep.subr.mxu0 0.0
    %4100 = vmatpush1.msra.mxu0 0.0
    %4101 = vmatprep.subr.mxu0 0.0
    %4102 = vmatpush1.msra.mxu0 0.0
    %4103 = vmatprep.subr.mxu0 0.0
    %4104 = vmatpush1.msra.mxu0 0.0
    %4105 = vmatprep.subr.mxu0 0.0
    %4106 = vmatpush1.msra.mxu0 0.0
    %4107 = vmatprep.subr.mxu0 0.0
    %4108 = vmatpush1.msra.mxu0 0.0
    %4109 = vmatprep.subr.mxu0 0.0
    %4110 = vmatpush1.msra.mxu0 0.0
    %4111 = vmatprep.subr.mxu0 0.0
    %4112 = vmatpush1.msra.mxu0 0.0
    %4113 = vmatprep.subr.mxu0 0.0
    %4114 = vmatpush1.msra.mxu0 0.0
    %4115 = vmatprep.subr.mxu0 0.0
    %4116 = vmatpush1.msra.mxu0 0.0
    %4117 = vmatprep.mubr.f32.mxu0 0.0
    %4118 = vmatmul.mubr.f32.gmra.mrb[0].mxu0 %v4051
    %v4119 = vpop.f32.mrb[0].mxu0
    %v4120 = vadd.f32 0.0, %v4119
    %v4121 = vpop.f32.mrb[0].mxu0
    %4122 = vdwg.mxu0
    %4123 = vrot.lane.b32.xlu0 %v3866, 64
    %v4124 = vpop.permute.xlu0 %4123
    %v4127 = vsel %vm253, %v4046, 0
    %4129 = vmatprep.subr.mxu0 0.0
    %4130 = vmatpush1.msra.mxu0 %v4124
    %4131 = vmatprep.subr.mxu0 0.0
    %4132 = vmatpush1.msra.mxu0 0.0
    %4133 = vmatprep.subr.mxu0 0.0
    %4134 = vmatpush1.msra.mxu0 0.0
    %4135 = vmatprep.subr.mxu0 0.0
    %4136 = vmatpush1.msra.mxu0 0.0
    %4137 = vmatprep.subr.mxu0 0.0
    %4138 = vmatpush1.msra.mxu0 0.0
    %4139 = vmatprep.subr.mxu0 0.0
    %4140 = vmatpush1.msra.mxu0 0.0
    %4141 = vmatprep.subr.mxu0 0.0
    %4142 = vmatpush1.msra.mxu0 0.0
    %4143 = vmatprep.subr.mxu0 0.0
    %4144 = vmatpush1.msra.mxu0 0.0
    %4145 = vmatprep.subr.mxu0 0.0
    %4146 = vmatpush1.msra.mxu0 0.0
    %4147 = vmatprep.subr.mxu0 0.0
    %4148 = vmatpush1.msra.mxu0 0.0
    %4149 = vmatprep.subr.mxu0 0.0
    %4150 = vmatpush1.msra.mxu0 0.0
    %4151 = vmatprep.subr.mxu0 0.0
    %4152 = vmatpush1.msra.mxu0 0.0
    %4153 = vmatprep.subr.mxu0 0.0
    %4154 = vmatpush1.msra.mxu0 0.0
    %4155 = vmatprep.subr.mxu0 0.0
    %4156 = vmatpush1.msra.mxu0 0.0
    %4157 = vmatprep.subr.mxu0 0.0
    %4158 = vmatpush1.msra.mxu0 0.0
    %4159 = vmatprep.subr.mxu0 0.0
    %4160 = vmatpush1.msra.mxu0 0.0
    %4161 = vmatprep.subr.mxu0 0.0
    %4162 = vmatpush1.msra.mxu0 0.0
    %4163 = vmatprep.subr.mxu0 0.0
    %4164 = vmatpush1.msra.mxu0 0.0
    %4165 = vmatprep.subr.mxu0 0.0
    %4166 = vmatpush1.msra.mxu0 0.0
    %4167 = vmatprep.subr.mxu0 0.0
    %4168 = vmatpush1.msra.mxu0 0.0
    %4169 = vmatprep.subr.mxu0 0.0
    %4170 = vmatpush1.msra.mxu0 0.0
    %4171 = vmatprep.subr.mxu0 0.0
    %4172 = vmatpush1.msra.mxu0 0.0
    %4173 = vmatprep.subr.mxu0 0.0
    %4174 = vmatpush1.msra.mxu0 0.0
    %4175 = vmatprep.subr.mxu0 0.0
    %4176 = vmatpush1.msra.mxu0 0.0
    %4177 = vmatprep.subr.mxu0 0.0
    %4178 = vmatpush1.msra.mxu0 0.0
    %4179 = vmatprep.subr.mxu0 0.0
    %4180 = vmatpush1.msra.mxu0 0.0
    %4181 = vmatprep.subr.mxu0 0.0
    %4182 = vmatpush1.msra.mxu0 0.0
    %4183 = vmatprep.subr.mxu0 0.0
    %4184 = vmatpush1.msra.mxu0 0.0
    %4185 = vmatprep.subr.mxu0 0.0
    %4186 = vmatpush1.msra.mxu0 0.0
    %4187 = vmatprep.subr.mxu0 0.0
    %4188 = vmatpush1.msra.mxu0 0.0
    %4189 = vmatprep.subr.mxu0 0.0
    %4190 = vmatpush1.msra.mxu0 0.0
    %4191 = vmatprep.subr.mxu0 0.0
    %4192 = vmatpush1.msra.mxu0 0.0
    %4193 = vmatprep.mubr.f32.mxu0 0.0
    %4194 = vmatmul.mubr.f32.gmra.mrb[0].mxu0 %v4127
    %v4195 = vpop.f32.mrb[0].mxu0
    %v4196 = vadd.f32 0.0, %v4195
    %v4197 = vpop.f32.mrb[0].mxu0
    %4198 = vdwg.mxu0
    %4199 = vrot.lane.b32.xlu0 %v3861, 120
    %v4200 = vpop.permute.xlu0 %4199
    %4201 = vrot.lane.b32.xlu0 %v3861, 88
    %v4202 = vpop.permute.xlu0 %4201
    %v4203 = vsel %vm253, %v4200, 0
    %v4205 = vsel %vm253, %v4202, 0
    %4207 = vmatprep.subr.mxu0 0.0
    %4208 = vmatpush1.xpose.msra.mxu0 %v4205
    %4209 = vmatprep.subr.mxu0 0.0
    %4210 = vmatpush1.xpose.msra.mxu0 0.0
    %4211 = vmatprep.subr.mxu0 0.0
    %4212 = vmatpush1.xpose.msra.mxu0 0.0
    %4213 = vmatprep.subr.mxu0 0.0
    %4214 = vmatpush1.xpose.msra.mxu0 0.0
    %4215 = vmatprep.subr.mxu0 0.0
    %4216 = vmatpush1.xpose.msra.mxu0 0.0
    %4217 = vmatprep.subr.mxu0 0.0
    %4218 = vmatpush1.xpose.msra.mxu0 0.0
    %4219 = vmatprep.subr.mxu0 0.0
    %4220 = vmatpush1.xpose.msra.mxu0 0.0
    %4221 = vmatprep.subr.mxu0 0.0
    %4222 = vmatpush1.xpose.msra.mxu0 0.0
    %4223 = vmatprep.subr.mxu0 0.0
    %4224 = vmatpush1.xpose.msra.mxu0 0.0
    %4225 = vmatprep.subr.mxu0 0.0
    %4226 = vmatpush1.xpose.msra.mxu0 0.0
    %4227 = vmatprep.subr.mxu0 0.0
    %4228 = vmatpush1.xpose.msra.mxu0 0.0
    %4229 = vmatprep.subr.mxu0 0.0
    %4230 = vmatpush1.xpose.msra.mxu0 0.0
    %4231 = vmatprep.subr.mxu0 0.0
    %4232 = vmatpush1.xpose.msra.mxu0 0.0
    %4233 = vmatprep.subr.mxu0 0.0
    %4234 = vmatpush1.xpose.msra.mxu0 0.0
    %4235 = vmatprep.subr.mxu0 0.0
    %4236 = vmatpush1.xpose.msra.mxu0 0.0
    %4237 = vmatprep.subr.mxu0 0.0
    %4238 = vmatpush1.xpose.msra.mxu0 0.0
    %4239 = vmatprep.subr.mxu0 0.0
    %4240 = vmatpush1.xpose.msra.mxu0 0.0
    %4241 = vmatprep.subr.mxu0 0.0
    %4242 = vmatpush1.xpose.msra.mxu0 0.0
    %4243 = vmatprep.subr.mxu0 0.0
    %4244 = vmatpush1.xpose.msra.mxu0 0.0
    %4245 = vmatprep.subr.mxu0 0.0
    %4246 = vmatpush1.xpose.msra.mxu0 0.0
    %4247 = vmatprep.subr.mxu0 0.0
    %4248 = vmatpush1.xpose.msra.mxu0 0.0
    %4249 = vmatprep.subr.mxu0 0.0
    %4250 = vmatpush1.xpose.msra.mxu0 0.0
    %4251 = vmatprep.subr.mxu0 0.0
    %4252 = vmatpush1.xpose.msra.mxu0 0.0
    %4253 = vmatprep.subr.mxu0 0.0
    %4254 = vmatpush1.xpose.msra.mxu0 0.0
    %4255 = vmatprep.subr.mxu0 0.0
    %4256 = vmatpush1.xpose.msra.mxu0 0.0
    %4257 = vmatprep.subr.mxu0 0.0
    %4258 = vmatpush1.xpose.msra.mxu0 0.0
    %4259 = vmatprep.subr.mxu0 0.0
    %4260 = vmatpush1.xpose.msra.mxu0 0.0
    %4261 = vmatprep.subr.mxu0 0.0
    %4262 = vmatpush1.xpose.msra.mxu0 0.0
    %4263 = vmatprep.subr.mxu0 0.0
    %4264 = vmatpush1.xpose.msra.mxu0 0.0
    %4265 = vmatprep.subr.mxu0 0.0
    %4266 = vmatpush1.xpose.msra.mxu0 0.0
    %4267 = vmatprep.subr.mxu0 0.0
    %4268 = vmatpush1.xpose.msra.mxu0 0.0
    %4269 = vmatprep.subr.mxu0 0.0
    %4270 = vmatpush1.xpose.msra.mxu0 0.0
    %4271 = vmatprep.mubr.f32.mxu0 0.0
    %4272 = vmatmul.mubr.f32.gmra.mrb[0].mxu0 %v4203
    %v4273 = vpop.f32.mrb[0].mxu0
    %v4274 = vadd.f32 0.0, %v4273
    %v4275 = vpop.f32.mrb[0].mxu0
    %4276 = vdwg.mxu0
    %4277 = vrot.lane.b32.xlu0 %v3866, 120
    %v4278 = vpop.permute.xlu0 %4277
    %4279 = vrot.lane.b32.xlu0 %v3866, 88
    %v4280 = vpop.permute.xlu0 %4279
    %v4281 = vsel %vm253, %v4278, 0
    %v4283 = vsel %vm253, %v4280, 0
    %4285 = vmatprep.subr.mxu0 0.0
    %4286 = vmatpush1.xpose.msra.mxu0 %v4283
    %4287 = vmatprep.subr.mxu0 0.0
    %4288 = vmatpush1.xpose.msra.mxu0 0.0
    %4289 = vmatprep.subr.mxu0 0.0
    %4290 = vmatpush1.xpose.msra.mxu0 0.0
    %4291 = vmatprep.subr.mxu0 0.0
    %4292 = vmatpush1.xpose.msra.mxu0 0.0
    %4293 = vmatprep.subr.mxu0 0.0
    %4294 = vmatpush1.xpose.msra.mxu0 0.0
    %4295 = vmatprep.subr.mxu0 0.0
    %4296 = vmatpush1.xpose.msra.mxu0 0.0
    %4297 = vmatprep.subr.mxu0 0.0
    %4298 = vmatpush1.xpose.msra.mxu0 0.0
    %4299 = vmatprep.subr.mxu0 0.0
    %4300 = vmatpush1.xpose.msra.mxu0 0.0
    %4301 = vmatprep.subr.mxu0 0.0
    %4302 = vmatpush1.xpose.msra.mxu0 0.0
    %4303 = vmatprep.subr.mxu0 0.0
    %4304 = vmatpush1.xpose.msra.mxu0 0.0
    %4305 = vmatprep.subr.mxu0 0.0
    %4306 = vmatpush1.xpose.msra.mxu0 0.0
    %4307 = vmatprep.subr.mxu0 0.0
    %4308 = vmatpush1.xpose.msra.mxu0 0.0
    %4309 = vmatprep.subr.mxu0 0.0
    %4310 = vmatpush1.xpose.msra.mxu0 0.0
    %4311 = vmatprep.subr.mxu0 0.0
    %4312 = vmatpush1.xpose.msra.mxu0 0.0
    %4313 = vmatprep.subr.mxu0 0.0
    %4314 = vmatpush1.xpose.msra.mxu0 0.0
    %4315 = vmatprep.subr.mxu0 0.0
    %4316 = vmatpush1.xpose.msra.mxu0 0.0
    %4317 = vmatprep.subr.mxu0 0.0
    %4318 = vmatpush1.xpose.msra.mxu0 0.0
    %4319 = vmatprep.subr.mxu0 0.0
    %4320 = vmatpush1.xpose.msra.mxu0 0.0
    %4321 = vmatprep.subr.mxu0 0.0
    %4322 = vmatpush1.xpose.msra.mxu0 0.0
    %4323 = vmatprep.subr.mxu0 0.0
    %4324 = vmatpush1.xpose.msra.mxu0 0.0
    %4325 = vmatprep.subr.mxu0 0.0
    %4326 = vmatpush1.xpose.msra.mxu0 0.0
    %4327 = vmatprep.subr.mxu0 0.0
    %4328 = vmatpush1.xpose.msra.mxu0 0.0
    %4329 = vmatprep.subr.mxu0 0.0
    %4330 = vmatpush1.xpose.msra.mxu0 0.0
    %4331 = vmatprep.subr.mxu0 0.0
    %4332 = vmatpush1.xpose.msra.mxu0 0.0
    %4333 = vmatprep.subr.mxu0 0.0
    %4334 = vmatpush1.xpose.msra.mxu0 0.0
    %4335 = vmatprep.subr.mxu0 0.0
    %4336 = vmatpush1.xpose.msra.mxu0 0.0
    %4337 = vmatprep.subr.mxu0 0.0
    %4338 = vmatpush1.xpose.msra.mxu0 0.0
    %4339 = vmatprep.subr.mxu0 0.0
    %4340 = vmatpush1.xpose.msra.mxu0 0.0
    %4341 = vmatprep.subr.mxu0 0.0
    %4342 = vmatpush1.xpose.msra.mxu0 0.0
    %4343 = vmatprep.subr.mxu0 0.0
    %4344 = vmatpush1.xpose.msra.mxu0 0.0
    %4345 = vmatprep.subr.mxu0 0.0
    %4346 = vmatpush1.xpose.msra.mxu0 0.0
    %4347 = vmatprep.subr.mxu0 0.0
    %4348 = vmatpush1.xpose.msra.mxu0 0.0
    %4349 = vmatprep.mubr.f32.mxu0 0.0
    %4350 = vmatmul.mubr.f32.gmra.mrb[0].mxu0 %v4281
    %v4351 = vpop.f32.mrb[0].mxu0
    %v4352 = vadd.f32 0.0, %v4351
    %v4353 = vpop.f32.mrb[0].mxu0
    %4354 = vdwg.mxu0
    %v4355 = vmul.f32 %v4274, 0.35355338
    %v4356 = vmul.f32 %v4352, 0.35355338
    %v4357 = vsel %vm253, %v4355, -inf
    %4358 = vmax.xlane.f32.xlu0 %v4357
    %v4359 = vpop.xlane.xlu0 %4358
    %v4360 = vsel %vm253, %v4356, -inf
    %4361 = vmax.xlane.f32.xlu0 %v4360
    %v4362 = vpop.xlane.xlu0 %4361
    %v4363 = vsub.f32 %v4355, %v4359
    %v4364 = vsub.f32 %v4356, %v4362
    %v4365 = vmul.f32 %v4363, 1.442695
    %v4366 = vpow.pop %v4365
    %v4367 = vmul.f32 %v4364, 1.442695
    %v4368 = vpow.pop %v4367
    %v4369 = vsel %vm253, %v4366, 0.0
    %4370 = vadd.xlane.f32.xlu0 %v4369
    %v4371 = vpop.xlane.xlu0 %4370
    %v4372 = vsel %vm253, %v4368, 0.0
    %4373 = vadd.xlane.f32.xlu0 %v4372
    %v4374 = vpop.xlane.xlu0 %4373
    %v4375 = vrcp.pop %v4371
    %v4376 = vmul.f32 %v4366, %v4375
    %v4377 = vrcp.pop %v4374
    %v4378 = vmul.f32 %v4368, %v4377
    %4379 = vrot.lane.b32.xlu0 %v3861, 56
    %v4380 = vpop.permute.xlu0 %4379
    %v4383 = vsel %vm253, %v4376, 0
    %4385 = vmatprep.subr.mxu0 0.0
    %4386 = vmatpush1.msra.mxu0 %v4380
    %4387 = vmatprep.subr.mxu0 0.0
    %4388 = vmatpush1.msra.mxu0 0.0
    %4389 = vmatprep.subr.mxu0 0.0
    %4390 = vmatpush1.msra.mxu0 0.0
    %4391 = vmatprep.subr.mxu0 0.0
    %4392 = vmatpush1.msra.mxu0 0.0
    %4393 = vmatprep.subr.mxu0 0.0
    %4394 = vmatpush1.msra.mxu0 0.0
    %4395 = vmatprep.subr.mxu0 0.0
    %4396 = vmatpush1.msra.mxu0 0.0
    %4397 = vmatprep.subr.mxu0 0.0
    %4398 = vmatpush1.msra.mxu0 0.0
    %4399 = vmatprep.subr.mxu0 0.0
    %4400 = vmatpush1.msra.mxu0 0.0
    %4401 = vmatprep.subr.mxu0 0.0
    %4402 = vmatpush1.msra.mxu0 0.0
    %4403 = vmatprep.subr.mxu0 0.0
    %4404 = vmatpush1.msra.mxu0 0.0
    %4405 = vmatprep.subr.mxu0 0.0
    %4406 = vmatpush1.msra.mxu0 0.0
    %4407 = vmatprep.subr.mxu0 0.0
    %4408 = vmatpush1.msra.mxu0 0.0
    %4409 = vmatprep.subr.mxu0 0.0
    %4410 = vmatpush1.msra.mxu0 0.0
    %4411 = vmatprep.subr.mxu0 0.0
    %4412 = vmatpush1.msra.mxu0 0.0
    %4413 = vmatprep.subr.mxu0 0.0
    %4414 = vmatpush1.msra.mxu0 0.0
    %4415 = vmatprep.subr.mxu0 0.0
    %4416 = vmatpush1.msra.mxu0 0.0
    %4417 = vmatprep.subr.mxu0 0.0
    %4418 = vmatpush1.msra.mxu0 0.0
    %4419 = vmatprep.subr.mxu0 0.0
    %4420 = vmatpush1.msra.mxu0 0.0
    %4421 = vmatprep.subr.mxu0 0.0
    %4422 = vmatpush1.msra.mxu0 0.0
    %4423 = vmatprep.subr.mxu0 0.0
    %4424 = vmatpush1.msra.mxu0 0.0
    %4425 = vmatprep.subr.mxu0 0.0
    %4426 = vmatpush1.msra.mxu0 0.0
    %4427 = vmatprep.subr.mxu0 0.0
    %4428 = vmatpush1.msra.mxu0 0.0
    %4429 = vmatprep.subr.mxu0 0.0
    %4430 = vmatpush1.msra.mxu0 0.0
    %4431 = vmatprep.subr.mxu0 0.0
    %4432 = vmatpush1.msra.mxu0 0.0
    %4433 = vmatprep.subr.mxu0 0.0
    %4434 = vmatpush1.msra.mxu0 0.0
    %4435 = vmatprep.subr.mxu0 0.0
    %4436 = vmatpush1.msra.mxu0 0.0
    %4437 = vmatprep.subr.mxu0 0.0
    %4438 = vmatpush1.msra.mxu0 0.0
    %4439 = vmatprep.subr.mxu0 0.0
    %4440 = vmatpush1.msra.mxu0 0.0
    %4441 = vmatprep.subr.mxu0 0.0
    %4442 = vmatpush1.msra.mxu0 0.0
    %4443 = vmatprep.subr.mxu0 0.0
    %4444 = vmatpush1.msra.mxu0 0.0
    %4445 = vmatprep.subr.mxu0 0.0
    %4446 = vmatpush1.msra.mxu0 0.0
    %4447 = vmatprep.subr.mxu0 0.0
    %4448 = vmatpush1.msra.mxu0 0.0
    %4449 = vmatprep.mubr.f32.mxu0 0.0
    %4450 = vmatmul.mubr.f32.gmra.mrb[0].mxu0 %v4383
    %v4451 = vpop.f32.mrb[0].mxu0
    %v4452 = vadd.f32 0.0, %v4451
    %v4453 = vpop.f32.mrb[0].mxu0
    %4454 = vdwg.mxu0
    %4455 = vrot.lane.b32.xlu0 %v3866, 56
    %v4456 = vpop.permute.xlu0 %4455
    %v4459 = vsel %vm253, %v4378, 0
    %4461 = vmatprep.subr.mxu0 0.0
    %4462 = vmatpush1.msra.mxu0 %v4456
    %4463 = vmatprep.subr.mxu0 0.0
    %4464 = vmatpush1.msra.mxu0 0.0
    %4465 = vmatprep.subr.mxu0 0.0
    %4466 = vmatpush1.msra.mxu0 0.0
    %4467 = vmatprep.subr.mxu0 0.0
    %4468 = vmatpush1.msra.mxu0 0.0
    %4469 = vmatprep.subr.mxu0 0.0
    %4470 = vmatpush1.msra.mxu0 0.0
    %4471 = vmatprep.subr.mxu0 0.0
    %4472 = vmatpush1.msra.mxu0 0.0
    %4473 = vmatprep.subr.mxu0 0.0
    %4474 = vmatpush1.msra.mxu0 0.0
    %4475 = vmatprep.subr.mxu0 0.0
    %4476 = vmatpush1.msra.mxu0 0.0
    %4477 = vmatprep.subr.mxu0 0.0
    %4478 = vmatpush1.msra.mxu0 0.0
    %4479 = vmatprep.subr.mxu0 0.0
    %4480 = vmatpush1.msra.mxu0 0.0
    %4481 = vmatprep.subr.mxu0 0.0
    %4482 = vmatpush1.msra.mxu0 0.0
    %4483 = vmatprep.subr.mxu0 0.0
    %4484 = vmatpush1.msra.mxu0 0.0
    %4485 = vmatprep.subr.mxu0 0.0
    %4486 = vmatpush1.msra.mxu0 0.0
    %4487 = vmatprep.subr.mxu0 0.0
    %4488 = vmatpush1.msra.mxu0 0.0
    %4489 = vmatprep.subr.mxu0 0.0
    %4490 = vmatpush1.msra.mxu0 0.0
    %4491 = vmatprep.subr.mxu0 0.0
    %4492 = vmatpush1.msra.mxu0 0.0
    %4493 = vmatprep.subr.mxu0 0.0
    %4494 = vmatpush1.msra.mxu0 0.0
    %4495 = vmatprep.subr.mxu0 0.0
    %4496 = vmatpush1.msra.mxu0 0.0
    %4497 = vmatprep.subr.mxu0 0.0
    %4498 = vmatpush1.msra.mxu0 0.0
    %4499 = vmatprep.subr.mxu0 0.0
    %4500 = vmatpush1.msra.mxu0 0.0
    %4501 = vmatprep.subr.mxu0 0.0
    %4502 = vmatpush1.msra.mxu0 0.0
    %4503 = vmatprep.subr.mxu0 0.0
    %4504 = vmatpush1.msra.mxu0 0.0
    %4505 = vmatprep.subr.mxu0 0.0
    %4506 = vmatpush1.msra.mxu0 0.0
    %4507 = vmatprep.subr.mxu0 0.0
    %4508 = vmatpush1.msra.mxu0 0.0
    %4509 = vmatprep.subr.mxu0 0.0
    %4510 = vmatpush1.msra.mxu0 0.0
    %4511 = vmatprep.subr.mxu0 0.0
    %4512 = vmatpush1.msra.mxu0 0.0
    %4513 = vmatprep.subr.mxu0 0.0
    %4514 = vmatpush1.msra.mxu0 0.0
    %4515 = vmatprep.subr.mxu0 0.0
    %4516 = vmatpush1.msra.mxu0 0.0
    %4517 = vmatprep.subr.mxu0 0.0
    %4518 = vmatpush1.msra.mxu0 0.0
    %4519 = vmatprep.subr.mxu0 0.0
    %4520 = vmatpush1.msra.mxu0 0.0
    %4521 = vmatprep.subr.mxu0 0.0
    %4522 = vmatpush1.msra.mxu0 0.0
    %4523 = vmatprep.subr.mxu0 0.0
    %4524 = vmatpush1.msra.mxu0 0.0
    %4525 = vmatprep.mubr.f32.mxu0 0.0
    %4526 = vmatmul.mubr.f32.gmra.mrb[0].mxu0 %v4459
    %v4527 = vpop.f32.mrb[0].mxu0
    %v4528 = vadd.f32 0.0, %v4527
    %v4529 = vpop.f32.mrb[0].mxu0
    %4530 = vdwg.mxu0
    %4531 = vrot.lane.b32.xlu0 %v3861, 112
    %v4532 = vpop.permute.xlu0 %4531
    %4533 = vrot.lane.b32.xlu0 %v3861, 80
    %v4534 = vpop.permute.xlu0 %4533
    %v4535 = vsel %vm253, %v4532, 0
    %v4537 = vsel %vm253, %v4534, 0
    %4539 = vmatprep.subr.mxu0 0.0
    %4540 = vmatpush1.xpose.msra.mxu0 %v4537
    %4541 = vmatprep.subr.mxu0 0.0
    %4542 = vmatpush1.xpose.msra.mxu0 0.0
    %4543 = vmatprep.subr.mxu0 0.0
    %4544 = vmatpush1.xpose.msra.mxu0 0.0
    %4545 = vmatprep.subr.mxu0 0.0
    %4546 = vmatpush1.xpose.msra.mxu0 0.0
    %4547 = vmatprep.subr.mxu0 0.0
    %4548 = vmatpush1.xpose.msra.mxu0 0.0
    %4549 = vmatprep.subr.mxu0 0.0
    %4550 = vmatpush1.xpose.msra.mxu0 0.0
    %4551 = vmatprep.subr.mxu0 0.0
    %4552 = vmatpush1.xpose.msra.mxu0 0.0
    %4553 = vmatprep.subr.mxu0 0.0
    %4554 = vmatpush1.xpose.msra.mxu0 0.0
    %4555 = vmatprep.subr.mxu0 0.0
    %4556 = vmatpush1.xpose.msra.mxu0 0.0
    %4557 = vmatprep.subr.mxu0 0.0
    %4558 = vmatpush1.xpose.msra.mxu0 0.0
    %4559 = vmatprep.subr.mxu0 0.0
    %4560 = vmatpush1.xpose.msra.mxu0 0.0
    %4561 = vmatprep.subr.mxu0 0.0
    %4562 = vmatpush1.xpose.msra.mxu0 0.0
    %4563 = vmatprep.subr.mxu0 0.0
    %4564 = vmatpush1.xpose.msra.mxu0 0.0
    %4565 = vmatprep.subr.mxu0 0.0
    %4566 = vmatpush1.xpose.msra.mxu0 0.0
    %4567 = vmatprep.subr.mxu0 0.0
    %4568 = vmatpush1.xpose.msra.mxu0 0.0
    %4569 = vmatprep.subr.mxu0 0.0
    %4570 = vmatpush1.xpose.msra.mxu0 0.0
    %4571 = vmatprep.subr.mxu0 0.0
    %4572 = vmatpush1.xpose.msra.mxu0 0.0
    %4573 = vmatprep.subr.mxu0 0.0
    %4574 = vmatpush1.xpose.msra.mxu0 0.0
    %4575 = vmatprep.subr.mxu0 0.0
    %4576 = vmatpush1.xpose.msra.mxu0 0.0
    %4577 = vmatprep.subr.mxu0 0.0
    %4578 = vmatpush1.xpose.msra.mxu0 0.0
    %4579 = vmatprep.subr.mxu0 0.0
    %4580 = vmatpush1.xpose.msra.mxu0 0.0
    %4581 = vmatprep.subr.mxu0 0.0
    %4582 = vmatpush1.xpose.msra.mxu0 0.0
    %4583 = vmatprep.subr.mxu0 0.0
    %4584 = vmatpush1.xpose.msra.mxu0 0.0
    %4585 = vmatprep.subr.mxu0 0.0
    %4586 = vmatpush1.xpose.msra.mxu0 0.0
    %4587 = vmatprep.subr.mxu0 0.0
    %4588 = vmatpush1.xpose.msra.mxu0 0.0
    %4589 = vmatprep.subr.mxu0 0.0
    %4590 = vmatpush1.xpose.msra.mxu0 0.0
    %4591 = vmatprep.subr.mxu0 0.0
    %4592 = vmatpush1.xpose.msra.mxu0 0.0
    %4593 = vmatprep.subr.mxu0 0.0
    %4594 = vmatpush1.xpose.msra.mxu0 0.0
    %4595 = vmatprep.subr.mxu0 0.0
    %4596 = vmatpush1.xpose.msra.mxu0 0.0
    %4597 = vmatprep.subr.mxu0 0.0
    %4598 = vmatpush1.xpose.msra.mxu0 0.0
    %4599 = vmatprep.subr.mxu0 0.0
    %4600 = vmatpush1.xpose.msra.mxu0 0.0
    %4601 = vmatprep.subr.mxu0 0.0
    %4602 = vmatpush1.xpose.msra.mxu0 0.0
    %4603 = vmatprep.mubr.f32.mxu0 0.0
    %4604 = vmatmul.mubr.f32.gmra.mrb[0].mxu0 %v4535
    %v4605 = vpop.f32.mrb[0].mxu0
    %v4606 = vadd.f32 0.0, %v4605
    %v4607 = vpop.f32.mrb[0].mxu0
    %4608 = vdwg.mxu0
    %4609 = vrot.lane.b32.xlu0 %v3866, 112
    %v4610 = vpop.permute.xlu0 %4609
    %4611 = vrot.lane.b32.xlu0 %v3866, 80
    %v4612 = vpop.permute.xlu0 %4611
    %v4613 = vsel %vm253, %v4610, 0
    %v4615 = vsel %vm253, %v4612, 0
    %4617 = vmatprep.subr.mxu0 0.0
    %4618 = vmatpush1.xpose.msra.mxu0 %v4615
    %4619 = vmatprep.subr.mxu0 0.0
    %4620 = vmatpush1.xpose.msra.mxu0 0.0
    %4621 = vmatprep.subr.mxu0 0.0
    %4622 = vmatpush1.xpose.msra.mxu0 0.0
    %4623 = vmatprep.subr.mxu0 0.0
    %4624 = vmatpush1.xpose.msra.mxu0 0.0
    %4625 = vmatprep.subr.mxu0 0.0
    %4626 = vmatpush1.xpose.msra.mxu0 0.0
    %4627 = vmatprep.subr.mxu0 0.0
    %4628 = vmatpush1.xpose.msra.mxu0 0.0
    %4629 = vmatprep.subr.mxu0 0.0
    %4630 = vmatpush1.xpose.msra.mxu0 0.0
    %4631 = vmatprep.subr.mxu0 0.0
    %4632 = vmatpush1.xpose.msra.mxu0 0.0
    %4633 = vmatprep.subr.mxu0 0.0
    %4634 = vmatpush1.xpose.msra.mxu0 0.0
    %4635 = vmatprep.subr.mxu0 0.0
    %4636 = vmatpush1.xpose.msra.mxu0 0.0
    %4637 = vmatprep.subr.mxu0 0.0
    %4638 = vmatpush1.xpose.msra.mxu0 0.0
    %4639 = vmatprep.subr.mxu0 0.0
    %4640 = vmatpush1.xpose.msra.mxu0 0.0
    %4641 = vmatprep.subr.mxu0 0.0
    %4642 = vmatpush1.xpose.msra.mxu0 0.0
    %4643 = vmatprep.subr.mxu0 0.0
    %4644 = vmatpush1.xpose.msra.mxu0 0.0
    %4645 = vmatprep.subr.mxu0 0.0
    %4646 = vmatpush1.xpose.msra.mxu0 0.0
    %4647 = vmatprep.subr.mxu0 0.0
    %4648 = vmatpush1.xpose.msra.mxu0 0.0
    %4649 = vmatprep.subr.mxu0 0.0
    %4650 = vmatpush1.xpose.msra.mxu0 0.0
    %4651 = vmatprep.subr.mxu0 0.0
    %4652 = vmatpush1.xpose.msra.mxu0 0.0
    %4653 = vmatprep.subr.mxu0 0.0
    %4654 = vmatpush1.xpose.msra.mxu0 0.0
    %4655 = vmatprep.subr.mxu0 0.0
    %4656 = vmatpush1.xpose.msra.mxu0 0.0
    %4657 = vmatprep.subr.mxu0 0.0
    %4658 = vmatpush1.xpose.msra.mxu0 0.0
    %4659 = vmatprep.subr.mxu0 0.0
    %4660 = vmatpush1.xpose.msra.mxu0 0.0
    %4661 = vmatprep.subr.mxu0 0.0
    %4662 = vmatpush1.xpose.msra.mxu0 0.0
    %4663 = vmatprep.subr.mxu0 0.0
    %4664 = vmatpush1.xpose.msra.mxu0 0.0
    %4665 = vmatprep.subr.mxu0 0.0
    %4666 = vmatpush1.xpose.msra.mxu0 0.0
    %4667 = vmatprep.subr.mxu0 0.0
    %4668 = vmatpush1.xpose.msra.mxu0 0.0
    %4669 = vmatprep.subr.mxu0 0.0
    %4670 = vmatpush1.xpose.msra.mxu0 0.0
    %4671 = vmatprep.subr.mxu0 0.0
    %4672 = vmatpush1.xpose.msra.mxu0 0.0
    %4673 = vmatprep.subr.mxu0 0.0
    %4674 = vmatpush1.xpose.msra.mxu0 0.0
    %4675 = vmatprep.subr.mxu0 0.0
    %4676 = vmatpush1.xpose.msra.mxu0 0.0
    %4677 = vmatprep.subr.mxu0 0.0
    %4678 = vmatpush1.xpose.msra.mxu0 0.0
    %4679 = vmatprep.subr.mxu0 0.0
    %4680 = vmatpush1.xpose.msra.mxu0 0.0
    %4681 = vmatprep.mubr.f32.mxu0 0.0
    %4682 = vmatmul.mubr.f32.gmra.mrb[0].mxu0 %v4613
    %v4683 = vpop.f32.mrb[0].mxu0
    %v4684 = vadd.f32 0.0, %v4683
    %v4685 = vpop.f32.mrb[0].mxu0
    %4686 = vdwg.mxu0
    %v4687 = vmul.f32 %v4606, 0.35355338
    %v4688 = vmul.f32 %v4684, 0.35355338
    %v4689 = vsel %vm253, %v4687, -inf
    %4690 = vmax.xlane.f32.xlu0 %v4689
    %v4691 = vpop.xlane.xlu0 %4690
    %v4692 = vsel %vm253, %v4688, -inf
    %4693 = vmax.xlane.f32.xlu0 %v4692
    %v4694 = vpop.xlane.xlu0 %4693
    %v4695 = vsub.f32 %v4687, %v4691
    %v4696 = vsub.f32 %v4688, %v4694
    %v4697 = vmul.f32 %v4695, 1.442695
    %v4698 = vpow.pop %v4697
    %v4699 = vmul.f32 %v4696, 1.442695
    %v4700 = vpow.pop %v4699
    %v4701 = vsel %vm253, %v4698, 0.0
    %4702 = vadd.xlane.f32.xlu0 %v4701
    %v4703 = vpop.xlane.xlu0 %4702
    %v4704 = vsel %vm253, %v4700, 0.0
    %4705 = vadd.xlane.f32.xlu0 %v4704
    %v4706 = vpop.xlane.xlu0 %4705
    %v4707 = vrcp.pop %v4703
    %v4708 = vmul.f32 %v4698, %v4707
    %v4709 = vrcp.pop %v4706
    %v4710 = vmul.f32 %v4700, %v4709
    %4711 = vrot.lane.b32.xlu0 %v3861, 48
    %v4712 = vpop.permute.xlu0 %4711
    %v4715 = vsel %vm253, %v4708, 0
    %4717 = vmatprep.subr.mxu0 0.0
    %4718 = vmatpush1.msra.mxu0 %v4712
    %4719 = vmatprep.subr.mxu0 0.0
    %4720 = vmatpush1.msra.mxu0 0.0
    %4721 = vmatprep.subr.mxu0 0.0
    %4722 = vmatpush1.msra.mxu0 0.0
    %4723 = vmatprep.subr.mxu0 0.0
    %4724 = vmatpush1.msra.mxu0 0.0
    %4725 = vmatprep.subr.mxu0 0.0
    %4726 = vmatpush1.msra.mxu0 0.0
    %4727 = vmatprep.subr.mxu0 0.0
    %4728 = vmatpush1.msra.mxu0 0.0
    %4729 = vmatprep.subr.mxu0 0.0
    %4730 = vmatpush1.msra.mxu0 0.0
    %4731 = vmatprep.subr.mxu0 0.0
    %4732 = vmatpush1.msra.mxu0 0.0
    %4733 = vmatprep.subr.mxu0 0.0
    %4734 = vmatpush1.msra.mxu0 0.0
    %4735 = vmatprep.subr.mxu0 0.0
    %4736 = vmatpush1.msra.mxu0 0.0
    %4737 = vmatprep.subr.mxu0 0.0
    %4738 = vmatpush1.msra.mxu0 0.0
    %4739 = vmatprep.subr.mxu0 0.0
    %4740 = vmatpush1.msra.mxu0 0.0
    %4741 = vmatprep.subr.mxu0 0.0
    %4742 = vmatpush1.msra.mxu0 0.0
    %4743 = vmatprep.subr.mxu0 0.0
    %4744 = vmatpush1.msra.mxu0 0.0
    %4745 = vmatprep.subr.mxu0 0.0
    %4746 = vmatpush1.msra.mxu0 0.0
    %4747 = vmatprep.subr.mxu0 0.0
    %4748 = vmatpush1.msra.mxu0 0.0
    %4749 = vmatprep.subr.mxu0 0.0
    %4750 = vmatpush1.msra.mxu0 0.0
    %4751 = vmatprep.subr.mxu0 0.0
    %4752 = vmatpush1.msra.mxu0 0.0
    %4753 = vmatprep.subr.mxu0 0.0
    %4754 = vmatpush1.msra.mxu0 0.0
    %4755 = vmatprep.subr.mxu0 0.0
    %4756 = vmatpush1.msra.mxu0 0.0
    %4757 = vmatprep.subr.mxu0 0.0
    %4758 = vmatpush1.msra.mxu0 0.0
    %4759 = vmatprep.subr.mxu0 0.0
    %4760 = vmatpush1.msra.mxu0 0.0
    %4761 = vmatprep.subr.mxu0 0.0
    %4762 = vmatpush1.msra.mxu0 0.0
    %4763 = vmatprep.subr.mxu0 0.0
    %4764 = vmatpush1.msra.mxu0 0.0
    %4765 = vmatprep.subr.mxu0 0.0
    %4766 = vmatpush1.msra.mxu0 0.0
    %4767 = vmatprep.subr.mxu0 0.0
    %4768 = vmatpush1.msra.mxu0 0.0
    %4769 = vmatprep.subr.mxu0 0.0
    %4770 = vmatpush1.msra.mxu0 0.0
    %4771 = vmatprep.subr.mxu0 0.0
    %4772 = vmatpush1.msra.mxu0 0.0
    %4773 = vmatprep.subr.mxu0 0.0
    %4774 = vmatpush1.msra.mxu0 0.0
    %4775 = vmatprep.subr.mxu0 0.0
    %4776 = vmatpush1.msra.mxu0 0.0
    %4777 = vmatprep.subr.mxu0 0.0
    %4778 = vmatpush1.msra.mxu0 0.0
    %4779 = vmatprep.subr.mxu0 0.0
    %4780 = vmatpush1.msra.mxu0 0.0
    %4781 = vmatprep.mubr.f32.mxu0 0.0
    %4782 = vmatmul.mubr.f32.gmra.mrb[0].mxu0 %v4715
    %v4783 = vpop.f32.mrb[0].mxu0
    %v4784 = vadd.f32 0.0, %v4783
    %v4785 = vpop.f32.mrb[0].mxu0
    %4786 = vdwg.mxu0
    %4787 = vrot.lane.b32.xlu0 %v3866, 48
    %v4788 = vpop.permute.xlu0 %4787
    %v4791 = vsel %vm253, %v4710, 0
    %4793 = vmatprep.subr.mxu0 0.0
    %4794 = vmatpush1.msra.mxu0 %v4788
    %4795 = vmatprep.subr.mxu0 0.0
    %4796 = vmatpush1.msra.mxu0 0.0
    %4797 = vmatprep.subr.mxu0 0.0
    %4798 = vmatpush1.msra.mxu0 0.0
    %4799 = vmatprep.subr.mxu0 0.0
    %4800 = vmatpush1.msra.mxu0 0.0
    %4801 = vmatprep.subr.mxu0 0.0
    %4802 = vmatpush1.msra.mxu0 0.0
    %4803 = vmatprep.subr.mxu0 0.0
    %4804 = vmatpush1.msra.mxu0 0.0
    %4805 = vmatprep.subr.mxu0 0.0
    %4806 = vmatpush1.msra.mxu0 0.0
    %4807 = vmatprep.subr.mxu0 0.0
    %4808 = vmatpush1.msra.mxu0 0.0
    %4809 = vmatprep.subr.mxu0 0.0
    %4810 = vmatpush1.msra.mxu0 0.0
    %4811 = vmatprep.subr.mxu0 0.0
    %4812 = vmatpush1.msra.mxu0 0.0
    %4813 = vmatprep.subr.mxu0 0.0
    %4814 = vmatpush1.msra.mxu0 0.0
    %4815 = vmatprep.subr.mxu0 0.0
    %4816 = vmatpush1.msra.mxu0 0.0
    %4817 = vmatprep.subr.mxu0 0.0
    %4818 = vmatpush1.msra.mxu0 0.0
    %4819 = vmatprep.subr.mxu0 0.0
    %4820 = vmatpush1.msra.mxu0 0.0
    %4821 = vmatprep.subr.mxu0 0.0
    %4822 = vmatpush1.msra.mxu0 0.0
    %4823 = vmatprep.subr.mxu0 0.0
    %4824 = vmatpush1.msra.mxu0 0.0
    %4825 = vmatprep.subr.mxu0 0.0
    %4826 = vmatpush1.msra.mxu0 0.0
    %4827 = vmatprep.subr.mxu0 0.0
    %4828 = vmatpush1.msra.mxu0 0.0
    %4829 = vmatprep.subr.mxu0 0.0
    %4830 = vmatpush1.msra.mxu0 0.0
    %4831 = vmatprep.subr.mxu0 0.0
    %4832 = vmatpush1.msra.mxu0 0.0
    %4833 = vmatprep.subr.mxu0 0.0
    %4834 = vmatpush1.msra.mxu0 0.0
    %4835 = vmatprep.subr.mxu0 0.0
    %4836 = vmatpush1.msra.mxu0 0.0
    %4837 = vmatprep.subr.mxu0 0.0
    %4838 = vmatpush1.msra.mxu0 0.0
    %4839 = vmatprep.subr.mxu0 0.0
    %4840 = vmatpush1.msra.mxu0 0.0
    %4841 = vmatprep.subr.mxu0 0.0
    %4842 = vmatpush1.msra.mxu0 0.0
    %4843 = vmatprep.subr.mxu0 0.0
    %4844 = vmatpush1.msra.mxu0 0.0
    %4845 = vmatprep.subr.mxu0 0.0
    %4846 = vmatpush1.msra.mxu0 0.0
    %4847 = vmatprep.subr.mxu0 0.0
    %4848 = vmatpush1.msra.mxu0 0.0
    %4849 = vmatprep.subr.mxu0 0.0
    %4850 = vmatpush1.msra.mxu0 0.0
    %4851 = vmatprep.subr.mxu0 0.0
    %4852 = vmatpush1.msra.mxu0 0.0
    %4853 = vmatprep.subr.mxu0 0.0
    %4854 = vmatpush1.msra.mxu0 0.0
    %4855 = vmatprep.subr.mxu0 0.0
    %4856 = vmatpush1.msra.mxu0 0.0
    %4857 = vmatprep.mubr.f32.mxu0 0.0
    %4858 = vmatmul.mubr.f32.gmra.mrb[0].mxu0 %v4791
    %v4859 = vpop.f32.mrb[0].mxu0
    %v4860 = vadd.f32 0.0, %v4859
    %v4861 = vpop.f32.mrb[0].mxu0
    %4862 = vdwg.mxu0
    %4863 = vrot.lane.b32.xlu0 %v3861, 104
    %v4864 = vpop.permute.xlu0 %4863
    %4865 = vrot.lane.b32.xlu0 %v3861, 72
    %v4866 = vpop.permute.xlu0 %4865
    %v4867 = vsel %vm253, %v4864, 0
    %v4869 = vsel %vm253, %v4866, 0
    %4871 = vmatprep.subr.mxu0 0.0
    %4872 = vmatpush1.xpose.msra.mxu0 %v4869
    %4873 = vmatprep.subr.mxu0 0.0
    %4874 = vmatpush1.xpose.msra.mxu0 0.0
    %4875 = vmatprep.subr.mxu0 0.0
    %4876 = vmatpush1.xpose.msra.mxu0 0.0
    %4877 = vmatprep.subr.mxu0 0.0
    %4878 = vmatpush1.xpose.msra.mxu0 0.0
    %4879 = vmatprep.subr.mxu0 0.0
    %4880 = vmatpush1.xpose.msra.mxu0 0.0
    %4881 = vmatprep.subr.mxu0 0.0
    %4882 = vmatpush1.xpose.msra.mxu0 0.0
    %4883 = vmatprep.subr.mxu0 0.0
    %4884 = vmatpush1.xpose.msra.mxu0 0.0
    %4885 = vmatprep.subr.mxu0 0.0
    %4886 = vmatpush1.xpose.msra.mxu0 0.0
    %4887 = vmatprep.subr.mxu0 0.0
    %4888 = vmatpush1.xpose.msra.mxu0 0.0
    %4889 = vmatprep.subr.mxu0 0.0
    %4890 = vmatpush1.xpose.msra.mxu0 0.0
    %4891 = vmatprep.subr.mxu0 0.0
    %4892 = vmatpush1.xpose.msra.mxu0 0.0
    %4893 = vmatprep.subr.mxu0 0.0
    %4894 = vmatpush1.xpose.msra.mxu0 0.0
    %4895 = vmatprep.subr.mxu0 0.0
    %4896 = vmatpush1.xpose.msra.mxu0 0.0
    %4897 = vmatprep.subr.mxu0 0.0
    %4898 = vmatpush1.xpose.msra.mxu0 0.0
    %4899 = vmatprep.subr.mxu0 0.0
    %4900 = vmatpush1.xpose.msra.mxu0 0.0
    %4901 = vmatprep.subr.mxu0 0.0
    %4902 = vmatpush1.xpose.msra.mxu0 0.0
    %4903 = vmatprep.subr.mxu0 0.0
    %4904 = vmatpush1.xpose.msra.mxu0 0.0
    %4905 = vmatprep.subr.mxu0 0.0
    %4906 = vmatpush1.xpose.msra.mxu0 0.0
    %4907 = vmatprep.subr.mxu0 0.0
    %4908 = vmatpush1.xpose.msra.mxu0 0.0
    %4909 = vmatprep.subr.mxu0 0.0
    %4910 = vmatpush1.xpose.msra.mxu0 0.0
    %4911 = vmatprep.subr.mxu0 0.0
    %4912 = vmatpush1.xpose.msra.mxu0 0.0
    %4913 = vmatprep.subr.mxu0 0.0
    %4914 = vmatpush1.xpose.msra.mxu0 0.0
    %4915 = vmatprep.subr.mxu0 0.0
    %4916 = vmatpush1.xpose.msra.mxu0 0.0
    %4917 = vmatprep.subr.mxu0 0.0
    %4918 = vmatpush1.xpose.msra.mxu0 0.0
    %4919 = vmatprep.subr.mxu0 0.0
    %4920 = vmatpush1.xpose.msra.mxu0 0.0
    %4921 = vmatprep.subr.mxu0 0.0
    %4922 = vmatpush1.xpose.msra.mxu0 0.0
    %4923 = vmatprep.subr.mxu0 0.0
    %4924 = vmatpush1.xpose.msra.mxu0 0.0
    %4925 = vmatprep.subr.mxu0 0.0
    %4926 = vmatpush1.xpose.msra.mxu0 0.0
    %4927 = vmatprep.subr.mxu0 0.0
    %4928 = vmatpush1.xpose.msra.mxu0 0.0
    %4929 = vmatprep.subr.mxu0 0.0
    %4930 = vmatpush1.xpose.msra.mxu0 0.0
    %4931 = vmatprep.subr.mxu0 0.0
    %4932 = vmatpush1.xpose.msra.mxu0 0.0
    %4933 = vmatprep.subr.mxu0 0.0
    %4934 = vmatpush1.xpose.msra.mxu0 0.0
    %4935 = vmatprep.mubr.f32.mxu0 0.0
    %4936 = vmatmul.mubr.f32.gmra.mrb[0].mxu0 %v4867
    %v4937 = vpop.f32.mrb[0].mxu0
    %v4938 = vadd.f32 0.0, %v4937
    %v4939 = vpop.f32.mrb[0].mxu0
    %4940 = vdwg.mxu0
    %4941 = vrot.lane.b32.xlu0 %v3866, 104
    %v4942 = vpop.permute.xlu0 %4941
    %4943 = vrot.lane.b32.xlu0 %v3866, 72
    %v4944 = vpop.permute.xlu0 %4943
    %v4945 = vsel %vm253, %v4942, 0
    %v4947 = vsel %vm253, %v4944, 0
    %4949 = vmatprep.subr.mxu0 0.0
    %4950 = vmatpush1.xpose.msra.mxu0 %v4947
    %4951 = vmatprep.subr.mxu0 0.0
    %4952 = vmatpush1.xpose.msra.mxu0 0.0
    %4953 = vmatprep.subr.mxu0 0.0
    %4954 = vmatpush1.xpose.msra.mxu0 0.0
    %4955 = vmatprep.subr.mxu0 0.0
    %4956 = vmatpush1.xpose.msra.mxu0 0.0
    %4957 = vmatprep.subr.mxu0 0.0
    %4958 = vmatpush1.xpose.msra.mxu0 0.0
    %4959 = vmatprep.subr.mxu0 0.0
    %4960 = vmatpush1.xpose.msra.mxu0 0.0
    %4961 = vmatprep.subr.mxu0 0.0
    %4962 = vmatpush1.xpose.msra.mxu0 0.0
    %4963 = vmatprep.subr.mxu0 0.0
    %4964 = vmatpush1.xpose.msra.mxu0 0.0
    %4965 = vmatprep.subr.mxu0 0.0
    %4966 = vmatpush1.xpose.msra.mxu0 0.0
    %4967 = vmatprep.subr.mxu0 0.0
    %4968 = vmatpush1.xpose.msra.mxu0 0.0
    %4969 = vmatprep.subr.mxu0 0.0
    %4970 = vmatpush1.xpose.msra.mxu0 0.0
    %4971 = vmatprep.subr.mxu0 0.0
    %4972 = vmatpush1.xpose.msra.mxu0 0.0
    %4973 = vmatprep.subr.mxu0 0.0
    %4974 = vmatpush1.xpose.msra.mxu0 0.0
    %4975 = vmatprep.subr.mxu0 0.0
    %4976 = vmatpush1.xpose.msra.mxu0 0.0
    %4977 = vmatprep.subr.mxu0 0.0
    %4978 = vmatpush1.xpose.msra.mxu0 0.0
    %4979 = vmatprep.subr.mxu0 0.0
    %4980 = vmatpush1.xpose.msra.mxu0 0.0
    %4981 = vmatprep.subr.mxu0 0.0
    %4982 = vmatpush1.xpose.msra.mxu0 0.0
    %4983 = vmatprep.subr.mxu0 0.0
    %4984 = vmatpush1.xpose.msra.mxu0 0.0
    %4985 = vmatprep.subr.mxu0 0.0
    %4986 = vmatpush1.xpose.msra.mxu0 0.0
    %4987 = vmatprep.subr.mxu0 0.0
    %4988 = vmatpush1.xpose.msra.mxu0 0.0
    %4989 = vmatprep.subr.mxu0 0.0
    %4990 = vmatpush1.xpose.msra.mxu0 0.0
    %4991 = vmatprep.subr.mxu0 0.0
    %4992 = vmatpush1.xpose.msra.mxu0 0.0
    %4993 = vmatprep.subr.mxu0 0.0
    %4994 = vmatpush1.xpose.msra.mxu0 0.0
    %4995 = vmatprep.subr.mxu0 0.0
    %4996 = vmatpush1.xpose.msra.mxu0 0.0
    %4997 = vmatprep.subr.mxu0 0.0
    %4998 = vmatpush1.xpose.msra.mxu0 0.0
    %4999 = vmatprep.subr.mxu0 0.0
    %5000 = vmatpush1.xpose.msra.mxu0 0.0
    %5001 = vmatprep.subr.mxu0 0.0
    %5002 = vmatpush1.xpose.msra.mxu0 0.0
    %5003 = vmatprep.subr.mxu0 0.0
    %5004 = vmatpush1.xpose.msra.mxu0 0.0
    %5005 = vmatprep.subr.mxu0 0.0
    %5006 = vmatpush1.xpose.msra.mxu0 0.0
    %5007 = vmatprep.subr.mxu0 0.0
    %5008 = vmatpush1.xpose.msra.mxu0 0.0
    %5009 = vmatprep.subr.mxu0 0.0
    %5010 = vmatpush1.xpose.msra.mxu0 0.0
    %5011 = vmatprep.subr.mxu0 0.0
    %5012 = vmatpush1.xpose.msra.mxu0 0.0
    %5013 = vmatprep.mubr.f32.mxu0 0.0
    %5014 = vmatmul.mubr.f32.gmra.mrb[0].mxu0 %v4945
    %v5015 = vpop.f32.mrb[0].mxu0
    %v5016 = vadd.f32 0.0, %v5015
    %v5017 = vpop.f32.mrb[0].mxu0
    %5018 = vdwg.mxu0
    %v5019 = vmul.f32 %v4938, 0.35355338
    %v5020 = vmul.f32 %v5016, 0.35355338
    %v5021 = vsel %vm253, %v5019, -inf
    %5022 = vmax.xlane.f32.xlu0 %v5021
    %v5023 = vpop.xlane.xlu0 %5022
    %v5024 = vsel %vm253, %v5020, -inf
    %5025 = vmax.xlane.f32.xlu0 %v5024
    %v5026 = vpop.xlane.xlu0 %5025
    %v5027 = vsub.f32 %v5019, %v5023
    %v5028 = vsub.f32 %v5020, %v5026
    %v5029 = vmul.f32 %v5027, 1.442695
    %v5030 = vpow.pop %v5029
    %v5031 = vmul.f32 %v5028, 1.442695
    %v5032 = vpow.pop %v5031
    %v5033 = vsel %vm253, %v5030, 0.0
    %5034 = vadd.xlane.f32.xlu0 %v5033
    %v5035 = vpop.xlane.xlu0 %5034
    %v5036 = vsel %vm253, %v5032, 0.0
    %5037 = vadd.xlane.f32.xlu0 %v5036
    %v5038 = vpop.xlane.xlu0 %5037
    %v5039 = vrcp.pop %v5035
    %v5040 = vmul.f32 %v5030, %v5039
    %v5041 = vrcp.pop %v5038
    %v5042 = vmul.f32 %v5032, %v5041
    %5043 = vrot.lane.b32.xlu0 %v3861, 40
    %v5044 = vpop.permute.xlu0 %5043
    %v5047 = vsel %vm253, %v5040, 0
    %5049 = vmatprep.subr.mxu0 0.0
    %5050 = vmatpush1.msra.mxu0 %v5044
    %5051 = vmatprep.subr.mxu0 0.0
    %5052 = vmatpush1.msra.mxu0 0.0
    %5053 = vmatprep.subr.mxu0 0.0
    %5054 = vmatpush1.msra.mxu0 0.0
    %5055 = vmatprep.subr.mxu0 0.0
    %5056 = vmatpush1.msra.mxu0 0.0
    %5057 = vmatprep.subr.mxu0 0.0
    %5058 = vmatpush1.msra.mxu0 0.0
    %5059 = vmatprep.subr.mxu0 0.0
    %5060 = vmatpush1.msra.mxu0 0.0
    %5061 = vmatprep.subr.mxu0 0.0
    %5062 = vmatpush1.msra.mxu0 0.0
    %5063 = vmatprep.subr.mxu0 0.0
    %5064 = vmatpush1.msra.mxu0 0.0
    %5065 = vmatprep.subr.mxu0 0.0
    %5066 = vmatpush1.msra.mxu0 0.0
    %5067 = vmatprep.subr.mxu0 0.0
    %5068 = vmatpush1.msra.mxu0 0.0
    %5069 = vmatprep.subr.mxu0 0.0
    %5070 = vmatpush1.msra.mxu0 0.0
    %5071 = vmatprep.subr.mxu0 0.0
    %5072 = vmatpush1.msra.mxu0 0.0
    %5073 = vmatprep.subr.mxu0 0.0
    %5074 = vmatpush1.msra.mxu0 0.0
    %5075 = vmatprep.subr.mxu0 0.0
    %5076 = vmatpush1.msra.mxu0 0.0
    %5077 = vmatprep.subr.mxu0 0.0
    %5078 = vmatpush1.msra.mxu0 0.0
    %5079 = vmatprep.subr.mxu0 0.0
    %5080 = vmatpush1.msra.mxu0 0.0
    %5081 = vmatprep.subr.mxu0 0.0
    %5082 = vmatpush1.msra.mxu0 0.0
    %5083 = vmatprep.subr.mxu0 0.0
    %5084 = vmatpush1.msra.mxu0 0.0
    %5085 = vmatprep.subr.mxu0 0.0
    %5086 = vmatpush1.msra.mxu0 0.0
    %5087 = vmatprep.subr.mxu0 0.0
    %5088 = vmatpush1.msra.mxu0 0.0
    %5089 = vmatprep.subr.mxu0 0.0
    %5090 = vmatpush1.msra.mxu0 0.0
    %5091 = vmatprep.subr.mxu0 0.0
    %5092 = vmatpush1.msra.mxu0 0.0
    %5093 = vmatprep.subr.mxu0 0.0
    %5094 = vmatpush1.msra.mxu0 0.0
    %5095 = vmatprep.subr.mxu0 0.0
    %5096 = vmatpush1.msra.mxu0 0.0
    %5097 = vmatprep.subr.mxu0 0.0
    %5098 = vmatpush1.msra.mxu0 0.0
    %5099 = vmatprep.subr.mxu0 0.0
    %5100 = vmatpush1.msra.mxu0 0.0
    %5101 = vmatprep.subr.mxu0 0.0
    %5102 = vmatpush1.msra.mxu0 0.0
    %5103 = vmatprep.subr.mxu0 0.0
    %5104 = vmatpush1.msra.mxu0 0.0
    %5105 = vmatprep.subr.mxu0 0.0
    %5106 = vmatpush1.msra.mxu0 0.0
    %5107 = vmatprep.subr.mxu0 0.0
    %5108 = vmatpush1.msra.mxu0 0.0
    %5109 = vmatprep.subr.mxu0 0.0
    %5110 = vmatpush1.msra.mxu0 0.0
    %5111 = vmatprep.subr.mxu0 0.0
    %5112 = vmatpush1.msra.mxu0 0.0
    %5113 = vmatprep.mubr.f32.mxu0 0.0
    %5114 = vmatmul.mubr.f32.gmra.mrb[0].mxu0 %v5047
    %v5115 = vpop.f32.mrb[0].mxu0
    %v5116 = vadd.f32 0.0, %v5115
    %v5117 = vpop.f32.mrb[0].mxu0
    %5118 = vdwg.mxu0
    %5119 = vrot.lane.b32.xlu0 %v3866, 40
    %v5120 = vpop.permute.xlu0 %5119
    %v5123 = vsel %vm253, %v5042, 0
    %5125 = vmatprep.subr.mxu0 0.0
    %5126 = vmatpush1.msra.mxu0 %v5120
    %5127 = vmatprep.subr.mxu0 0.0
    %5128 = vmatpush1.msra.mxu0 0.0
    %5129 = vmatprep.subr.mxu0 0.0
    %5130 = vmatpush1.msra.mxu0 0.0
    %5131 = vmatprep.subr.mxu0 0.0
    %5132 = vmatpush1.msra.mxu0 0.0
    %5133 = vmatprep.subr.mxu0 0.0
    %5134 = vmatpush1.msra.mxu0 0.0
    %5135 = vmatprep.subr.mxu0 0.0
    %5136 = vmatpush1.msra.mxu0 0.0
    %5137 = vmatprep.subr.mxu0 0.0
    %5138 = vmatpush1.msra.mxu0 0.0
    %5139 = vmatprep.subr.mxu0 0.0
    %5140 = vmatpush1.msra.mxu0 0.0
    %5141 = vmatprep.subr.mxu0 0.0
    %5142 = vmatpush1.msra.mxu0 0.0
    %5143 = vmatprep.subr.mxu0 0.0
    %5144 = vmatpush1.msra.mxu0 0.0
    %5145 = vmatprep.subr.mxu0 0.0
    %5146 = vmatpush1.msra.mxu0 0.0
    %5147 = vmatprep.subr.mxu0 0.0
    %5148 = vmatpush1.msra.mxu0 0.0
    %5149 = vmatprep.subr.mxu0 0.0
    %5150 = vmatpush1.msra.mxu0 0.0
    %5151 = vmatprep.subr.mxu0 0.0
    %5152 = vmatpush1.msra.mxu0 0.0
    %5153 = vmatprep.subr.mxu0 0.0
    %5154 = vmatpush1.msra.mxu0 0.0
    %5155 = vmatprep.subr.mxu0 0.0
    %5156 = vmatpush1.msra.mxu0 0.0
    %5157 = vmatprep.subr.mxu0 0.0
    %5158 = vmatpush1.msra.mxu0 0.0
    %5159 = vmatprep.subr.mxu0 0.0
    %5160 = vmatpush1.msra.mxu0 0.0
    %5161 = vmatprep.subr.mxu0 0.0
    %5162 = vmatpush1.msra.mxu0 0.0
    %5163 = vmatprep.subr.mxu0 0.0
    %5164 = vmatpush1.msra.mxu0 0.0
    %5165 = vmatprep.subr.mxu0 0.0
    %5166 = vmatpush1.msra.mxu0 0.0
    %5167 = vmatprep.subr.mxu0 0.0
    %5168 = vmatpush1.msra.mxu0 0.0
    %5169 = vmatprep.subr.mxu0 0.0
    %5170 = vmatpush1.msra.mxu0 0.0
    %5171 = vmatprep.subr.mxu0 0.0
    %5172 = vmatpush1.msra.mxu0 0.0
    %5173 = vmatprep.subr.mxu0 0.0
    %5174 = vmatpush1.msra.mxu0 0.0
    %5175 = vmatprep.subr.mxu0 0.0
    %5176 = vmatpush1.msra.mxu0 0.0
    %5177 = vmatprep.subr.mxu0 0.0
    %5178 = vmatpush1.msra.mxu0 0.0
    %5179 = vmatprep.subr.mxu0 0.0
    %5180 = vmatpush1.msra.mxu0 0.0
    %5181 = vmatprep.subr.mxu0 0.0
    %5182 = vmatpush1.msra.mxu0 0.0
    %5183 = vmatprep.subr.mxu0 0.0
    %5184 = vmatpush1.msra.mxu0 0.0
    %5185 = vmatprep.subr.mxu0 0.0
    %5186 = vmatpush1.msra.mxu0 0.0
    %5187 = vmatprep.subr.mxu0 0.0
    %5188 = vmatpush1.msra.mxu0 0.0
    %5189 = vmatprep.mubr.f32.mxu0 0.0
    %5190 = vmatmul.mubr.f32.gmra.mrb[0].mxu0 %v5123
    %v5191 = vpop.f32.mrb[0].mxu0
    %v5192 = vadd.f32 0.0, %v5191
    %v5193 = vpop.f32.mrb[0].mxu0
    %5194 = vdwg.mxu0
    %5197 = vrot.lane.b32.xlu0 %v4452, 8
    %v5198 = vpop.permute.xlu0 %5197
    %5199 = vrot.lane.b32.xlu0 %v4528, 8
    %v5200 = vpop.permute.xlu0 %5199
    %5205 = vrot.lane.b32.xlu0 %v4784, 16
    %v5206 = vpop.permute.xlu0 %5205
    %5207 = vrot.lane.b32.xlu0 %v4860, 16
    %v5208 = vpop.permute.xlu0 %5207
    %5213 = vrot.lane.b32.xlu0 %v5116, 24
    %v5214 = vpop.permute.xlu0 %5213
    %5215 = vrot.lane.b32.xlu0 %v5192, 24
    %v5216 = vpop.permute.xlu0 %5215
    %v5219 = vsel %vm253, %v4120, %v5198
    %v5220 = vsel %vm253, %v4196, %v5200
    %v5221 = vsel %vm1603, %v5219, %v5206
    %v5222 = vsel %vm1603, %v5220, %v5208
    %v5223 = vsel %vm1606, %v5221, %v5214
    %v5224 = vsel %vm1606, %v5222, %v5216
    %v5225 = vld [vmem:[%s1 + $0x180] sm:$0xff]
    %v5226 = vld [vmem:[%s1 + $0x188] sm:$0xff]
    %v5227 = vld [vmem:[%s1 + $0x190] sm:$0xff]
    %v5228 = vld [vmem:[%s1 + $0x198] sm:$0xff]
    %v5230 = vsel %vm120, %v5223, 0
    %v5233 = vsel %vm120, %v5224, 0
    %5235 = vmatprep.subr.mxu0 0.0
    %5236 = vmatpush1.msra.mxu0 %v5225
    %5237 = vmatprep.subr.mxu0 0.0
    %5238 = vmatpush1.msra.mxu0 %v5226
    %5239 = vmatprep.subr.mxu0 0.0
    %5240 = vmatpush1.msra.mxu0 %v5227
    %5241 = vmatprep.subr.mxu0 0.0
    %5242 = vmatpush1.msra.mxu0 %v5228
    %5243 = vmatprep.subr.mxu0 0.0
    %5244 = vmatpush1.msra.mxu0 0.0
    %5245 = vmatprep.subr.mxu0 0.0
    %5246 = vmatpush1.msra.mxu0 0.0
    %5247 = vmatprep.subr.mxu0 0.0
    %5248 = vmatpush1.msra.mxu0 0.0
    %5249 = vmatprep.subr.mxu0 0.0
    %5250 = vmatpush1.msra.mxu0 0.0
    %5251 = vmatprep.subr.mxu0 0.0
    %5252 = vmatpush1.msra.mxu0 0.0
    %5253 = vmatprep.subr.mxu0 0.0
    %5254 = vmatpush1.msra.mxu0 0.0
    %5255 = vmatprep.subr.mxu0 0.0
    %5256 = vmatpush1.msra.mxu0 0.0
    %5257 = vmatprep.subr.mxu0 0.0
    %5258 = vmatpush1.msra.mxu0 0.0
    %5259 = vmatprep.subr.mxu0 0.0
    %5260 = vmatpush1.msra.mxu0 0.0
    %5261 = vmatprep.subr.mxu0 0.0
    %5262 = vmatpush1.msra.mxu0 0.0
    %5263 = vmatprep.subr.mxu0 0.0
    %5264 = vmatpush1.msra.mxu0 0.0
    %5265 = vmatprep.subr.mxu0 0.0
    %5266 = vmatpush1.msra.mxu0 0.0
    %5267 = vmatprep.subr.mxu0 0.0
    %5268 = vmatpush1.msra.mxu0 0.0
    %5269 = vmatprep.subr.mxu0 0.0
    %5270 = vmatpush1.msra.mxu0 0.0
    %5271 = vmatprep.subr.mxu0 0.0
    %5272 = vmatpush1.msra.mxu0 0.0
    %5273 = vmatprep.subr.mxu0 0.0
    %5274 = vmatpush1.msra.mxu0 0.0
    %5275 = vmatprep.subr.mxu0 0.0
    %5276 = vmatpush1.msra.mxu0 0.0
    %5277 = vmatprep.subr.mxu0 0.0
    %5278 = vmatpush1.msra.mxu0 0.0
    %5279 = vmatprep.subr.mxu0 0.0
    %5280 = vmatpush1.msra.mxu0 0.0
    %5281 = vmatprep.subr.mxu0 0.0
    %5282 = vmatpush1.msra.mxu0 0.0
    %5283 = vmatprep.subr.mxu0 0.0
    %5284 = vmatpush1.msra.mxu0 0.0
    %5285 = vmatprep.subr.mxu0 0.0
    %5286 = vmatpush1.msra.mxu0 0.0
    %5287 = vmatprep.subr.mxu0 0.0
    %5288 = vmatpush1.msra.mxu0 0.0
    %5289 = vmatprep.subr.mxu0 0.0
    %5290 = vmatpush1.msra.mxu0 0.0
    %5291 = vmatprep.subr.mxu0 0.0
    %5292 = vmatpush1.msra.mxu0 0.0
    %5293 = vmatprep.subr.mxu0 0.0
    %5294 = vmatpush1.msra.mxu0 0.0
    %5295 = vmatprep.subr.mxu0 0.0
    %5296 = vmatpush1.msra.mxu0 0.0
    %5297 = vmatprep.subr.mxu0 0.0
    %5298 = vmatpush1.msra.mxu0 0.0
    %5299 = vmatprep.mubr.f32.mxu0 0.0
    %5300 = vmatmul.mubr.f32.gmra.mrb[0].mxu0 %v5230
    %v5301 = vpop.f32.mrb[0].mxu0
    %v5302 = vadd.f32 0.0, %v5301
    %v5303 = vpop.f32.mrb[0].mxu0
    %5304 = vmatprep.mubr.f32.mxu0 0.0
    %5305 = vmatmul.mubr.f32.gmra.mrb[0].mxu0 %v5233
    %v5306 = vpop.f32.mrb[0].mxu0
    %v5307 = vadd.f32 0.0, %v5306
    %v5308 = vpop.f32.mrb[0].mxu0
    %5309 = vdwg.mxu0
    %v5310 = vadd.f32 %v3737, %v5302
    %v5311 = vadd.f32 %v3738, %v5307
    %v5312 = vld [vmem:[%s1 + $0x1a0] sm:$0x1]
    %v5313 = vlaneseq
    %v5314 = vshrl.u32 %v5313, 7
    %v5315 = vsub.s32 0, %v5314
    %v5316 = vrot.slane %v5312, %v5315
    %v5317 = vadd.f32 %v5310, %v5316
    %v5318 = vadd.f32 %v5311, %v5316
    %v5319 = vld [vmem:[%s1 + $0x1a8] sm:$0x1]
    %v5320 = vld [vmem:[%s1 + $0x1b0] sm:$0x1]
    %v5321 = vsel %vm120, %v5317, 0.0
    %5322 = vadd.xlane.f32.xlu0 %v5321
    %v5323 = vpop.xlane.xlu0 %5322
    %v5324 = vsel %vm120, %v5318, 0.0
    %5325 = vadd.xlane.f32.xlu0 %v5324
    %v5326 = vpop.xlane.xlu0 %5325
    %v5327 = vmul.f32 %v5323, %v127
    %v5328 = vmul.f32 %v5326, %v127
    %v5329 = vsub.f32 %v5317, %v5327
    %v5330 = vsub.f32 %v5318, %v5328
    %v5331 = vmul.f32 %v5329, %v5329
    %v5332 = vmul.f32 %v5330, %v5330
    %v5333 = vsel %vm120, %v5331, 0.0
    %5334 = vadd.xlane.f32.xlu0 %v5333
    %v5335 = vpop.xlane.xlu0 %5334
    %v5336 = vsel %vm120, %v5332, 0.0
    %5337 = vadd.xlane.f32.xlu0 %v5336
    %v5338 = vpop.xlane.xlu0 %5337
    %v5339 = vmul.f32 %v5335, %v127
    %v5340 = vmul.f32 %v5338, %v127
    %v5341 = vadd.f32 %v5339, 1e-05
    %v5342 = vadd.f32 %v5340, 1e-05
    %v5343 = vrsqrt.pop %v5341
    %v5344 = vrsqrt.pop %v5342
    %v5345 = vmul.f32 %v5329, %v5343
    %v5346 = vmul.f32 %v5330, %v5344
    %v5347 = vlaneseq
    %v5348 = vshrl.u32 %v5347, 7
    %v5349 = vsub.s32 0, %v5348
    %v5350 = vrot.slane %v5319, %v5349
    %v5351 = vmul.f32 %v5345, %v5350
    %v5352 = vmul.f32 %v5346, %v5350
    %v5353 = vlaneseq
    %v5354 = vshrl.u32 %v5353, 7
    %v5355 = vsub.s32 0, %v5354
    %v5356 = vrot.slane %v5320, %v5355
    %v5357 = vadd.f32 %v5351, %v5356
    %v5358 = vadd.f32 %v5352, %v5356
    %v5359 = vld [vmem:[%s1 + $0x1b8] sm:$0xff]
    %v5360 = vld [vmem:[%s1 + $0x1c0] sm:$0xff]
    %v5361 = vld [vmem:[%s1 + $0x1c8] sm:$0xff]
    %v5362 = vld [vmem:[%s1 + $0x1d0] sm:$0xff]
    %v5363 = vld [vmem:[%s1 + $0x1d8] sm:$0x1]
    %v5364 = vlaneseq
    %v5365 = vshrl.u32 %v5364, 7
    %v5366 = vsub.s32 0, %v5365
    %v5367 = vrot.slane %v5363, %v5366
    %v5369 = vsel %vm120, %v5357, 0
    %v5372 = vsel %vm120, %v5358, 0
    %5374 = vmatprep.subr.mxu0 0.0
    %5375 = vmatpush1.msra.mxu0 %v5359
    %5376 = vmatprep.subr.mxu0 0.0
    %5377 = vmatpush1.msra.mxu0 %v5360
    %5378 = vmatprep.subr.mxu0 0.0
    %5379 = vmatpush1.msra.mxu0 %v5361
    %5380 = vmatprep.subr.mxu0 0.0
    %5381 = vmatpush1.msra.mxu0 %v5362
    %5382 = vmatprep.subr.mxu0 0.0
    %5383 = vmatpush1.msra.mxu0 0.0
    %5384 = vmatprep.subr.mxu0 0.0
    %5385 = vmatpush1.msra.mxu0 0.0
    %5386 = vmatprep.subr.mxu0 0.0
    %5387 = vmatpush1.msra.mxu0 0.0
    %5388 = vmatprep.subr.mxu0 0.0
    %5389 = vmatpush1.msra.mxu0 0.0
    %5390 = vmatprep.subr.mxu0 0.0
    %5391 = vmatpush1.msra.mxu0 0.0
    %5392 = vmatprep.subr.mxu0 0.0
    %5393 = vmatpush1.msra.mxu0 0.0
    %5394 = vmatprep.subr.mxu0 0.0
    %5395 = vmatpush1.msra.mxu0 0.0
    %5396 = vmatprep.subr.mxu0 0.0
    %5397 = vmatpush1.msra.mxu0 0.0
    %5398 = vmatprep.subr.mxu0 0.0
    %5399 = vmatpush1.msra.mxu0 0.0
    %5400 = vmatprep.subr.mxu0 0.0
    %5401 = vmatpush1.msra.mxu0 0.0
    %5402 = vmatprep.subr.mxu0 0.0
    %5403 = vmatpush1.msra.mxu0 0.0
    %5404 = vmatprep.subr.mxu0 0.0
    %5405 = vmatpush1.msra.mxu0 0.0
    %5406 = vmatprep.subr.mxu0 0.0
    %5407 = vmatpush1.msra.mxu0 0.0
    %5408 = vmatprep.subr.mxu0 0.0
    %5409 = vmatpush1.msra.mxu0 0.0
    %5410 = vmatprep.subr.mxu0 0.0
    %5411 = vmatpush1.msra.mxu0 0.0
    %5412 = vmatprep.subr.mxu0 0.0
    %5413 = vmatpush1.msra.mxu0 0.0
    %5414 = vmatprep.subr.mxu0 0.0
    %5415 = vmatpush1.msra.mxu0 0.0
    %5416 = vmatprep.subr.mxu0 0.0
    %5417 = vmatpush1.msra.mxu0 0.0
    %5418 = vmatprep.subr.mxu0 0.0
    %5419 = vmatpush1.msra.mxu0 0.0
    %5420 = vmatprep.subr.mxu0 0.0
    %5421 = vmatpush1.msra.mxu0 0.0
    %5422 = vmatprep.subr.mxu0 0.0
    %5423 = vmatpush1.msra.mxu0 0.0
    %5424 = vmatprep.subr.mxu0 0.0
    %5425 = vmatpush1.msra.mxu0 0.0
    %5426 = vmatprep.subr.mxu0 0.0
    %5427 = vmatpush1.msra.mxu0 0.0
    %5428 = vmatprep.subr.mxu0 0.0
    %5429 = vmatpush1.msra.mxu0 0.0
    %5430 = vmatprep.subr.mxu0 0.0
    %5431 = vmatpush1.msra.mxu0 0.0
    %5432 = vmatprep.subr.mxu0 0.0
    %5433 = vmatpush1.msra.mxu0 0.0
    %5434 = vmatprep.subr.mxu0 0.0
    %5435 = vmatpush1.msra.mxu0 0.0
    %5436 = vmatprep.subr.mxu0 0.0
    %5437 = vmatpush1.msra.mxu0 0.0
    %5438 = vmatprep.mubr.f32.mxu0 0.0
    %5439 = vmatmul.mubr.f32.gmra.mrb[0].mxu0 %v5369
    %v5440 = vpop.f32.mrb[0].mxu0
    %v5441 = vadd.f32 %v5367, %v5440
    %v5442 = vpop.f32.mrb[0].mxu0
    %5443 = vmatprep.mubr.f32.mxu0 0.0
    %5444 = vmatmul.mubr.f32.gmra.mrb[0].mxu0 %v5372
    %v5445 = vpop.f32.mrb[0].mxu0
    %v5446 = vadd.f32 %v5367, %v5445
    %v5447 = vpop.f32.mrb[0].mxu0
    %5448 = vdwg.mxu0
    %v5449 = vmax.f32 %v5441, 0.0
    %v5450 = vmax.f32 %v5446, 0.0
    %v5451 = vld [vmem:[%s1 + $0x1e0] sm:$0xff]
    %v5452 = vld [vmem:[%s1 + $0x1e8] sm:$0xff]
    %v5453 = vld [vmem:[%s1 + $0x1f0] sm:$0xff]
    %v5454 = vld [vmem:[%s1 + $0x1f8] sm:$0xff]
    %v5456 = vsel %vm120, %v5449, 0
    %v5459 = vsel %vm120, %v5450, 0
    %5461 = vmatprep.subr.mxu0 0.0
    %5462 = vmatpush1.msra.mxu0 %v5451
    %5463 = vmatprep.subr.mxu0 0.0
    %5464 = vmatpush1.msra.mxu0 %v5452
    %5465 = vmatprep.subr.mxu0 0.0
    %5466 = vmatpush1.msra.mxu0 %v5453
    %5467 = vmatprep.subr.mxu0 0.0
    %5468 = vmatpush1.msra.mxu0 %v5454
    %5469 = vmatprep.subr.mxu0 0.0
    %5470 = vmatpush1.msra.mxu0 0.0
    %5471 = vmatprep.subr.mxu0 0.0
    %5472 = vmatpush1.msra.mxu0 0.0
    %5473 = vmatprep.subr.mxu0 0.0
    %5474 = vmatpush1.msra.mxu0 0.0
    %5475 = vmatprep.subr.mxu0 0.0
    %5476 = vmatpush1.msra.mxu0 0.0
    %5477 = vmatprep.subr.mxu0 0.0
    %5478 = vmatpush1.msra.mxu0 0.0
    %5479 = vmatprep.subr.mxu0 0.0
    %5480 = vmatpush1.msra.mxu0 0.0
    %5481 = vmatprep.subr.mxu0 0.0
    %5482 = vmatpush1.msra.mxu0 0.0
    %5483 = vmatprep.subr.mxu0 0.0
    %5484 = vmatpush1.msra.mxu0 0.0
    %5485 = vmatprep.subr.mxu0 0.0
    %5486 = vmatpush1.msra.mxu0 0.0
    %5487 = vmatprep.subr.mxu0 0.0
    %5488 = vmatpush1.msra.mxu0 0.0
    %5489 = vmatprep.subr.mxu0 0.0
    %5490 = vmatpush1.msra.mxu0 0.0
    %5491 = vmatprep.subr.mxu0 0.0
    %5492 = vmatpush1.msra.mxu0 0.0
    %5493 = vmatprep.subr.mxu0 0.0
    %5494 = vmatpush1.msra.mxu0 0.0
    %5495 = vmatprep.subr.mxu0 0.0
    %5496 = vmatpush1.msra.mxu0 0.0
    %5497 = vmatprep.subr.mxu0 0.0
    %5498 = vmatpush1.msra.mxu0 0.0
    %5499 = vmatprep.subr.mxu0 0.0
    %5500 = vmatpush1.msra.mxu0 0.0
    %5501 = vmatprep.subr.mxu0 0.0
    %5502 = vmatpush1.msra.mxu0 0.0
    %5503 = vmatprep.subr.mxu0 0.0
    %5504 = vmatpush1.msra.mxu0 0.0
    %5505 = vmatprep.subr.mxu0 0.0
    %5506 = vmatpush1.msra.mxu0 0.0
    %5507 = vmatprep.subr.mxu0 0.0
    %5508 = vmatpush1.msra.mxu0 0.0
    %5509 = vmatprep.subr.mxu0 0.0
    %5510 = vmatpush1.msra.mxu0 0.0
    %5511 = vmatprep.subr.mxu0 0.0
    %5512 = vmatpush1.msra.mxu0 0.0
    %5513 = vmatprep.subr.mxu0 0.0
    %5514 = vmatpush1.msra.mxu0 0.0
    %5515 = vmatprep.subr.mxu0 0.0
    %5516 = vmatpush1.msra.mxu0 0.0
    %5517 = vmatprep.subr.mxu0 0.0
    %5518 = vmatpush1.msra.mxu0 0.0
    %5519 = vmatprep.subr.mxu0 0.0
    %5520 = vmatpush1.msra.mxu0 0.0
    %5521 = vmatprep.subr.mxu0 0.0
    %5522 = vmatpush1.msra.mxu0 0.0
    %5523 = vmatprep.subr.mxu0 0.0
    %5524 = vmatpush1.msra.mxu0 0.0
    %5525 = vmatprep.mubr.f32.mxu0 0.0
    %5526 = vmatmul.mubr.f32.gmra.mrb[0].mxu0 %v5456
    %v5527 = vpop.f32.mrb[0].mxu0
    %v5528 = vadd.f32 0.0, %v5527
    %v5529 = vpop.f32.mrb[0].mxu0
    %5530 = vmatprep.mubr.f32.mxu0 0.0
    %5531 = vmatmul.mubr.f32.gmra.mrb[0].mxu0 %v5459
    %v5532 = vpop.f32.mrb[0].mxu0
    %v5533 = vadd.f32 0.0, %v5532
    %v5534 = vpop.f32.mrb[0].mxu0
    %5535 = vdwg.mxu0
    %v5536 = vadd.f32 %v5317, %v5528
    %v5537 = vadd.f32 %v5318, %v5533
    %v5538 = vld [vmem:[%s1 + $0x200] sm:$0x1]
    %v5539 = vlaneseq
    %v5540 = vshrl.u32 %v5539, 7
    %v5541 = vsub.s32 0, %v5540
    %v5542 = vrot.slane %v5538, %v5541
    %v5543 = vadd.f32 %v5536, %v5542
    %v5544 = vadd.f32 %v5537, %v5542
    %v5545 = vld [vmem:[%s1 + $0x208] sm:$0x1]
    %v5546 = vld [vmem:[%s1 + $0x210] sm:$0x1]
    %v5547 = vsel %vm120, %v5543, 0.0
    %5548 = vadd.xlane.f32.xlu0 %v5547
    %v5549 = vpop.xlane.xlu0 %5548
    %v5550 = vsel %vm120, %v5544, 0.0
    %5551 = vadd.xlane.f32.xlu0 %v5550
    %v5552 = vpop.xlane.xlu0 %5551
    %v5553 = vmul.f32 %v5549, %v127
    %v5554 = vmul.f32 %v5552, %v127
    %v5555 = vsub.f32 %v5543, %v5553
    %v5556 = vsub.f32 %v5544, %v5554
    %v5557 = vmul.f32 %v5555, %v5555
    %v5558 = vmul.f32 %v5556, %v5556
    %v5559 = vsel %vm120, %v5557, 0.0
    %5560 = vadd.xlane.f32.xlu0 %v5559
    %v5561 = vpop.xlane.xlu0 %5560
    %v5562 = vsel %vm120, %v5558, 0.0
    %5563 = vadd.xlane.f32.xlu0 %v5562
    %v5564 = vpop.xlane.xlu0 %5563
    %v5565 = vmul.f32 %v5561, %v127
    %v5566 = vmul.f32 %v5564, %v127
    %v5567 = vadd.f32 %v5565, 1e-05
    %v5568 = vadd.f32 %v5566, 1e-05
    %v5569 = vrsqrt.pop %v5567
    %v5570 = vrsqrt.pop %v5568
    %v5571 = vmul.f32 %v5555, %v5569
    %v5572 = vmul.f32 %v5556, %v5570
    %v5573 = vlaneseq
    %v5574 = vshrl.u32 %v5573, 7
    %v5575 = vsub.s32 0, %v5574
    %v5576 = vrot.slane %v5545, %v5575
    %v5577 = vmul.f32 %v5571, %v5576
    %v5578 = vmul.f32 %v5572, %v5576
    %v5579 = vlaneseq
    %v5580 = vshrl.u32 %v5579, 7
    %v5581 = vsub.s32 0, %v5580
    %v5582 = vrot.slane %v5546, %v5581
    %v5583 = vadd.f32 %v5577, %v5582
    %v5584 = vadd.f32 %v5578, %v5582
    %v5585 = vld [vmem:[%s4] sm:$0xff]
    %v5586 = vld [vmem:[%s4 + $0x8] sm:$0xff]
    %v5587 = vld [vmem:[%s4 + $0x10] sm:$0xff]
    %v5588 = vld [vmem:[%s4 + $0x18] sm:$0xff]
    %v5589 = vld [vmem:[%s4 + $0x20] sm:$0xff]
    %v5590 = vld [vmem:[%s4 + $0x28] sm:$0xff]
    %v5591 = vld [vmem:[%s4 + $0x30] sm:$0xff]
    %v5592 = vld [vmem:[%s4 + $0x38] sm:$0xff]
    %v5593 = vld [vmem:[%s4 + $0x40] sm:$0xff]
    %v5594 = vld [vmem:[%s4 + $0x48] sm:$0xff]
    %v5595 = vld [vmem:[%s4 + $0x50] sm:$0xff]
    %v5596 = vld [vmem:[%s4 + $0x58] sm:$0xff]
    %v5597 = vld [vmem:[%s4 + $0x60] sm:$0xff]
    %v5598 = vld [vmem:[%s4 + $0x68] sm:$0xff]
    %v5599 = vld [vmem:[%s4 + $0x70] sm:$0xff]
    %v5600 = vld [vmem:[%s4 + $0x78] sm:$0xff]
    %s5601 = scalar_lea.vmem %s4, 128
    %v5602 = vld [vmem:[%s5601] ss:$8 sm:$0xf]
    %v5604 = vlaneseq
    %v5605 = vshrl.u32 %v5604, 7
    %v5606 = vsub.s32 0, %v5605
    %v5607 = vrot.slane %v5602, %v5606
    %v5608 = vlaneseq
    %v5609 = vshrl.u32 %v5608, 7
    %v5610 = vsub.s32 1, %v5609
    %v5611 = vrot.slane %v5602, %v5610
    %v5612 = vlaneseq
    %v5613 = vshrl.u32 %v5612, 7
    %v5614 = vsub.s32 2, %v5613
    %v5615 = vrot.slane %v5602, %v5614
    %v5616 = vlaneseq
    %v5617 = vshrl.u32 %v5616, 7
    %v5618 = vsub.s32 3, %v5617
    %v5619 = vrot.slane %v5602, %v5618
    %v5625 = vsel %vm120, %v5583, 0
    %v5628 = vsel %vm120, %v5584, 0
    %5630 = vmatprep.subr.mxu0 %v5586
    %5631 = vmatpush1.msra.mxu0 %v5585
    %5632 = vmatprep.subr.mxu0 %v5590
    %5633 = vmatpush1.msra.mxu0 %v5589
    %5634 = vmatprep.subr.mxu0 %v5594
    %5635 = vmatpush1.msra.mxu0 %v5593
    %5636 = vmatprep.subr.mxu0 %v5598
    %5637 = vmatpush1.msra.mxu0 %v5597
    %5638 = vmatprep.subr.mxu0 0.0
    %5639 = vmatpush1.msra.mxu0 0.0
    %5640 = vmatprep.subr.mxu0 0.0
    %5641 = vmatpush1.msra.mxu0 0.0
    %5642 = vmatprep.subr.mxu0 0.0
    %5643 = vmatpush1.msra.mxu0 0.0
    %5644 = vmatprep.subr.mxu0 0.0
    %5645 = vmatpush1.msra.mxu0 0.0
    %5646 = vmatprep.subr.mxu0 0.0
    %5647 = vmatpush1.msra.mxu0 0.0
    %5648 = vmatprep.subr.mxu0 0.0
    %5649 = vmatpush1.msra.mxu0 0.0
    %5650 = vmatprep.subr.mxu0 0.0
    %5651 = vmatpush1.msra.mxu0 0.0
    %5652 = vmatprep.subr.mxu0 0.0
    %5653 = vmatpush1.msra.mxu0 0.0
    %5654 = vmatprep.subr.mxu0 0.0
    %5655 = vmatpush1.msra.mxu0 0.0
    %5656 = vmatprep.subr.mxu0 0.0
    %5657 = vmatpush1.msra.mxu0 0.0
    %5658 = vmatprep.subr.mxu0 0.0
    %5659 = vmatpush1.msra.mxu0 0.0
    %5660 = vmatprep.subr.mxu0 0.0
    %5661 = vmatpush1.msra.mxu0 0.0
    %5662 = vmatprep.subr.mxu0 0.0
    %5663 = vmatpush1.msra.mxu0 0.0
    %5664 = vmatprep.subr.mxu0 0.0
    %5665 = vmatpush1.msra.mxu0 0.0
    %5666 = vmatprep.subr.mxu0 0.0
    %5667 = vmatpush1.msra.mxu0 0.0
    %5668 = vmatprep.subr.mxu0 0.0
    %5669 = vmatpush1.msra.mxu0 0.0
    %5670 = vmatprep.subr.mxu0 0.0
    %5671 = vmatpush1.msra.mxu0 0.0
    %5672 = vmatprep.subr.mxu0 0.0
    %5673 = vmatpush1.msra.mxu0 0.0
    %5674 = vmatprep.subr.mxu0 0.0
    %5675 = vmatpush1.msra.mxu0 0.0
    %5676 = vmatprep.subr.mxu0 0.0
    %5677 = vmatpush1.msra.mxu0 0.0
    %5678 = vmatprep.subr.mxu0 0.0
    %5679 = vmatpush1.msra.mxu0 0.0
    %5680 = vmatprep.subr.mxu0 0.0
    %5681 = vmatpush1.msra.mxu0 0.0
    %5682 = vmatprep.subr.mxu0 0.0
    %5683 = vmatpush1.msra.mxu0 0.0
    %5684 = vmatprep.subr.mxu0 0.0
    %5685 = vmatpush1.msra.mxu0 0.0
    %5686 = vmatprep.subr.mxu0 0.0
    %5687 = vmatpush1.msra.mxu0 0.0
    %5688 = vmatprep.subr.mxu0 0.0
    %5689 = vmatpush1.msra.mxu0 0.0
    %5690 = vmatprep.subr.mxu0 0.0
    %5691 = vmatpush1.msra.mxu0 0.0
    %5692 = vmatprep.subr.mxu0 0.0
    %5693 = vmatpush1.msra.mxu0 0.0
    %5694 = vmatprep.mubr.f32.mxu0 0.0
    %5695 = vmatmul.mubr.f32.gmra.mrb[0].mxu0 %v5625
    %v5696 = vpop.f32.mrb[0].mxu0
    %v5697 = vadd.f32 %v5607, %v5696
    %v5698 = vpop.f32.mrb[0].mxu0
    %v5699 = vadd.f32 %v5611, %v5698
    %5700 = vmatprep.mubr.f32.mxu0 0.0
    %5701 = vmatmul.mubr.f32.gmra.mrb[0].mxu0 %v5628
    %v5702 = vpop.f32.mrb[0].mxu0
    %v5703 = vadd.f32 %v5607, %v5702
    %v5704 = vpop.f32.mrb[0].mxu0
    %v5705 = vadd.f32 %v5611, %v5704
    %5706 = vdwg.mxu0
    %5707 = vmatprep.subr.mxu0 %v5588
    %5708 = vmatpush1.msra.mxu0 %v5587
    %5709 = vmatprep.subr.mxu0 %v5592
    %5710 = vmatpush1.msra.mxu0 %v5591
    %5711 = vmatprep.subr.mxu0 %v5596
    %5712 = vmatpush1.msra.mxu0 %v5595
    %5713 = vmatprep.subr.mxu0 %v5600
    %5714 = vmatpush1.msra.mxu0 %v5599
    %5715 = vmatprep.subr.mxu0 0.0
    %5716 = vmatpush1.msra.mxu0 0.0
    %5717 = vmatprep.subr.mxu0 0.0
    %5718 = vmatpush1.msra.mxu0 0.0
    %5719 = vmatprep.subr.mxu0 0.0
    %5720 = vmatpush1.msra.mxu0 0.0
    %5721 = vmatprep.subr.mxu0 0.0
    %5722 = vmatpush1.msra.mxu0 0.0
    %5723 = vmatprep.subr.mxu0 0.0
    %5724 = vmatpush1.msra.mxu0 0.0
    %5725 = vmatprep.subr.mxu0 0.0
    %5726 = vmatpush1.msra.mxu0 0.0
    %5727 = vmatprep.subr.mxu0 0.0
    %5728 = vmatpush1.msra.mxu0 0.0
    %5729 = vmatprep.subr.mxu0 0.0
    %5730 = vmatpush1.msra.mxu0 0.0
    %5731 = vmatprep.subr.mxu0 0.0
    %5732 = vmatpush1.msra.mxu0 0.0
    %5733 = vmatprep.subr.mxu0 0.0
    %5734 = vmatpush1.msra.mxu0 0.0
    %5735 = vmatprep.subr.mxu0 0.0
    %5736 = vmatpush1.msra.mxu0 0.0
    %5737 = vmatprep.subr.mxu0 0.0
    %5738 = vmatpush1.msra.mxu0 0.0
    %5739 = vmatprep.subr.mxu0 0.0
    %5740 = vmatpush1.msra.mxu0 0.0
    %5741 = vmatprep.subr.mxu0 0.0
    %5742 = vmatpush1.msra.mxu0 0.0
    %5743 = vmatprep.subr.mxu0 0.0
    %5744 = vmatpush1.msra.mxu0 0.0
    %5745 = vmatprep.subr.mxu0 0.0
    %5746 = vmatpush1.msra.mxu0 0.0
    %5747 = vmatprep.subr.mxu0 0.0
    %5748 = vmatpush1.msra.mxu0 0.0
    %5749 = vmatprep.subr.mxu0 0.0
    %5750 = vmatpush1.msra.mxu0 0.0
    %5751 = vmatprep.subr.mxu0 0.0
    %5752 = vmatpush1.msra.mxu0 0.0
    %5753 = vmatprep.subr.mxu0 0.0
    %5754 = vmatpush1.msra.mxu0 0.0
    %5755 = vmatprep.subr.mxu0 0.0
    %5756 = vmatpush1.msra.mxu0 0.0
    %5757 = vmatprep.subr.mxu0 0.0
    %5758 = vmatpush1.msra.mxu0 0.0
    %5759 = vmatprep.subr.mxu0 0.0
    %5760 = vmatpush1.msra.mxu0 0.0
    %5761 = vmatprep.subr.mxu0 0.0
    %5762 = vmatpush1.msra.mxu0 0.0
    %5763 = vmatprep.subr.mxu0 0.0
    %5764 = vmatpush1.msra.mxu0 0.0
    %5765 = vmatprep.subr.mxu0 0.0
    %5766 = vmatpush1.msra.mxu0 0.0
    %5767 = vmatprep.subr.mxu0 0.0
    %5768 = vmatpush1.msra.mxu0 0.0
    %5769 = vmatprep.subr.mxu0 0.0
    %5770 = vmatpush1.msra.mxu0 0.0
    %5771 = vmatprep.mubr.f32.mxu0 0.0
    %5772 = vmatmul.mubr.f32.gmra.mrb[0].mxu0 %v5625
    %v5773 = vpop.f32.mrb[0].mxu0
    %v5774 = vadd.f32 %v5615, %v5773
    %v5775 = vpop.f32.mrb[0].mxu0
    %v5776 = vadd.f32 %v5619, %v5775
    %5777 = vmatprep.mubr.f32.mxu0 0.0
    %5778 = vmatmul.mubr.f32.gmra.mrb[0].mxu0 %v5628
    %v5779 = vpop.f32.mrb[0].mxu0
    %v5780 = vadd.f32 %v5615, %v5779
    %v5781 = vpop.f32.mrb[0].mxu0
    %v5782 = vadd.f32 %v5619, %v5781
    %5783 = vdwg.mxu0
    %v5784 = vmax.f32 %v5697, 0.0
    %v5785 = vmax.f32 %v5699, 0.0
    %v5786 = vmax.f32 %v5774, 0.0
    %v5787 = vmax.f32 %v5776, 0.0
    %v5788 = vmax.f32 %v5703, 0.0
    %v5789 = vmax.f32 %v5705, 0.0
    %v5790 = vmax.f32 %v5780, 0.0
    %v5791 = vmax.f32 %v5782, 0.0
    %v5792 = vld [vmem:[%s1 + $0x218] sm:$0xff]
    %v5793 = vld [vmem:[%s1 + $0x220] sm:$0xff]
    %v5794 = vld [vmem:[%s1 + $0x228] sm:$0xff]
    %v5795 = vld [vmem:[%s1 + $0x230] sm:$0xff]
    %v5796 = vld [vmem:[%s1 + $0x238] sm:$0xff]
    %v5797 = vld [vmem:[%s1 + $0x240] sm:$0xff]
    %v5798 = vld [vmem:[%s1 + $0x248] sm:$0xff]
    %v5799 = vld [vmem:[%s1 + $0x250] sm:$0xff]
    %v5800 = vld [vmem:[%s1 + $0x258] sm:$0xff]
    %v5801 = vld [vmem:[%s1 + $0x260] sm:$0xff]
    %v5802 = vld [vmem:[%s1 + $0x268] sm:$0xff]
    %v5803 = vld [vmem:[%s1 + $0x270] sm:$0xff]
    %v5804 = vld [vmem:[%s1 + $0x278] sm:$0xff]
    %v5805 = vld [vmem:[%s1 + $0x280] sm:$0xff]
    %v5806 = vld [vmem:[%s1 + $0x288] sm:$0xff]
    %v5807 = vld [vmem:[%s1 + $0x290] sm:$0xff]
    %v5808 = vld [vmem:[%s1 + $0x298] sm:$0xff]
    %v5809 = vld [vmem:[%s1 + $0x2a0] sm:$0xff]
    %v5810 = vld [vmem:[%s1 + $0x2a8] sm:$0xff]
    %v5811 = vld [vmem:[%s1 + $0x2b0] sm:$0xff]
    %v5812 = vld [vmem:[%s1 + $0x2b8] sm:$0xff]
    %v5813 = vld [vmem:[%s1 + $0x2c0] sm:$0xff]
    %v5814 = vld [vmem:[%s1 + $0x2c8] sm:$0xff]
    %v5815 = vld [vmem:[%s1 + $0x2d0] sm:$0xff]
    %v5816 = vld [vmem:[%s1 + $0x2d8] sm:$0xff]
    %v5817 = vld [vmem:[%s1 + $0x2e0] sm:$0xff]
    %v5818 = vld [vmem:[%s1 + $0x2e8] sm:$0xff]
    %v5819 = vld [vmem:[%s1 + $0x2f0] sm:$0xff]
    %v5820 = vld [vmem:[%s1 + $0x2f8] sm:$0xff]
    %v5821 = vld [vmem:[%s1 + $0x300] sm:$0xff]
    %v5822 = vld [vmem:[%s1 + $0x308] sm:$0xff]
    %v5823 = vld [vmem:[%s1 + $0x310] sm:$0xff]
    %v5824 = vld [vmem:[%s1 + $0x318] sm:$0xff]
    %v5825 = vld [vmem:[%s1 + $0x320] sm:$0xff]
    %v5826 = vld [vmem:[%s1 + $0x328] sm:$0xff]
    %v5827 = vld [vmem:[%s1 + $0x330] sm:$0xff]
    %v5828 = vld [vmem:[%s1 + $0x338] sm:$0xff]
    %v5829 = vld [vmem:[%s1 + $0x340] sm:$0xff]
    %v5830 = vld [vmem:[%s1 + $0x348] sm:$0xff]
    %v5831 = vld [vmem:[%s1 + $0x350] sm:$0xff]
    %v5832 = vld [vmem:[%s1 + $0x358] sm:$0xff]
    %v5833 = vld [vmem:[%s1 + $0x360] sm:$0xff]
    %v5834 = vld [vmem:[%s1 + $0x368] sm:$0xff]
    %v5835 = vld [vmem:[%s1 + $0x370] sm:$0xff]
    %v5836 = vld [vmem:[%s1 + $0x378] sm:$0xff]
    %v5837 = vld [vmem:[%s1 + $0x380] sm:$0xff]
    %v5838 = vld [vmem:[%s1 + $0x388] sm:$0xff]
    %v5839 = vld [vmem:[%s1 + $0x390] sm:$0xff]
    %v5840 = vld [vmem:[%s1 + $0x398] sm:$0xff]
    %v5841 = vld [vmem:[%s1 + $0x3a0] sm:$0xff]
    %v5842 = vld [vmem:[%s1 + $0x3a8] sm:$0xff]
    %v5843 = vld [vmem:[%s1 + $0x3b0] sm:$0xff]
    %v5844 = vld [vmem:[%s1 + $0x3b8] sm:$0xff]
    %v5845 = vld [vmem:[%s1 + $0x3c0] sm:$0xff]
    %v5846 = vld [vmem:[%s1 + $0x3c8] sm:$0xff]
    %v5847 = vld [vmem:[%s1 + $0x3d0] sm:$0xff]
    %v5848 = vld [vmem:[%s1 + $0x3d8] sm:$0xff]
    %v5849 = vld [vmem:[%s1 + $0x3e0] sm:$0xff]
    %v5850 = vld [vmem:[%s1 + $0x3e8] sm:$0xff]
    %v5851 = vld [vmem:[%s1 + $0x3f0] sm:$0xff]
    %v5852 = vld [vmem:[%s1 + $0x3f8] sm:$0xff]
    %v5853 = vld [vmem:[%s1 + $0x400] sm:$0xff]
    %v5854 = vld [vmem:[%s1 + $0x408] sm:$0xff]
    %v5855 = vld [vmem:[%s1 + $0x410] sm:$0xff]
    %v5856 = vld [vmem:[%s1 + $0x418] sm:$0x1]
    %v5857 = vlaneseq
    %v5858 = vshrl.u32 %v5857, 7
    %v5859 = vsub.s32 0, %v5858
    %v5860 = vrot.slane %v5856, %v5859
    %5861 = vmatprep.subr.mxu0 0.0
    %5862 = vmatpush1.msra.mxu0 %v5792
    %5863 = vmatprep.subr.mxu0 0.0
    %5864 = vmatpush1.msra.mxu0 %v5793
    %5865 = vmatprep.subr.mxu0 0.0
    %5866 = vmatpush1.msra.mxu0 %v5794
    %5867 = vmatprep.subr.mxu0 0.0
    %5868 = vmatpush1.msra.mxu0 %v5795
    %5869 = vmatprep.subr.mxu0 0.0
    %5870 = vmatpush1.msra.mxu0 %v5796
    %5871 = vmatprep.subr.mxu0 0.0
    %5872 = vmatpush1.msra.mxu0 %v5797
    %5873 = vmatprep.subr.mxu0 0.0
    %5874 = vmatpush1.msra.mxu0 %v5798
    %5875 = vmatprep.subr.mxu0 0.0
    %5876 = vmatpush1.msra.mxu0 %v5799
    %5877 = vmatprep.subr.mxu0 0.0
    %5878 = vmatpush1.msra.mxu0 %v5800
    %5879 = vmatprep.subr.mxu0 0.0
    %5880 = vmatpush1.msra.mxu0 %v5801
    %5881 = vmatprep.subr.mxu0 0.0
    %5882 = vmatpush1.msra.mxu0 %v5802
    %5883 = vmatprep.subr.mxu0 0.0
    %5884 = vmatpush1.msra.mxu0 %v5803
    %5885 = vmatprep.subr.mxu0 0.0
    %5886 = vmatpush1.msra.mxu0 %v5804
    %5887 = vmatprep.subr.mxu0 0.0
    %5888 = vmatpush1.msra.mxu0 %v5805
    %5889 = vmatprep.subr.mxu0 0.0
    %5890 = vmatpush1.msra.mxu0 %v5806
    %5891 = vmatprep.subr.mxu0 0.0
    %5892 = vmatpush1.msra.mxu0 %v5807
    %5893 = vmatprep.subr.mxu0 0.0
    %5894 = vmatpush1.msra.mxu0 %v5808
    %5895 = vmatprep.subr.mxu0 0.0
    %5896 = vmatpush1.msra.mxu0 %v5809
    %5897 = vmatprep.subr.mxu0 0.0
    %5898 = vmatpush1.msra.mxu0 %v5810
    %5899 = vmatprep.subr.mxu0 0.0
    %5900 = vmatpush1.msra.mxu0 %v5811
    %5901 = vmatprep.subr.mxu0 0.0
    %5902 = vmatpush1.msra.mxu0 %v5812
    %5903 = vmatprep.subr.mxu0 0.0
    %5904 = vmatpush1.msra.mxu0 %v5813
    %5905 = vmatprep.subr.mxu0 0.0
    %5906 = vmatpush1.msra.mxu0 %v5814
    %5907 = vmatprep.subr.mxu0 0.0
    %5908 = vmatpush1.msra.mxu0 %v5815
    %5909 = vmatprep.subr.mxu0 0.0
    %5910 = vmatpush1.msra.mxu0 %v5816
    %5911 = vmatprep.subr.mxu0 0.0
    %5912 = vmatpush1.msra.mxu0 %v5817
    %5913 = vmatprep.subr.mxu0 0.0
    %5914 = vmatpush1.msra.mxu0 %v5818
    %5915 = vmatprep.subr.mxu0 0.0
    %5916 = vmatpush1.msra.mxu0 %v5819
    %5917 = vmatprep.subr.mxu0 0.0
    %5918 = vmatpush1.msra.mxu0 %v5820
    %5919 = vmatprep.subr.mxu0 0.0
    %5920 = vmatpush1.msra.mxu0 %v5821
    %5921 = vmatprep.subr.mxu0 0.0
    %5922 = vmatpush1.msra.mxu0 %v5822
    %5923 = vmatprep.subr.mxu0 0.0
    %5924 = vmatpush1.msra.mxu0 %v5823
    %5925 = vmatprep.mubr.f32.mxu0 %v5785
    %5926 = vmatmul.mubr.f32.gmra.mrb[0].mxu0 %v5784
    %v5927 = vpop.f32.mrb[0].mxu0
    %v5928 = vadd.f32 %v5860, %v5927
    %v5929 = vpop.f32.mrb[0].mxu0
    %5930 = vmatprep.mubr.f32.mxu0 %v5789
    %5931 = vmatmul.mubr.f32.gmra.mrb[0].mxu0 %v5788
    %v5932 = vpop.f32.mrb[0].mxu0
    %v5933 = vadd.f32 %v5860, %v5932
    %v5934 = vpop.f32.mrb[0].mxu0
    %5935 = vdwg.mxu0
    %5936 = vmatprep.subr.mxu0 0.0
    %5937 = vmatpush1.msra.mxu0 %v5824
    %5938 = vmatprep.subr.mxu0 0.0
    %5939 = vmatpush1.msra.mxu0 %v5825
    %5940 = vmatprep.subr.mxu0 0.0
    %5941 = vmatpush1.msra.mxu0 %v5826
    %5942 = vmatprep.subr.mxu0 0.0
    %5943 = vmatpush1.msra.mxu0 %v5827
    %5944 = vmatprep.subr.mxu0 0.0
    %5945 = vmatpush1.msra.mxu0 %v5828
    %5946 = vmatprep.subr.mxu0 0.0
    %5947 = vmatpush1.msra.mxu0 %v5829
    %5948 = vmatprep.subr.mxu0 0.0
    %5949 = vmatpush1.msra.mxu0 %v5830
    %5950 = vmatprep.subr.mxu0 0.0
    %5951 = vmatpush1.msra.mxu0 %v5831
    %5952 = vmatprep.subr.mxu0 0.0
    %5953 = vmatpush1.msra.mxu0 %v5832
    %5954 = vmatprep.subr.mxu0 0.0
    %5955 = vmatpush1.msra.mxu0 %v5833
    %5956 = vmatprep.subr.mxu0 0.0
    %5957 = vmatpush1.msra.mxu0 %v5834
    %5958 = vmatprep.subr.mxu0 0.0
    %5959 = vmatpush1.msra.mxu0 %v5835
    %5960 = vmatprep.subr.mxu0 0.0
    %5961 = vmatpush1.msra.mxu0 %v5836
    %5962 = vmatprep.subr.mxu0 0.0
    %5963 = vmatpush1.msra.mxu0 %v5837
    %5964 = vmatprep.subr.mxu0 0.0
    %5965 = vmatpush1.msra.mxu0 %v5838
    %5966 = vmatprep.subr.mxu0 0.0
    %5967 = vmatpush1.msra.mxu0 %v5839
    %5968 = vmatprep.subr.mxu0 0.0
    %5969 = vmatpush1.msra.mxu0 %v5840
    %5970 = vmatprep.subr.mxu0 0.0
    %5971 = vmatpush1.msra.mxu0 %v5841
    %5972 = vmatprep.subr.mxu0 0.0
    %5973 = vmatpush1.msra.mxu0 %v5842
    %5974 = vmatprep.subr.mxu0 0.0
    %5975 = vmatpush1.msra.mxu0 %v5843
    %5976 = vmatprep.subr.mxu0 0.0
    %5977 = vmatpush1.msra.mxu0 %v5844
    %5978 = vmatprep.subr.mxu0 0.0
    %5979 = vmatpush1.msra.mxu0 %v5845
    %5980 = vmatprep.subr.mxu0 0.0
    %5981 = vmatpush1.msra.mxu0 %v5846
    %5982 = vmatprep.subr.mxu0 0.0
    %5983 = vmatpush1.msra.mxu0 %v5847
    %5984 = vmatprep.subr.mxu0 0.0
    %5985 = vmatpush1.msra.mxu0 %v5848
    %5986 = vmatprep.subr.mxu0 0.0
    %5987 = vmatpush1.msra.mxu0 %v5849
    %5988 = vmatprep.subr.mxu0 0.0
    %5989 = vmatpush1.msra.mxu0 %v5850
    %5990 = vmatprep.subr.mxu0 0.0
    %5991 = vmatpush1.msra.mxu0 %v5851
    %5992 = vmatprep.subr.mxu0 0.0
    %5993 = vmatpush1.msra.mxu0 %v5852
    %5994 = vmatprep.subr.mxu0 0.0
    %5995 = vmatpush1.msra.mxu0 %v5853
    %5996 = vmatprep.subr.mxu0 0.0
    %5997 = vmatpush1.msra.mxu0 %v5854
    %5998 = vmatprep.subr.mxu0 0.0
    %5999 = vmatpush1.msra.mxu0 %v5855
    %6000 = vmatprep.mubr.f32.mxu0 %v5787
    %6001 = vmatmul.mubr.f32.gmra.mrb[0].mxu0 %v5786
    %v6002 = vpop.f32.mrb[0].mxu0
    %v6003 = vadd.f32 %v5928, %v6002
    %v6004 = vpop.f32.mrb[0].mxu0
    %6005 = vmatprep.mubr.f32.mxu0 %v5791
    %6006 = vmatmul.mubr.f32.gmra.mrb[0].mxu0 %v5790
    %v6007 = vpop.f32.mrb[0].mxu0
    %v6008 = vadd.f32 %v5933, %v6007
    %v6009 = vpop.f32.mrb[0].mxu0
    %6010 = vdwg.mxu0
    %v6011 = vld [vmem:[%s1 + $0x420] sm:$0x1]
    %v6012 = vld [vmem:[%s1 + $0x428] sm:$0x1]
    %v6014 = vsel %vm120, %v6011, 0
    %v6017 = vsel %vm120, %v6003, 0
    %6019 = vmatprep.subr.mxu0 0.0
    %6020 = vmatpush1.xpose.msra.mxu0 %v6017
    %6021 = vmatprep.subr.mxu0 0.0
    %6022 = vmatpush1.xpose.msra.mxu0 0.0
    %6023 = vmatprep.subr.mxu0 0.0
    %6024 = vmatpush1.xpose.msra.mxu0 0.0
    %6025 = vmatprep.subr.mxu0 0.0
    %6026 = vmatpush1.xpose.msra.mxu0 0.0
    %6027 = vmatprep.subr.mxu0 0.0
    %6028 = vmatpush1.xpose.msra.mxu0 0.0
    %6029 = vmatprep.subr.mxu0 0.0
    %6030 = vmatpush1.xpose.msra.mxu0 0.0
    %6031 = vmatprep.subr.mxu0 0.0
    %6032 = vmatpush1.xpose.msra.mxu0 0.0
    %6033 = vmatprep.subr.mxu0 0.0
    %6034 = vmatpush1.xpose.msra.mxu0 0.0
    %6035 = vmatprep.subr.mxu0 0.0
    %6036 = vmatpush1.xpose.msra.mxu0 0.0
    %6037 = vmatprep.subr.mxu0 0.0
    %6038 = vmatpush1.xpose.msra.mxu0 0.0
    %6039 = vmatprep.subr.mxu0 0.0
    %6040 = vmatpush1.xpose.msra.mxu0 0.0
    %6041 = vmatprep.subr.mxu0 0.0
    %6042 = vmatpush1.xpose.msra.mxu0 0.0
    %6043 = vmatprep.subr.mxu0 0.0
    %6044 = vmatpush1.xpose.msra.mxu0 0.0
    %6045 = vmatprep.subr.mxu0 0.0
    %6046 = vmatpush1.xpose.msra.mxu0 0.0
    %6047 = vmatprep.subr.mxu0 0.0
    %6048 = vmatpush1.xpose.msra.mxu0 0.0
    %6049 = vmatprep.subr.mxu0 0.0
    %6050 = vmatpush1.xpose.msra.mxu0 0.0
    %6051 = vmatprep.subr.mxu0 0.0
    %6052 = vmatpush1.xpose.msra.mxu0 0.0
    %6053 = vmatprep.subr.mxu0 0.0
    %6054 = vmatpush1.xpose.msra.mxu0 0.0
    %6055 = vmatprep.subr.mxu0 0.0
    %6056 = vmatpush1.xpose.msra.mxu0 0.0
    %6057 = vmatprep.subr.mxu0 0.0
    %6058 = vmatpush1.xpose.msra.mxu0 0.0
    %6059 = vmatprep.subr.mxu0 0.0
    %6060 = vmatpush1.xpose.msra.mxu0 0.0
    %6061 = vmatprep.subr.mxu0 0.0
    %6062 = vmatpush1.xpose.msra.mxu0 0.0
    %6063 = vmatprep.subr.mxu0 0.0
    %6064 = vmatpush1.xpose.msra.mxu0 0.0
    %6065 = vmatprep.subr.mxu0 0.0
    %6066 = vmatpush1.xpose.msra.mxu0 0.0
    %6067 = vmatprep.subr.mxu0 0.0
    %6068 = vmatpush1.xpose.msra.mxu0 0.0
    %6069 = vmatprep.subr.mxu0 0.0
    %6070 = vmatpush1.xpose.msra.mxu0 0.0
    %6071 = vmatprep.subr.mxu0 0.0
    %6072 = vmatpush1.xpose.msra.mxu0 0.0
    %6073 = vmatprep.subr.mxu0 0.0
    %6074 = vmatpush1.xpose.msra.mxu0 0.0
    %6075 = vmatprep.subr.mxu0 0.0
    %6076 = vmatpush1.xpose.msra.mxu0 0.0
    %6077 = vmatprep.subr.mxu0 0.0
    %6078 = vmatpush1.xpose.msra.mxu0 0.0
    %6079 = vmatprep.subr.mxu0 0.0
    %6080 = vmatpush1.xpose.msra.mxu0 0.0
    %6081 = vmatprep.subr.mxu0 0.0
    %6082 = vmatpush1.xpose.msra.mxu0 0.0
    %6083 = vmatprep.mubr.f32.mxu0 0.0
    %6084 = vmatmul.mubr.f32.gmra.mrb[0].mxu0 %v6014
    %v6085 = vpop.f32.mrb[0].mxu0
    %v6086 = vadd.f32 0.0, %v6085
    %v6087 = vpop.f32.mrb[0].mxu0
    %6088 = vdwg.mxu0
    %v6090 = vsel %vm120, %v6008, 0
    %6092 = vmatprep.subr.mxu0 0.0
    %6093 = vmatpush1.xpose.msra.mxu0 %v6090
    %6094 = vmatprep.subr.mxu0 0.0
    %6095 = vmatpush1.xpose.msra.mxu0 0.0
    %6096 = vmatprep.subr.mxu0 0.0
    %6097 = vmatpush1.xpose.msra.mxu0 0.0
    %6098 = vmatprep.subr.mxu0 0.0
    %6099 = vmatpush1.xpose.msra.mxu0 0.0
    %6100 = vmatprep.subr.mxu0 0.0
    %6101 = vmatpush1.xpose.msra.mxu0 0.0
    %6102 = vmatprep.subr.mxu0 0.0
    %6103 = vmatpush1.xpose.msra.mxu0 0.0
    %6104 = vmatprep.subr.mxu0 0.0
    %6105 = vmatpush1.xpose.msra.mxu0 0.0
    %6106 = vmatprep.subr.mxu0 0.0
    %6107 = vmatpush1.xpose.msra.mxu0 0.0
    %6108 = vmatprep.subr.mxu0 0.0
    %6109 = vmatpush1.xpose.msra.mxu0 0.0
    %6110 = vmatprep.subr.mxu0 0.0
    %6111 = vmatpush1.xpose.msra.mxu0 0.0
    %6112 = vmatprep.subr.mxu0 0.0
    %6113 = vmatpush1.xpose.msra.mxu0 0.0
    %6114 = vmatprep.subr.mxu0 0.0
    %6115 = vmatpush1.xpose.msra.mxu0 0.0
    %6116 = vmatprep.subr.mxu0 0.0
    %6117 = vmatpush1.xpose.msra.mxu0 0.0
    %6118 = vmatprep.subr.mxu0 0.0
    %6119 = vmatpush1.xpose.msra.mxu0 0.0
    %6120 = vmatprep.subr.mxu0 0.0
    %6121 = vmatpush1.xpose.msra.mxu0 0.0
    %6122 = vmatprep.subr.mxu0 0.0
    %6123 = vmatpush1.xpose.msra.mxu0 0.0
    %6124 = vmatprep.subr.mxu0 0.0
    %6125 = vmatpush1.xpose.msra.mxu0 0.0
    %6126 = vmatprep.subr.mxu0 0.0
    %6127 = vmatpush1.xpose.msra.mxu0 0.0
    %6128 = vmatprep.subr.mxu0 0.0
    %6129 = vmatpush1.xpose.msra.mxu0 0.0
    %6130 = vmatprep.subr.mxu0 0.0
    %6131 = vmatpush1.xpose.msra.mxu0 0.0
    %6132 = vmatprep.subr.mxu0 0.0
    %6133 = vmatpush1.xpose.msra.mxu0 0.0
    %6134 = vmatprep.subr.mxu0 0.0
    %6135 = vmatpush1.xpose.msra.mxu0 0.0
    %6136 = vmatprep.subr.mxu0 0.0
    %6137 = vmatpush1.xpose.msra.mxu0 0.0
    %6138 = vmatprep.subr.mxu0 0.0
    %6139 = vmatpush1.xpose.msra.mxu0 0.0
    %6140 = vmatprep.subr.mxu0 0.0
    %6141 = vmatpush1.xpose.msra.mxu0 0.0
    %6142 = vmatprep.subr.mxu0 0.0
    %6143 = vmatpush1.xpose.msra.mxu0 0.0
    %6144 = vmatprep.subr.mxu0 0.0
    %6145 = vmatpush1.xpose.msra.mxu0 0.0
    %6146 = vmatprep.subr.mxu0 0.0
    %6147 = vmatpush1.xpose.msra.mxu0 0.0
    %6148 = vmatprep.subr.mxu0 0.0
    %6149 = vmatpush1.xpose.msra.mxu0 0.0
    %6150 = vmatprep.subr.mxu0 0.0
    %6151 = vmatpush1.xpose.msra.mxu0 0.0
    %6152 = vmatprep.subr.mxu0 0.0
    %6153 = vmatpush1.xpose.msra.mxu0 0.0
    %6154 = vmatprep.subr.mxu0 0.0
    %6155 = vmatpush1.xpose.msra.mxu0 0.0
    %6156 = vmatprep.mubr.f32.mxu0 0.0
    %6157 = vmatmul.mubr.f32.gmra.mrb[0].mxu0 %v6014
    %v6158 = vpop.f32.mrb[0].mxu0
    %v6159 = vadd.f32 0.0, %v6158
    %v6160 = vpop.f32.mrb[0].mxu0
    %6161 = vdwg.mxu0
    %v6163 = vrot.slane %v6159, 7
    %vm6165 = vcmask 1040384
    %v6166 = vsel %vm6165, %v6086, %v6163
    %s6168 = vtos %v6012
    %v6169 = vstv %s6168
    %v6171 = vadd.f32 %v6166, %v6169
    %v6172 = vxor.u32 %v6171, 2147483648
    %v6173 = vmul.f32 %v6172, 1.442695
    %v6174 = vpow.pop %v6173
    %v6175 = vadd.f32 %v6174, 1.0
    %v6176 = vrcp.pop %v6175
    %v6177 = vmul.f32 1.0, %v6176
    %vm6178 = vcmask 58368
    %6179 = vst.msk [vmem:[#allocation2] sm:$0x3] %vm6178, %v6177
    // Predicated region
    $region22: #{tpu_custom_call.1} parent=1 // pred_check
      _
    $region23: #{tpu_custom_call.1} parent=1 // pred_check_branch
      %6181 = sbr.rel (0) target = $region25
    $region24: #{tpu_custom_call.1} parent=1 // pred_region
      %s6183 = ssub.s32 32, 32
      %6184 = vsyncadd [#allocation3], %s6183
      %s6186 = sshll.u32 [#allocation2], 4
      %s6187 = int_to_ptr.vmem [resolvable:$true] %s6186
      %6189 = dma.vmem_to_hbm [thread:$0]  %s6187, 32, %s5, [#allocation3]
    $region25: #{tpu_custom_call.1} parent=1 // pred_fallthru
      _
    // Predicated region
    $region26: #{tpu_custom_call.1} parent=1 // pred_check
      _
    $region27: #{tpu_custom_call.1} parent=1 // pred_check_branch
      %6191 = sbr.rel (0) target = $region29
    $region28: #{tpu_custom_call.1} parent=1 // pred_region
      %6192 = dma.done [#allocation3], 32
    $region29: #{tpu_custom_call.1} parent=1 // pred_fallthru
      _
    %6193 = vsyncpa [#allocation3], 1

</llo_original>
